<compile_context>
chip_gen: v6e
topology: v6e:2x2x1
jax: 0.10.0
libtpu: 0.0.40
codegen_flags: <defaults>
</compile_context>

<pallas_src>
import functools
import math

import numpy as np
import jax
import jax.numpy as jnp
from jax import lax
from jax.experimental import pallas as pl
from jax.experimental.pallas import tpu as pltpu

# ---- config (mirrors the LMConfig fields DecodeModel actually uses) ----
DIM = 32
N_HEADS = 4
HEAD_DIM = DIM // N_HEADS
HIDDEN_DIM = 64          # SwiGLU hidden size
N_LAYERS = 2             # params.decoder_layers
NORM_EPS = 1e-5
ROPE_THETA = 10000.0


# ---------------------------------------------------------------------------
# Fused kernel: the whole encoder/decoder stack in one pallas_call.
# ---------------------------------------------------------------------------
def _decode_model_kernel(
    x_ref, y_ref,
    cos_e_ref, sin_e_ref, cos_d_ref, sin_d_ref,
    e_an_ref, e_fn_ref, e_wqkvr_ref, e_wo_ref, e_w13_ref, e_w2_ref,
    d_an_ref, d_fn_ref, d_wqkvr_ref, d_wo_ref, d_w13_ref, d_w2_ref,
    o_ref,
    *, B, S_enc, S_dec, H, hd, hidden, n_layers, eps,
):
    D = H * hd
    scale = 1.0 / math.sqrt(hd)
    neg_inf = -1e30          # Python float -> jaxpr literal (NOT a captured array constant)

    def rmsnorm(v, w):                              # v: (M, D) f32, w: (1, D)
        ms = jnp.mean(v * v, axis=-1, keepdims=True)
        return v * lax.rsqrt(ms + eps) * w

    def split_heads(t, s):
        # (B*s, D) -> (H*B, s, hd); leading index = h*B + b.
        # Only 3-D ops: H lane slices + one leading-axis concat (no 4-D transpose).
        t3 = t.reshape(B, s, D)
        return jnp.concatenate(
            [t3[:, :, h * hd:(h + 1) * hd] for h in range(H)], axis=0)

    def merge_heads(o, s):
        # (H*B, s, hd) -> (B*s, D); columns end up head-major = original Q/K/V layout.
        return jnp.concatenate(
            [o[h * B:(h + 1) * B] for h in range(H)], axis=-1).reshape(B * s, D)

    def attention(q, k, v, S, past, causal):
        # q/k/v: (B*S, D) with RoPE already applied to q, k.
        qh, kh, vh = split_heads(q, S), split_heads(k, S), split_heads(v, S)
        if past is not None:
            # Merge cached encoder K/V with this layer's own K/V ONCE (cheap VMEM concat)
            # so scores and PV are one batched matmul each (review item #2).
            k_all = jnp.concatenate([past[0], kh], axis=1)
            v_all = jnp.concatenate([past[1], vh], axis=1)
        else:
            k_all, v_all = kh, vh
        Sk = k_all.shape[1]

        # One batched score matmul over all (batch, head) slabs (review item #1).
        s = jnp.einsum('bqd,bkd->bqk', qh, k_all,
                       preferred_element_type=jnp.float32) * scale
        if causal:
            s_past = Sk - S          # cached encoder positions fully visible
            row = lax.broadcasted_iota(jnp.int32, s.shape, 1)
            col = lax.broadcasted_iota(jnp.int32, s.shape, 2)
            s = jnp.where(col <= row + s_past, s, neg_inf)

        # One softmax over the whole slab instead of B*H tiny ones.
        m = jnp.max(s, axis=-1, keepdims=True)
        p = jnp.exp(s - m)
        inv = pl.reciprocal(jnp.sum(p, axis=-1, keepdims=True), approx=True)
        o = jnp.einsum('bqk,bkd->bqd', p, v_all,
                       preferred_element_type=jnp.float32) * inv
        return merge_heads(o, S), (kh, vh)

    def coder_block(act, S, cos_t, sin_t, an, fn, wqkvr, wo, w13, w2, past, causal):
        # --- attention sub-block ---
        hn = rmsnorm(act, an)
        proj = jnp.dot(hn, wqkvr, preferred_element_type=jnp.float32)    # (B*S, 5D)
        q, k, v = proj[:, 0:D], proj[:, D:2 * D], proj[:, 2 * D:3 * D]
        q_sw, k_sw = proj[:, 3 * D:4 * D], proj[:, 4 * D:5 * D]
        q = q * cos_t + q_sw * sin_t          # RoPE (pair swap folded into wqkvr)
        k = k * cos_t + k_sw * sin_t
        attn, kv = attention(q, k, v, S, past, causal)
        h = act + jnp.dot(attn, wo, preferred_element_type=jnp.float32)  # mode != 1 residual
        # --- feed-forward sub-block (SwiGLU) ---
        hn2 = rmsnorm(h, fn)
        h13 = jnp.dot(hn2, w13, preferred_element_type=jnp.float32)      # (B*S, 2*hidden)
        h1, h3 = h13[:, :hidden], h13[:, hidden:]
        ff = jnp.dot(h1 * jax.nn.sigmoid(h1) * h3, w2,
                     preferred_element_type=jnp.float32)
        return h + ff, kv

    x = x_ref[...].astype(jnp.float32)
    y = y_ref[...].astype(jnp.float32)
    cos_e, sin_e = cos_e_ref[...], sin_e_ref[...]
    cos_d, sin_d = cos_d_ref[...], sin_d_ref[...]

    # Encoder stack: no causal mask, cache (rotated K, V) per layer (stays in VMEM,
    # already in head layout (H*B, S_enc, hd)).
    enc_kv = []
    for l in range(n_layers):
        x, kv = coder_block(
            x, S_enc, cos_e, sin_e,
            e_an_ref[l], e_fn_ref[l], e_wqkvr_ref[l], e_wo_ref[l],
            e_w13_ref[l], e_w2_ref[l],
            past=None, causal=False)
        enc_kv.append(kv)

    # Decoder stack: causal among decoder positions, encoder K/V fully visible.
    for l in range(n_layers):
        y, _ = coder_block(
            y, S_dec, cos_d, sin_d,
            d_an_ref[l], d_fn_ref[l], d_wqkvr_ref[l], d_wo_ref[l],
            d_w13_ref[l], d_w2_ref[l],
            past=enc_kv[l], causal=True)

    o_ref[...] = y.astype(o_ref.dtype)


# ---------------------------------------------------------------------------
# Host-side preparation (weight fusion, RoPE tables) and the pallas_call wrapper.
# ---------------------------------------------------------------------------
def _pair_swap_matrix(d):
    # P such that (x @ P)[:, j] = x[:, j ^ 1]  (swap within interleaved RoPE pairs).
    idx = np.arange(d)
    return jnp.asarray(np.eye(d, dtype=np.float32)[idx ^ 1])


def _rope_tables(head_dim, n_heads, seq_len, batch, theta=ROPE_THETA):
    # Interleaved cos / signed-sin tables, tiled over heads and batch -> (B*S, D).
    freqs = 1.0 / (theta ** (np.arange(0, head_dim, 2, dtype=np.float64) / head_dim))
    ang = np.outer(np.arange(seq_len, dtype=np.float64), freqs)        # (S, hd/2)
    cos = np.repeat(np.cos(ang), 2, axis=-1)                           # c0 c0 c1 c1 ...
    sin = np.repeat(np.sin(ang), 2, axis=-1)
    sign = np.tile(np.array([-1.0, 1.0]), head_dim // 2)               # -s0 +s0 -s1 +s1 ...
    cos_full = np.tile(np.tile(cos, (1, n_heads)), (batch, 1))
    sin_full = np.tile(np.tile(sin * sign, (1, n_heads)), (batch, 1))
    return (jnp.asarray(cos_full, jnp.float32), jnp.asarray(sin_full, jnp.float32))


def _pack_stack(params_list, P):
    def cat_qkvr(p):
        return jnp.concatenate(
            [p["wq"], p["wk"], p["wv"], p["wq"] @ P, p["wk"] @ P], axis=1)   # (D, 5D)
    return dict(
        an=jnp.stack([p["attention_norm"].reshape(1, DIM) for p in params_list]),
        fn=jnp.stack([p["ffn_norm"].reshape(1, DIM) for p in params_list]),
        wqkvr=jnp.stack([cat_qkvr(p) for p in params_list]),
        wo=jnp.stack([p["wo"] for p in params_list]),
        w13=jnp.stack([jnp.concatenate([p["w1"], p["w3"]], axis=1) for p in params_list]),
        w2=jnp.stack([p["w2"] for p in params_list]),
    )


def _full_spec(shape):
    if len(shape) == 2:
        return pl.BlockSpec(shape, lambda i: (0, 0))
    if len(shape) == 3:
        return pl.BlockSpec(shape, lambda i: (0, 0, 0))
    raise ValueError(f"unexpected rank for {shape}")


def decode_model(x, y, enc_params, dec_params):
    """DecodeModel.forward: encoder stack (no mask, cache K/V) then decoder stack."""
    B, S_enc, D = x.shape
    _, S_dec, _ = y.shape
    assert D == DIM and len(enc_params) == N_LAYERS and len(dec_params) == N_LAYERS

    P = _pair_swap_matrix(D)
    enc = _pack_stack(enc_params, P)
    dec = _pack_stack(dec_params, P)
    cos_e, sin_e = _rope_tables(HEAD_DIM, N_HEADS, S_enc, B)    # pos_cis
    cos_d, sin_d = _rope_tables(HEAD_DIM, N_HEADS, S_dec, B)    # pos_cis_decoder

    inputs = (
        x.reshape(B * S_enc, D), y.reshape(B * S_dec, D),
        cos_e, sin_e, cos_d, sin_d,
        enc["an"], enc["fn"], enc["wqkvr"], enc["wo"], enc["w13"], enc["w2"],
        dec["an"], dec["fn"], dec["wqkvr"], dec["wo"], dec["w13"], dec["w2"],
    )

    kern = functools.partial(
        _decode_model_kernel,
        B=B, S_enc=S_enc, S_dec=S_dec, H=N_HEADS, hd=HEAD_DIM,
        hidden=HIDDEN_DIM, n_layers=N_LAYERS, eps=NORM_EPS)

    out = pl.pallas_call(
        kern,
        out_shape=jax.ShapeDtypeStruct((B * S_dec, D), y.dtype),
        grid=(1,),
        in_specs=[_full_spec(a.shape) for a in inputs],
        out_specs=pl.BlockSpec((B * S_dec, D), lambda i: (0, 0)),
        compiler_params=pltpu.CompilerParams(dimension_semantics=("arbitrary",)),
    )(*inputs)
    return out.reshape(B, S_dec, D)


# ---------------------------------------------------------------------------
# Pure-JAX reference (mirrors the PyTorch module) for a correctness check.
# ---------------------------------------------------------------------------
def _ref_rmsnorm(x, w, eps=NORM_EPS):
    ms = jnp.mean(x.astype(jnp.float32) ** 2, axis=-1, keepdims=True)
    return x * lax.rsqrt(ms + eps) * w


def _ref_pos_cis(head_dim, seq_len, theta=ROPE_THETA):
    freqs = 1.0 / (theta ** (jnp.arange(0, head_dim, 2, dtype=jnp.float32) / head_dim))
    ang = jnp.outer(jnp.arange(seq_len, dtype=jnp.float32), freqs)
    return jnp.cos(ang), jnp.sin(ang)


def _ref_apply_rope(x, cos, sin):
    B, S, H, hd = x.shape
    xr = x.reshape(B, S, H, hd // 2, 2)
    x0, x1 = xr[..., 0], xr[..., 1]
    c, s = cos[None, :, None, :], sin[None, :, None, :]
    return jnp.stack([x0 * c - x1 * s, x0 * s + x1 * c], axis=-1).reshape(B, S, H, hd)


def _ref_block(x, p, cos, sin, past_kv, causal):
    B, S, D = x.shape
    H, hd = N_HEADS, HEAD_DIM
    hn = _ref_rmsnorm(x, p["attention_norm"])
    q = _ref_apply_rope((hn @ p["wq"]).reshape(B, S, H, hd), cos, sin)
    k = _ref_apply_rope((hn @ p["wk"]).reshape(B, S, H, hd), cos, sin)
    v = (hn @ p["wv"]).reshape(B, S, H, hd)
    if past_kv is not None:
        k_all = jnp.concatenate([past_kv[0], k], axis=1)
        v_all = jnp.concatenate([past_kv[1], v], axis=1)
    else:
        k_all, v_all = k, v
    Sk = k_all.shape[1]
    scores = jnp.einsum("bqhd,bkhd->bhqk", q, k_all) / math.sqrt(hd)
    if causal:
        row = jnp.arange(S)[:, None]
        col = jnp.arange(Sk)[None, :]
        scores = jnp.where(col <= row + (Sk - S), scores, -1e30)
    probs = jax.nn.softmax(scores, axis=-1)
    attn = jnp.einsum("bhqk,bkhd->bqhd", probs, v_all).reshape(B, S, D)
    h = x + attn @ p["wo"]
    hn2 = _ref_rmsnorm(h, p["ffn_norm"])
    h1 = hn2 @ p["w1"]
    ff = (h1 * jax.nn.sigmoid(h1) * (hn2 @ p["w3"])) @ p["w2"]
    return h + ff, (k, v)


def _ref_decode_model(x, y, enc_params, dec_params):
    _, S_enc, _ = x.shape
    _, S_dec, _ = y.shape
    cos_e, sin_e = _ref_pos_cis(HEAD_DIM, S_enc)
    cos_d, sin_d = _ref_pos_cis(HEAD_DIM, S_dec)
    all_kv = []
    for p in enc_params:
        x, kv = _ref_block(x, p, cos_e, sin_e, None, causal=False)
        all_kv.append(kv)
    for p, kv in zip(dec_params, all_kv):
        y, _ = _ref_block(y, p, cos_d, sin_d, kv, causal=True)
    return y


# ---------------------------------------------------------------------------
def init_block_params(key):
    keys = jax.random.split(key, 7)
    std = 0.02

    def w(k, shp):
        return (std * jax.random.normal(k, shp)).astype(jnp.float32)

    return {
        "attention_norm": jnp.ones((DIM,), jnp.float32),
        "ffn_norm": jnp.ones((DIM,), jnp.float32),
        "wq": w(keys[0], (DIM, DIM)),
        "wk": w(keys[1], (DIM, DIM)),
        "wv": w(keys[2], (DIM, DIM)),
        "wo": w(keys[3], (DIM, DIM)),
        "w1": w(keys[4], (DIM, HIDDEN_DIM)),
        "w3": w(keys[5], (DIM, HIDDEN_DIM)),
        "w2": w(keys[6], (HIDDEN_DIM, DIM)),
    }


if __name__ == "__main__":
    key = jax.random.PRNGKey(0)
    B, S_ENC, S_DEC = 2, 8, 8
    k1, k2, k3 = jax.random.split(key, 3)
    x = jax.random.normal(k1, (B, S_ENC, DIM), jnp.float32)   # encoder input
    y = jax.random.normal(k2, (B, S_DEC, DIM), jnp.float32)   # decoder input
    pkeys = jax.random.split(k3, 2 * N_LAYERS)
    enc_params = [init_block_params(pkeys[i]) for i in range(N_LAYERS)]
    dec_params = [init_block_params(pkeys[N_LAYERS + i]) for i in range(N_LAYERS)]

    out = decode_model(x, y, enc_params, dec_params)
    out = jax.block_until_ready(out)
    assert out.shape == (B, S_DEC, DIM) and out.dtype == jnp.float32

    ref = jax.block_until_ready(_ref_decode_model(x, y, enc_params, dec_params))
    np.testing.assert_allclose(np.asarray(out), np.asarray(ref), rtol=2e-2, atol=2e-2)
    print("KERNEL_OK")
</pallas_src>

<mosaic_0001>
module attributes {stable_mosaic.version = 11 : i64} {
  func.func @_decode_model_kernel(%arg0: i32, %arg1: memref<16x32xf32, #tpu.memory_space<vmem>>, %arg2: memref<16x32xf32, #tpu.memory_space<vmem>>, %arg3: memref<16x32xf32, #tpu.memory_space<vmem>>, %arg4: memref<16x32xf32, #tpu.memory_space<vmem>>, %arg5: memref<16x32xf32, #tpu.memory_space<vmem>>, %arg6: memref<16x32xf32, #tpu.memory_space<vmem>>, %arg7: memref<2x1x32xf32, #tpu.memory_space<vmem>>, %arg8: memref<2x1x32xf32, #tpu.memory_space<vmem>>, %arg9: memref<2x32x160xf32, #tpu.memory_space<vmem>>, %arg10: memref<2x32x32xf32, #tpu.memory_space<vmem>>, %arg11: memref<2x32x128xf32, #tpu.memory_space<vmem>>, %arg12: memref<2x64x32xf32, #tpu.memory_space<vmem>>, %arg13: memref<2x1x32xf32, #tpu.memory_space<vmem>>, %arg14: memref<2x1x32xf32, #tpu.memory_space<vmem>>, %arg15: memref<2x32x160xf32, #tpu.memory_space<vmem>>, %arg16: memref<2x32x32xf32, #tpu.memory_space<vmem>>, %arg17: memref<2x32x128xf32, #tpu.memory_space<vmem>>, %arg18: memref<2x64x32xf32, #tpu.memory_space<vmem>>, %arg19: memref<16x32xf32, #tpu.memory_space<vmem>>) attributes {dimension_semantics = [#tpu.dimension_semantics<arbitrary>], iteration_bounds = array<i64: 1>, scalar_prefetch = 0 : i64, scratch_operands = 0 : i64, tpu.core_type = #tpu.core_type<tc>, window_params = [{pipeline_mode = #tpu.pipeline_mode<synchronous>, transform_indices = @transform_0, window_bounds = array<i64: 16, 32>}, {pipeline_mode = #tpu.pipeline_mode<synchronous>, transform_indices = @transform_1, window_bounds = array<i64: 16, 32>}, {pipeline_mode = #tpu.pipeline_mode<synchronous>, transform_indices = @transform_2, window_bounds = array<i64: 16, 32>}, {pipeline_mode = #tpu.pipeline_mode<synchronous>, transform_indices = @transform_3, window_bounds = array<i64: 16, 32>}, {pipeline_mode = #tpu.pipeline_mode<synchronous>, transform_indices = @transform_4, window_bounds = array<i64: 16, 32>}, {pipeline_mode = #tpu.pipeline_mode<synchronous>, transform_indices = @transform_5, window_bounds = array<i64: 16, 32>}, {pipeline_mode = #tpu.pipeline_mode<synchronous>, transform_indices = @transform_6, window_bounds = array<i64: 2, 1, 32>}, {pipeline_mode = #tpu.pipeline_mode<synchronous>, transform_indices = @transform_7, window_bounds = array<i64: 2, 1, 32>}, {pipeline_mode = #tpu.pipeline_mode<synchronous>, transform_indices = @transform_8, window_bounds = array<i64: 2, 32, 160>}, {pipeline_mode = #tpu.pipeline_mode<synchronous>, transform_indices = @transform_9, window_bounds = array<i64: 2, 32, 32>}, {pipeline_mode = #tpu.pipeline_mode<synchronous>, transform_indices = @transform_10, window_bounds = array<i64: 2, 32, 128>}, {pipeline_mode = #tpu.pipeline_mode<synchronous>, transform_indices = @transform_11, window_bounds = array<i64: 2, 64, 32>}, {pipeline_mode = #tpu.pipeline_mode<synchronous>, transform_indices = @transform_12, window_bounds = array<i64: 2, 1, 32>}, {pipeline_mode = #tpu.pipeline_mode<synchronous>, transform_indices = @transform_13, window_bounds = array<i64: 2, 1, 32>}, {pipeline_mode = #tpu.pipeline_mode<synchronous>, transform_indices = @transform_14, window_bounds = array<i64: 2, 32, 160>}, {pipeline_mode = #tpu.pipeline_mode<synchronous>, transform_indices = @transform_15, window_bounds = array<i64: 2, 32, 32>}, {pipeline_mode = #tpu.pipeline_mode<synchronous>, transform_indices = @transform_16, window_bounds = array<i64: 2, 32, 128>}, {pipeline_mode = #tpu.pipeline_mode<synchronous>, transform_indices = @transform_17, window_bounds = array<i64: 2, 64, 32>}, {pipeline_mode = #tpu.pipeline_mode<synchronous>, transform_indices = @transform_18, window_bounds = array<i64: 16, 32>}]} {
    %c0 = arith.constant 0 : index
    %c0_0 = arith.constant 0 : index
    %0 = vector.load %arg1[%c0, %c0_0] : memref<16x32xf32, #tpu.memory_space<vmem>>, vector<16x32xf32>
    %c0_1 = arith.constant 0 : index
    %c0_2 = arith.constant 0 : index
    %1 = vector.load %arg2[%c0_1, %c0_2] : memref<16x32xf32, #tpu.memory_space<vmem>>, vector<16x32xf32>
    %c0_3 = arith.constant 0 : index
    %c0_4 = arith.constant 0 : index
    %2 = vector.load %arg3[%c0_3, %c0_4] : memref<16x32xf32, #tpu.memory_space<vmem>>, vector<16x32xf32>
    %c0_5 = arith.constant 0 : index
    %c0_6 = arith.constant 0 : index
    %3 = vector.load %arg4[%c0_5, %c0_6] : memref<16x32xf32, #tpu.memory_space<vmem>>, vector<16x32xf32>
    %c0_7 = arith.constant 0 : index
    %c0_8 = arith.constant 0 : index
    %4 = vector.load %arg5[%c0_7, %c0_8] : memref<16x32xf32, #tpu.memory_space<vmem>>, vector<16x32xf32>
    %c0_9 = arith.constant 0 : index
    %c0_10 = arith.constant 0 : index
    %5 = vector.load %arg6[%c0_9, %c0_10] : memref<16x32xf32, #tpu.memory_space<vmem>>, vector<16x32xf32>
    %c0_11 = arith.constant 0 : index
    %c0_12 = arith.constant 0 : index
    %c0_13 = arith.constant 0 : index
    %6 = vector.load %arg7[%c0_11, %c0_12, %c0_13] : memref<2x1x32xf32, #tpu.memory_space<vmem>>, vector<1x1x32xf32>
    %7 = vector.shape_cast %6 : vector<1x1x32xf32> to vector<1x32xf32>
    %c0_14 = arith.constant 0 : index
    %c0_15 = arith.constant 0 : index
    %c0_16 = arith.constant 0 : index
    %8 = vector.load %arg8[%c0_14, %c0_15, %c0_16] : memref<2x1x32xf32, #tpu.memory_space<vmem>>, vector<1x1x32xf32>
    %9 = vector.shape_cast %8 : vector<1x1x32xf32> to vector<1x32xf32>
    %c0_17 = arith.constant 0 : index
    %c0_18 = arith.constant 0 : index
    %c0_19 = arith.constant 0 : index
    %10 = vector.load %arg9[%c0_17, %c0_18, %c0_19] : memref<2x32x160xf32, #tpu.memory_space<vmem>>, vector<1x32x160xf32>
    %11 = vector.shape_cast %10 : vector<1x32x160xf32> to vector<32x160xf32>
    %c0_20 = arith.constant 0 : index
    %c0_21 = arith.constant 0 : index
    %c0_22 = arith.constant 0 : index
    %12 = vector.load %arg10[%c0_20, %c0_21, %c0_22] : memref<2x32x32xf32, #tpu.memory_space<vmem>>, vector<1x32x32xf32>
    %13 = vector.shape_cast %12 : vector<1x32x32xf32> to vector<32x32xf32>
    %c0_23 = arith.constant 0 : index
    %c0_24 = arith.constant 0 : index
    %c0_25 = arith.constant 0 : index
    %14 = vector.load %arg11[%c0_23, %c0_24, %c0_25] : memref<2x32x128xf32, #tpu.memory_space<vmem>>, vector<1x32x128xf32>
    %15 = vector.shape_cast %14 : vector<1x32x128xf32> to vector<32x128xf32>
    %c0_26 = arith.constant 0 : index
    %c0_27 = arith.constant 0 : index
    %c0_28 = arith.constant 0 : index
    %16 = vector.load %arg12[%c0_26, %c0_27, %c0_28] : memref<2x64x32xf32, #tpu.memory_space<vmem>>, vector<1x64x32xf32>
    %17 = vector.shape_cast %16 : vector<1x64x32xf32> to vector<64x32xf32>
    %18 = arith.mulf %0, %0 : vector<16x32xf32>
    %cst = arith.constant dense<0.000000e+00> : vector<16xf32>
    %19 = vector.multi_reduction <add>, %18, %cst [1] : vector<16x32xf32> to vector<16xf32>
    %20 = vector.shape_cast %19 : vector<16xf32> to vector<16x1xf32>
    %cst_29 = arith.constant 3.200000e+01 : f32
    %21 = vector.broadcast %cst_29 : f32 to vector<16x1xf32>
    %22 = arith.divf %20, %21 : vector<16x1xf32>
    %cst_30 = arith.constant 9.99999974E-6 : f32
    %23 = vector.broadcast %cst_30 : f32 to vector<16x1xf32>
    %24 = arith.addf %22, %23 : vector<16x1xf32>
    %25 = math.rsqrt %24 : vector<16x1xf32>
    %26 = vector.broadcast %25 : vector<16x1xf32> to vector<16x32xf32>
    %27 = arith.mulf %0, %26 : vector<16x32xf32>
    %28 = vector.broadcast %7 : vector<1x32xf32> to vector<16x32xf32>
    %29 = arith.mulf %27, %28 : vector<16x32xf32>
    %cst_31 = arith.constant dense<0.000000e+00> : vector<16x160xf32>
    %30 = tpu.matmul %29, %11, %cst_31 {dimension_numbers = #tpu.dot_dimension_numbers<[1], [0], [0], [1], [0, 0, 1, 1], [], []>} : vector<16x32xf32>, vector<32x160xf32>, vector<16x160xf32> -> vector<16x160xf32>
    %31 = vector.extract_strided_slice %30 {offsets = [0, 0], sizes = [16, 32], strides = [1, 1]} : vector<16x160xf32> to vector<16x32xf32>
    %32 = vector.extract_strided_slice %30 {offsets = [0, 32], sizes = [16, 32], strides = [1, 1]} : vector<16x160xf32> to vector<16x32xf32>
    %33 = vector.extract_strided_slice %30 {offsets = [0, 64], sizes = [16, 32], strides = [1, 1]} : vector<16x160xf32> to vector<16x32xf32>
    %34 = vector.extract_strided_slice %30 {offsets = [0, 96], sizes = [16, 32], strides = [1, 1]} : vector<16x160xf32> to vector<16x32xf32>
    %35 = vector.extract_strided_slice %30 {offsets = [0, 128], sizes = [16, 32], strides = [1, 1]} : vector<16x160xf32> to vector<16x32xf32>
    %36 = arith.mulf %31, %2 : vector<16x32xf32>
    %37 = arith.mulf %34, %3 : vector<16x32xf32>
    %38 = arith.addf %36, %37 : vector<16x32xf32>
    %39 = arith.mulf %32, %2 : vector<16x32xf32>
    %40 = arith.mulf %35, %3 : vector<16x32xf32>
    %41 = arith.addf %39, %40 : vector<16x32xf32>
    %42 = vector.shape_cast %38 : vector<16x32xf32> to vector<2x8x32xf32>
    %43 = vector.extract_strided_slice %42 {offsets = [0, 0, 0], sizes = [2, 8, 8], strides = [1, 1, 1]} : vector<2x8x32xf32> to vector<2x8x8xf32>
    %44 = vector.extract_strided_slice %42 {offsets = [0, 0, 8], sizes = [2, 8, 8], strides = [1, 1, 1]} : vector<2x8x32xf32> to vector<2x8x8xf32>
    %45 = vector.extract_strided_slice %42 {offsets = [0, 0, 16], sizes = [2, 8, 8], strides = [1, 1, 1]} : vector<2x8x32xf32> to vector<2x8x8xf32>
    %46 = vector.extract_strided_slice %42 {offsets = [0, 0, 24], sizes = [2, 8, 8], strides = [1, 1, 1]} : vector<2x8x32xf32> to vector<2x8x8xf32>
    %47 = tpu.concatenate %43, %44, %45, %46 in 0 : vector<2x8x8xf32>, vector<2x8x8xf32>, vector<2x8x8xf32>, vector<2x8x8xf32> -> vector<8x8x8xf32>
    %48 = vector.shape_cast %41 : vector<16x32xf32> to vector<2x8x32xf32>
    %49 = vector.extract_strided_slice %48 {offsets = [0, 0, 0], sizes = [2, 8, 8], strides = [1, 1, 1]} : vector<2x8x32xf32> to vector<2x8x8xf32>
    %50 = vector.extract_strided_slice %48 {offsets = [0, 0, 8], sizes = [2, 8, 8], strides = [1, 1, 1]} : vector<2x8x32xf32> to vector<2x8x8xf32>
    %51 = vector.extract_strided_slice %48 {offsets = [0, 0, 16], sizes = [2, 8, 8], strides = [1, 1, 1]} : vector<2x8x32xf32> to vector<2x8x8xf32>
    %52 = vector.extract_strided_slice %48 {offsets = [0, 0, 24], sizes = [2, 8, 8], strides = [1, 1, 1]} : vector<2x8x32xf32> to vector<2x8x8xf32>
    %53 = tpu.concatenate %49, %50, %51, %52 in 0 : vector<2x8x8xf32>, vector<2x8x8xf32>, vector<2x8x8xf32>, vector<2x8x8xf32> -> vector<8x8x8xf32>
    %54 = vector.shape_cast %33 : vector<16x32xf32> to vector<2x8x32xf32>
    %55 = vector.extract_strided_slice %54 {offsets = [0, 0, 0], sizes = [2, 8, 8], strides = [1, 1, 1]} : vector<2x8x32xf32> to vector<2x8x8xf32>
    %56 = vector.extract_strided_slice %54 {offsets = [0, 0, 8], sizes = [2, 8, 8], strides = [1, 1, 1]} : vector<2x8x32xf32> to vector<2x8x8xf32>
    %57 = vector.extract_strided_slice %54 {offsets = [0, 0, 16], sizes = [2, 8, 8], strides = [1, 1, 1]} : vector<2x8x32xf32> to vector<2x8x8xf32>
    %58 = vector.extract_strided_slice %54 {offsets = [0, 0, 24], sizes = [2, 8, 8], strides = [1, 1, 1]} : vector<2x8x32xf32> to vector<2x8x8xf32>
    %59 = tpu.concatenate %55, %56, %57, %58 in 0 : vector<2x8x8xf32>, vector<2x8x8xf32>, vector<2x8x8xf32>, vector<2x8x8xf32> -> vector<8x8x8xf32>
    "tpu.trace_start"() <{level = 10 : i32, message = "bqd,bkd->bqk"}> : () -> ()
    %cst_32 = arith.constant dense<0.000000e+00> : vector<8x8x8xf32>
    %60 = tpu.matmul %47, %53, %cst_32 {dimension_numbers = #tpu.dot_dimension_numbers<[2], [2], [1], [1], [0, 0, 0, 1, 1, 1], [0], [0]>} : vector<8x8x8xf32>, vector<8x8x8xf32>, vector<8x8x8xf32> -> vector<8x8x8xf32>
    "tpu.trace_stop"() : () -> ()
    %cst_33 = arith.constant 0.353553385 : f32
    %61 = vector.broadcast %cst_33 : f32 to vector<8x8x8xf32>
    %62 = arith.mulf %60, %61 : vector<8x8x8xf32>
    %cst_34 = arith.constant dense<0xFF800000> : vector<8x8xf32>
    %63 = vector.multi_reduction <maximumf>, %62, %cst_34 [2] : vector<8x8x8xf32> to vector<8x8xf32>
    %64 = vector.shape_cast %63 : vector<8x8xf32> to vector<8x8x1xf32>
    %65 = vector.broadcast %64 : vector<8x8x1xf32> to vector<8x8x8xf32>
    %66 = arith.subf %62, %65 : vector<8x8x8xf32>
    %67 = math.exp %66 : vector<8x8x8xf32>
    %cst_35 = arith.constant dense<0.000000e+00> : vector<8x8xf32>
    %68 = vector.multi_reduction <add>, %67, %cst_35 [2] : vector<8x8x8xf32> to vector<8x8xf32>
    %69 = vector.shape_cast %68 : vector<8x8xf32> to vector<8x8x1xf32>
    %70 = tpu.reciprocal %69 {approx = true} : vector<8x8x1xf32> -> vector<8x8x1xf32>
    "tpu.trace_start"() <{level = 10 : i32, message = "bqk,bkd->bqd"}> : () -> ()
    %cst_36 = arith.constant dense<0.000000e+00> : vector<8x8x8xf32>
    %71 = tpu.matmul %67, %59, %cst_36 {dimension_numbers = #tpu.dot_dimension_numbers<[2], [1], [1], [2], [0, 0, 0, 1, 1, 2], [0], [0]>} : vector<8x8x8xf32>, vector<8x8x8xf32>, vector<8x8x8xf32> -> vector<8x8x8xf32>
    "tpu.trace_stop"() : () -> ()
    %72 = vector.broadcast %70 : vector<8x8x1xf32> to vector<8x8x8xf32>
    %73 = arith.mulf %71, %72 : vector<8x8x8xf32>
    %74 = vector.extract_strided_slice %73 {offsets = [0, 0, 0], sizes = [2, 8, 8], strides = [1, 1, 1]} : vector<8x8x8xf32> to vector<2x8x8xf32>
    %75 = vector.extract_strided_slice %73 {offsets = [2, 0, 0], sizes = [2, 8, 8], strides = [1, 1, 1]} : vector<8x8x8xf32> to vector<2x8x8xf32>
    %76 = vector.extract_strided_slice %73 {offsets = [4, 0, 0], sizes = [2, 8, 8], strides = [1, 1, 1]} : vector<8x8x8xf32> to vector<2x8x8xf32>
    %77 = vector.extract_strided_slice %73 {offsets = [6, 0, 0], sizes = [2, 8, 8], strides = [1, 1, 1]} : vector<8x8x8xf32> to vector<2x8x8xf32>
    %78 = tpu.concatenate %74, %75, %76, %77 in 2 : vector<2x8x8xf32>, vector<2x8x8xf32>, vector<2x8x8xf32>, vector<2x8x8xf32> -> vector<2x8x32xf32>
    %79 = vector.shape_cast %78 : vector<2x8x32xf32> to vector<16x32xf32>
    %cst_37 = arith.constant dense<0.000000e+00> : vector<16x32xf32>
    %80 = tpu.matmul %79, %13, %cst_37 {dimension_numbers = #tpu.dot_dimension_numbers<[1], [0], [0], [1], [0, 0, 1, 1], [], []>} : vector<16x32xf32>, vector<32x32xf32>, vector<16x32xf32> -> vector<16x32xf32>
    %81 = arith.addf %0, %80 : vector<16x32xf32>
    %82 = arith.mulf %81, %81 : vector<16x32xf32>
    %cst_38 = arith.constant dense<0.000000e+00> : vector<16xf32>
    %83 = vector.multi_reduction <add>, %82, %cst_38 [1] : vector<16x32xf32> to vector<16xf32>
    %84 = vector.shape_cast %83 : vector<16xf32> to vector<16x1xf32>
    %cst_39 = arith.constant 3.200000e+01 : f32
    %85 = vector.broadcast %cst_39 : f32 to vector<16x1xf32>
    %86 = arith.divf %84, %85 : vector<16x1xf32>
    %cst_40 = arith.constant 9.99999974E-6 : f32
    %87 = vector.broadcast %cst_40 : f32 to vector<16x1xf32>
    %88 = arith.addf %86, %87 : vector<16x1xf32>
    %89 = math.rsqrt %88 : vector<16x1xf32>
    %90 = vector.broadcast %89 : vector<16x1xf32> to vector<16x32xf32>
    %91 = arith.mulf %81, %90 : vector<16x32xf32>
    %92 = vector.broadcast %9 : vector<1x32xf32> to vector<16x32xf32>
    %93 = arith.mulf %91, %92 : vector<16x32xf32>
    %cst_41 = arith.constant dense<0.000000e+00> : vector<16x128xf32>
    %94 = tpu.matmul %93, %15, %cst_41 {dimension_numbers = #tpu.dot_dimension_numbers<[1], [0], [0], [1], [0, 0, 1, 1], [], []>} : vector<16x32xf32>, vector<32x128xf32>, vector<16x128xf32> -> vector<16x128xf32>
    %95 = vector.extract_strided_slice %94 {offsets = [0, 0], sizes = [16, 64], strides = [1, 1]} : vector<16x128xf32> to vector<16x64xf32>
    %96 = vector.extract_strided_slice %94 {offsets = [0, 64], sizes = [16, 64], strides = [1, 1]} : vector<16x128xf32> to vector<16x64xf32>
    %97 = arith.negf %95 : vector<16x64xf32>
    %98 = math.exp %97 : vector<16x64xf32>
    %cst_42 = arith.constant 1.000000e+00 : f32
    %99 = vector.broadcast %cst_42 : f32 to vector<16x64xf32>
    %100 = arith.addf %99, %98 : vector<16x64xf32>
    %101 = arith.divf %99, %100 : vector<16x64xf32>
    %102 = arith.mulf %95, %101 : vector<16x64xf32>
    %103 = arith.mulf %102, %96 : vector<16x64xf32>
    %cst_43 = arith.constant dense<0.000000e+00> : vector<16x32xf32>
    %104 = tpu.matmul %103, %17, %cst_43 {dimension_numbers = #tpu.dot_dimension_numbers<[1], [0], [0], [1], [0, 0, 1, 1], [], []>} : vector<16x64xf32>, vector<64x32xf32>, vector<16x32xf32> -> vector<16x32xf32>
    %105 = arith.addf %81, %104 : vector<16x32xf32>
    %c1 = arith.constant 1 : index
    %c0_44 = arith.constant 0 : index
    %c0_45 = arith.constant 0 : index
    %106 = vector.load %arg7[%c1, %c0_44, %c0_45] : memref<2x1x32xf32, #tpu.memory_space<vmem>>, vector<1x1x32xf32>
    %107 = vector.shape_cast %106 : vector<1x1x32xf32> to vector<1x32xf32>
    %c1_46 = arith.constant 1 : index
    %c0_47 = arith.constant 0 : index
    %c0_48 = arith.constant 0 : index
    %108 = vector.load %arg9[%c1_46, %c0_47, %c0_48] : memref<2x32x160xf32, #tpu.memory_space<vmem>>, vector<1x32x160xf32>
    %109 = vector.shape_cast %108 : vector<1x32x160xf32> to vector<32x160xf32>
    %110 = arith.mulf %105, %105 : vector<16x32xf32>
    %cst_49 = arith.constant dense<0.000000e+00> : vector<16xf32>
    %111 = vector.multi_reduction <add>, %110, %cst_49 [1] : vector<16x32xf32> to vector<16xf32>
    %112 = vector.shape_cast %111 : vector<16xf32> to vector<16x1xf32>
    %cst_50 = arith.constant 3.200000e+01 : f32
    %113 = vector.broadcast %cst_50 : f32 to vector<16x1xf32>
    %114 = arith.divf %112, %113 : vector<16x1xf32>
    %cst_51 = arith.constant 9.99999974E-6 : f32
    %115 = vector.broadcast %cst_51 : f32 to vector<16x1xf32>
    %116 = arith.addf %114, %115 : vector<16x1xf32>
    %117 = math.rsqrt %116 : vector<16x1xf32>
    %118 = vector.broadcast %117 : vector<16x1xf32> to vector<16x32xf32>
    %119 = arith.mulf %105, %118 : vector<16x32xf32>
    %120 = vector.broadcast %107 : vector<1x32xf32> to vector<16x32xf32>
    %121 = arith.mulf %119, %120 : vector<16x32xf32>
    %cst_52 = arith.constant dense<0.000000e+00> : vector<16x160xf32>
    %122 = tpu.matmul %121, %109, %cst_52 {dimension_numbers = #tpu.dot_dimension_numbers<[1], [0], [0], [1], [0, 0, 1, 1], [], []>} : vector<16x32xf32>, vector<32x160xf32>, vector<16x160xf32> -> vector<16x160xf32>
    %123 = vector.extract_strided_slice %122 {offsets = [0, 32], sizes = [16, 32], strides = [1, 1]} : vector<16x160xf32> to vector<16x32xf32>
    %124 = vector.extract_strided_slice %122 {offsets = [0, 64], sizes = [16, 32], strides = [1, 1]} : vector<16x160xf32> to vector<16x32xf32>
    %125 = vector.extract_strided_slice %122 {offsets = [0, 128], sizes = [16, 32], strides = [1, 1]} : vector<16x160xf32> to vector<16x32xf32>
    %126 = arith.mulf %123, %2 : vector<16x32xf32>
    %127 = arith.mulf %125, %3 : vector<16x32xf32>
    %128 = arith.addf %126, %127 : vector<16x32xf32>
    %129 = vector.shape_cast %128 : vector<16x32xf32> to vector<2x8x32xf32>
    %130 = vector.extract_strided_slice %129 {offsets = [0, 0, 0], sizes = [2, 8, 8], strides = [1, 1, 1]} : vector<2x8x32xf32> to vector<2x8x8xf32>
    %131 = vector.extract_strided_slice %129 {offsets = [0, 0, 8], sizes = [2, 8, 8], strides = [1, 1, 1]} : vector<2x8x32xf32> to vector<2x8x8xf32>
    %132 = vector.extract_strided_slice %129 {offsets = [0, 0, 16], sizes = [2, 8, 8], strides = [1, 1, 1]} : vector<2x8x32xf32> to vector<2x8x8xf32>
    %133 = vector.extract_strided_slice %129 {offsets = [0, 0, 24], sizes = [2, 8, 8], strides = [1, 1, 1]} : vector<2x8x32xf32> to vector<2x8x8xf32>
    %134 = tpu.concatenate %130, %131, %132, %133 in 0 : vector<2x8x8xf32>, vector<2x8x8xf32>, vector<2x8x8xf32>, vector<2x8x8xf32> -> vector<8x8x8xf32>
    %135 = vector.shape_cast %124 : vector<16x32xf32> to vector<2x8x32xf32>
    %136 = vector.extract_strided_slice %135 {offsets = [0, 0, 0], sizes = [2, 8, 8], strides = [1, 1, 1]} : vector<2x8x32xf32> to vector<2x8x8xf32>
    %137 = vector.extract_strided_slice %135 {offsets = [0, 0, 8], sizes = [2, 8, 8], strides = [1, 1, 1]} : vector<2x8x32xf32> to vector<2x8x8xf32>
    %138 = vector.extract_strided_slice %135 {offsets = [0, 0, 16], sizes = [2, 8, 8], strides = [1, 1, 1]} : vector<2x8x32xf32> to vector<2x8x8xf32>
    %139 = vector.extract_strided_slice %135 {offsets = [0, 0, 24], sizes = [2, 8, 8], strides = [1, 1, 1]} : vector<2x8x32xf32> to vector<2x8x8xf32>
    %140 = tpu.concatenate %136, %137, %138, %139 in 0 : vector<2x8x8xf32>, vector<2x8x8xf32>, vector<2x8x8xf32>, vector<2x8x8xf32> -> vector<8x8x8xf32>
    %c0_53 = arith.constant 0 : index
    %c0_54 = arith.constant 0 : index
    %c0_55 = arith.constant 0 : index
    %141 = vector.load %arg13[%c0_53, %c0_54, %c0_55] : memref<2x1x32xf32, #tpu.memory_space<vmem>>, vector<1x1x32xf32>
    %142 = vector.shape_cast %141 : vector<1x1x32xf32> to vector<1x32xf32>
    %c0_56 = arith.constant 0 : index
    %c0_57 = arith.constant 0 : index
    %c0_58 = arith.constant 0 : index
    %143 = vector.load %arg14[%c0_56, %c0_57, %c0_58] : memref<2x1x32xf32, #tpu.memory_space<vmem>>, vector<1x1x32xf32>
    %144 = vector.shape_cast %143 : vector<1x1x32xf32> to vector<1x32xf32>
    %c0_59 = arith.constant 0 : index
    %c0_60 = arith.constant 0 : index
    %c0_61 = arith.constant 0 : index
    %145 = vector.load %arg15[%c0_59, %c0_60, %c0_61] : memref<2x32x160xf32, #tpu.memory_space<vmem>>, vector<1x32x160xf32>
    %146 = vector.shape_cast %145 : vector<1x32x160xf32> to vector<32x160xf32>
    %c0_62 = arith.constant 0 : index
    %c0_63 = arith.constant 0 : index
    %c0_64 = arith.constant 0 : index
    %147 = vector.load %arg16[%c0_62, %c0_63, %c0_64] : memref<2x32x32xf32, #tpu.memory_space<vmem>>, vector<1x32x32xf32>
    %148 = vector.shape_cast %147 : vector<1x32x32xf32> to vector<32x32xf32>
    %c0_65 = arith.constant 0 : index
    %c0_66 = arith.constant 0 : index
    %c0_67 = arith.constant 0 : index
    %149 = vector.load %arg17[%c0_65, %c0_66, %c0_67] : memref<2x32x128xf32, #tpu.memory_space<vmem>>, vector<1x32x128xf32>
    %150 = vector.shape_cast %149 : vector<1x32x128xf32> to vector<32x128xf32>
    %c0_68 = arith.constant 0 : index
    %c0_69 = arith.constant 0 : index
    %c0_70 = arith.constant 0 : index
    %151 = vector.load %arg18[%c0_68, %c0_69, %c0_70] : memref<2x64x32xf32, #tpu.memory_space<vmem>>, vector<1x64x32xf32>
    %152 = vector.shape_cast %151 : vector<1x64x32xf32> to vector<64x32xf32>
    %153 = arith.mulf %1, %1 : vector<16x32xf32>
    %cst_71 = arith.constant dense<0.000000e+00> : vector<16xf32>
    %154 = vector.multi_reduction <add>, %153, %cst_71 [1] : vector<16x32xf32> to vector<16xf32>
    %155 = vector.shape_cast %154 : vector<16xf32> to vector<16x1xf32>
    %cst_72 = arith.constant 3.200000e+01 : f32
    %156 = vector.broadcast %cst_72 : f32 to vector<16x1xf32>
    %157 = arith.divf %155, %156 : vector<16x1xf32>
    %cst_73 = arith.constant 9.99999974E-6 : f32
    %158 = vector.broadcast %cst_73 : f32 to vector<16x1xf32>
    %159 = arith.addf %157, %158 : vector<16x1xf32>
    %160 = math.rsqrt %159 : vector<16x1xf32>
    %161 = vector.broadcast %160 : vector<16x1xf32> to vector<16x32xf32>
    %162 = arith.mulf %1, %161 : vector<16x32xf32>
    %163 = vector.broadcast %142 : vector<1x32xf32> to vector<16x32xf32>
    %164 = arith.mulf %162, %163 : vector<16x32xf32>
    %cst_74 = arith.constant dense<0.000000e+00> : vector<16x160xf32>
    %165 = tpu.matmul %164, %146, %cst_74 {dimension_numbers = #tpu.dot_dimension_numbers<[1], [0], [0], [1], [0, 0, 1, 1], [], []>} : vector<16x32xf32>, vector<32x160xf32>, vector<16x160xf32> -> vector<16x160xf32>
    %166 = vector.extract_strided_slice %165 {offsets = [0, 0], sizes = [16, 32], strides = [1, 1]} : vector<16x160xf32> to vector<16x32xf32>
    %167 = vector.extract_strided_slice %165 {offsets = [0, 32], sizes = [16, 32], strides = [1, 1]} : vector<16x160xf32> to vector<16x32xf32>
    %168 = vector.extract_strided_slice %165 {offsets = [0, 64], sizes = [16, 32], strides = [1, 1]} : vector<16x160xf32> to vector<16x32xf32>
    %169 = vector.extract_strided_slice %165 {offsets = [0, 96], sizes = [16, 32], strides = [1, 1]} : vector<16x160xf32> to vector<16x32xf32>
    %170 = vector.extract_strided_slice %165 {offsets = [0, 128], sizes = [16, 32], strides = [1, 1]} : vector<16x160xf32> to vector<16x32xf32>
    %171 = arith.mulf %166, %4 : vector<16x32xf32>
    %172 = arith.mulf %169, %5 : vector<16x32xf32>
    %173 = arith.addf %171, %172 : vector<16x32xf32>
    %174 = arith.mulf %167, %4 : vector<16x32xf32>
    %175 = arith.mulf %170, %5 : vector<16x32xf32>
    %176 = arith.addf %174, %175 : vector<16x32xf32>
    %177 = vector.shape_cast %173 : vector<16x32xf32> to vector<2x8x32xf32>
    %178 = vector.extract_strided_slice %177 {offsets = [0, 0, 0], sizes = [2, 8, 8], strides = [1, 1, 1]} : vector<2x8x32xf32> to vector<2x8x8xf32>
    %179 = vector.extract_strided_slice %177 {offsets = [0, 0, 8], sizes = [2, 8, 8], strides = [1, 1, 1]} : vector<2x8x32xf32> to vector<2x8x8xf32>
    %180 = vector.extract_strided_slice %177 {offsets = [0, 0, 16], sizes = [2, 8, 8], strides = [1, 1, 1]} : vector<2x8x32xf32> to vector<2x8x8xf32>
    %181 = vector.extract_strided_slice %177 {offsets = [0, 0, 24], sizes = [2, 8, 8], strides = [1, 1, 1]} : vector<2x8x32xf32> to vector<2x8x8xf32>
    %182 = tpu.concatenate %178, %179, %180, %181 in 0 : vector<2x8x8xf32>, vector<2x8x8xf32>, vector<2x8x8xf32>, vector<2x8x8xf32> -> vector<8x8x8xf32>
    %183 = vector.shape_cast %176 : vector<16x32xf32> to vector<2x8x32xf32>
    %184 = vector.extract_strided_slice %183 {offsets = [0, 0, 0], sizes = [2, 8, 8], strides = [1, 1, 1]} : vector<2x8x32xf32> to vector<2x8x8xf32>
    %185 = vector.extract_strided_slice %183 {offsets = [0, 0, 8], sizes = [2, 8, 8], strides = [1, 1, 1]} : vector<2x8x32xf32> to vector<2x8x8xf32>
    %186 = vector.extract_strided_slice %183 {offsets = [0, 0, 16], sizes = [2, 8, 8], strides = [1, 1, 1]} : vector<2x8x32xf32> to vector<2x8x8xf32>
    %187 = vector.extract_strided_slice %183 {offsets = [0, 0, 24], sizes = [2, 8, 8], strides = [1, 1, 1]} : vector<2x8x32xf32> to vector<2x8x8xf32>
    %188 = tpu.concatenate %184, %185, %186, %187 in 0 : vector<2x8x8xf32>, vector<2x8x8xf32>, vector<2x8x8xf32>, vector<2x8x8xf32> -> vector<8x8x8xf32>
    %189 = vector.shape_cast %168 : vector<16x32xf32> to vector<2x8x32xf32>
    %190 = vector.extract_strided_slice %189 {offsets = [0, 0, 0], sizes = [2, 8, 8], strides = [1, 1, 1]} : vector<2x8x32xf32> to vector<2x8x8xf32>
    %191 = vector.extract_strided_slice %189 {offsets = [0, 0, 8], sizes = [2, 8, 8], strides = [1, 1, 1]} : vector<2x8x32xf32> to vector<2x8x8xf32>
    %192 = vector.extract_strided_slice %189 {offsets = [0, 0, 16], sizes = [2, 8, 8], strides = [1, 1, 1]} : vector<2x8x32xf32> to vector<2x8x8xf32>
    %193 = vector.extract_strided_slice %189 {offsets = [0, 0, 24], sizes = [2, 8, 8], strides = [1, 1, 1]} : vector<2x8x32xf32> to vector<2x8x8xf32>
    %194 = tpu.concatenate %190, %191, %192, %193 in 0 : vector<2x8x8xf32>, vector<2x8x8xf32>, vector<2x8x8xf32>, vector<2x8x8xf32> -> vector<8x8x8xf32>
    %195 = tpu.concatenate %53, %188 in 1 : vector<8x8x8xf32>, vector<8x8x8xf32> -> vector<8x16x8xf32>
    %196 = tpu.concatenate %59, %194 in 1 : vector<8x8x8xf32>, vector<8x8x8xf32> -> vector<8x16x8xf32>
    "tpu.trace_start"() <{level = 10 : i32, message = "bqd,bkd->bqk"}> : () -> ()
    %cst_75 = arith.constant dense<0.000000e+00> : vector<8x8x16xf32>
    %197 = tpu.matmul %182, %195, %cst_75 {dimension_numbers = #tpu.dot_dimension_numbers<[2], [2], [1], [1], [0, 0, 0, 1, 1, 1], [0], [0]>} : vector<8x8x8xf32>, vector<8x16x8xf32>, vector<8x8x16xf32> -> vector<8x8x16xf32>
    "tpu.trace_stop"() : () -> ()
    %cst_76 = arith.constant 0.353553385 : f32
    %198 = vector.broadcast %cst_76 : f32 to vector<8x8x16xf32>
    %199 = arith.mulf %197, %198 : vector<8x8x16xf32>
    %200 = tpu.iota {dimensions = array<i32: 1>} : vector<8x8x16xi32>
    %201 = tpu.iota {dimensions = array<i32: 2>} : vector<8x8x16xi32>
    %c8_i32 = arith.constant 8 : i32
    %202 = vector.broadcast %c8_i32 : i32 to vector<8x8x16xi32>
    %203 = arith.addi %200, %202 : vector<8x8x16xi32>
    %204 = arith.cmpi sle, %201, %203 : vector<8x8x16xi32>
    %cst_77 = arith.constant -1.000000e+30 : f32
    %205 = vector.broadcast %cst_77 : f32 to vector<8x8x16xf32>
    %206 = arith.select %204, %199, %205 : vector<8x8x16xi1>, vector<8x8x16xf32>
    %cst_78 = arith.constant dense<0xFF800000> : vector<8x8xf32>
    %207 = vector.multi_reduction <maximumf>, %206, %cst_78 [2] : vector<8x8x16xf32> to vector<8x8xf32>
    %208 = vector.shape_cast %207 : vector<8x8xf32> to vector<8x8x1xf32>
    %209 = vector.broadcast %208 : vector<8x8x1xf32> to vector<8x8x16xf32>
    %210 = arith.subf %206, %209 : vector<8x8x16xf32>
    %211 = math.exp %210 : vector<8x8x16xf32>
    %cst_79 = arith.constant dense<0.000000e+00> : vector<8x8xf32>
    %212 = vector.multi_reduction <add>, %211, %cst_79 [2] : vector<8x8x16xf32> to vector<8x8xf32>
    %213 = vector.shape_cast %212 : vector<8x8xf32> to vector<8x8x1xf32>
    %214 = tpu.reciprocal %213 {approx = true} : vector<8x8x1xf32> -> vector<8x8x1xf32>
    "tpu.trace_start"() <{level = 10 : i32, message = "bqk,bkd->bqd"}> : () -> ()
    %cst_80 = arith.constant dense<0.000000e+00> : vector<8x8x8xf32>
    %215 = tpu.matmul %211, %196, %cst_80 {dimension_numbers = #tpu.dot_dimension_numbers<[2], [1], [1], [2], [0, 0, 0, 1, 1, 2], [0], [0]>} : vector<8x8x16xf32>, vector<8x16x8xf32>, vector<8x8x8xf32> -> vector<8x8x8xf32>
    "tpu.trace_stop"() : () -> ()
    %216 = vector.broadcast %214 : vector<8x8x1xf32> to vector<8x8x8xf32>
    %217 = arith.mulf %215, %216 : vector<8x8x8xf32>
    %218 = vector.extract_strided_slice %217 {offsets = [0, 0, 0], sizes = [2, 8, 8], strides = [1, 1, 1]} : vector<8x8x8xf32> to vector<2x8x8xf32>
    %219 = vector.extract_strided_slice %217 {offsets = [2, 0, 0], sizes = [2, 8, 8], strides = [1, 1, 1]} : vector<8x8x8xf32> to vector<2x8x8xf32>
    %220 = vector.extract_strided_slice %217 {offsets = [4, 0, 0], sizes = [2, 8, 8], strides = [1, 1, 1]} : vector<8x8x8xf32> to vector<2x8x8xf32>
    %221 = vector.extract_strided_slice %217 {offsets = [6, 0, 0], sizes = [2, 8, 8], strides = [1, 1, 1]} : vector<8x8x8xf32> to vector<2x8x8xf32>
    %222 = tpu.concatenate %218, %219, %220, %221 in 2 : vector<2x8x8xf32>, vector<2x8x8xf32>, vector<2x8x8xf32>, vector<2x8x8xf32> -> vector<2x8x32xf32>
    %223 = vector.shape_cast %222 : vector<2x8x32xf32> to vector<16x32xf32>
    %cst_81 = arith.constant dense<0.000000e+00> : vector<16x32xf32>
    %224 = tpu.matmul %223, %148, %cst_81 {dimension_numbers = #tpu.dot_dimension_numbers<[1], [0], [0], [1], [0, 0, 1, 1], [], []>} : vector<16x32xf32>, vector<32x32xf32>, vector<16x32xf32> -> vector<16x32xf32>
    %225 = arith.addf %1, %224 : vector<16x32xf32>
    %226 = arith.mulf %225, %225 : vector<16x32xf32>
    %cst_82 = arith.constant dense<0.000000e+00> : vector<16xf32>
    %227 = vector.multi_reduction <add>, %226, %cst_82 [1] : vector<16x32xf32> to vector<16xf32>
    %228 = vector.shape_cast %227 : vector<16xf32> to vector<16x1xf32>
    %cst_83 = arith.constant 3.200000e+01 : f32
    %229 = vector.broadcast %cst_83 : f32 to vector<16x1xf32>
    %230 = arith.divf %228, %229 : vector<16x1xf32>
    %cst_84 = arith.constant 9.99999974E-6 : f32
    %231 = vector.broadcast %cst_84 : f32 to vector<16x1xf32>
    %232 = arith.addf %230, %231 : vector<16x1xf32>
    %233 = math.rsqrt %232 : vector<16x1xf32>
    %234 = vector.broadcast %233 : vector<16x1xf32> to vector<16x32xf32>
    %235 = arith.mulf %225, %234 : vector<16x32xf32>
    %236 = vector.broadcast %144 : vector<1x32xf32> to vector<16x32xf32>
    %237 = arith.mulf %235, %236 : vector<16x32xf32>
    %cst_85 = arith.constant dense<0.000000e+00> : vector<16x128xf32>
    %238 = tpu.matmul %237, %150, %cst_85 {dimension_numbers = #tpu.dot_dimension_numbers<[1], [0], [0], [1], [0, 0, 1, 1], [], []>} : vector<16x32xf32>, vector<32x128xf32>, vector<16x128xf32> -> vector<16x128xf32>
    %239 = vector.extract_strided_slice %238 {offsets = [0, 0], sizes = [16, 64], strides = [1, 1]} : vector<16x128xf32> to vector<16x64xf32>
    %240 = vector.extract_strided_slice %238 {offsets = [0, 64], sizes = [16, 64], strides = [1, 1]} : vector<16x128xf32> to vector<16x64xf32>
    %241 = arith.negf %239 : vector<16x64xf32>
    %242 = math.exp %241 : vector<16x64xf32>
    %cst_86 = arith.constant 1.000000e+00 : f32
    %243 = vector.broadcast %cst_86 : f32 to vector<16x64xf32>
    %244 = arith.addf %243, %242 : vector<16x64xf32>
    %245 = arith.divf %243, %244 : vector<16x64xf32>
    %246 = arith.mulf %239, %245 : vector<16x64xf32>
    %247 = arith.mulf %246, %240 : vector<16x64xf32>
    %cst_87 = arith.constant dense<0.000000e+00> : vector<16x32xf32>
    %248 = tpu.matmul %247, %152, %cst_87 {dimension_numbers = #tpu.dot_dimension_numbers<[1], [0], [0], [1], [0, 0, 1, 1], [], []>} : vector<16x64xf32>, vector<64x32xf32>, vector<16x32xf32> -> vector<16x32xf32>
    %249 = arith.addf %225, %248 : vector<16x32xf32>
    %c1_88 = arith.constant 1 : index
    %c0_89 = arith.constant 0 : index
    %c0_90 = arith.constant 0 : index
    %250 = vector.load %arg13[%c1_88, %c0_89, %c0_90] : memref<2x1x32xf32, #tpu.memory_space<vmem>>, vector<1x1x32xf32>
    %251 = vector.shape_cast %250 : vector<1x1x32xf32> to vector<1x32xf32>
    %c1_91 = arith.constant 1 : index
    %c0_92 = arith.constant 0 : index
    %c0_93 = arith.constant 0 : index
    %252 = vector.load %arg14[%c1_91, %c0_92, %c0_93] : memref<2x1x32xf32, #tpu.memory_space<vmem>>, vector<1x1x32xf32>
    %253 = vector.shape_cast %252 : vector<1x1x32xf32> to vector<1x32xf32>
    %c1_94 = arith.constant 1 : index
    %c0_95 = arith.constant 0 : index
    %c0_96 = arith.constant 0 : index
    %254 = vector.load %arg15[%c1_94, %c0_95, %c0_96] : memref<2x32x160xf32, #tpu.memory_space<vmem>>, vector<1x32x160xf32>
    %255 = vector.shape_cast %254 : vector<1x32x160xf32> to vector<32x160xf32>
    %c1_97 = arith.constant 1 : index
    %c0_98 = arith.constant 0 : index
    %c0_99 = arith.constant 0 : index
    %256 = vector.load %arg16[%c1_97, %c0_98, %c0_99] : memref<2x32x32xf32, #tpu.memory_space<vmem>>, vector<1x32x32xf32>
    %257 = vector.shape_cast %256 : vector<1x32x32xf32> to vector<32x32xf32>
    %c1_100 = arith.constant 1 : index
    %c0_101 = arith.constant 0 : index
    %c0_102 = arith.constant 0 : index
    %258 = vector.load %arg17[%c1_100, %c0_101, %c0_102] : memref<2x32x128xf32, #tpu.memory_space<vmem>>, vector<1x32x128xf32>
    %259 = vector.shape_cast %258 : vector<1x32x128xf32> to vector<32x128xf32>
    %c1_103 = arith.constant 1 : index
    %c0_104 = arith.constant 0 : index
    %c0_105 = arith.constant 0 : index
    %260 = vector.load %arg18[%c1_103, %c0_104, %c0_105] : memref<2x64x32xf32, #tpu.memory_space<vmem>>, vector<1x64x32xf32>
    %261 = vector.shape_cast %260 : vector<1x64x32xf32> to vector<64x32xf32>
    %262 = arith.mulf %249, %249 : vector<16x32xf32>
    %cst_106 = arith.constant dense<0.000000e+00> : vector<16xf32>
    %263 = vector.multi_reduction <add>, %262, %cst_106 [1] : vector<16x32xf32> to vector<16xf32>
    %264 = vector.shape_cast %263 : vector<16xf32> to vector<16x1xf32>
    %cst_107 = arith.constant 3.200000e+01 : f32
    %265 = vector.broadcast %cst_107 : f32 to vector<16x1xf32>
    %266 = arith.divf %264, %265 : vector<16x1xf32>
    %cst_108 = arith.constant 9.99999974E-6 : f32
    %267 = vector.broadcast %cst_108 : f32 to vector<16x1xf32>
    %268 = arith.addf %266, %267 : vector<16x1xf32>
    %269 = math.rsqrt %268 : vector<16x1xf32>
    %270 = vector.broadcast %269 : vector<16x1xf32> to vector<16x32xf32>
    %271 = arith.mulf %249, %270 : vector<16x32xf32>
    %272 = vector.broadcast %251 : vector<1x32xf32> to vector<16x32xf32>
    %273 = arith.mulf %271, %272 : vector<16x32xf32>
    %cst_109 = arith.constant dense<0.000000e+00> : vector<16x160xf32>
    %274 = tpu.matmul %273, %255, %cst_109 {dimension_numbers = #tpu.dot_dimension_numbers<[1], [0], [0], [1], [0, 0, 1, 1], [], []>} : vector<16x32xf32>, vector<32x160xf32>, vector<16x160xf32> -> vector<16x160xf32>
    %275 = vector.extract_strided_slice %274 {offsets = [0, 0], sizes = [16, 32], strides = [1, 1]} : vector<16x160xf32> to vector<16x32xf32>
    %276 = vector.extract_strided_slice %274 {offsets = [0, 32], sizes = [16, 32], strides = [1, 1]} : vector<16x160xf32> to vector<16x32xf32>
    %277 = vector.extract_strided_slice %274 {offsets = [0, 64], sizes = [16, 32], strides = [1, 1]} : vector<16x160xf32> to vector<16x32xf32>
    %278 = vector.extract_strided_slice %274 {offsets = [0, 96], sizes = [16, 32], strides = [1, 1]} : vector<16x160xf32> to vector<16x32xf32>
    %279 = vector.extract_strided_slice %274 {offsets = [0, 128], sizes = [16, 32], strides = [1, 1]} : vector<16x160xf32> to vector<16x32xf32>
    %280 = arith.mulf %275, %4 : vector<16x32xf32>
    %281 = arith.mulf %278, %5 : vector<16x32xf32>
    %282 = arith.addf %280, %281 : vector<16x32xf32>
    %283 = arith.mulf %276, %4 : vector<16x32xf32>
    %284 = arith.mulf %279, %5 : vector<16x32xf32>
    %285 = arith.addf %283, %284 : vector<16x32xf32>
    %286 = vector.shape_cast %282 : vector<16x32xf32> to vector<2x8x32xf32>
    %287 = vector.extract_strided_slice %286 {offsets = [0, 0, 0], sizes = [2, 8, 8], strides = [1, 1, 1]} : vector<2x8x32xf32> to vector<2x8x8xf32>
    %288 = vector.extract_strided_slice %286 {offsets = [0, 0, 8], sizes = [2, 8, 8], strides = [1, 1, 1]} : vector<2x8x32xf32> to vector<2x8x8xf32>
    %289 = vector.extract_strided_slice %286 {offsets = [0, 0, 16], sizes = [2, 8, 8], strides = [1, 1, 1]} : vector<2x8x32xf32> to vector<2x8x8xf32>
    %290 = vector.extract_strided_slice %286 {offsets = [0, 0, 24], sizes = [2, 8, 8], strides = [1, 1, 1]} : vector<2x8x32xf32> to vector<2x8x8xf32>
    %291 = tpu.concatenate %287, %288, %289, %290 in 0 : vector<2x8x8xf32>, vector<2x8x8xf32>, vector<2x8x8xf32>, vector<2x8x8xf32> -> vector<8x8x8xf32>
    %292 = vector.shape_cast %285 : vector<16x32xf32> to vector<2x8x32xf32>
    %293 = vector.extract_strided_slice %292 {offsets = [0, 0, 0], sizes = [2, 8, 8], strides = [1, 1, 1]} : vector<2x8x32xf32> to vector<2x8x8xf32>
    %294 = vector.extract_strided_slice %292 {offsets = [0, 0, 8], sizes = [2, 8, 8], strides = [1, 1, 1]} : vector<2x8x32xf32> to vector<2x8x8xf32>
    %295 = vector.extract_strided_slice %292 {offsets = [0, 0, 16], sizes = [2, 8, 8], strides = [1, 1, 1]} : vector<2x8x32xf32> to vector<2x8x8xf32>
    %296 = vector.extract_strided_slice %292 {offsets = [0, 0, 24], sizes = [2, 8, 8], strides = [1, 1, 1]} : vector<2x8x32xf32> to vector<2x8x8xf32>
    %297 = tpu.concatenate %293, %294, %295, %296 in 0 : vector<2x8x8xf32>, vector<2x8x8xf32>, vector<2x8x8xf32>, vector<2x8x8xf32> -> vector<8x8x8xf32>
    %298 = vector.shape_cast %277 : vector<16x32xf32> to vector<2x8x32xf32>
    %299 = vector.extract_strided_slice %298 {offsets = [0, 0, 0], sizes = [2, 8, 8], strides = [1, 1, 1]} : vector<2x8x32xf32> to vector<2x8x8xf32>
    %300 = vector.extract_strided_slice %298 {offsets = [0, 0, 8], sizes = [2, 8, 8], strides = [1, 1, 1]} : vector<2x8x32xf32> to vector<2x8x8xf32>
    %301 = vector.extract_strided_slice %298 {offsets = [0, 0, 16], sizes = [2, 8, 8], strides = [1, 1, 1]} : vector<2x8x32xf32> to vector<2x8x8xf32>
    %302 = vector.extract_strided_slice %298 {offsets = [0, 0, 24], sizes = [2, 8, 8], strides = [1, 1, 1]} : vector<2x8x32xf32> to vector<2x8x8xf32>
    %303 = tpu.concatenate %299, %300, %301, %302 in 0 : vector<2x8x8xf32>, vector<2x8x8xf32>, vector<2x8x8xf32>, vector<2x8x8xf32> -> vector<8x8x8xf32>
    %304 = tpu.concatenate %134, %297 in 1 : vector<8x8x8xf32>, vector<8x8x8xf32> -> vector<8x16x8xf32>
    %305 = tpu.concatenate %140, %303 in 1 : vector<8x8x8xf32>, vector<8x8x8xf32> -> vector<8x16x8xf32>
    "tpu.trace_start"() <{level = 10 : i32, message = "bqd,bkd->bqk"}> : () -> ()
    %cst_110 = arith.constant dense<0.000000e+00> : vector<8x8x16xf32>
    %306 = tpu.matmul %291, %304, %cst_110 {dimension_numbers = #tpu.dot_dimension_numbers<[2], [2], [1], [1], [0, 0, 0, 1, 1, 1], [0], [0]>} : vector<8x8x8xf32>, vector<8x16x8xf32>, vector<8x8x16xf32> -> vector<8x8x16xf32>
    "tpu.trace_stop"() : () -> ()
    %cst_111 = arith.constant 0.353553385 : f32
    %307 = vector.broadcast %cst_111 : f32 to vector<8x8x16xf32>
    %308 = arith.mulf %306, %307 : vector<8x8x16xf32>
    %309 = tpu.iota {dimensions = array<i32: 1>} : vector<8x8x16xi32>
    %310 = tpu.iota {dimensions = array<i32: 2>} : vector<8x8x16xi32>
    %c8_i32_112 = arith.constant 8 : i32
    %311 = vector.broadcast %c8_i32_112 : i32 to vector<8x8x16xi32>
    %312 = arith.addi %309, %311 : vector<8x8x16xi32>
    %313 = arith.cmpi sle, %310, %312 : vector<8x8x16xi32>
    %cst_113 = arith.constant -1.000000e+30 : f32
    %314 = vector.broadcast %cst_113 : f32 to vector<8x8x16xf32>
    %315 = arith.select %313, %308, %314 : vector<8x8x16xi1>, vector<8x8x16xf32>
    %cst_114 = arith.constant dense<0xFF800000> : vector<8x8xf32>
    %316 = vector.multi_reduction <maximumf>, %315, %cst_114 [2] : vector<8x8x16xf32> to vector<8x8xf32>
    %317 = vector.shape_cast %316 : vector<8x8xf32> to vector<8x8x1xf32>
    %318 = vector.broadcast %317 : vector<8x8x1xf32> to vector<8x8x16xf32>
    %319 = arith.subf %315, %318 : vector<8x8x16xf32>
    %320 = math.exp %319 : vector<8x8x16xf32>
    %cst_115 = arith.constant dense<0.000000e+00> : vector<8x8xf32>
    %321 = vector.multi_reduction <add>, %320, %cst_115 [2] : vector<8x8x16xf32> to vector<8x8xf32>
    %322 = vector.shape_cast %321 : vector<8x8xf32> to vector<8x8x1xf32>
    %323 = tpu.reciprocal %322 {approx = true} : vector<8x8x1xf32> -> vector<8x8x1xf32>
    "tpu.trace_start"() <{level = 10 : i32, message = "bqk,bkd->bqd"}> : () -> ()
    %cst_116 = arith.constant dense<0.000000e+00> : vector<8x8x8xf32>
    %324 = tpu.matmul %320, %305, %cst_116 {dimension_numbers = #tpu.dot_dimension_numbers<[2], [1], [1], [2], [0, 0, 0, 1, 1, 2], [0], [0]>} : vector<8x8x16xf32>, vector<8x16x8xf32>, vector<8x8x8xf32> -> vector<8x8x8xf32>
    "tpu.trace_stop"() : () -> ()
    %325 = vector.broadcast %323 : vector<8x8x1xf32> to vector<8x8x8xf32>
    %326 = arith.mulf %324, %325 : vector<8x8x8xf32>
    %327 = vector.extract_strided_slice %326 {offsets = [0, 0, 0], sizes = [2, 8, 8], strides = [1, 1, 1]} : vector<8x8x8xf32> to vector<2x8x8xf32>
    %328 = vector.extract_strided_slice %326 {offsets = [2, 0, 0], sizes = [2, 8, 8], strides = [1, 1, 1]} : vector<8x8x8xf32> to vector<2x8x8xf32>
    %329 = vector.extract_strided_slice %326 {offsets = [4, 0, 0], sizes = [2, 8, 8], strides = [1, 1, 1]} : vector<8x8x8xf32> to vector<2x8x8xf32>
    %330 = vector.extract_strided_slice %326 {offsets = [6, 0, 0], sizes = [2, 8, 8], strides = [1, 1, 1]} : vector<8x8x8xf32> to vector<2x8x8xf32>
    %331 = tpu.concatenate %327, %328, %329, %330 in 2 : vector<2x8x8xf32>, vector<2x8x8xf32>, vector<2x8x8xf32>, vector<2x8x8xf32> -> vector<2x8x32xf32>
    %332 = vector.shape_cast %331 : vector<2x8x32xf32> to vector<16x32xf32>
    %cst_117 = arith.constant dense<0.000000e+00> : vector<16x32xf32>
    %333 = tpu.matmul %332, %257, %cst_117 {dimension_numbers = #tpu.dot_dimension_numbers<[1], [0], [0], [1], [0, 0, 1, 1], [], []>} : vector<16x32xf32>, vector<32x32xf32>, vector<16x32xf32> -> vector<16x32xf32>
    %334 = arith.addf %249, %333 : vector<16x32xf32>
    %335 = arith.mulf %334, %334 : vector<16x32xf32>
    %cst_118 = arith.constant dense<0.000000e+00> : vector<16xf32>
    %336 = vector.multi_reduction <add>, %335, %cst_118 [1] : vector<16x32xf32> to vector<16xf32>
    %337 = vector.shape_cast %336 : vector<16xf32> to vector<16x1xf32>
    %cst_119 = arith.constant 3.200000e+01 : f32
    %338 = vector.broadcast %cst_119 : f32 to vector<16x1xf32>
    %339 = arith.divf %337, %338 : vector<16x1xf32>
    %cst_120 = arith.constant 9.99999974E-6 : f32
    %340 = vector.broadcast %cst_120 : f32 to vector<16x1xf32>
    %341 = arith.addf %339, %340 : vector<16x1xf32>
    %342 = math.rsqrt %341 : vector<16x1xf32>
    %343 = vector.broadcast %342 : vector<16x1xf32> to vector<16x32xf32>
    %344 = arith.mulf %334, %343 : vector<16x32xf32>
    %345 = vector.broadcast %253 : vector<1x32xf32> to vector<16x32xf32>
    %346 = arith.mulf %344, %345 : vector<16x32xf32>
    %cst_121 = arith.constant dense<0.000000e+00> : vector<16x128xf32>
    %347 = tpu.matmul %346, %259, %cst_121 {dimension_numbers = #tpu.dot_dimension_numbers<[1], [0], [0], [1], [0, 0, 1, 1], [], []>} : vector<16x32xf32>, vector<32x128xf32>, vector<16x128xf32> -> vector<16x128xf32>
    %348 = vector.extract_strided_slice %347 {offsets = [0, 0], sizes = [16, 64], strides = [1, 1]} : vector<16x128xf32> to vector<16x64xf32>
    %349 = vector.extract_strided_slice %347 {offsets = [0, 64], sizes = [16, 64], strides = [1, 1]} : vector<16x128xf32> to vector<16x64xf32>
    %350 = arith.negf %348 : vector<16x64xf32>
    %351 = math.exp %350 : vector<16x64xf32>
    %cst_122 = arith.constant 1.000000e+00 : f32
    %352 = vector.broadcast %cst_122 : f32 to vector<16x64xf32>
    %353 = arith.addf %352, %351 : vector<16x64xf32>
    %354 = arith.divf %352, %353 : vector<16x64xf32>
    %355 = arith.mulf %348, %354 : vector<16x64xf32>
    %356 = arith.mulf %355, %349 : vector<16x64xf32>
    %cst_123 = arith.constant dense<0.000000e+00> : vector<16x32xf32>
    %357 = tpu.matmul %356, %261, %cst_123 {dimension_numbers = #tpu.dot_dimension_numbers<[1], [0], [0], [1], [0, 0, 1, 1], [], []>} : vector<16x64xf32>, vector<64x32xf32>, vector<16x32xf32> -> vector<16x32xf32>
    %358 = arith.addf %334, %357 : vector<16x32xf32>
    %c0_124 = arith.constant 0 : index
    %c0_125 = arith.constant 0 : index
    %359 = vector.load %arg19[%c0_124, %c0_125] : memref<16x32xf32, #tpu.memory_space<vmem>>, vector<16x32xf32>
    tpu.vector_store %arg19[%c0_124, %c0_125], %358 {strides = array<i32>} : memref<16x32xf32, #tpu.memory_space<vmem>>, vector<16x32xf32>,
    return
  }
  func.func @transform_0(%arg0: i32) -> (i32, i32) {
    %c0_i32 = arith.constant 0 : i32
    %c0_i32_0 = arith.constant 0 : i32
    %c0_i32_1 = arith.constant 0 : i32
    return %c0_i32, %c0_i32_0 : i32, i32
  }
  func.func @transform_1(%arg0: i32) -> (i32, i32) {
    %c0_i32 = arith.constant 0 : i32
    %c0_i32_0 = arith.constant 0 : i32
    %c0_i32_1 = arith.constant 0 : i32
    return %c0_i32, %c0_i32_0 : i32, i32
  }
  func.func @transform_2(%arg0: i32) -> (i32, i32) {
    %c0_i32 = arith.constant 0 : i32
    %c0_i32_0 = arith.constant 0 : i32
    %c0_i32_1 = arith.constant 0 : i32
    return %c0_i32, %c0_i32_0 : i32, i32
  }
  func.func @transform_3(%arg0: i32) -> (i32, i32) {
    %c0_i32 = arith.constant 0 : i32
    %c0_i32_0 = arith.constant 0 : i32
    %c0_i32_1 = arith.constant 0 : i32
    return %c0_i32, %c0_i32_0 : i32, i32
  }
  func.func @transform_4(%arg0: i32) -> (i32, i32) {
    %c0_i32 = arith.constant 0 : i32
    %c0_i32_0 = arith.constant 0 : i32
    %c0_i32_1 = arith.constant 0 : i32
    return %c0_i32, %c0_i32_0 : i32, i32
  }
  func.func @transform_5(%arg0: i32) -> (i32, i32) {
    %c0_i32 = arith.constant 0 : i32
    %c0_i32_0 = arith.constant 0 : i32
    %c0_i32_1 = arith.constant 0 : i32
    return %c0_i32, %c0_i32_0 : i32, i32
  }
  func.func @transform_6(%arg0: i32) -> (i32, i32, i32) {
    %c0_i32 = arith.constant 0 : i32
    %c0_i32_0 = arith.constant 0 : i32
    %c0_i32_1 = arith.constant 0 : i32
    %c0_i32_2 = arith.constant 0 : i32
    return %c0_i32, %c0_i32_0, %c0_i32_1 : i32, i32, i32
  }
  func.func @transform_7(%arg0: i32) -> (i32, i32, i32) {
    %c0_i32 = arith.constant 0 : i32
    %c0_i32_0 = arith.constant 0 : i32
    %c0_i32_1 = arith.constant 0 : i32
    %c0_i32_2 = arith.constant 0 : i32
    return %c0_i32, %c0_i32_0, %c0_i32_1 : i32, i32, i32
  }
  func.func @transform_8(%arg0: i32) -> (i32, i32, i32) {
    %c0_i32 = arith.constant 0 : i32
    %c0_i32_0 = arith.constant 0 : i32
    %c0_i32_1 = arith.constant 0 : i32
    %c0_i32_2 = arith.constant 0 : i32
    return %c0_i32, %c0_i32_0, %c0_i32_1 : i32, i32, i32
  }
  func.func @transform_9(%arg0: i32) -> (i32, i32, i32) {
    %c0_i32 = arith.constant 0 : i32
    %c0_i32_0 = arith.constant 0 : i32
    %c0_i32_1 = arith.constant 0 : i32
    %c0_i32_2 = arith.constant 0 : i32
    return %c0_i32, %c0_i32_0, %c0_i32_1 : i32, i32, i32
  }
  func.func @transform_10(%arg0: i32) -> (i32, i32, i32) {
    %c0_i32 = arith.constant 0 : i32
    %c0_i32_0 = arith.constant 0 : i32
    %c0_i32_1 = arith.constant 0 : i32
    %c0_i32_2 = arith.constant 0 : i32
    return %c0_i32, %c0_i32_0, %c0_i32_1 : i32, i32, i32
  }
  func.func @transform_11(%arg0: i32) -> (i32, i32, i32) {
    %c0_i32 = arith.constant 0 : i32
    %c0_i32_0 = arith.constant 0 : i32
    %c0_i32_1 = arith.constant 0 : i32
    %c0_i32_2 = arith.constant 0 : i32
    return %c0_i32, %c0_i32_0, %c0_i32_1 : i32, i32, i32
  }
  func.func @transform_12(%arg0: i32) -> (i32, i32, i32) {
    %c0_i32 = arith.constant 0 : i32
    %c0_i32_0 = arith.constant 0 : i32
    %c0_i32_1 = arith.constant 0 : i32
    %c0_i32_2 = arith.constant 0 : i32
    return %c0_i32, %c0_i32_0, %c0_i32_1 : i32, i32, i32
  }
  func.func @transform_13(%arg0: i32) -> (i32, i32, i32) {
    %c0_i32 = arith.constant 0 : i32
    %c0_i32_0 = arith.constant 0 : i32
    %c0_i32_1 = arith.constant 0 : i32
    %c0_i32_2 = arith.constant 0 : i32
    return %c0_i32, %c0_i32_0, %c0_i32_1 : i32, i32, i32
  }
  func.func @transform_14(%arg0: i32) -> (i32, i32, i32) {
    %c0_i32 = arith.constant 0 : i32
    %c0_i32_0 = arith.constant 0 : i32
    %c0_i32_1 = arith.constant 0 : i32
    %c0_i32_2 = arith.constant 0 : i32
    return %c0_i32, %c0_i32_0, %c0_i32_1 : i32, i32, i32
  }
  func.func @transform_15(%arg0: i32) -> (i32, i32, i32) {
    %c0_i32 = arith.constant 0 : i32
    %c0_i32_0 = arith.constant 0 : i32
    %c0_i32_1 = arith.constant 0 : i32
    %c0_i32_2 = arith.constant 0 : i32
    return %c0_i32, %c0_i32_0, %c0_i32_1 : i32, i32, i32
  }
  func.func @transform_16(%arg0: i32) -> (i32, i32, i32) {
    %c0_i32 = arith.constant 0 : i32
    %c0_i32_0 = arith.constant 0 : i32
    %c0_i32_1 = arith.constant 0 : i32
    %c0_i32_2 = arith.constant 0 : i32
    return %c0_i32, %c0_i32_0, %c0_i32_1 : i32, i32, i32
  }
  func.func @transform_17(%arg0: i32) -> (i32, i32, i32) {
    %c0_i32 = arith.constant 0 : i32
    %c0_i32_0 = arith.constant 0 : i32
    %c0_i32_1 = arith.constant 0 : i32
    %c0_i32_2 = arith.constant 0 : i32
    return %c0_i32, %c0_i32_0, %c0_i32_1 : i32, i32, i32
  }
  func.func @transform_18(%arg0: i32) -> (i32, i32) {
    %c0_i32 = arith.constant 0 : i32
    %c0_i32_0 = arith.constant 0 : i32
    %c0_i32_1 = arith.constant 0 : i32
    return %c0_i32, %c0_i32_0 : i32, i32
  }
}

</mosaic_0001>

<llo_original>
// kernel: tpu_custom_call.1
$region0: #{tpu_custom_call.1}
  #allocation0 [shape = 'u32[]', space=smem, size = 0x4, offset = 0x4, fixed_abs, tag = 'smem constant byte address 0x4 - core index']
  #allocation1 [shape = 'u32[144,128]{1,0:T(1,128)}', space=vmem, size = 0x12000, scoped, tag = 'internal scratch']
  %s0 = inlined_call_operand.hbm [shape: f32[16,32], index: 0, kind: input, shape index: {}]
  %s1 = inlined_call_operand.hbm [shape: f32[16,32], index: 1, kind: input, shape index: {}]
  %s2 = inlined_call_operand.hbm [shape: f32[16,32], index: 2, kind: input, shape index: {}]
  %s3 = inlined_call_operand.hbm [shape: f32[16,32], index: 3, kind: input, shape index: {}]
  %s4 = inlined_call_operand.hbm [shape: f32[16,32], index: 4, kind: input, shape index: {}]
  %s5 = inlined_call_operand.hbm [shape: f32[16,32], index: 5, kind: input, shape index: {}]
  %s6 = inlined_call_operand.vmem [shape: f32[2,1,32], index: 6, kind: input, shape index: {}]
  %s7 = inlined_call_operand.vmem [shape: f32[2,1,32], index: 7, kind: input, shape index: {}]
  %s8 = inlined_call_operand.vmem [shape: f32[2,32,160], index: 8, kind: input, shape index: {}]
  %s9 = inlined_call_operand.vmem [shape: f32[2,32,32], index: 9, kind: input, shape index: {}]
  %s10 = inlined_call_operand.vmem [shape: f32[2,32,128], index: 10, kind: input, shape index: {}]
  %s11 = inlined_call_operand.vmem [shape: f32[2,64,32], index: 11, kind: input, shape index: {}]
  %s12 = inlined_call_operand.vmem [shape: f32[2,1,32], index: 12, kind: input, shape index: {}]
  %s13 = inlined_call_operand.vmem [shape: f32[2,1,32], index: 13, kind: input, shape index: {}]
  %s14 = inlined_call_operand.vmem [shape: f32[2,32,160], index: 14, kind: input, shape index: {}]
  %s15 = inlined_call_operand.hbm [shape: f32[2,32,32], index: 15, kind: input, shape index: {}]
  %s16 = inlined_call_operand.hbm [shape: f32[2,32,128], index: 16, kind: input, shape index: {}]
  %s17 = inlined_call_operand.vmem [shape: f32[2,64,32], index: 17, kind: input, shape index: {}]
  %s18 = inlined_call_operand.hbm [shape: f32[16,32], index: 18, kind: output, shape index: {}]
  %s19 = sld [smem:[#allocation0]]
  $region114: #{tpu_custom_call.1} parent=0
    _
  %s21 = ssub.s32 1, %s19
  %s22 = scalar_select 0, %s21, %s19
  $region1: #{tpu_custom_call.1} parent=0
    #allocation2 [shape = 'u8[8192]{0}', space=vmem, size = 0x2000, scoped, tag = 'input window, operand 0, single buffered']
    #allocation3 [shape = 's32[1]{0}', space=sflag, size = 0x4, scoped, tag = 'scoped memory for tpu_custom_call.1']
    #allocation4 [shape = 's32[1]{0}', space=sflag, size = 0x4, scoped, tag = 'scoped memory for tpu_custom_call.1']
    #allocation5 [shape = 'u8[8192]{0}', space=vmem, size = 0x2000, scoped, tag = 'input window, operand 1, single buffered']
    #allocation6 [shape = 's32[1]{0}', space=sflag, size = 0x4, scoped, tag = 'scoped memory for tpu_custom_call.1']
    #allocation7 [shape = 'u8[8192]{0}', space=vmem, size = 0x2000, scoped, tag = 'input window, operand 2, single buffered']
    #allocation8 [shape = 'u8[8192]{0}', space=vmem, size = 0x2000, scoped, tag = 'input window, operand 3, single buffered']
    #allocation9 [shape = 's32[1]{0}', space=sflag, size = 0x4, scoped, tag = 'scoped memory for tpu_custom_call.1']
    #allocation10 [shape = 'u8[8192]{0}', space=vmem, size = 0x2000, scoped, tag = 'input window, operand 4, single buffered']
    #allocation11 [shape = 'u8[8192]{0}', space=vmem, size = 0x2000, scoped, tag = 'input window, operand 5, single buffered']
    #allocation12 [shape = 's32[1]{0}', space=sflag, size = 0x4, scoped, tag = 'scoped memory for tpu_custom_call.1']
    #allocation13 [shape = 'u8[32768]{0}', space=vmem, size = 0x8000, scoped, tag = 'input window, operand 15, single buffered']
    #allocation14 [shape = 'u8[32768]{0}', space=vmem, size = 0x8000, scoped, tag = 'input window, operand 16, single buffered']
    #allocation15 [shape = 's32[1]{0}', space=sflag, size = 0x4, scoped, tag = 'scoped memory for tpu_custom_call.1']
    #allocation16 [shape = 'u8[8192]{0}', space=vmem, size = 0x2000, scoped, tag = 'output window, operand 0, single buffered']
    %23 = vsyncpa [#allocation3], 0
    %24 = vsyncpa [#allocation6], 0
    %25 = vsyncpa [#allocation9], 0
    %26 = vsyncpa [#allocation12], 0
    %27 = vsyncpa [#allocation15], 0
    %28 = vsyncpa [#allocation4], 0
    // Predicated region
    $region2: #{tpu_custom_call.1} parent=1 // pred_check
      _
    $region3: #{tpu_custom_call.1} parent=1 // pred_check_branch
      %30 = sbr.rel (0) target = $region5
    $region4: #{tpu_custom_call.1} parent=1 // pred_region
      %s32 = ssub.s32 256, 256
      %33 = vsyncadd [#allocation3], %s32
      %s34 = sshll.u32 [#allocation2], 4
      %s35 = int_to_ptr.vmem [resolvable:$true] %s34
      %40 = dma.hbm_to_vmem [thread:$0]  %s0, 256, %s35, [#allocation3], 128, 128, 8
    $region5: #{tpu_custom_call.1} parent=1 // pred_fallthru
      _
    // Predicated region
    $region6: #{tpu_custom_call.1} parent=1 // pred_check
      _
    $region7: #{tpu_custom_call.1} parent=1 // pred_check_branch
      %42 = sbr.rel (0) target = $region9
    $region8: #{tpu_custom_call.1} parent=1 // pred_region
      %s44 = ssub.s32 256, 256
      %45 = vsyncadd [#allocation6], %s44
      %s46 = sshll.u32 [#allocation5], 4
      %s47 = int_to_ptr.vmem [resolvable:$true] %s46
      %52 = dma.hbm_to_vmem [thread:$0]  %s1, 256, %s47, [#allocation6], 128, 128, 8
    $region9: #{tpu_custom_call.1} parent=1 // pred_fallthru
      _
    // Predicated region
    $region10: #{tpu_custom_call.1} parent=1 // pred_check
      _
    $region11: #{tpu_custom_call.1} parent=1 // pred_check_branch
      %54 = sbr.rel (0) target = $region13
    $region12: #{tpu_custom_call.1} parent=1 // pred_region
      %s56 = ssub.s32 256, 256
      %57 = vsyncadd [#allocation6], %s56
      %s58 = sshll.u32 [#allocation7], 4
      %s59 = int_to_ptr.vmem [resolvable:$true] %s58
      %64 = dma.hbm_to_vmem [thread:$0]  %s2, 256, %s59, [#allocation6], 128, 128, 8
    $region13: #{tpu_custom_call.1} parent=1 // pred_fallthru
      _
    // Predicated region
    $region14: #{tpu_custom_call.1} parent=1 // pred_check
      _
    $region15: #{tpu_custom_call.1} parent=1 // pred_check_branch
      %66 = sbr.rel (0) target = $region17
    $region16: #{tpu_custom_call.1} parent=1 // pred_region
      %s68 = ssub.s32 256, 256
      %69 = vsyncadd [#allocation9], %s68
      %s70 = sshll.u32 [#allocation8], 4
      %s71 = int_to_ptr.vmem [resolvable:$true] %s70
      %76 = dma.hbm_to_vmem [thread:$0]  %s3, 256, %s71, [#allocation9], 128, 128, 8
    $region17: #{tpu_custom_call.1} parent=1 // pred_fallthru
      _
    // Predicated region
    $region18: #{tpu_custom_call.1} parent=1 // pred_check
      _
    $region19: #{tpu_custom_call.1} parent=1 // pred_check_branch
      %78 = sbr.rel (0) target = $region21
    $region20: #{tpu_custom_call.1} parent=1 // pred_region
      %s80 = ssub.s32 256, 256
      %81 = vsyncadd [#allocation9], %s80
      %s82 = sshll.u32 [#allocation10], 4
      %s83 = int_to_ptr.vmem [resolvable:$true] %s82
      %88 = dma.hbm_to_vmem [thread:$0]  %s4, 256, %s83, [#allocation9], 128, 128, 8
    $region21: #{tpu_custom_call.1} parent=1 // pred_fallthru
      _
    // Predicated region
    $region22: #{tpu_custom_call.1} parent=1 // pred_check
      _
    $region23: #{tpu_custom_call.1} parent=1 // pred_check_branch
      %90 = sbr.rel (0) target = $region25
    $region24: #{tpu_custom_call.1} parent=1 // pred_region
      %s92 = ssub.s32 256, 256
      %93 = vsyncadd [#allocation12], %s92
      %s94 = sshll.u32 [#allocation11], 4
      %s95 = int_to_ptr.vmem [resolvable:$true] %s94
      %100 = dma.hbm_to_vmem [thread:$0]  %s5, 256, %s95, [#allocation12], 128, 128, 8
    $region25: #{tpu_custom_call.1} parent=1 // pred_fallthru
      _
    // Predicated region
    $region26: #{tpu_custom_call.1} parent=1 // pred_check
      _
    $region27: #{tpu_custom_call.1} parent=1 // pred_check_branch
      %102 = sbr.rel (0) target = $region29
    $region28: #{tpu_custom_call.1} parent=1 // pred_region
      _
    $region29: #{tpu_custom_call.1} parent=1 // pred_fallthru
      _
    // Predicated region
    $region30: #{tpu_custom_call.1} parent=1 // pred_check
      _
    $region31: #{tpu_custom_call.1} parent=1 // pred_check_branch
      %104 = sbr.rel (0) target = $region33
    $region32: #{tpu_custom_call.1} parent=1 // pred_region
      _
    $region33: #{tpu_custom_call.1} parent=1 // pred_fallthru
      _
    // Predicated region
    $region34: #{tpu_custom_call.1} parent=1 // pred_check
      _
    $region35: #{tpu_custom_call.1} parent=1 // pred_check_branch
      %106 = sbr.rel (0) target = $region37
    $region36: #{tpu_custom_call.1} parent=1 // pred_region
      _
    $region37: #{tpu_custom_call.1} parent=1 // pred_fallthru
      _
    // Predicated region
    $region38: #{tpu_custom_call.1} parent=1 // pred_check
      _
    $region39: #{tpu_custom_call.1} parent=1 // pred_check_branch
      %108 = sbr.rel (0) target = $region41
    $region40: #{tpu_custom_call.1} parent=1 // pred_region
      _
    $region41: #{tpu_custom_call.1} parent=1 // pred_fallthru
      _
    // Predicated region
    $region42: #{tpu_custom_call.1} parent=1 // pred_check
      _
    $region43: #{tpu_custom_call.1} parent=1 // pred_check_branch
      %110 = sbr.rel (0) target = $region45
    $region44: #{tpu_custom_call.1} parent=1 // pred_region
      _
    $region45: #{tpu_custom_call.1} parent=1 // pred_fallthru
      _
    // Predicated region
    $region46: #{tpu_custom_call.1} parent=1 // pred_check
      _
    $region47: #{tpu_custom_call.1} parent=1 // pred_check_branch
      %112 = sbr.rel (0) target = $region49
    $region48: #{tpu_custom_call.1} parent=1 // pred_region
      _
    $region49: #{tpu_custom_call.1} parent=1 // pred_fallthru
      _
    // Predicated region
    $region50: #{tpu_custom_call.1} parent=1 // pred_check
      _
    $region51: #{tpu_custom_call.1} parent=1 // pred_check_branch
      %114 = sbr.rel (0) target = $region53
    $region52: #{tpu_custom_call.1} parent=1 // pred_region
      _
    $region53: #{tpu_custom_call.1} parent=1 // pred_fallthru
      _
    // Predicated region
    $region54: #{tpu_custom_call.1} parent=1 // pred_check
      _
    $region55: #{tpu_custom_call.1} parent=1 // pred_check_branch
      %116 = sbr.rel (0) target = $region57
    $region56: #{tpu_custom_call.1} parent=1 // pred_region
      _
    $region57: #{tpu_custom_call.1} parent=1 // pred_fallthru
      _
    // Predicated region
    $region58: #{tpu_custom_call.1} parent=1 // pred_check
      _
    $region59: #{tpu_custom_call.1} parent=1 // pred_check_branch
      %118 = sbr.rel (0) target = $region61
    $region60: #{tpu_custom_call.1} parent=1 // pred_region
      _
    $region61: #{tpu_custom_call.1} parent=1 // pred_fallthru
      _
    // Predicated region
    $region62: #{tpu_custom_call.1} parent=1 // pred_check
      _
    $region63: #{tpu_custom_call.1} parent=1 // pred_check_branch
      %120 = sbr.rel (0) target = $region65
    $region64: #{tpu_custom_call.1} parent=1 // pred_region
      %s122 = ssub.s32 1024, 1024
      %123 = vsyncadd [#allocation12], %s122
      %s124 = sshll.u32 [#allocation13], 4
      %s125 = int_to_ptr.vmem [resolvable:$true] %s124
      %130 = dma.hbm_to_vmem [thread:$0]  %s15, 1024, %s125, [#allocation12], 128, 128, 8
    $region65: #{tpu_custom_call.1} parent=1 // pred_fallthru
      _
    // Predicated region
    $region66: #{tpu_custom_call.1} parent=1 // pred_check
      _
    $region67: #{tpu_custom_call.1} parent=1 // pred_check_branch
      %132 = sbr.rel (0) target = $region69
    $region68: #{tpu_custom_call.1} parent=1 // pred_region
      %s134 = ssub.s32 1024, 1024
      %135 = vsyncadd [#allocation15], %s134
      %s136 = sshll.u32 [#allocation14], 4
      %s137 = int_to_ptr.vmem [resolvable:$true] %s136
      %142 = dma.hbm_to_vmem [thread:$0]  %s16, 1024, %s137, [#allocation15], 128, 128, 8
    $region69: #{tpu_custom_call.1} parent=1 // pred_fallthru
      _
    // Predicated region
    $region70: #{tpu_custom_call.1} parent=1 // pred_check
      _
    $region71: #{tpu_custom_call.1} parent=1 // pred_check_branch
      %144 = sbr.rel (0) target = $region73
    $region72: #{tpu_custom_call.1} parent=1 // pred_region
      _
    $region73: #{tpu_custom_call.1} parent=1 // pred_fallthru
      _
    // Predicated region
    $region74: #{tpu_custom_call.1} parent=1 // pred_check
      _
    $region75: #{tpu_custom_call.1} parent=1 // pred_check_branch
      %146 = sbr.rel (0) target = $region77
    $region76: #{tpu_custom_call.1} parent=1 // pred_region
      %147 = dma.done [#allocation3], 256
    $region77: #{tpu_custom_call.1} parent=1 // pred_fallthru
      _
    // Predicated region
    $region78: #{tpu_custom_call.1} parent=1 // pred_check
      _
    $region79: #{tpu_custom_call.1} parent=1 // pred_check_branch
      %149 = sbr.rel (0) target = $region81
    $region80: #{tpu_custom_call.1} parent=1 // pred_region
      %150 = dma.done [#allocation6], 256
    $region81: #{tpu_custom_call.1} parent=1 // pred_fallthru
      _
    // Predicated region
    $region82: #{tpu_custom_call.1} parent=1 // pred_check
      _
    $region83: #{tpu_custom_call.1} parent=1 // pred_check_branch
      %152 = sbr.rel (0) target = $region85
    $region84: #{tpu_custom_call.1} parent=1 // pred_region
      %153 = dma.done [#allocation6], 256
    $region85: #{tpu_custom_call.1} parent=1 // pred_fallthru
      _
    // Predicated region
    $region86: #{tpu_custom_call.1} parent=1 // pred_check
      _
    $region87: #{tpu_custom_call.1} parent=1 // pred_check_branch
      %155 = sbr.rel (0) target = $region89
    $region88: #{tpu_custom_call.1} parent=1 // pred_region
      %156 = dma.done [#allocation9], 256
    $region89: #{tpu_custom_call.1} parent=1 // pred_fallthru
      _
    // Predicated region
    $region90: #{tpu_custom_call.1} parent=1 // pred_check
      _
    $region91: #{tpu_custom_call.1} parent=1 // pred_check_branch
      %158 = sbr.rel (0) target = $region93
    $region92: #{tpu_custom_call.1} parent=1 // pred_region
      %159 = dma.done [#allocation9], 256
    $region93: #{tpu_custom_call.1} parent=1 // pred_fallthru
      _
    // Predicated region
    $region94: #{tpu_custom_call.1} parent=1 // pred_check
      _
    $region95: #{tpu_custom_call.1} parent=1 // pred_check_branch
      %161 = sbr.rel (0) target = $region97
    $region96: #{tpu_custom_call.1} parent=1 // pred_region
      %162 = dma.done [#allocation12], 256
    $region97: #{tpu_custom_call.1} parent=1 // pred_fallthru
      _
    // Predicated region
    $region98: #{tpu_custom_call.1} parent=1 // pred_check
      _
    $region99: #{tpu_custom_call.1} parent=1 // pred_check_branch
      %164 = sbr.rel (0) target = $region101
    $region100: #{tpu_custom_call.1} parent=1 // pred_region
      %165 = dma.done [#allocation12], 1024
    $region101: #{tpu_custom_call.1} parent=1 // pred_fallthru
      _
    // Predicated region
    $region102: #{tpu_custom_call.1} parent=1 // pred_check
      _
    $region103: #{tpu_custom_call.1} parent=1 // pred_check_branch
      %167 = sbr.rel (0) target = $region105
    $region104: #{tpu_custom_call.1} parent=1 // pred_region
      %168 = dma.done [#allocation15], 1024
    $region105: #{tpu_custom_call.1} parent=1 // pred_fallthru
      _
    %v169 = vld [vmem:[#allocation2] sm:$0xff]
    %v170 = vld [vmem:[#allocation2 + $0x8] sm:$0xff]
    %v171 = vld [vmem:[#allocation5] sm:$0xff]
    %v172 = vld [vmem:[#allocation5 + $0x8] sm:$0xff]
    %v173 = vld [vmem:[#allocation7] sm:$0xff]
    %v174 = vld [vmem:[#allocation7 + $0x8] sm:$0xff]
    %v175 = vld [vmem:[#allocation8] sm:$0xff]
    %v176 = vld [vmem:[#allocation8 + $0x8] sm:$0xff]
    %v177 = vld [vmem:[#allocation10] sm:$0xff]
    %v178 = vld [vmem:[#allocation10 + $0x8] sm:$0xff]
    %v179 = vld [vmem:[#allocation11] sm:$0xff]
    %v180 = vld [vmem:[#allocation11 + $0x8] sm:$0xff]
    %v181 = vld [vmem:[%s6] sm:$0x1]
    %v182 = vld [vmem:[%s7] sm:$0x1]
    %v183 = vld [vmem:[%s8] sm:$0xff]
    %v184 = vld [vmem:[%s8 + $0x8] sm:$0xff]
    %v185 = vld [vmem:[%s8 + $0x10] sm:$0xff]
    %v186 = vld [vmem:[%s8 + $0x18] sm:$0xff]
    %v187 = vld [vmem:[%s8 + $0x20] sm:$0xff]
    %v188 = vld [vmem:[%s8 + $0x28] sm:$0xff]
    %v189 = vld [vmem:[%s8 + $0x30] sm:$0xff]
    %v190 = vld [vmem:[%s8 + $0x38] sm:$0xff]
    %v191 = vld [vmem:[%s9] sm:$0xff]
    %v192 = vld [vmem:[%s9 + $0x8] sm:$0xff]
    %v193 = vld [vmem:[%s9 + $0x10] sm:$0xff]
    %v194 = vld [vmem:[%s9 + $0x18] sm:$0xff]
    %v195 = vld [vmem:[%s10] sm:$0xff]
    %v196 = vld [vmem:[%s10 + $0x8] sm:$0xff]
    %v197 = vld [vmem:[%s10 + $0x10] sm:$0xff]
    %v198 = vld [vmem:[%s10 + $0x18] sm:$0xff]
    %v199 = vld [vmem:[%s11] sm:$0xff]
    %v200 = vld [vmem:[%s11 + $0x8] sm:$0xff]
    %v201 = vld [vmem:[%s11 + $0x10] sm:$0xff]
    %v202 = vld [vmem:[%s11 + $0x18] sm:$0xff]
    %v203 = vld [vmem:[%s11 + $0x20] sm:$0xff]
    %v204 = vld [vmem:[%s11 + $0x28] sm:$0xff]
    %v205 = vld [vmem:[%s11 + $0x30] sm:$0xff]
    %v206 = vld [vmem:[%s11 + $0x38] sm:$0xff]
    %v207 = vmul.f32 %v169, %v169
    %v208 = vmul.f32 %v170, %v170
    %vm209 = vcmask 261120
    %v210 = vsel %vm209, %v207, 0.0
    %211 = vadd.xlane.f32.xlu0 %v210
    %v212 = vpop.xlane.xlu0 %211
    %v213 = vsel %vm209, %v208, 0.0
    %214 = vadd.xlane.f32.xlu0 %v213
    %v215 = vpop.xlane.xlu0 %214
    %v216 = vrcp.pop 32.0
    %v217 = vmul.f32 %v212, %v216
    %v218 = vmul.f32 %v215, %v216
    %v219 = vadd.f32 %v217, 1e-05
    %v220 = vadd.f32 %v218, 1e-05
    %v221 = vrsqrt.pop %v219
    %v222 = vrsqrt.pop %v220
    %v223 = vmul.f32 %v169, %v221
    %v224 = vmul.f32 %v170, %v222
    %v226 = vlaneseq
    %v227 = vshrl.u32 %v226, 7
    %v228 = vsub.s32 0, %v227
    %v229 = vrot.slane %v181, %v228
    %v231 = vmul.f32 %v223, %v229
    %v232 = vmul.f32 %v224, %v229
    %v234 = vsel %vm209, %v231, 0
    %v237 = vsel %vm209, %v232, 0
    %239 = vmatprep.subr.mxu0 0.0
    %240 = vmatpush1.msra.mxu0 0.0
    %241 = vmatprep.subr.mxu0 0.0
    %242 = vmatpush1.msra.mxu0 0.0
    %243 = vmatprep.subr.mxu0 0.0
    %244 = vmatpush1.msra.mxu0 0.0
    %245 = vmatprep.subr.mxu0 0.0
    %246 = vmatpush1.msra.mxu0 0.0
    %247 = vmatprep.subr.mxu0 0.0
    %248 = vmatpush1.msra.mxu0 0.0
    %249 = vmatprep.subr.mxu0 0.0
    %250 = vmatpush1.msra.mxu0 0.0
    %251 = vmatprep.subr.mxu0 0.0
    %252 = vmatpush1.msra.mxu0 0.0
    %253 = vmatprep.subr.mxu0 0.0
    %254 = vmatpush1.msra.mxu0 0.0
    %255 = vmatprep.subr.mxu0 0.0
    %256 = vmatpush1.msra.mxu0 0.0
    %257 = vmatprep.subr.mxu0 0.0
    %258 = vmatpush1.msra.mxu0 0.0
    %259 = vmatprep.subr.mxu0 0.0
    %260 = vmatpush1.msra.mxu0 0.0
    %261 = vmatprep.subr.mxu0 0.0
    %262 = vmatpush1.msra.mxu0 0.0
    %263 = vmatprep.subr.mxu0 %v190
    %264 = vmatpush1.msra.mxu0 %v189
    %265 = vmatprep.subr.mxu0 %v188
    %266 = vmatpush1.msra.mxu0 %v187
    %267 = vmatprep.subr.mxu0 %v186
    %268 = vmatpush1.msra.mxu0 %v185
    %269 = vmatprep.subr.mxu0 %v184
    %270 = vmatpush1.msra.mxu0 %v183
    %271 = vmatprep.subr.mxu0 0.0
    %272 = vmatpush2.msra.mxu0 0.0
    %273 = vmatprep.subr.mxu0 0.0
    %274 = vmatpush2.msra.mxu0 0.0
    %275 = vmatprep.subr.mxu0 0.0
    %276 = vmatpush2.msra.mxu0 0.0
    %277 = vmatprep.subr.mxu0 0.0
    %278 = vmatpush2.msra.mxu0 0.0
    %279 = vmatprep.subr.mxu0 0.0
    %280 = vmatpush2.msra.mxu0 0.0
    %281 = vmatprep.subr.mxu0 0.0
    %282 = vmatpush2.msra.mxu0 0.0
    %283 = vmatprep.subr.mxu0 0.0
    %284 = vmatpush2.msra.mxu0 0.0
    %285 = vmatprep.subr.mxu0 0.0
    %286 = vmatpush2.msra.mxu0 0.0
    %287 = vmatprep.subr.mxu0 0.0
    %288 = vmatpush2.msra.mxu0 0.0
    %289 = vmatprep.subr.mxu0 0.0
    %290 = vmatpush2.msra.mxu0 0.0
    %291 = vmatprep.subr.mxu0 0.0
    %292 = vmatpush2.msra.mxu0 0.0
    %293 = vmatprep.subr.mxu0 0.0
    %294 = vmatpush2.msra.mxu0 0.0
    %295 = vmatprep.subr.mxu0 0.0
    %296 = vmatpush2.msra.mxu0 0.0
    %297 = vmatprep.subr.mxu0 0.0
    %298 = vmatpush2.msra.mxu0 0.0
    %299 = vmatprep.subr.mxu0 0.0
    %300 = vmatpush2.msra.mxu0 0.0
    %301 = vmatprep.subr.mxu0 0.0
    %302 = vmatpush2.msra.mxu0 0.0
    %303 = vmatprep.mubr.f32.mxu0 0.0
    %304 = vmatmul.mubr.f32.gmra.mxu0 %v234
    %v305 = vpop.f32.mrf.mxu0
    %v306 = vadd.f32 0.0, %v305
    %v307 = vpop.f32.mrf.mxu0
    %v308 = vadd.f32 0.0, %v307
    %309 = vmatprep.mubr.f32.mxu0 0.0
    %310 = vmatmul.mubr.f32.gmra.mxu0 %v237
    %v311 = vpop.f32.mrf.mxu0
    %v312 = vadd.f32 0.0, %v311
    %v313 = vpop.f32.mrf.mxu0
    %v314 = vadd.f32 0.0, %v313
    %315 = vdwg.mxu0
    %v316 = vmul.f32 %v306, %v173
    %v317 = vmul.f32 %v312, %v174
    %320 = vrot.lane.b32.xlu0 %v175, 96
    %v321 = vpop.permute.xlu0 %320
    %322 = vrot.lane.b32.xlu0 %v176, 96
    %v323 = vpop.permute.xlu0 %322
    %v326 = vmul.f32 %v306, %v321
    %v327 = vmul.f32 %v312, %v323
    %330 = vrot.lane.b32.xlu0 %v326, 32
    %v331 = vpop.permute.xlu0 %330
    %332 = vrot.lane.b32.xlu0 %v327, 32
    %v333 = vpop.permute.xlu0 %332
    %v336 = vadd.f32 %v316, %v331
    %v337 = vadd.f32 %v317, %v333
    %340 = vrot.lane.b32.xlu0 %v173, 32
    %v341 = vpop.permute.xlu0 %340
    %342 = vrot.lane.b32.xlu0 %v174, 32
    %v343 = vpop.permute.xlu0 %342
    %v346 = vmul.f32 %v306, %v341
    %v347 = vmul.f32 %v312, %v343
    %v348 = vmul.f32 %v308, %v175
    %v349 = vmul.f32 %v314, %v176
    %352 = vrot.lane.b32.xlu0 %v348, 32
    %v353 = vpop.permute.xlu0 %352
    %354 = vrot.lane.b32.xlu0 %v349, 32
    %v355 = vpop.permute.xlu0 %354
    %v358 = vadd.f32 %v346, %v353
    %v359 = vadd.f32 %v347, %v355
    %362 = vrot.lane.b32.xlu0 %v336, 120
    %v363 = vpop.permute.xlu0 %362
    %364 = vrot.lane.b32.xlu0 %v337, 120
    %v365 = vpop.permute.xlu0 %364
    %366 = vrot.lane.b32.xlu0 %v336, 112
    %v367 = vpop.permute.xlu0 %366
    %368 = vrot.lane.b32.xlu0 %v337, 112
    %v369 = vpop.permute.xlu0 %368
    %370 = vrot.lane.b32.xlu0 %v336, 104
    %v371 = vpop.permute.xlu0 %370
    %372 = vrot.lane.b32.xlu0 %v337, 104
    %v373 = vpop.permute.xlu0 %372
    %376 = vrot.lane.b32.xlu0 %v358, 120
    %v377 = vpop.permute.xlu0 %376
    %378 = vrot.lane.b32.xlu0 %v359, 120
    %v379 = vpop.permute.xlu0 %378
    %380 = vrot.lane.b32.xlu0 %v358, 112
    %v381 = vpop.permute.xlu0 %380
    %382 = vrot.lane.b32.xlu0 %v359, 112
    %v383 = vpop.permute.xlu0 %382
    %384 = vrot.lane.b32.xlu0 %v358, 104
    %v385 = vpop.permute.xlu0 %384
    %386 = vrot.lane.b32.xlu0 %v359, 104
    %v387 = vpop.permute.xlu0 %386
    %390 = vrot.lane.b32.xlu0 %v306, 120
    %v391 = vpop.permute.xlu0 %390
    %392 = vrot.lane.b32.xlu0 %v312, 120
    %v393 = vpop.permute.xlu0 %392
    %394 = vrot.lane.b32.xlu0 %v306, 112
    %v395 = vpop.permute.xlu0 %394
    %396 = vrot.lane.b32.xlu0 %v312, 112
    %v397 = vpop.permute.xlu0 %396
    %398 = vrot.lane.b32.xlu0 %v306, 104
    %v399 = vpop.permute.xlu0 %398
    %400 = vrot.lane.b32.xlu0 %v312, 104
    %v401 = vpop.permute.xlu0 %400
    %402 = vrot.lane.b32.xlu0 %v358, 96
    %v403 = vpop.permute.xlu0 %402
    %vm404 = vcmask 64512
    %v405 = vsel %vm404, %v336, 0
    %v407 = vsel %vm404, %v403, 0
    %409 = vmatprep.subr.mxu0 0.0
    %410 = vmatpush1.xpose.msra.mxu0 0.0
    %411 = vmatprep.subr.mxu0 0.0
    %412 = vmatpush1.xpose.msra.mxu0 0.0
    %413 = vmatprep.subr.mxu0 0.0
    %414 = vmatpush1.xpose.msra.mxu0 0.0
    %415 = vmatprep.subr.mxu0 0.0
    %416 = vmatpush1.xpose.msra.mxu0 0.0
    %417 = vmatprep.subr.mxu0 0.0
    %418 = vmatpush1.xpose.msra.mxu0 0.0
    %419 = vmatprep.subr.mxu0 0.0
    %420 = vmatpush1.xpose.msra.mxu0 0.0
    %421 = vmatprep.subr.mxu0 0.0
    %422 = vmatpush1.xpose.msra.mxu0 0.0
    %423 = vmatprep.subr.mxu0 0.0
    %424 = vmatpush1.xpose.msra.mxu0 0.0
    %425 = vmatprep.subr.mxu0 0.0
    %426 = vmatpush1.xpose.msra.mxu0 0.0
    %427 = vmatprep.subr.mxu0 0.0
    %428 = vmatpush1.xpose.msra.mxu0 0.0
    %429 = vmatprep.subr.mxu0 0.0
    %430 = vmatpush1.xpose.msra.mxu0 0.0
    %431 = vmatprep.subr.mxu0 0.0
    %432 = vmatpush1.xpose.msra.mxu0 0.0
    %433 = vmatprep.subr.mxu0 0.0
    %434 = vmatpush1.xpose.msra.mxu0 0.0
    %435 = vmatprep.subr.mxu0 0.0
    %436 = vmatpush1.xpose.msra.mxu0 0.0
    %437 = vmatprep.subr.mxu0 0.0
    %438 = vmatpush1.xpose.msra.mxu0 0.0
    %439 = vmatprep.subr.mxu0 0.0
    %440 = vmatpush1.xpose.msra.mxu0 %v407
    %441 = vmatprep.subr.mxu0 0.0
    %442 = vmatpush2.xpose.msra.mxu0 0.0
    %443 = vmatprep.subr.mxu0 0.0
    %444 = vmatpush2.xpose.msra.mxu0 0.0
    %445 = vmatprep.subr.mxu0 0.0
    %446 = vmatpush2.xpose.msra.mxu0 0.0
    %447 = vmatprep.subr.mxu0 0.0
    %448 = vmatpush2.xpose.msra.mxu0 0.0
    %449 = vmatprep.subr.mxu0 0.0
    %450 = vmatpush2.xpose.msra.mxu0 0.0
    %451 = vmatprep.subr.mxu0 0.0
    %452 = vmatpush2.xpose.msra.mxu0 0.0
    %453 = vmatprep.subr.mxu0 0.0
    %454 = vmatpush2.xpose.msra.mxu0 0.0
    %455 = vmatprep.subr.mxu0 0.0
    %456 = vmatpush2.xpose.msra.mxu0 0.0
    %457 = vmatprep.subr.mxu0 0.0
    %458 = vmatpush2.xpose.msra.mxu0 0.0
    %459 = vmatprep.subr.mxu0 0.0
    %460 = vmatpush2.xpose.msra.mxu0 0.0
    %461 = vmatprep.subr.mxu0 0.0
    %462 = vmatpush2.xpose.msra.mxu0 0.0
    %463 = vmatprep.subr.mxu0 0.0
    %464 = vmatpush2.xpose.msra.mxu0 0.0
    %465 = vmatprep.subr.mxu0 0.0
    %466 = vmatpush2.xpose.msra.mxu0 0.0
    %467 = vmatprep.subr.mxu0 0.0
    %468 = vmatpush2.xpose.msra.mxu0 0.0
    %469 = vmatprep.subr.mxu0 0.0
    %470 = vmatpush2.xpose.msra.mxu0 0.0
    %471 = vmatprep.subr.mxu0 0.0
    %472 = vmatpush2.xpose.msra.mxu0 0.0
    %473 = vmatprep.mubr.f32.mxu0 0.0
    %474 = vmatmul.mubr.f32.gmra.mxu0 %v405
    %v475 = vpop.f32.mrf.mxu0
    %v476 = vadd.f32 0.0, %v475
    %v477 = vpop.f32.mrf.mxu0
    %478 = vdwg.mxu0
    %479 = vrot.lane.b32.xlu0 %v359, 96
    %v480 = vpop.permute.xlu0 %479
    %v481 = vsel %vm404, %v337, 0
    %v483 = vsel %vm404, %v480, 0
    %485 = vmatprep.subr.mxu0 0.0
    %486 = vmatpush1.xpose.msra.mxu0 0.0
    %487 = vmatprep.subr.mxu0 0.0
    %488 = vmatpush1.xpose.msra.mxu0 0.0
    %489 = vmatprep.subr.mxu0 0.0
    %490 = vmatpush1.xpose.msra.mxu0 0.0
    %491 = vmatprep.subr.mxu0 0.0
    %492 = vmatpush1.xpose.msra.mxu0 0.0
    %493 = vmatprep.subr.mxu0 0.0
    %494 = vmatpush1.xpose.msra.mxu0 0.0
    %495 = vmatprep.subr.mxu0 0.0
    %496 = vmatpush1.xpose.msra.mxu0 0.0
    %497 = vmatprep.subr.mxu0 0.0
    %498 = vmatpush1.xpose.msra.mxu0 0.0
    %499 = vmatprep.subr.mxu0 0.0
    %500 = vmatpush1.xpose.msra.mxu0 0.0
    %501 = vmatprep.subr.mxu0 0.0
    %502 = vmatpush1.xpose.msra.mxu0 0.0
    %503 = vmatprep.subr.mxu0 0.0
    %504 = vmatpush1.xpose.msra.mxu0 0.0
    %505 = vmatprep.subr.mxu0 0.0
    %506 = vmatpush1.xpose.msra.mxu0 0.0
    %507 = vmatprep.subr.mxu0 0.0
    %508 = vmatpush1.xpose.msra.mxu0 0.0
    %509 = vmatprep.subr.mxu0 0.0
    %510 = vmatpush1.xpose.msra.mxu0 0.0
    %511 = vmatprep.subr.mxu0 0.0
    %512 = vmatpush1.xpose.msra.mxu0 0.0
    %513 = vmatprep.subr.mxu0 0.0
    %514 = vmatpush1.xpose.msra.mxu0 0.0
    %515 = vmatprep.subr.mxu0 0.0
    %516 = vmatpush1.xpose.msra.mxu0 %v483
    %517 = vmatprep.subr.mxu0 0.0
    %518 = vmatpush2.xpose.msra.mxu0 0.0
    %519 = vmatprep.subr.mxu0 0.0
    %520 = vmatpush2.xpose.msra.mxu0 0.0
    %521 = vmatprep.subr.mxu0 0.0
    %522 = vmatpush2.xpose.msra.mxu0 0.0
    %523 = vmatprep.subr.mxu0 0.0
    %524 = vmatpush2.xpose.msra.mxu0 0.0
    %525 = vmatprep.subr.mxu0 0.0
    %526 = vmatpush2.xpose.msra.mxu0 0.0
    %527 = vmatprep.subr.mxu0 0.0
    %528 = vmatpush2.xpose.msra.mxu0 0.0
    %529 = vmatprep.subr.mxu0 0.0
    %530 = vmatpush2.xpose.msra.mxu0 0.0
    %531 = vmatprep.subr.mxu0 0.0
    %532 = vmatpush2.xpose.msra.mxu0 0.0
    %533 = vmatprep.subr.mxu0 0.0
    %534 = vmatpush2.xpose.msra.mxu0 0.0
    %535 = vmatprep.subr.mxu0 0.0
    %536 = vmatpush2.xpose.msra.mxu0 0.0
    %537 = vmatprep.subr.mxu0 0.0
    %538 = vmatpush2.xpose.msra.mxu0 0.0
    %539 = vmatprep.subr.mxu0 0.0
    %540 = vmatpush2.xpose.msra.mxu0 0.0
    %541 = vmatprep.subr.mxu0 0.0
    %542 = vmatpush2.xpose.msra.mxu0 0.0
    %543 = vmatprep.subr.mxu0 0.0
    %544 = vmatpush2.xpose.msra.mxu0 0.0
    %545 = vmatprep.subr.mxu0 0.0
    %546 = vmatpush2.xpose.msra.mxu0 0.0
    %547 = vmatprep.subr.mxu0 0.0
    %548 = vmatpush2.xpose.msra.mxu0 0.0
    %549 = vmatprep.mubr.f32.mxu0 0.0
    %550 = vmatmul.mubr.f32.gmra.mxu0 %v481
    %v551 = vpop.f32.mrf.mxu0
    %v552 = vadd.f32 0.0, %v551
    %v553 = vpop.f32.mrf.mxu0
    %554 = vdwg.mxu0
    %555 = vrot.lane.b32.xlu0 %v377, 96
    %v556 = vpop.permute.xlu0 %555
    %v557 = vsel %vm404, %v363, 0
    %v559 = vsel %vm404, %v556, 0
    %561 = vmatprep.subr.mxu0 0.0
    %562 = vmatpush1.xpose.msra.mxu0 0.0
    %563 = vmatprep.subr.mxu0 0.0
    %564 = vmatpush1.xpose.msra.mxu0 0.0
    %565 = vmatprep.subr.mxu0 0.0
    %566 = vmatpush1.xpose.msra.mxu0 0.0
    %567 = vmatprep.subr.mxu0 0.0
    %568 = vmatpush1.xpose.msra.mxu0 0.0
    %569 = vmatprep.subr.mxu0 0.0
    %570 = vmatpush1.xpose.msra.mxu0 0.0
    %571 = vmatprep.subr.mxu0 0.0
    %572 = vmatpush1.xpose.msra.mxu0 0.0
    %573 = vmatprep.subr.mxu0 0.0
    %574 = vmatpush1.xpose.msra.mxu0 0.0
    %575 = vmatprep.subr.mxu0 0.0
    %576 = vmatpush1.xpose.msra.mxu0 0.0
    %577 = vmatprep.subr.mxu0 0.0
    %578 = vmatpush1.xpose.msra.mxu0 0.0
    %579 = vmatprep.subr.mxu0 0.0
    %580 = vmatpush1.xpose.msra.mxu0 0.0
    %581 = vmatprep.subr.mxu0 0.0
    %582 = vmatpush1.xpose.msra.mxu0 0.0
    %583 = vmatprep.subr.mxu0 0.0
    %584 = vmatpush1.xpose.msra.mxu0 0.0
    %585 = vmatprep.subr.mxu0 0.0
    %586 = vmatpush1.xpose.msra.mxu0 0.0
    %587 = vmatprep.subr.mxu0 0.0
    %588 = vmatpush1.xpose.msra.mxu0 0.0
    %589 = vmatprep.subr.mxu0 0.0
    %590 = vmatpush1.xpose.msra.mxu0 0.0
    %591 = vmatprep.subr.mxu0 0.0
    %592 = vmatpush1.xpose.msra.mxu0 %v559
    %593 = vmatprep.subr.mxu0 0.0
    %594 = vmatpush2.xpose.msra.mxu0 0.0
    %595 = vmatprep.subr.mxu0 0.0
    %596 = vmatpush2.xpose.msra.mxu0 0.0
    %597 = vmatprep.subr.mxu0 0.0
    %598 = vmatpush2.xpose.msra.mxu0 0.0
    %599 = vmatprep.subr.mxu0 0.0
    %600 = vmatpush2.xpose.msra.mxu0 0.0
    %601 = vmatprep.subr.mxu0 0.0
    %602 = vmatpush2.xpose.msra.mxu0 0.0
    %603 = vmatprep.subr.mxu0 0.0
    %604 = vmatpush2.xpose.msra.mxu0 0.0
    %605 = vmatprep.subr.mxu0 0.0
    %606 = vmatpush2.xpose.msra.mxu0 0.0
    %607 = vmatprep.subr.mxu0 0.0
    %608 = vmatpush2.xpose.msra.mxu0 0.0
    %609 = vmatprep.subr.mxu0 0.0
    %610 = vmatpush2.xpose.msra.mxu0 0.0
    %611 = vmatprep.subr.mxu0 0.0
    %612 = vmatpush2.xpose.msra.mxu0 0.0
    %613 = vmatprep.subr.mxu0 0.0
    %614 = vmatpush2.xpose.msra.mxu0 0.0
    %615 = vmatprep.subr.mxu0 0.0
    %616 = vmatpush2.xpose.msra.mxu0 0.0
    %617 = vmatprep.subr.mxu0 0.0
    %618 = vmatpush2.xpose.msra.mxu0 0.0
    %619 = vmatprep.subr.mxu0 0.0
    %620 = vmatpush2.xpose.msra.mxu0 0.0
    %621 = vmatprep.subr.mxu0 0.0
    %622 = vmatpush2.xpose.msra.mxu0 0.0
    %623 = vmatprep.subr.mxu0 0.0
    %624 = vmatpush2.xpose.msra.mxu0 0.0
    %625 = vmatprep.mubr.f32.mxu0 0.0
    %626 = vmatmul.mubr.f32.gmra.mxu0 %v557
    %v627 = vpop.f32.mrf.mxu0
    %v628 = vadd.f32 0.0, %v627
    %v629 = vpop.f32.mrf.mxu0
    %630 = vdwg.mxu0
    %631 = vrot.lane.b32.xlu0 %v379, 96
    %v632 = vpop.permute.xlu0 %631
    %v633 = vsel %vm404, %v365, 0
    %v635 = vsel %vm404, %v632, 0
    %637 = vmatprep.subr.mxu0 0.0
    %638 = vmatpush1.xpose.msra.mxu0 0.0
    %639 = vmatprep.subr.mxu0 0.0
    %640 = vmatpush1.xpose.msra.mxu0 0.0
    %641 = vmatprep.subr.mxu0 0.0
    %642 = vmatpush1.xpose.msra.mxu0 0.0
    %643 = vmatprep.subr.mxu0 0.0
    %644 = vmatpush1.xpose.msra.mxu0 0.0
    %645 = vmatprep.subr.mxu0 0.0
    %646 = vmatpush1.xpose.msra.mxu0 0.0
    %647 = vmatprep.subr.mxu0 0.0
    %648 = vmatpush1.xpose.msra.mxu0 0.0
    %649 = vmatprep.subr.mxu0 0.0
    %650 = vmatpush1.xpose.msra.mxu0 0.0
    %651 = vmatprep.subr.mxu0 0.0
    %652 = vmatpush1.xpose.msra.mxu0 0.0
    %653 = vmatprep.subr.mxu0 0.0
    %654 = vmatpush1.xpose.msra.mxu0 0.0
    %655 = vmatprep.subr.mxu0 0.0
    %656 = vmatpush1.xpose.msra.mxu0 0.0
    %657 = vmatprep.subr.mxu0 0.0
    %658 = vmatpush1.xpose.msra.mxu0 0.0
    %659 = vmatprep.subr.mxu0 0.0
    %660 = vmatpush1.xpose.msra.mxu0 0.0
    %661 = vmatprep.subr.mxu0 0.0
    %662 = vmatpush1.xpose.msra.mxu0 0.0
    %663 = vmatprep.subr.mxu0 0.0
    %664 = vmatpush1.xpose.msra.mxu0 0.0
    %665 = vmatprep.subr.mxu0 0.0
    %666 = vmatpush1.xpose.msra.mxu0 0.0
    %667 = vmatprep.subr.mxu0 0.0
    %668 = vmatpush1.xpose.msra.mxu0 %v635
    %669 = vmatprep.subr.mxu0 0.0
    %670 = vmatpush2.xpose.msra.mxu0 0.0
    %671 = vmatprep.subr.mxu0 0.0
    %672 = vmatpush2.xpose.msra.mxu0 0.0
    %673 = vmatprep.subr.mxu0 0.0
    %674 = vmatpush2.xpose.msra.mxu0 0.0
    %675 = vmatprep.subr.mxu0 0.0
    %676 = vmatpush2.xpose.msra.mxu0 0.0
    %677 = vmatprep.subr.mxu0 0.0
    %678 = vmatpush2.xpose.msra.mxu0 0.0
    %679 = vmatprep.subr.mxu0 0.0
    %680 = vmatpush2.xpose.msra.mxu0 0.0
    %681 = vmatprep.subr.mxu0 0.0
    %682 = vmatpush2.xpose.msra.mxu0 0.0
    %683 = vmatprep.subr.mxu0 0.0
    %684 = vmatpush2.xpose.msra.mxu0 0.0
    %685 = vmatprep.subr.mxu0 0.0
    %686 = vmatpush2.xpose.msra.mxu0 0.0
    %687 = vmatprep.subr.mxu0 0.0
    %688 = vmatpush2.xpose.msra.mxu0 0.0
    %689 = vmatprep.subr.mxu0 0.0
    %690 = vmatpush2.xpose.msra.mxu0 0.0
    %691 = vmatprep.subr.mxu0 0.0
    %692 = vmatpush2.xpose.msra.mxu0 0.0
    %693 = vmatprep.subr.mxu0 0.0
    %694 = vmatpush2.xpose.msra.mxu0 0.0
    %695 = vmatprep.subr.mxu0 0.0
    %696 = vmatpush2.xpose.msra.mxu0 0.0
    %697 = vmatprep.subr.mxu0 0.0
    %698 = vmatpush2.xpose.msra.mxu0 0.0
    %699 = vmatprep.subr.mxu0 0.0
    %700 = vmatpush2.xpose.msra.mxu0 0.0
    %701 = vmatprep.mubr.f32.mxu0 0.0
    %702 = vmatmul.mubr.f32.gmra.mxu0 %v633
    %v703 = vpop.f32.mrf.mxu0
    %v704 = vadd.f32 0.0, %v703
    %v705 = vpop.f32.mrf.mxu0
    %706 = vdwg.mxu0
    %707 = vrot.lane.b32.xlu0 %v381, 96
    %v708 = vpop.permute.xlu0 %707
    %v709 = vsel %vm404, %v367, 0
    %v711 = vsel %vm404, %v708, 0
    %713 = vmatprep.subr.mxu0 0.0
    %714 = vmatpush1.xpose.msra.mxu0 0.0
    %715 = vmatprep.subr.mxu0 0.0
    %716 = vmatpush1.xpose.msra.mxu0 0.0
    %717 = vmatprep.subr.mxu0 0.0
    %718 = vmatpush1.xpose.msra.mxu0 0.0
    %719 = vmatprep.subr.mxu0 0.0
    %720 = vmatpush1.xpose.msra.mxu0 0.0
    %721 = vmatprep.subr.mxu0 0.0
    %722 = vmatpush1.xpose.msra.mxu0 0.0
    %723 = vmatprep.subr.mxu0 0.0
    %724 = vmatpush1.xpose.msra.mxu0 0.0
    %725 = vmatprep.subr.mxu0 0.0
    %726 = vmatpush1.xpose.msra.mxu0 0.0
    %727 = vmatprep.subr.mxu0 0.0
    %728 = vmatpush1.xpose.msra.mxu0 0.0
    %729 = vmatprep.subr.mxu0 0.0
    %730 = vmatpush1.xpose.msra.mxu0 0.0
    %731 = vmatprep.subr.mxu0 0.0
    %732 = vmatpush1.xpose.msra.mxu0 0.0
    %733 = vmatprep.subr.mxu0 0.0
    %734 = vmatpush1.xpose.msra.mxu0 0.0
    %735 = vmatprep.subr.mxu0 0.0
    %736 = vmatpush1.xpose.msra.mxu0 0.0
    %737 = vmatprep.subr.mxu0 0.0
    %738 = vmatpush1.xpose.msra.mxu0 0.0
    %739 = vmatprep.subr.mxu0 0.0
    %740 = vmatpush1.xpose.msra.mxu0 0.0
    %741 = vmatprep.subr.mxu0 0.0
    %742 = vmatpush1.xpose.msra.mxu0 0.0
    %743 = vmatprep.subr.mxu0 0.0
    %744 = vmatpush1.xpose.msra.mxu0 %v711
    %745 = vmatprep.subr.mxu0 0.0
    %746 = vmatpush2.xpose.msra.mxu0 0.0
    %747 = vmatprep.subr.mxu0 0.0
    %748 = vmatpush2.xpose.msra.mxu0 0.0
    %749 = vmatprep.subr.mxu0 0.0
    %750 = vmatpush2.xpose.msra.mxu0 0.0
    %751 = vmatprep.subr.mxu0 0.0
    %752 = vmatpush2.xpose.msra.mxu0 0.0
    %753 = vmatprep.subr.mxu0 0.0
    %754 = vmatpush2.xpose.msra.mxu0 0.0
    %755 = vmatprep.subr.mxu0 0.0
    %756 = vmatpush2.xpose.msra.mxu0 0.0
    %757 = vmatprep.subr.mxu0 0.0
    %758 = vmatpush2.xpose.msra.mxu0 0.0
    %759 = vmatprep.subr.mxu0 0.0
    %760 = vmatpush2.xpose.msra.mxu0 0.0
    %761 = vmatprep.subr.mxu0 0.0
    %762 = vmatpush2.xpose.msra.mxu0 0.0
    %763 = vmatprep.subr.mxu0 0.0
    %764 = vmatpush2.xpose.msra.mxu0 0.0
    %765 = vmatprep.subr.mxu0 0.0
    %766 = vmatpush2.xpose.msra.mxu0 0.0
    %767 = vmatprep.subr.mxu0 0.0
    %768 = vmatpush2.xpose.msra.mxu0 0.0
    %769 = vmatprep.subr.mxu0 0.0
    %770 = vmatpush2.xpose.msra.mxu0 0.0
    %771 = vmatprep.subr.mxu0 0.0
    %772 = vmatpush2.xpose.msra.mxu0 0.0
    %773 = vmatprep.subr.mxu0 0.0
    %774 = vmatpush2.xpose.msra.mxu0 0.0
    %775 = vmatprep.subr.mxu0 0.0
    %776 = vmatpush2.xpose.msra.mxu0 0.0
    %777 = vmatprep.mubr.f32.mxu0 0.0
    %778 = vmatmul.mubr.f32.gmra.mxu0 %v709
    %v779 = vpop.f32.mrf.mxu0
    %v780 = vadd.f32 0.0, %v779
    %v781 = vpop.f32.mrf.mxu0
    %782 = vdwg.mxu0
    %783 = vrot.lane.b32.xlu0 %v383, 96
    %v784 = vpop.permute.xlu0 %783
    %v785 = vsel %vm404, %v369, 0
    %v787 = vsel %vm404, %v784, 0
    %789 = vmatprep.subr.mxu0 0.0
    %790 = vmatpush1.xpose.msra.mxu0 0.0
    %791 = vmatprep.subr.mxu0 0.0
    %792 = vmatpush1.xpose.msra.mxu0 0.0
    %793 = vmatprep.subr.mxu0 0.0
    %794 = vmatpush1.xpose.msra.mxu0 0.0
    %795 = vmatprep.subr.mxu0 0.0
    %796 = vmatpush1.xpose.msra.mxu0 0.0
    %797 = vmatprep.subr.mxu0 0.0
    %798 = vmatpush1.xpose.msra.mxu0 0.0
    %799 = vmatprep.subr.mxu0 0.0
    %800 = vmatpush1.xpose.msra.mxu0 0.0
    %801 = vmatprep.subr.mxu0 0.0
    %802 = vmatpush1.xpose.msra.mxu0 0.0
    %803 = vmatprep.subr.mxu0 0.0
    %804 = vmatpush1.xpose.msra.mxu0 0.0
    %805 = vmatprep.subr.mxu0 0.0
    %806 = vmatpush1.xpose.msra.mxu0 0.0
    %807 = vmatprep.subr.mxu0 0.0
    %808 = vmatpush1.xpose.msra.mxu0 0.0
    %809 = vmatprep.subr.mxu0 0.0
    %810 = vmatpush1.xpose.msra.mxu0 0.0
    %811 = vmatprep.subr.mxu0 0.0
    %812 = vmatpush1.xpose.msra.mxu0 0.0
    %813 = vmatprep.subr.mxu0 0.0
    %814 = vmatpush1.xpose.msra.mxu0 0.0
    %815 = vmatprep.subr.mxu0 0.0
    %816 = vmatpush1.xpose.msra.mxu0 0.0
    %817 = vmatprep.subr.mxu0 0.0
    %818 = vmatpush1.xpose.msra.mxu0 0.0
    %819 = vmatprep.subr.mxu0 0.0
    %820 = vmatpush1.xpose.msra.mxu0 %v787
    %821 = vmatprep.subr.mxu0 0.0
    %822 = vmatpush2.xpose.msra.mxu0 0.0
    %823 = vmatprep.subr.mxu0 0.0
    %824 = vmatpush2.xpose.msra.mxu0 0.0
    %825 = vmatprep.subr.mxu0 0.0
    %826 = vmatpush2.xpose.msra.mxu0 0.0
    %827 = vmatprep.subr.mxu0 0.0
    %828 = vmatpush2.xpose.msra.mxu0 0.0
    %829 = vmatprep.subr.mxu0 0.0
    %830 = vmatpush2.xpose.msra.mxu0 0.0
    %831 = vmatprep.subr.mxu0 0.0
    %832 = vmatpush2.xpose.msra.mxu0 0.0
    %833 = vmatprep.subr.mxu0 0.0
    %834 = vmatpush2.xpose.msra.mxu0 0.0
    %835 = vmatprep.subr.mxu0 0.0
    %836 = vmatpush2.xpose.msra.mxu0 0.0
    %837 = vmatprep.subr.mxu0 0.0
    %838 = vmatpush2.xpose.msra.mxu0 0.0
    %839 = vmatprep.subr.mxu0 0.0
    %840 = vmatpush2.xpose.msra.mxu0 0.0
    %841 = vmatprep.subr.mxu0 0.0
    %842 = vmatpush2.xpose.msra.mxu0 0.0
    %843 = vmatprep.subr.mxu0 0.0
    %844 = vmatpush2.xpose.msra.mxu0 0.0
    %845 = vmatprep.subr.mxu0 0.0
    %846 = vmatpush2.xpose.msra.mxu0 0.0
    %847 = vmatprep.subr.mxu0 0.0
    %848 = vmatpush2.xpose.msra.mxu0 0.0
    %849 = vmatprep.subr.mxu0 0.0
    %850 = vmatpush2.xpose.msra.mxu0 0.0
    %851 = vmatprep.subr.mxu0 0.0
    %852 = vmatpush2.xpose.msra.mxu0 0.0
    %853 = vmatprep.mubr.f32.mxu0 0.0
    %854 = vmatmul.mubr.f32.gmra.mxu0 %v785
    %v855 = vpop.f32.mrf.mxu0
    %v856 = vadd.f32 0.0, %v855
    %v857 = vpop.f32.mrf.mxu0
    %858 = vdwg.mxu0
    %859 = vrot.lane.b32.xlu0 %v385, 96
    %v860 = vpop.permute.xlu0 %859
    %v861 = vsel %vm404, %v371, 0
    %v863 = vsel %vm404, %v860, 0
    %865 = vmatprep.subr.mxu0 0.0
    %866 = vmatpush1.xpose.msra.mxu0 0.0
    %867 = vmatprep.subr.mxu0 0.0
    %868 = vmatpush1.xpose.msra.mxu0 0.0
    %869 = vmatprep.subr.mxu0 0.0
    %870 = vmatpush1.xpose.msra.mxu0 0.0
    %871 = vmatprep.subr.mxu0 0.0
    %872 = vmatpush1.xpose.msra.mxu0 0.0
    %873 = vmatprep.subr.mxu0 0.0
    %874 = vmatpush1.xpose.msra.mxu0 0.0
    %875 = vmatprep.subr.mxu0 0.0
    %876 = vmatpush1.xpose.msra.mxu0 0.0
    %877 = vmatprep.subr.mxu0 0.0
    %878 = vmatpush1.xpose.msra.mxu0 0.0
    %879 = vmatprep.subr.mxu0 0.0
    %880 = vmatpush1.xpose.msra.mxu0 0.0
    %881 = vmatprep.subr.mxu0 0.0
    %882 = vmatpush1.xpose.msra.mxu0 0.0
    %883 = vmatprep.subr.mxu0 0.0
    %884 = vmatpush1.xpose.msra.mxu0 0.0
    %885 = vmatprep.subr.mxu0 0.0
    %886 = vmatpush1.xpose.msra.mxu0 0.0
    %887 = vmatprep.subr.mxu0 0.0
    %888 = vmatpush1.xpose.msra.mxu0 0.0
    %889 = vmatprep.subr.mxu0 0.0
    %890 = vmatpush1.xpose.msra.mxu0 0.0
    %891 = vmatprep.subr.mxu0 0.0
    %892 = vmatpush1.xpose.msra.mxu0 0.0
    %893 = vmatprep.subr.mxu0 0.0
    %894 = vmatpush1.xpose.msra.mxu0 0.0
    %895 = vmatprep.subr.mxu0 0.0
    %896 = vmatpush1.xpose.msra.mxu0 %v863
    %897 = vmatprep.subr.mxu0 0.0
    %898 = vmatpush2.xpose.msra.mxu0 0.0
    %899 = vmatprep.subr.mxu0 0.0
    %900 = vmatpush2.xpose.msra.mxu0 0.0
    %901 = vmatprep.subr.mxu0 0.0
    %902 = vmatpush2.xpose.msra.mxu0 0.0
    %903 = vmatprep.subr.mxu0 0.0
    %904 = vmatpush2.xpose.msra.mxu0 0.0
    %905 = vmatprep.subr.mxu0 0.0
    %906 = vmatpush2.xpose.msra.mxu0 0.0
    %907 = vmatprep.subr.mxu0 0.0
    %908 = vmatpush2.xpose.msra.mxu0 0.0
    %909 = vmatprep.subr.mxu0 0.0
    %910 = vmatpush2.xpose.msra.mxu0 0.0
    %911 = vmatprep.subr.mxu0 0.0
    %912 = vmatpush2.xpose.msra.mxu0 0.0
    %913 = vmatprep.subr.mxu0 0.0
    %914 = vmatpush2.xpose.msra.mxu0 0.0
    %915 = vmatprep.subr.mxu0 0.0
    %916 = vmatpush2.xpose.msra.mxu0 0.0
    %917 = vmatprep.subr.mxu0 0.0
    %918 = vmatpush2.xpose.msra.mxu0 0.0
    %919 = vmatprep.subr.mxu0 0.0
    %920 = vmatpush2.xpose.msra.mxu0 0.0
    %921 = vmatprep.subr.mxu0 0.0
    %922 = vmatpush2.xpose.msra.mxu0 0.0
    %923 = vmatprep.subr.mxu0 0.0
    %924 = vmatpush2.xpose.msra.mxu0 0.0
    %925 = vmatprep.subr.mxu0 0.0
    %926 = vmatpush2.xpose.msra.mxu0 0.0
    %927 = vmatprep.subr.mxu0 0.0
    %928 = vmatpush2.xpose.msra.mxu0 0.0
    %929 = vmatprep.mubr.f32.mxu0 0.0
    %930 = vmatmul.mubr.f32.gmra.mxu0 %v861
    %v931 = vpop.f32.mrf.mxu0
    %v932 = vadd.f32 0.0, %v931
    %v933 = vpop.f32.mrf.mxu0
    %934 = vdwg.mxu0
    %935 = vrot.lane.b32.xlu0 %v387, 96
    %v936 = vpop.permute.xlu0 %935
    %v937 = vsel %vm404, %v373, 0
    %v939 = vsel %vm404, %v936, 0
    %941 = vmatprep.subr.mxu0 0.0
    %942 = vmatpush1.xpose.msra.mxu0 0.0
    %943 = vmatprep.subr.mxu0 0.0
    %944 = vmatpush1.xpose.msra.mxu0 0.0
    %945 = vmatprep.subr.mxu0 0.0
    %946 = vmatpush1.xpose.msra.mxu0 0.0
    %947 = vmatprep.subr.mxu0 0.0
    %948 = vmatpush1.xpose.msra.mxu0 0.0
    %949 = vmatprep.subr.mxu0 0.0
    %950 = vmatpush1.xpose.msra.mxu0 0.0
    %951 = vmatprep.subr.mxu0 0.0
    %952 = vmatpush1.xpose.msra.mxu0 0.0
    %953 = vmatprep.subr.mxu0 0.0
    %954 = vmatpush1.xpose.msra.mxu0 0.0
    %955 = vmatprep.subr.mxu0 0.0
    %956 = vmatpush1.xpose.msra.mxu0 0.0
    %957 = vmatprep.subr.mxu0 0.0
    %958 = vmatpush1.xpose.msra.mxu0 0.0
    %959 = vmatprep.subr.mxu0 0.0
    %960 = vmatpush1.xpose.msra.mxu0 0.0
    %961 = vmatprep.subr.mxu0 0.0
    %962 = vmatpush1.xpose.msra.mxu0 0.0
    %963 = vmatprep.subr.mxu0 0.0
    %964 = vmatpush1.xpose.msra.mxu0 0.0
    %965 = vmatprep.subr.mxu0 0.0
    %966 = vmatpush1.xpose.msra.mxu0 0.0
    %967 = vmatprep.subr.mxu0 0.0
    %968 = vmatpush1.xpose.msra.mxu0 0.0
    %969 = vmatprep.subr.mxu0 0.0
    %970 = vmatpush1.xpose.msra.mxu0 0.0
    %971 = vmatprep.subr.mxu0 0.0
    %972 = vmatpush1.xpose.msra.mxu0 %v939
    %973 = vmatprep.subr.mxu0 0.0
    %974 = vmatpush2.xpose.msra.mxu0 0.0
    %975 = vmatprep.subr.mxu0 0.0
    %976 = vmatpush2.xpose.msra.mxu0 0.0
    %977 = vmatprep.subr.mxu0 0.0
    %978 = vmatpush2.xpose.msra.mxu0 0.0
    %979 = vmatprep.subr.mxu0 0.0
    %980 = vmatpush2.xpose.msra.mxu0 0.0
    %981 = vmatprep.subr.mxu0 0.0
    %982 = vmatpush2.xpose.msra.mxu0 0.0
    %983 = vmatprep.subr.mxu0 0.0
    %984 = vmatpush2.xpose.msra.mxu0 0.0
    %985 = vmatprep.subr.mxu0 0.0
    %986 = vmatpush2.xpose.msra.mxu0 0.0
    %987 = vmatprep.subr.mxu0 0.0
    %988 = vmatpush2.xpose.msra.mxu0 0.0
    %989 = vmatprep.subr.mxu0 0.0
    %990 = vmatpush2.xpose.msra.mxu0 0.0
    %991 = vmatprep.subr.mxu0 0.0
    %992 = vmatpush2.xpose.msra.mxu0 0.0
    %993 = vmatprep.subr.mxu0 0.0
    %994 = vmatpush2.xpose.msra.mxu0 0.0
    %995 = vmatprep.subr.mxu0 0.0
    %996 = vmatpush2.xpose.msra.mxu0 0.0
    %997 = vmatprep.subr.mxu0 0.0
    %998 = vmatpush2.xpose.msra.mxu0 0.0
    %999 = vmatprep.subr.mxu0 0.0
    %1000 = vmatpush2.xpose.msra.mxu0 0.0
    %1001 = vmatprep.subr.mxu0 0.0
    %1002 = vmatpush2.xpose.msra.mxu0 0.0
    %1003 = vmatprep.subr.mxu0 0.0
    %1004 = vmatpush2.xpose.msra.mxu0 0.0
    %1005 = vmatprep.mubr.f32.mxu0 0.0
    %1006 = vmatmul.mubr.f32.gmra.mxu0 %v937
    %v1007 = vpop.f32.mrf.mxu0
    %v1008 = vadd.f32 0.0, %v1007
    %v1009 = vpop.f32.mrf.mxu0
    %1010 = vdwg.mxu0
    %v1011 = vmul.f32 %v476, 0.35355338
    %v1012 = vmul.f32 %v552, 0.35355338
    %v1013 = vmul.f32 %v628, 0.35355338
    %v1014 = vmul.f32 %v704, 0.35355338
    %v1015 = vmul.f32 %v780, 0.35355338
    %v1016 = vmul.f32 %v856, 0.35355338
    %v1017 = vmul.f32 %v932, 0.35355338
    %v1018 = vmul.f32 %v1008, 0.35355338
    %v1019 = vsel %vm404, %v1011, -inf
    %1020 = vmax.xlane.f32.xlu0 %v1019
    %v1021 = vpop.xlane.xlu0 %1020
    %v1022 = vsel %vm404, %v1012, -inf
    %1023 = vmax.xlane.f32.xlu0 %v1022
    %v1024 = vpop.xlane.xlu0 %1023
    %v1025 = vsel %vm404, %v1013, -inf
    %1026 = vmax.xlane.f32.xlu0 %v1025
    %v1027 = vpop.xlane.xlu0 %1026
    %v1028 = vsel %vm404, %v1014, -inf
    %1029 = vmax.xlane.f32.xlu0 %v1028
    %v1030 = vpop.xlane.xlu0 %1029
    %v1031 = vsel %vm404, %v1015, -inf
    %1032 = vmax.xlane.f32.xlu0 %v1031
    %v1033 = vpop.xlane.xlu0 %1032
    %v1034 = vsel %vm404, %v1016, -inf
    %1035 = vmax.xlane.f32.xlu0 %v1034
    %v1036 = vpop.xlane.xlu0 %1035
    %v1037 = vsel %vm404, %v1017, -inf
    %1038 = vmax.xlane.f32.xlu0 %v1037
    %v1039 = vpop.xlane.xlu0 %1038
    %v1040 = vsel %vm404, %v1018, -inf
    %1041 = vmax.xlane.f32.xlu0 %v1040
    %v1042 = vpop.xlane.xlu0 %1041
    %v1043 = vsub.f32 %v1011, %v1021
    %v1044 = vsub.f32 %v1012, %v1024
    %v1045 = vsub.f32 %v1013, %v1027
    %v1046 = vsub.f32 %v1014, %v1030
    %v1047 = vsub.f32 %v1015, %v1033
    %v1048 = vsub.f32 %v1016, %v1036
    %v1049 = vsub.f32 %v1017, %v1039
    %v1050 = vsub.f32 %v1018, %v1042
    %v1051 = vmul.f32 %v1043, 1.442695
    %v1052 = vpow.pop %v1051
    %v1053 = vmul.f32 %v1044, 1.442695
    %v1054 = vpow.pop %v1053
    %v1055 = vmul.f32 %v1045, 1.442695
    %v1056 = vpow.pop %v1055
    %v1057 = vmul.f32 %v1046, 1.442695
    %v1058 = vpow.pop %v1057
    %v1059 = vmul.f32 %v1047, 1.442695
    %v1060 = vpow.pop %v1059
    %v1061 = vmul.f32 %v1048, 1.442695
    %v1062 = vpow.pop %v1061
    %v1063 = vmul.f32 %v1049, 1.442695
    %v1064 = vpow.pop %v1063
    %v1065 = vmul.f32 %v1050, 1.442695
    %v1066 = vpow.pop %v1065
    %v1067 = vsel %vm404, %v1052, 0.0
    %1068 = vadd.xlane.f32.xlu0 %v1067
    %v1069 = vpop.xlane.xlu0 %1068
    %v1070 = vsel %vm404, %v1054, 0.0
    %1071 = vadd.xlane.f32.xlu0 %v1070
    %v1072 = vpop.xlane.xlu0 %1071
    %v1073 = vsel %vm404, %v1056, 0.0
    %1074 = vadd.xlane.f32.xlu0 %v1073
    %v1075 = vpop.xlane.xlu0 %1074
    %v1076 = vsel %vm404, %v1058, 0.0
    %1077 = vadd.xlane.f32.xlu0 %v1076
    %v1078 = vpop.xlane.xlu0 %1077
    %v1079 = vsel %vm404, %v1060, 0.0
    %1080 = vadd.xlane.f32.xlu0 %v1079
    %v1081 = vpop.xlane.xlu0 %1080
    %v1082 = vsel %vm404, %v1062, 0.0
    %1083 = vadd.xlane.f32.xlu0 %v1082
    %v1084 = vpop.xlane.xlu0 %1083
    %v1085 = vsel %vm404, %v1064, 0.0
    %1086 = vadd.xlane.f32.xlu0 %v1085
    %v1087 = vpop.xlane.xlu0 %1086
    %v1088 = vsel %vm404, %v1066, 0.0
    %1089 = vadd.xlane.f32.xlu0 %v1088
    %v1090 = vpop.xlane.xlu0 %1089
    %v1091 = vrcp.pop %v1069
    %v1092 = vrcp.pop %v1072
    %v1093 = vrcp.pop %v1075
    %v1094 = vrcp.pop %v1078
    %v1095 = vrcp.pop %v1081
    %v1096 = vrcp.pop %v1084
    %v1097 = vrcp.pop %v1087
    %v1098 = vrcp.pop %v1090
    %1099 = vrot.lane.b32.xlu0 %v306, 64
    %v1100 = vpop.permute.xlu0 %1099
    %v1103 = vsel %vm404, %v1052, 0
    %1105 = vmatprep.subr.mxu0 0.0
    %1106 = vmatpush1.msra.mxu0 0.0
    %1107 = vmatprep.subr.mxu0 0.0
    %1108 = vmatpush1.msra.mxu0 0.0
    %1109 = vmatprep.subr.mxu0 0.0
    %1110 = vmatpush1.msra.mxu0 0.0
    %1111 = vmatprep.subr.mxu0 0.0
    %1112 = vmatpush1.msra.mxu0 0.0
    %1113 = vmatprep.subr.mxu0 0.0
    %1114 = vmatpush1.msra.mxu0 0.0
    %1115 = vmatprep.subr.mxu0 0.0
    %1116 = vmatpush1.msra.mxu0 0.0
    %1117 = vmatprep.subr.mxu0 0.0
    %1118 = vmatpush1.msra.mxu0 0.0
    %1119 = vmatprep.subr.mxu0 0.0
    %1120 = vmatpush1.msra.mxu0 0.0
    %1121 = vmatprep.subr.mxu0 0.0
    %1122 = vmatpush1.msra.mxu0 0.0
    %1123 = vmatprep.subr.mxu0 0.0
    %1124 = vmatpush1.msra.mxu0 0.0
    %1125 = vmatprep.subr.mxu0 0.0
    %1126 = vmatpush1.msra.mxu0 0.0
    %1127 = vmatprep.subr.mxu0 0.0
    %1128 = vmatpush1.msra.mxu0 0.0
    %1129 = vmatprep.subr.mxu0 0.0
    %1130 = vmatpush1.msra.mxu0 0.0
    %1131 = vmatprep.subr.mxu0 0.0
    %1132 = vmatpush1.msra.mxu0 0.0
    %1133 = vmatprep.subr.mxu0 0.0
    %1134 = vmatpush1.msra.mxu0 0.0
    %1135 = vmatprep.subr.mxu0 0.0
    %1136 = vmatpush1.msra.mxu0 %v1100
    %1137 = vmatprep.subr.mxu0 0.0
    %1138 = vmatpush2.msra.mxu0 0.0
    %1139 = vmatprep.subr.mxu0 0.0
    %1140 = vmatpush2.msra.mxu0 0.0
    %1141 = vmatprep.subr.mxu0 0.0
    %1142 = vmatpush2.msra.mxu0 0.0
    %1143 = vmatprep.subr.mxu0 0.0
    %1144 = vmatpush2.msra.mxu0 0.0
    %1145 = vmatprep.subr.mxu0 0.0
    %1146 = vmatpush2.msra.mxu0 0.0
    %1147 = vmatprep.subr.mxu0 0.0
    %1148 = vmatpush2.msra.mxu0 0.0
    %1149 = vmatprep.subr.mxu0 0.0
    %1150 = vmatpush2.msra.mxu0 0.0
    %1151 = vmatprep.subr.mxu0 0.0
    %1152 = vmatpush2.msra.mxu0 0.0
    %1153 = vmatprep.subr.mxu0 0.0
    %1154 = vmatpush2.msra.mxu0 0.0
    %1155 = vmatprep.subr.mxu0 0.0
    %1156 = vmatpush2.msra.mxu0 0.0
    %1157 = vmatprep.subr.mxu0 0.0
    %1158 = vmatpush2.msra.mxu0 0.0
    %1159 = vmatprep.subr.mxu0 0.0
    %1160 = vmatpush2.msra.mxu0 0.0
    %1161 = vmatprep.subr.mxu0 0.0
    %1162 = vmatpush2.msra.mxu0 0.0
    %1163 = vmatprep.subr.mxu0 0.0
    %1164 = vmatpush2.msra.mxu0 0.0
    %1165 = vmatprep.subr.mxu0 0.0
    %1166 = vmatpush2.msra.mxu0 0.0
    %1167 = vmatprep.subr.mxu0 0.0
    %1168 = vmatpush2.msra.mxu0 0.0
    %1169 = vmatprep.mubr.f32.mxu0 0.0
    %1170 = vmatmul.mubr.f32.gmra.mxu0 %v1103
    %v1171 = vpop.f32.mrf.mxu0
    %v1172 = vadd.f32 0.0, %v1171
    %v1173 = vpop.f32.mrf.mxu0
    %1174 = vdwg.mxu0
    %1175 = vrot.lane.b32.xlu0 %v312, 64
    %v1176 = vpop.permute.xlu0 %1175
    %v1179 = vsel %vm404, %v1054, 0
    %1181 = vmatprep.subr.mxu0 0.0
    %1182 = vmatpush1.msra.mxu0 0.0
    %1183 = vmatprep.subr.mxu0 0.0
    %1184 = vmatpush1.msra.mxu0 0.0
    %1185 = vmatprep.subr.mxu0 0.0
    %1186 = vmatpush1.msra.mxu0 0.0
    %1187 = vmatprep.subr.mxu0 0.0
    %1188 = vmatpush1.msra.mxu0 0.0
    %1189 = vmatprep.subr.mxu0 0.0
    %1190 = vmatpush1.msra.mxu0 0.0
    %1191 = vmatprep.subr.mxu0 0.0
    %1192 = vmatpush1.msra.mxu0 0.0
    %1193 = vmatprep.subr.mxu0 0.0
    %1194 = vmatpush1.msra.mxu0 0.0
    %1195 = vmatprep.subr.mxu0 0.0
    %1196 = vmatpush1.msra.mxu0 0.0
    %1197 = vmatprep.subr.mxu0 0.0
    %1198 = vmatpush1.msra.mxu0 0.0
    %1199 = vmatprep.subr.mxu0 0.0
    %1200 = vmatpush1.msra.mxu0 0.0
    %1201 = vmatprep.subr.mxu0 0.0
    %1202 = vmatpush1.msra.mxu0 0.0
    %1203 = vmatprep.subr.mxu0 0.0
    %1204 = vmatpush1.msra.mxu0 0.0
    %1205 = vmatprep.subr.mxu0 0.0
    %1206 = vmatpush1.msra.mxu0 0.0
    %1207 = vmatprep.subr.mxu0 0.0
    %1208 = vmatpush1.msra.mxu0 0.0
    %1209 = vmatprep.subr.mxu0 0.0
    %1210 = vmatpush1.msra.mxu0 0.0
    %1211 = vmatprep.subr.mxu0 0.0
    %1212 = vmatpush1.msra.mxu0 %v1176
    %1213 = vmatprep.subr.mxu0 0.0
    %1214 = vmatpush2.msra.mxu0 0.0
    %1215 = vmatprep.subr.mxu0 0.0
    %1216 = vmatpush2.msra.mxu0 0.0
    %1217 = vmatprep.subr.mxu0 0.0
    %1218 = vmatpush2.msra.mxu0 0.0
    %1219 = vmatprep.subr.mxu0 0.0
    %1220 = vmatpush2.msra.mxu0 0.0
    %1221 = vmatprep.subr.mxu0 0.0
    %1222 = vmatpush2.msra.mxu0 0.0
    %1223 = vmatprep.subr.mxu0 0.0
    %1224 = vmatpush2.msra.mxu0 0.0
    %1225 = vmatprep.subr.mxu0 0.0
    %1226 = vmatpush2.msra.mxu0 0.0
    %1227 = vmatprep.subr.mxu0 0.0
    %1228 = vmatpush2.msra.mxu0 0.0
    %1229 = vmatprep.subr.mxu0 0.0
    %1230 = vmatpush2.msra.mxu0 0.0
    %1231 = vmatprep.subr.mxu0 0.0
    %1232 = vmatpush2.msra.mxu0 0.0
    %1233 = vmatprep.subr.mxu0 0.0
    %1234 = vmatpush2.msra.mxu0 0.0
    %1235 = vmatprep.subr.mxu0 0.0
    %1236 = vmatpush2.msra.mxu0 0.0
    %1237 = vmatprep.subr.mxu0 0.0
    %1238 = vmatpush2.msra.mxu0 0.0
    %1239 = vmatprep.subr.mxu0 0.0
    %1240 = vmatpush2.msra.mxu0 0.0
    %1241 = vmatprep.subr.mxu0 0.0
    %1242 = vmatpush2.msra.mxu0 0.0
    %1243 = vmatprep.subr.mxu0 0.0
    %1244 = vmatpush2.msra.mxu0 0.0
    %1245 = vmatprep.mubr.f32.mxu0 0.0
    %1246 = vmatmul.mubr.f32.gmra.mxu0 %v1179
    %v1247 = vpop.f32.mrf.mxu0
    %v1248 = vadd.f32 0.0, %v1247
    %v1249 = vpop.f32.mrf.mxu0
    %1250 = vdwg.mxu0
    %1251 = vrot.lane.b32.xlu0 %v391, 64
    %v1252 = vpop.permute.xlu0 %1251
    %v1255 = vsel %vm404, %v1056, 0
    %1257 = vmatprep.subr.mxu0 0.0
    %1258 = vmatpush1.msra.mxu0 0.0
    %1259 = vmatprep.subr.mxu0 0.0
    %1260 = vmatpush1.msra.mxu0 0.0
    %1261 = vmatprep.subr.mxu0 0.0
    %1262 = vmatpush1.msra.mxu0 0.0
    %1263 = vmatprep.subr.mxu0 0.0
    %1264 = vmatpush1.msra.mxu0 0.0
    %1265 = vmatprep.subr.mxu0 0.0
    %1266 = vmatpush1.msra.mxu0 0.0
    %1267 = vmatprep.subr.mxu0 0.0
    %1268 = vmatpush1.msra.mxu0 0.0
    %1269 = vmatprep.subr.mxu0 0.0
    %1270 = vmatpush1.msra.mxu0 0.0
    %1271 = vmatprep.subr.mxu0 0.0
    %1272 = vmatpush1.msra.mxu0 0.0
    %1273 = vmatprep.subr.mxu0 0.0
    %1274 = vmatpush1.msra.mxu0 0.0
    %1275 = vmatprep.subr.mxu0 0.0
    %1276 = vmatpush1.msra.mxu0 0.0
    %1277 = vmatprep.subr.mxu0 0.0
    %1278 = vmatpush1.msra.mxu0 0.0
    %1279 = vmatprep.subr.mxu0 0.0
    %1280 = vmatpush1.msra.mxu0 0.0
    %1281 = vmatprep.subr.mxu0 0.0
    %1282 = vmatpush1.msra.mxu0 0.0
    %1283 = vmatprep.subr.mxu0 0.0
    %1284 = vmatpush1.msra.mxu0 0.0
    %1285 = vmatprep.subr.mxu0 0.0
    %1286 = vmatpush1.msra.mxu0 0.0
    %1287 = vmatprep.subr.mxu0 0.0
    %1288 = vmatpush1.msra.mxu0 %v1252
    %1289 = vmatprep.subr.mxu0 0.0
    %1290 = vmatpush2.msra.mxu0 0.0
    %1291 = vmatprep.subr.mxu0 0.0
    %1292 = vmatpush2.msra.mxu0 0.0
    %1293 = vmatprep.subr.mxu0 0.0
    %1294 = vmatpush2.msra.mxu0 0.0
    %1295 = vmatprep.subr.mxu0 0.0
    %1296 = vmatpush2.msra.mxu0 0.0
    %1297 = vmatprep.subr.mxu0 0.0
    %1298 = vmatpush2.msra.mxu0 0.0
    %1299 = vmatprep.subr.mxu0 0.0
    %1300 = vmatpush2.msra.mxu0 0.0
    %1301 = vmatprep.subr.mxu0 0.0
    %1302 = vmatpush2.msra.mxu0 0.0
    %1303 = vmatprep.subr.mxu0 0.0
    %1304 = vmatpush2.msra.mxu0 0.0
    %1305 = vmatprep.subr.mxu0 0.0
    %1306 = vmatpush2.msra.mxu0 0.0
    %1307 = vmatprep.subr.mxu0 0.0
    %1308 = vmatpush2.msra.mxu0 0.0
    %1309 = vmatprep.subr.mxu0 0.0
    %1310 = vmatpush2.msra.mxu0 0.0
    %1311 = vmatprep.subr.mxu0 0.0
    %1312 = vmatpush2.msra.mxu0 0.0
    %1313 = vmatprep.subr.mxu0 0.0
    %1314 = vmatpush2.msra.mxu0 0.0
    %1315 = vmatprep.subr.mxu0 0.0
    %1316 = vmatpush2.msra.mxu0 0.0
    %1317 = vmatprep.subr.mxu0 0.0
    %1318 = vmatpush2.msra.mxu0 0.0
    %1319 = vmatprep.subr.mxu0 0.0
    %1320 = vmatpush2.msra.mxu0 0.0
    %1321 = vmatprep.mubr.f32.mxu0 0.0
    %1322 = vmatmul.mubr.f32.gmra.mxu0 %v1255
    %v1323 = vpop.f32.mrf.mxu0
    %v1324 = vadd.f32 0.0, %v1323
    %v1325 = vpop.f32.mrf.mxu0
    %1326 = vdwg.mxu0
    %1327 = vrot.lane.b32.xlu0 %v393, 64
    %v1328 = vpop.permute.xlu0 %1327
    %v1331 = vsel %vm404, %v1058, 0
    %1333 = vmatprep.subr.mxu0 0.0
    %1334 = vmatpush1.msra.mxu0 0.0
    %1335 = vmatprep.subr.mxu0 0.0
    %1336 = vmatpush1.msra.mxu0 0.0
    %1337 = vmatprep.subr.mxu0 0.0
    %1338 = vmatpush1.msra.mxu0 0.0
    %1339 = vmatprep.subr.mxu0 0.0
    %1340 = vmatpush1.msra.mxu0 0.0
    %1341 = vmatprep.subr.mxu0 0.0
    %1342 = vmatpush1.msra.mxu0 0.0
    %1343 = vmatprep.subr.mxu0 0.0
    %1344 = vmatpush1.msra.mxu0 0.0
    %1345 = vmatprep.subr.mxu0 0.0
    %1346 = vmatpush1.msra.mxu0 0.0
    %1347 = vmatprep.subr.mxu0 0.0
    %1348 = vmatpush1.msra.mxu0 0.0
    %1349 = vmatprep.subr.mxu0 0.0
    %1350 = vmatpush1.msra.mxu0 0.0
    %1351 = vmatprep.subr.mxu0 0.0
    %1352 = vmatpush1.msra.mxu0 0.0
    %1353 = vmatprep.subr.mxu0 0.0
    %1354 = vmatpush1.msra.mxu0 0.0
    %1355 = vmatprep.subr.mxu0 0.0
    %1356 = vmatpush1.msra.mxu0 0.0
    %1357 = vmatprep.subr.mxu0 0.0
    %1358 = vmatpush1.msra.mxu0 0.0
    %1359 = vmatprep.subr.mxu0 0.0
    %1360 = vmatpush1.msra.mxu0 0.0
    %1361 = vmatprep.subr.mxu0 0.0
    %1362 = vmatpush1.msra.mxu0 0.0
    %1363 = vmatprep.subr.mxu0 0.0
    %1364 = vmatpush1.msra.mxu0 %v1328
    %1365 = vmatprep.subr.mxu0 0.0
    %1366 = vmatpush2.msra.mxu0 0.0
    %1367 = vmatprep.subr.mxu0 0.0
    %1368 = vmatpush2.msra.mxu0 0.0
    %1369 = vmatprep.subr.mxu0 0.0
    %1370 = vmatpush2.msra.mxu0 0.0
    %1371 = vmatprep.subr.mxu0 0.0
    %1372 = vmatpush2.msra.mxu0 0.0
    %1373 = vmatprep.subr.mxu0 0.0
    %1374 = vmatpush2.msra.mxu0 0.0
    %1375 = vmatprep.subr.mxu0 0.0
    %1376 = vmatpush2.msra.mxu0 0.0
    %1377 = vmatprep.subr.mxu0 0.0
    %1378 = vmatpush2.msra.mxu0 0.0
    %1379 = vmatprep.subr.mxu0 0.0
    %1380 = vmatpush2.msra.mxu0 0.0
    %1381 = vmatprep.subr.mxu0 0.0
    %1382 = vmatpush2.msra.mxu0 0.0
    %1383 = vmatprep.subr.mxu0 0.0
    %1384 = vmatpush2.msra.mxu0 0.0
    %1385 = vmatprep.subr.mxu0 0.0
    %1386 = vmatpush2.msra.mxu0 0.0
    %1387 = vmatprep.subr.mxu0 0.0
    %1388 = vmatpush2.msra.mxu0 0.0
    %1389 = vmatprep.subr.mxu0 0.0
    %1390 = vmatpush2.msra.mxu0 0.0
    %1391 = vmatprep.subr.mxu0 0.0
    %1392 = vmatpush2.msra.mxu0 0.0
    %1393 = vmatprep.subr.mxu0 0.0
    %1394 = vmatpush2.msra.mxu0 0.0
    %1395 = vmatprep.subr.mxu0 0.0
    %1396 = vmatpush2.msra.mxu0 0.0
    %1397 = vmatprep.mubr.f32.mxu0 0.0
    %1398 = vmatmul.mubr.f32.gmra.mxu0 %v1331
    %v1399 = vpop.f32.mrf.mxu0
    %v1400 = vadd.f32 0.0, %v1399
    %v1401 = vpop.f32.mrf.mxu0
    %1402 = vdwg.mxu0
    %1403 = vrot.lane.b32.xlu0 %v395, 64
    %v1404 = vpop.permute.xlu0 %1403
    %v1407 = vsel %vm404, %v1060, 0
    %1409 = vmatprep.subr.mxu0 0.0
    %1410 = vmatpush1.msra.mxu0 0.0
    %1411 = vmatprep.subr.mxu0 0.0
    %1412 = vmatpush1.msra.mxu0 0.0
    %1413 = vmatprep.subr.mxu0 0.0
    %1414 = vmatpush1.msra.mxu0 0.0
    %1415 = vmatprep.subr.mxu0 0.0
    %1416 = vmatpush1.msra.mxu0 0.0
    %1417 = vmatprep.subr.mxu0 0.0
    %1418 = vmatpush1.msra.mxu0 0.0
    %1419 = vmatprep.subr.mxu0 0.0
    %1420 = vmatpush1.msra.mxu0 0.0
    %1421 = vmatprep.subr.mxu0 0.0
    %1422 = vmatpush1.msra.mxu0 0.0
    %1423 = vmatprep.subr.mxu0 0.0
    %1424 = vmatpush1.msra.mxu0 0.0
    %1425 = vmatprep.subr.mxu0 0.0
    %1426 = vmatpush1.msra.mxu0 0.0
    %1427 = vmatprep.subr.mxu0 0.0
    %1428 = vmatpush1.msra.mxu0 0.0
    %1429 = vmatprep.subr.mxu0 0.0
    %1430 = vmatpush1.msra.mxu0 0.0
    %1431 = vmatprep.subr.mxu0 0.0
    %1432 = vmatpush1.msra.mxu0 0.0
    %1433 = vmatprep.subr.mxu0 0.0
    %1434 = vmatpush1.msra.mxu0 0.0
    %1435 = vmatprep.subr.mxu0 0.0
    %1436 = vmatpush1.msra.mxu0 0.0
    %1437 = vmatprep.subr.mxu0 0.0
    %1438 = vmatpush1.msra.mxu0 0.0
    %1439 = vmatprep.subr.mxu0 0.0
    %1440 = vmatpush1.msra.mxu0 %v1404
    %1441 = vmatprep.subr.mxu0 0.0
    %1442 = vmatpush2.msra.mxu0 0.0
    %1443 = vmatprep.subr.mxu0 0.0
    %1444 = vmatpush2.msra.mxu0 0.0
    %1445 = vmatprep.subr.mxu0 0.0
    %1446 = vmatpush2.msra.mxu0 0.0
    %1447 = vmatprep.subr.mxu0 0.0
    %1448 = vmatpush2.msra.mxu0 0.0
    %1449 = vmatprep.subr.mxu0 0.0
    %1450 = vmatpush2.msra.mxu0 0.0
    %1451 = vmatprep.subr.mxu0 0.0
    %1452 = vmatpush2.msra.mxu0 0.0
    %1453 = vmatprep.subr.mxu0 0.0
    %1454 = vmatpush2.msra.mxu0 0.0
    %1455 = vmatprep.subr.mxu0 0.0
    %1456 = vmatpush2.msra.mxu0 0.0
    %1457 = vmatprep.subr.mxu0 0.0
    %1458 = vmatpush2.msra.mxu0 0.0
    %1459 = vmatprep.subr.mxu0 0.0
    %1460 = vmatpush2.msra.mxu0 0.0
    %1461 = vmatprep.subr.mxu0 0.0
    %1462 = vmatpush2.msra.mxu0 0.0
    %1463 = vmatprep.subr.mxu0 0.0
    %1464 = vmatpush2.msra.mxu0 0.0
    %1465 = vmatprep.subr.mxu0 0.0
    %1466 = vmatpush2.msra.mxu0 0.0
    %1467 = vmatprep.subr.mxu0 0.0
    %1468 = vmatpush2.msra.mxu0 0.0
    %1469 = vmatprep.subr.mxu0 0.0
    %1470 = vmatpush2.msra.mxu0 0.0
    %1471 = vmatprep.subr.mxu0 0.0
    %1472 = vmatpush2.msra.mxu0 0.0
    %1473 = vmatprep.mubr.f32.mxu0 0.0
    %1474 = vmatmul.mubr.f32.gmra.mxu0 %v1407
    %v1475 = vpop.f32.mrf.mxu0
    %v1476 = vadd.f32 0.0, %v1475
    %v1477 = vpop.f32.mrf.mxu0
    %1478 = vdwg.mxu0
    %1479 = vrot.lane.b32.xlu0 %v397, 64
    %v1480 = vpop.permute.xlu0 %1479
    %v1483 = vsel %vm404, %v1062, 0
    %1485 = vmatprep.subr.mxu0 0.0
    %1486 = vmatpush1.msra.mxu0 0.0
    %1487 = vmatprep.subr.mxu0 0.0
    %1488 = vmatpush1.msra.mxu0 0.0
    %1489 = vmatprep.subr.mxu0 0.0
    %1490 = vmatpush1.msra.mxu0 0.0
    %1491 = vmatprep.subr.mxu0 0.0
    %1492 = vmatpush1.msra.mxu0 0.0
    %1493 = vmatprep.subr.mxu0 0.0
    %1494 = vmatpush1.msra.mxu0 0.0
    %1495 = vmatprep.subr.mxu0 0.0
    %1496 = vmatpush1.msra.mxu0 0.0
    %1497 = vmatprep.subr.mxu0 0.0
    %1498 = vmatpush1.msra.mxu0 0.0
    %1499 = vmatprep.subr.mxu0 0.0
    %1500 = vmatpush1.msra.mxu0 0.0
    %1501 = vmatprep.subr.mxu0 0.0
    %1502 = vmatpush1.msra.mxu0 0.0
    %1503 = vmatprep.subr.mxu0 0.0
    %1504 = vmatpush1.msra.mxu0 0.0
    %1505 = vmatprep.subr.mxu0 0.0
    %1506 = vmatpush1.msra.mxu0 0.0
    %1507 = vmatprep.subr.mxu0 0.0
    %1508 = vmatpush1.msra.mxu0 0.0
    %1509 = vmatprep.subr.mxu0 0.0
    %1510 = vmatpush1.msra.mxu0 0.0
    %1511 = vmatprep.subr.mxu0 0.0
    %1512 = vmatpush1.msra.mxu0 0.0
    %1513 = vmatprep.subr.mxu0 0.0
    %1514 = vmatpush1.msra.mxu0 0.0
    %1515 = vmatprep.subr.mxu0 0.0
    %1516 = vmatpush1.msra.mxu0 %v1480
    %1517 = vmatprep.subr.mxu0 0.0
    %1518 = vmatpush2.msra.mxu0 0.0
    %1519 = vmatprep.subr.mxu0 0.0
    %1520 = vmatpush2.msra.mxu0 0.0
    %1521 = vmatprep.subr.mxu0 0.0
    %1522 = vmatpush2.msra.mxu0 0.0
    %1523 = vmatprep.subr.mxu0 0.0
    %1524 = vmatpush2.msra.mxu0 0.0
    %1525 = vmatprep.subr.mxu0 0.0
    %1526 = vmatpush2.msra.mxu0 0.0
    %1527 = vmatprep.subr.mxu0 0.0
    %1528 = vmatpush2.msra.mxu0 0.0
    %1529 = vmatprep.subr.mxu0 0.0
    %1530 = vmatpush2.msra.mxu0 0.0
    %1531 = vmatprep.subr.mxu0 0.0
    %1532 = vmatpush2.msra.mxu0 0.0
    %1533 = vmatprep.subr.mxu0 0.0
    %1534 = vmatpush2.msra.mxu0 0.0
    %1535 = vmatprep.subr.mxu0 0.0
    %1536 = vmatpush2.msra.mxu0 0.0
    %1537 = vmatprep.subr.mxu0 0.0
    %1538 = vmatpush2.msra.mxu0 0.0
    %1539 = vmatprep.subr.mxu0 0.0
    %1540 = vmatpush2.msra.mxu0 0.0
    %1541 = vmatprep.subr.mxu0 0.0
    %1542 = vmatpush2.msra.mxu0 0.0
    %1543 = vmatprep.subr.mxu0 0.0
    %1544 = vmatpush2.msra.mxu0 0.0
    %1545 = vmatprep.subr.mxu0 0.0
    %1546 = vmatpush2.msra.mxu0 0.0
    %1547 = vmatprep.subr.mxu0 0.0
    %1548 = vmatpush2.msra.mxu0 0.0
    %1549 = vmatprep.mubr.f32.mxu0 0.0
    %1550 = vmatmul.mubr.f32.gmra.mxu0 %v1483
    %v1551 = vpop.f32.mrf.mxu0
    %v1552 = vadd.f32 0.0, %v1551
    %v1553 = vpop.f32.mrf.mxu0
    %1554 = vdwg.mxu0
    %1555 = vrot.lane.b32.xlu0 %v399, 64
    %v1556 = vpop.permute.xlu0 %1555
    %v1559 = vsel %vm404, %v1064, 0
    %1561 = vmatprep.subr.mxu0 0.0
    %1562 = vmatpush1.msra.mxu0 0.0
    %1563 = vmatprep.subr.mxu0 0.0
    %1564 = vmatpush1.msra.mxu0 0.0
    %1565 = vmatprep.subr.mxu0 0.0
    %1566 = vmatpush1.msra.mxu0 0.0
    %1567 = vmatprep.subr.mxu0 0.0
    %1568 = vmatpush1.msra.mxu0 0.0
    %1569 = vmatprep.subr.mxu0 0.0
    %1570 = vmatpush1.msra.mxu0 0.0
    %1571 = vmatprep.subr.mxu0 0.0
    %1572 = vmatpush1.msra.mxu0 0.0
    %1573 = vmatprep.subr.mxu0 0.0
    %1574 = vmatpush1.msra.mxu0 0.0
    %1575 = vmatprep.subr.mxu0 0.0
    %1576 = vmatpush1.msra.mxu0 0.0
    %1577 = vmatprep.subr.mxu0 0.0
    %1578 = vmatpush1.msra.mxu0 0.0
    %1579 = vmatprep.subr.mxu0 0.0
    %1580 = vmatpush1.msra.mxu0 0.0
    %1581 = vmatprep.subr.mxu0 0.0
    %1582 = vmatpush1.msra.mxu0 0.0
    %1583 = vmatprep.subr.mxu0 0.0
    %1584 = vmatpush1.msra.mxu0 0.0
    %1585 = vmatprep.subr.mxu0 0.0
    %1586 = vmatpush1.msra.mxu0 0.0
    %1587 = vmatprep.subr.mxu0 0.0
    %1588 = vmatpush1.msra.mxu0 0.0
    %1589 = vmatprep.subr.mxu0 0.0
    %1590 = vmatpush1.msra.mxu0 0.0
    %1591 = vmatprep.subr.mxu0 0.0
    %1592 = vmatpush1.msra.mxu0 %v1556
    %1593 = vmatprep.subr.mxu0 0.0
    %1594 = vmatpush2.msra.mxu0 0.0
    %1595 = vmatprep.subr.mxu0 0.0
    %1596 = vmatpush2.msra.mxu0 0.0
    %1597 = vmatprep.subr.mxu0 0.0
    %1598 = vmatpush2.msra.mxu0 0.0
    %1599 = vmatprep.subr.mxu0 0.0
    %1600 = vmatpush2.msra.mxu0 0.0
    %1601 = vmatprep.subr.mxu0 0.0
    %1602 = vmatpush2.msra.mxu0 0.0
    %1603 = vmatprep.subr.mxu0 0.0
    %1604 = vmatpush2.msra.mxu0 0.0
    %1605 = vmatprep.subr.mxu0 0.0
    %1606 = vmatpush2.msra.mxu0 0.0
    %1607 = vmatprep.subr.mxu0 0.0
    %1608 = vmatpush2.msra.mxu0 0.0
    %1609 = vmatprep.subr.mxu0 0.0
    %1610 = vmatpush2.msra.mxu0 0.0
    %1611 = vmatprep.subr.mxu0 0.0
    %1612 = vmatpush2.msra.mxu0 0.0
    %1613 = vmatprep.subr.mxu0 0.0
    %1614 = vmatpush2.msra.mxu0 0.0
    %1615 = vmatprep.subr.mxu0 0.0
    %1616 = vmatpush2.msra.mxu0 0.0
    %1617 = vmatprep.subr.mxu0 0.0
    %1618 = vmatpush2.msra.mxu0 0.0
    %1619 = vmatprep.subr.mxu0 0.0
    %1620 = vmatpush2.msra.mxu0 0.0
    %1621 = vmatprep.subr.mxu0 0.0
    %1622 = vmatpush2.msra.mxu0 0.0
    %1623 = vmatprep.subr.mxu0 0.0
    %1624 = vmatpush2.msra.mxu0 0.0
    %1625 = vmatprep.mubr.f32.mxu0 0.0
    %1626 = vmatmul.mubr.f32.gmra.mxu0 %v1559
    %v1627 = vpop.f32.mrf.mxu0
    %v1628 = vadd.f32 0.0, %v1627
    %v1629 = vpop.f32.mrf.mxu0
    %1630 = vdwg.mxu0
    %1631 = vrot.lane.b32.xlu0 %v401, 64
    %v1632 = vpop.permute.xlu0 %1631
    %v1635 = vsel %vm404, %v1066, 0
    %1637 = vmatprep.subr.mxu0 0.0
    %1638 = vmatpush1.msra.mxu0 0.0
    %1639 = vmatprep.subr.mxu0 0.0
    %1640 = vmatpush1.msra.mxu0 0.0
    %1641 = vmatprep.subr.mxu0 0.0
    %1642 = vmatpush1.msra.mxu0 0.0
    %1643 = vmatprep.subr.mxu0 0.0
    %1644 = vmatpush1.msra.mxu0 0.0
    %1645 = vmatprep.subr.mxu0 0.0
    %1646 = vmatpush1.msra.mxu0 0.0
    %1647 = vmatprep.subr.mxu0 0.0
    %1648 = vmatpush1.msra.mxu0 0.0
    %1649 = vmatprep.subr.mxu0 0.0
    %1650 = vmatpush1.msra.mxu0 0.0
    %1651 = vmatprep.subr.mxu0 0.0
    %1652 = vmatpush1.msra.mxu0 0.0
    %1653 = vmatprep.subr.mxu0 0.0
    %1654 = vmatpush1.msra.mxu0 0.0
    %1655 = vmatprep.subr.mxu0 0.0
    %1656 = vmatpush1.msra.mxu0 0.0
    %1657 = vmatprep.subr.mxu0 0.0
    %1658 = vmatpush1.msra.mxu0 0.0
    %1659 = vmatprep.subr.mxu0 0.0
    %1660 = vmatpush1.msra.mxu0 0.0
    %1661 = vmatprep.subr.mxu0 0.0
    %1662 = vmatpush1.msra.mxu0 0.0
    %1663 = vmatprep.subr.mxu0 0.0
    %1664 = vmatpush1.msra.mxu0 0.0
    %1665 = vmatprep.subr.mxu0 0.0
    %1666 = vmatpush1.msra.mxu0 0.0
    %1667 = vmatprep.subr.mxu0 0.0
    %1668 = vmatpush1.msra.mxu0 %v1632
    %1669 = vmatprep.subr.mxu0 0.0
    %1670 = vmatpush2.msra.mxu0 0.0
    %1671 = vmatprep.subr.mxu0 0.0
    %1672 = vmatpush2.msra.mxu0 0.0
    %1673 = vmatprep.subr.mxu0 0.0
    %1674 = vmatpush2.msra.mxu0 0.0
    %1675 = vmatprep.subr.mxu0 0.0
    %1676 = vmatpush2.msra.mxu0 0.0
    %1677 = vmatprep.subr.mxu0 0.0
    %1678 = vmatpush2.msra.mxu0 0.0
    %1679 = vmatprep.subr.mxu0 0.0
    %1680 = vmatpush2.msra.mxu0 0.0
    %1681 = vmatprep.subr.mxu0 0.0
    %1682 = vmatpush2.msra.mxu0 0.0
    %1683 = vmatprep.subr.mxu0 0.0
    %1684 = vmatpush2.msra.mxu0 0.0
    %1685 = vmatprep.subr.mxu0 0.0
    %1686 = vmatpush2.msra.mxu0 0.0
    %1687 = vmatprep.subr.mxu0 0.0
    %1688 = vmatpush2.msra.mxu0 0.0
    %1689 = vmatprep.subr.mxu0 0.0
    %1690 = vmatpush2.msra.mxu0 0.0
    %1691 = vmatprep.subr.mxu0 0.0
    %1692 = vmatpush2.msra.mxu0 0.0
    %1693 = vmatprep.subr.mxu0 0.0
    %1694 = vmatpush2.msra.mxu0 0.0
    %1695 = vmatprep.subr.mxu0 0.0
    %1696 = vmatpush2.msra.mxu0 0.0
    %1697 = vmatprep.subr.mxu0 0.0
    %1698 = vmatpush2.msra.mxu0 0.0
    %1699 = vmatprep.subr.mxu0 0.0
    %1700 = vmatpush2.msra.mxu0 0.0
    %1701 = vmatprep.mubr.f32.mxu0 0.0
    %1702 = vmatmul.mubr.f32.gmra.mxu0 %v1635
    %v1703 = vpop.f32.mrf.mxu0
    %v1704 = vadd.f32 0.0, %v1703
    %v1705 = vpop.f32.mrf.mxu0
    %1706 = vdwg.mxu0
    %v1707 = vmul.f32 %v1172, %v1091
    %v1708 = vmul.f32 %v1248, %v1092
    %v1709 = vmul.f32 %v1324, %v1093
    %v1710 = vmul.f32 %v1400, %v1094
    %v1711 = vmul.f32 %v1476, %v1095
    %v1712 = vmul.f32 %v1552, %v1096
    %v1713 = vmul.f32 %v1628, %v1097
    %v1714 = vmul.f32 %v1704, %v1098
    %1717 = vrot.lane.b32.xlu0 %v1709, 8
    %v1718 = vpop.permute.xlu0 %1717
    %1719 = vrot.lane.b32.xlu0 %v1710, 8
    %v1720 = vpop.permute.xlu0 %1719
    %1725 = vrot.lane.b32.xlu0 %v1711, 16
    %v1726 = vpop.permute.xlu0 %1725
    %1727 = vrot.lane.b32.xlu0 %v1712, 16
    %v1728 = vpop.permute.xlu0 %1727
    %1733 = vrot.lane.b32.xlu0 %v1713, 24
    %v1734 = vpop.permute.xlu0 %1733
    %1735 = vrot.lane.b32.xlu0 %v1714, 24
    %v1736 = vpop.permute.xlu0 %1735
    %v1739 = vsel %vm404, %v1707, %v1718
    %v1740 = vsel %vm404, %v1708, %v1720
    %vm1741 = vcmask 130048
    %v1742 = vsel %vm1741, %v1739, %v1726
    %v1743 = vsel %vm1741, %v1740, %v1728
    %vm1744 = vcmask 195584
    %v1745 = vsel %vm1744, %v1742, %v1734
    %v1746 = vsel %vm1744, %v1743, %v1736
    %v1748 = vsel %vm209, %v1745, 0
    %v1751 = vsel %vm209, %v1746, 0
    %1753 = vmatprep.subr.mxu0 0.0
    %1754 = vmatpush1.msra.mxu0 0.0
    %1755 = vmatprep.subr.mxu0 0.0
    %1756 = vmatpush1.msra.mxu0 0.0
    %1757 = vmatprep.subr.mxu0 0.0
    %1758 = vmatpush1.msra.mxu0 0.0
    %1759 = vmatprep.subr.mxu0 0.0
    %1760 = vmatpush1.msra.mxu0 0.0
    %1761 = vmatprep.subr.mxu0 0.0
    %1762 = vmatpush1.msra.mxu0 0.0
    %1763 = vmatprep.subr.mxu0 0.0
    %1764 = vmatpush1.msra.mxu0 0.0
    %1765 = vmatprep.subr.mxu0 0.0
    %1766 = vmatpush1.msra.mxu0 0.0
    %1767 = vmatprep.subr.mxu0 0.0
    %1768 = vmatpush1.msra.mxu0 0.0
    %1769 = vmatprep.subr.mxu0 0.0
    %1770 = vmatpush1.msra.mxu0 0.0
    %1771 = vmatprep.subr.mxu0 0.0
    %1772 = vmatpush1.msra.mxu0 0.0
    %1773 = vmatprep.subr.mxu0 0.0
    %1774 = vmatpush1.msra.mxu0 0.0
    %1775 = vmatprep.subr.mxu0 0.0
    %1776 = vmatpush1.msra.mxu0 0.0
    %1777 = vmatprep.subr.mxu0 0.0
    %1778 = vmatpush1.msra.mxu0 %v194
    %1779 = vmatprep.subr.mxu0 0.0
    %1780 = vmatpush1.msra.mxu0 %v193
    %1781 = vmatprep.subr.mxu0 0.0
    %1782 = vmatpush1.msra.mxu0 %v192
    %1783 = vmatprep.subr.mxu0 0.0
    %1784 = vmatpush1.msra.mxu0 %v191
    %1785 = vmatprep.subr.mxu0 0.0
    %1786 = vmatpush2.msra.mxu0 0.0
    %1787 = vmatprep.subr.mxu0 0.0
    %1788 = vmatpush2.msra.mxu0 0.0
    %1789 = vmatprep.subr.mxu0 0.0
    %1790 = vmatpush2.msra.mxu0 0.0
    %1791 = vmatprep.subr.mxu0 0.0
    %1792 = vmatpush2.msra.mxu0 0.0
    %1793 = vmatprep.subr.mxu0 0.0
    %1794 = vmatpush2.msra.mxu0 0.0
    %1795 = vmatprep.subr.mxu0 0.0
    %1796 = vmatpush2.msra.mxu0 0.0
    %1797 = vmatprep.subr.mxu0 0.0
    %1798 = vmatpush2.msra.mxu0 0.0
    %1799 = vmatprep.subr.mxu0 0.0
    %1800 = vmatpush2.msra.mxu0 0.0
    %1801 = vmatprep.subr.mxu0 0.0
    %1802 = vmatpush2.msra.mxu0 0.0
    %1803 = vmatprep.subr.mxu0 0.0
    %1804 = vmatpush2.msra.mxu0 0.0
    %1805 = vmatprep.subr.mxu0 0.0
    %1806 = vmatpush2.msra.mxu0 0.0
    %1807 = vmatprep.subr.mxu0 0.0
    %1808 = vmatpush2.msra.mxu0 0.0
    %1809 = vmatprep.subr.mxu0 0.0
    %1810 = vmatpush2.msra.mxu0 0.0
    %1811 = vmatprep.subr.mxu0 0.0
    %1812 = vmatpush2.msra.mxu0 0.0
    %1813 = vmatprep.subr.mxu0 0.0
    %1814 = vmatpush2.msra.mxu0 0.0
    %1815 = vmatprep.subr.mxu0 0.0
    %1816 = vmatpush2.msra.mxu0 0.0
    %1817 = vmatprep.mubr.f32.mxu0 0.0
    %1818 = vmatmul.mubr.f32.gmra.mxu0 %v1748
    %v1819 = vpop.f32.mrf.mxu0
    %v1820 = vadd.f32 0.0, %v1819
    %v1821 = vpop.f32.mrf.mxu0
    %1822 = vmatprep.mubr.f32.mxu0 0.0
    %1823 = vmatmul.mubr.f32.gmra.mxu0 %v1751
    %v1824 = vpop.f32.mrf.mxu0
    %v1825 = vadd.f32 0.0, %v1824
    %v1826 = vpop.f32.mrf.mxu0
    %1827 = vdwg.mxu0
    %v1828 = vadd.f32 %v169, %v1820
    %v1829 = vadd.f32 %v170, %v1825
    %v1830 = vmul.f32 %v1828, %v1828
    %v1831 = vmul.f32 %v1829, %v1829
    %v1832 = vsel %vm209, %v1830, 0.0
    %1833 = vadd.xlane.f32.xlu0 %v1832
    %v1834 = vpop.xlane.xlu0 %1833
    %v1835 = vsel %vm209, %v1831, 0.0
    %1836 = vadd.xlane.f32.xlu0 %v1835
    %v1837 = vpop.xlane.xlu0 %1836
    %v1838 = vmul.f32 %v1834, %v216
    %v1839 = vmul.f32 %v1837, %v216
    %v1840 = vadd.f32 %v1838, 1e-05
    %v1841 = vadd.f32 %v1839, 1e-05
    %v1842 = vrsqrt.pop %v1840
    %v1843 = vrsqrt.pop %v1841
    %v1844 = vmul.f32 %v1828, %v1842
    %v1845 = vmul.f32 %v1829, %v1843
    %v1847 = vlaneseq
    %v1848 = vshrl.u32 %v1847, 7
    %v1849 = vsub.s32 0, %v1848
    %v1850 = vrot.slane %v182, %v1849
    %v1852 = vmul.f32 %v1844, %v1850
    %v1853 = vmul.f32 %v1845, %v1850
    %v1855 = vsel %vm209, %v1852, 0
    %v1858 = vsel %vm209, %v1853, 0
    %1860 = vmatprep.subr.mxu0 0.0
    %1861 = vmatpush1.msra.mxu0 0.0
    %1862 = vmatprep.subr.mxu0 0.0
    %1863 = vmatpush1.msra.mxu0 0.0
    %1864 = vmatprep.subr.mxu0 0.0
    %1865 = vmatpush1.msra.mxu0 0.0
    %1866 = vmatprep.subr.mxu0 0.0
    %1867 = vmatpush1.msra.mxu0 0.0
    %1868 = vmatprep.subr.mxu0 0.0
    %1869 = vmatpush1.msra.mxu0 0.0
    %1870 = vmatprep.subr.mxu0 0.0
    %1871 = vmatpush1.msra.mxu0 0.0
    %1872 = vmatprep.subr.mxu0 0.0
    %1873 = vmatpush1.msra.mxu0 0.0
    %1874 = vmatprep.subr.mxu0 0.0
    %1875 = vmatpush1.msra.mxu0 0.0
    %1876 = vmatprep.subr.mxu0 0.0
    %1877 = vmatpush1.msra.mxu0 0.0
    %1878 = vmatprep.subr.mxu0 0.0
    %1879 = vmatpush1.msra.mxu0 0.0
    %1880 = vmatprep.subr.mxu0 0.0
    %1881 = vmatpush1.msra.mxu0 0.0
    %1882 = vmatprep.subr.mxu0 0.0
    %1883 = vmatpush1.msra.mxu0 0.0
    %1884 = vmatprep.subr.mxu0 0.0
    %1885 = vmatpush1.msra.mxu0 %v198
    %1886 = vmatprep.subr.mxu0 0.0
    %1887 = vmatpush1.msra.mxu0 %v197
    %1888 = vmatprep.subr.mxu0 0.0
    %1889 = vmatpush1.msra.mxu0 %v196
    %1890 = vmatprep.subr.mxu0 0.0
    %1891 = vmatpush1.msra.mxu0 %v195
    %1892 = vmatprep.subr.mxu0 0.0
    %1893 = vmatpush2.msra.mxu0 0.0
    %1894 = vmatprep.subr.mxu0 0.0
    %1895 = vmatpush2.msra.mxu0 0.0
    %1896 = vmatprep.subr.mxu0 0.0
    %1897 = vmatpush2.msra.mxu0 0.0
    %1898 = vmatprep.subr.mxu0 0.0
    %1899 = vmatpush2.msra.mxu0 0.0
    %1900 = vmatprep.subr.mxu0 0.0
    %1901 = vmatpush2.msra.mxu0 0.0
    %1902 = vmatprep.subr.mxu0 0.0
    %1903 = vmatpush2.msra.mxu0 0.0
    %1904 = vmatprep.subr.mxu0 0.0
    %1905 = vmatpush2.msra.mxu0 0.0
    %1906 = vmatprep.subr.mxu0 0.0
    %1907 = vmatpush2.msra.mxu0 0.0
    %1908 = vmatprep.subr.mxu0 0.0
    %1909 = vmatpush2.msra.mxu0 0.0
    %1910 = vmatprep.subr.mxu0 0.0
    %1911 = vmatpush2.msra.mxu0 0.0
    %1912 = vmatprep.subr.mxu0 0.0
    %1913 = vmatpush2.msra.mxu0 0.0
    %1914 = vmatprep.subr.mxu0 0.0
    %1915 = vmatpush2.msra.mxu0 0.0
    %1916 = vmatprep.subr.mxu0 0.0
    %1917 = vmatpush2.msra.mxu0 0.0
    %1918 = vmatprep.subr.mxu0 0.0
    %1919 = vmatpush2.msra.mxu0 0.0
    %1920 = vmatprep.subr.mxu0 0.0
    %1921 = vmatpush2.msra.mxu0 0.0
    %1922 = vmatprep.subr.mxu0 0.0
    %1923 = vmatpush2.msra.mxu0 0.0
    %1924 = vmatprep.mubr.f32.mxu0 0.0
    %1925 = vmatmul.mubr.f32.gmra.mxu0 %v1855
    %v1926 = vpop.f32.mrf.mxu0
    %v1927 = vadd.f32 0.0, %v1926
    %v1928 = vpop.f32.mrf.mxu0
    %1929 = vmatprep.mubr.f32.mxu0 0.0
    %1930 = vmatmul.mubr.f32.gmra.mxu0 %v1858
    %v1931 = vpop.f32.mrf.mxu0
    %v1932 = vadd.f32 0.0, %v1931
    %v1933 = vpop.f32.mrf.mxu0
    %1934 = vdwg.mxu0
    %v1935 = vxor.u32 %v1927, 2147483648
    %v1936 = vxor.u32 %v1932, 2147483648
    %v1937 = vmul.f32 %v1935, 1.442695
    %v1938 = vpow.pop %v1937
    %v1939 = vmul.f32 %v1936, 1.442695
    %v1940 = vpow.pop %v1939
    %v1941 = vadd.f32 %v1938, 1.0
    %v1942 = vadd.f32 %v1940, 1.0
    %v1943 = vrcp.pop %v1941
    %v1944 = vmul.f32 1.0, %v1943
    %v1945 = vrcp.pop %v1942
    %v1946 = vmul.f32 1.0, %v1945
    %v1947 = vmul.f32 %v1927, %v1944
    %v1948 = vmul.f32 %v1932, %v1946
    %1951 = vrot.lane.b32.xlu0 %v1927, 64
    %v1952 = vpop.permute.xlu0 %1951
    %1953 = vrot.lane.b32.xlu0 %v1932, 64
    %v1954 = vpop.permute.xlu0 %1953
    %v1957 = vmul.f32 %v1947, %v1952
    %v1958 = vmul.f32 %v1948, %v1954
    %vm1959 = vcmask 523264
    %v1961 = vsel %vm1959, %v1957, 0
    %v1964 = vsel %vm1959, %v1958, 0
    %1966 = vmatprep.subr.mxu0 0.0
    %1967 = vmatpush1.msra.mxu0 0.0
    %1968 = vmatprep.subr.mxu0 0.0
    %1969 = vmatpush1.msra.mxu0 0.0
    %1970 = vmatprep.subr.mxu0 0.0
    %1971 = vmatpush1.msra.mxu0 0.0
    %1972 = vmatprep.subr.mxu0 0.0
    %1973 = vmatpush1.msra.mxu0 0.0
    %1974 = vmatprep.subr.mxu0 0.0
    %1975 = vmatpush1.msra.mxu0 0.0
    %1976 = vmatprep.subr.mxu0 0.0
    %1977 = vmatpush1.msra.mxu0 0.0
    %1978 = vmatprep.subr.mxu0 0.0
    %1979 = vmatpush1.msra.mxu0 0.0
    %1980 = vmatprep.subr.mxu0 0.0
    %1981 = vmatpush1.msra.mxu0 0.0
    %1982 = vmatprep.subr.mxu0 0.0
    %1983 = vmatpush1.msra.mxu0 %v206
    %1984 = vmatprep.subr.mxu0 0.0
    %1985 = vmatpush1.msra.mxu0 %v205
    %1986 = vmatprep.subr.mxu0 0.0
    %1987 = vmatpush1.msra.mxu0 %v204
    %1988 = vmatprep.subr.mxu0 0.0
    %1989 = vmatpush1.msra.mxu0 %v203
    %1990 = vmatprep.subr.mxu0 0.0
    %1991 = vmatpush1.msra.mxu0 %v202
    %1992 = vmatprep.subr.mxu0 0.0
    %1993 = vmatpush1.msra.mxu0 %v201
    %1994 = vmatprep.subr.mxu0 0.0
    %1995 = vmatpush1.msra.mxu0 %v200
    %1996 = vmatprep.subr.mxu0 0.0
    %1997 = vmatpush1.msra.mxu0 %v199
    %1998 = vmatprep.subr.mxu0 0.0
    %1999 = vmatpush2.msra.mxu0 0.0
    %2000 = vmatprep.subr.mxu0 0.0
    %2001 = vmatpush2.msra.mxu0 0.0
    %2002 = vmatprep.subr.mxu0 0.0
    %2003 = vmatpush2.msra.mxu0 0.0
    %2004 = vmatprep.subr.mxu0 0.0
    %2005 = vmatpush2.msra.mxu0 0.0
    %2006 = vmatprep.subr.mxu0 0.0
    %2007 = vmatpush2.msra.mxu0 0.0
    %2008 = vmatprep.subr.mxu0 0.0
    %2009 = vmatpush2.msra.mxu0 0.0
    %2010 = vmatprep.subr.mxu0 0.0
    %2011 = vmatpush2.msra.mxu0 0.0
    %2012 = vmatprep.subr.mxu0 0.0
    %2013 = vmatpush2.msra.mxu0 0.0
    %2014 = vmatprep.subr.mxu0 0.0
    %2015 = vmatpush2.msra.mxu0 0.0
    %2016 = vmatprep.subr.mxu0 0.0
    %2017 = vmatpush2.msra.mxu0 0.0
    %2018 = vmatprep.subr.mxu0 0.0
    %2019 = vmatpush2.msra.mxu0 0.0
    %2020 = vmatprep.subr.mxu0 0.0
    %2021 = vmatpush2.msra.mxu0 0.0
    %2022 = vmatprep.subr.mxu0 0.0
    %2023 = vmatpush2.msra.mxu0 0.0
    %2024 = vmatprep.subr.mxu0 0.0
    %2025 = vmatpush2.msra.mxu0 0.0
    %2026 = vmatprep.subr.mxu0 0.0
    %2027 = vmatpush2.msra.mxu0 0.0
    %2028 = vmatprep.subr.mxu0 0.0
    %2029 = vmatpush2.msra.mxu0 0.0
    %2030 = vmatprep.mubr.f32.mxu0 0.0
    %2031 = vmatmul.mubr.f32.gmra.mxu0 %v1961
    %v2032 = vpop.f32.mrf.mxu0
    %v2033 = vadd.f32 0.0, %v2032
    %v2034 = vpop.f32.mrf.mxu0
    %2035 = vmatprep.mubr.f32.mxu0 0.0
    %2036 = vmatmul.mubr.f32.gmra.mxu0 %v1964
    %v2037 = vpop.f32.mrf.mxu0
    %v2038 = vadd.f32 0.0, %v2037
    %v2039 = vpop.f32.mrf.mxu0
    %2040 = vdwg.mxu0
    %v2041 = vadd.f32 %v1828, %v2033
    %v2042 = vadd.f32 %v1829, %v2038
    %s2043 = scalar_lea.vmem %s6, 1
    %v2044 = vld [vmem:[%s2043] sm:$0x1]
    %s2045 = scalar_lea.vmem %s8, 64
    %v2046 = vld [vmem:[%s2045] sm:$0xff]
    %v2047 = vld [vmem:[%s2045 + $0x8] sm:$0xff]
    %v2048 = vld [vmem:[%s2045 + $0x10] sm:$0xff]
    %v2049 = vld [vmem:[%s2045 + $0x18] sm:$0xff]
    %v2050 = vld [vmem:[%s2045 + $0x20] sm:$0xff]
    %v2051 = vld [vmem:[%s2045 + $0x28] sm:$0xff]
    %v2052 = vld [vmem:[%s2045 + $0x30] sm:$0xff]
    %v2053 = vld [vmem:[%s2045 + $0x38] sm:$0xff]
    %v2054 = vmul.f32 %v2041, %v2041
    %v2055 = vmul.f32 %v2042, %v2042
    %v2056 = vsel %vm209, %v2054, 0.0
    %2057 = vadd.xlane.f32.xlu0 %v2056
    %v2058 = vpop.xlane.xlu0 %2057
    %v2059 = vsel %vm209, %v2055, 0.0
    %2060 = vadd.xlane.f32.xlu0 %v2059
    %v2061 = vpop.xlane.xlu0 %2060
    %v2062 = vmul.f32 %v2058, %v216
    %v2063 = vmul.f32 %v2061, %v216
    %v2064 = vadd.f32 %v2062, 1e-05
    %v2065 = vadd.f32 %v2063, 1e-05
    %v2066 = vrsqrt.pop %v2064
    %v2067 = vrsqrt.pop %v2065
    %v2068 = vmul.f32 %v2041, %v2066
    %v2069 = vmul.f32 %v2042, %v2067
    %v2071 = vlaneseq
    %v2072 = vshrl.u32 %v2071, 7
    %v2073 = vsub.s32 0, %v2072
    %v2074 = vrot.slane %v2044, %v2073
    %v2076 = vmul.f32 %v2068, %v2074
    %v2077 = vmul.f32 %v2069, %v2074
    %v2079 = vsel %vm209, %v2076, 0
    %v2082 = vsel %vm209, %v2077, 0
    %2084 = vmatprep.subr.mxu0 0.0
    %2085 = vmatpush1.msra.mxu0 0.0
    %2086 = vmatprep.subr.mxu0 0.0
    %2087 = vmatpush1.msra.mxu0 0.0
    %2088 = vmatprep.subr.mxu0 0.0
    %2089 = vmatpush1.msra.mxu0 0.0
    %2090 = vmatprep.subr.mxu0 0.0
    %2091 = vmatpush1.msra.mxu0 0.0
    %2092 = vmatprep.subr.mxu0 0.0
    %2093 = vmatpush1.msra.mxu0 0.0
    %2094 = vmatprep.subr.mxu0 0.0
    %2095 = vmatpush1.msra.mxu0 0.0
    %2096 = vmatprep.subr.mxu0 0.0
    %2097 = vmatpush1.msra.mxu0 0.0
    %2098 = vmatprep.subr.mxu0 0.0
    %2099 = vmatpush1.msra.mxu0 0.0
    %2100 = vmatprep.subr.mxu0 0.0
    %2101 = vmatpush1.msra.mxu0 0.0
    %2102 = vmatprep.subr.mxu0 0.0
    %2103 = vmatpush1.msra.mxu0 0.0
    %2104 = vmatprep.subr.mxu0 0.0
    %2105 = vmatpush1.msra.mxu0 0.0
    %2106 = vmatprep.subr.mxu0 0.0
    %2107 = vmatpush1.msra.mxu0 0.0
    %2108 = vmatprep.subr.mxu0 %v2053
    %2109 = vmatpush1.msra.mxu0 %v2052
    %2110 = vmatprep.subr.mxu0 %v2051
    %2111 = vmatpush1.msra.mxu0 %v2050
    %2112 = vmatprep.subr.mxu0 %v2049
    %2113 = vmatpush1.msra.mxu0 %v2048
    %2114 = vmatprep.subr.mxu0 %v2047
    %2115 = vmatpush1.msra.mxu0 %v2046
    %2116 = vmatprep.subr.mxu0 0.0
    %2117 = vmatpush2.msra.mxu0 0.0
    %2118 = vmatprep.subr.mxu0 0.0
    %2119 = vmatpush2.msra.mxu0 0.0
    %2120 = vmatprep.subr.mxu0 0.0
    %2121 = vmatpush2.msra.mxu0 0.0
    %2122 = vmatprep.subr.mxu0 0.0
    %2123 = vmatpush2.msra.mxu0 0.0
    %2124 = vmatprep.subr.mxu0 0.0
    %2125 = vmatpush2.msra.mxu0 0.0
    %2126 = vmatprep.subr.mxu0 0.0
    %2127 = vmatpush2.msra.mxu0 0.0
    %2128 = vmatprep.subr.mxu0 0.0
    %2129 = vmatpush2.msra.mxu0 0.0
    %2130 = vmatprep.subr.mxu0 0.0
    %2131 = vmatpush2.msra.mxu0 0.0
    %2132 = vmatprep.subr.mxu0 0.0
    %2133 = vmatpush2.msra.mxu0 0.0
    %2134 = vmatprep.subr.mxu0 0.0
    %2135 = vmatpush2.msra.mxu0 0.0
    %2136 = vmatprep.subr.mxu0 0.0
    %2137 = vmatpush2.msra.mxu0 0.0
    %2138 = vmatprep.subr.mxu0 0.0
    %2139 = vmatpush2.msra.mxu0 0.0
    %2140 = vmatprep.subr.mxu0 0.0
    %2141 = vmatpush2.msra.mxu0 0.0
    %2142 = vmatprep.subr.mxu0 0.0
    %2143 = vmatpush2.msra.mxu0 0.0
    %2144 = vmatprep.subr.mxu0 0.0
    %2145 = vmatpush2.msra.mxu0 0.0
    %2146 = vmatprep.subr.mxu0 0.0
    %2147 = vmatpush2.msra.mxu0 0.0
    %2148 = vmatprep.mubr.f32.mxu0 0.0
    %2149 = vmatmul.mubr.f32.gmra.mxu0 %v2079
    %v2150 = vpop.f32.mrf.mxu0
    %v2151 = vadd.f32 0.0, %v2150
    %v2152 = vpop.f32.mrf.mxu0
    %v2153 = vadd.f32 0.0, %v2152
    %2154 = vmatprep.mubr.f32.mxu0 0.0
    %2155 = vmatmul.mubr.f32.gmra.mxu0 %v2082
    %v2156 = vpop.f32.mrf.mxu0
    %v2157 = vadd.f32 0.0, %v2156
    %v2158 = vpop.f32.mrf.mxu0
    %v2159 = vadd.f32 0.0, %v2158
    %2160 = vdwg.mxu0
    %v2161 = vmul.f32 %v2151, %v341
    %v2162 = vmul.f32 %v2157, %v343
    %v2163 = vmul.f32 %v2153, %v175
    %v2164 = vmul.f32 %v2159, %v176
    %2167 = vrot.lane.b32.xlu0 %v2163, 32
    %v2168 = vpop.permute.xlu0 %2167
    %2169 = vrot.lane.b32.xlu0 %v2164, 32
    %v2170 = vpop.permute.xlu0 %2169
    %v2173 = vadd.f32 %v2161, %v2168
    %v2174 = vadd.f32 %v2162, %v2170
    %2177 = vrot.lane.b32.xlu0 %v2173, 120
    %v2178 = vpop.permute.xlu0 %2177
    %2179 = vrot.lane.b32.xlu0 %v2174, 120
    %v2180 = vpop.permute.xlu0 %2179
    %2181 = vrot.lane.b32.xlu0 %v2173, 112
    %v2182 = vpop.permute.xlu0 %2181
    %2183 = vrot.lane.b32.xlu0 %v2174, 112
    %v2184 = vpop.permute.xlu0 %2183
    %2185 = vrot.lane.b32.xlu0 %v2173, 104
    %v2186 = vpop.permute.xlu0 %2185
    %2187 = vrot.lane.b32.xlu0 %v2174, 104
    %v2188 = vpop.permute.xlu0 %2187
    %2191 = vrot.lane.b32.xlu0 %v2151, 120
    %v2192 = vpop.permute.xlu0 %2191
    %2193 = vrot.lane.b32.xlu0 %v2157, 120
    %v2194 = vpop.permute.xlu0 %2193
    %2195 = vrot.lane.b32.xlu0 %v2151, 112
    %v2196 = vpop.permute.xlu0 %2195
    %2197 = vrot.lane.b32.xlu0 %v2157, 112
    %v2198 = vpop.permute.xlu0 %2197
    %2199 = vrot.lane.b32.xlu0 %v2151, 104
    %v2200 = vpop.permute.xlu0 %2199
    %2201 = vrot.lane.b32.xlu0 %v2157, 104
    %v2202 = vpop.permute.xlu0 %2201
    %v2203 = vld [vmem:[%s12] sm:$0x1]
    %v2204 = vld [vmem:[%s13] sm:$0x1]
    %v2205 = vld [vmem:[%s14] sm:$0xff]
    %v2206 = vld [vmem:[%s14 + $0x8] sm:$0xff]
    %v2207 = vld [vmem:[%s14 + $0x10] sm:$0xff]
    %v2208 = vld [vmem:[%s14 + $0x18] sm:$0xff]
    %v2209 = vld [vmem:[%s14 + $0x20] sm:$0xff]
    %v2210 = vld [vmem:[%s14 + $0x28] sm:$0xff]
    %v2211 = vld [vmem:[%s14 + $0x30] sm:$0xff]
    %v2212 = vld [vmem:[%s14 + $0x38] sm:$0xff]
    %v2213 = vld [vmem:[#allocation13] sm:$0xff]
    %v2214 = vld [vmem:[#allocation13 + $0x8] sm:$0xff]
    %v2215 = vld [vmem:[#allocation13 + $0x10] sm:$0xff]
    %v2216 = vld [vmem:[#allocation13 + $0x18] sm:$0xff]
    %v2217 = vld [vmem:[#allocation14] sm:$0xff]
    %v2218 = vld [vmem:[#allocation14 + $0x8] sm:$0xff]
    %v2219 = vld [vmem:[#allocation14 + $0x10] sm:$0xff]
    %v2220 = vld [vmem:[#allocation14 + $0x18] sm:$0xff]
    %v2221 = vld [vmem:[%s17] sm:$0xff]
    %v2222 = vld [vmem:[%s17 + $0x8] sm:$0xff]
    %v2223 = vld [vmem:[%s17 + $0x10] sm:$0xff]
    %v2224 = vld [vmem:[%s17 + $0x18] sm:$0xff]
    %v2225 = vld [vmem:[%s17 + $0x20] sm:$0xff]
    %v2226 = vld [vmem:[%s17 + $0x28] sm:$0xff]
    %v2227 = vld [vmem:[%s17 + $0x30] sm:$0xff]
    %v2228 = vld [vmem:[%s17 + $0x38] sm:$0xff]
    %v2229 = vmul.f32 %v171, %v171
    %v2230 = vmul.f32 %v172, %v172
    %v2231 = vsel %vm209, %v2229, 0.0
    %2232 = vadd.xlane.f32.xlu0 %v2231
    %v2233 = vpop.xlane.xlu0 %2232
    %v2234 = vsel %vm209, %v2230, 0.0
    %2235 = vadd.xlane.f32.xlu0 %v2234
    %v2236 = vpop.xlane.xlu0 %2235
    %v2237 = vmul.f32 %v2233, %v216
    %v2238 = vmul.f32 %v2236, %v216
    %v2239 = vadd.f32 %v2237, 1e-05
    %v2240 = vadd.f32 %v2238, 1e-05
    %v2241 = vrsqrt.pop %v2239
    %v2242 = vrsqrt.pop %v2240
    %v2243 = vmul.f32 %v171, %v2241
    %v2244 = vmul.f32 %v172, %v2242
    %v2246 = vlaneseq
    %v2247 = vshrl.u32 %v2246, 7
    %v2248 = vsub.s32 0, %v2247
    %v2249 = vrot.slane %v2203, %v2248
    %v2251 = vmul.f32 %v2243, %v2249
    %v2252 = vmul.f32 %v2244, %v2249
    %v2254 = vsel %vm209, %v2251, 0
    %v2257 = vsel %vm209, %v2252, 0
    %2259 = vmatprep.subr.mxu0 0.0
    %2260 = vmatpush1.msra.mxu0 0.0
    %2261 = vmatprep.subr.mxu0 0.0
    %2262 = vmatpush1.msra.mxu0 0.0
    %2263 = vmatprep.subr.mxu0 0.0
    %2264 = vmatpush1.msra.mxu0 0.0
    %2265 = vmatprep.subr.mxu0 0.0
    %2266 = vmatpush1.msra.mxu0 0.0
    %2267 = vmatprep.subr.mxu0 0.0
    %2268 = vmatpush1.msra.mxu0 0.0
    %2269 = vmatprep.subr.mxu0 0.0
    %2270 = vmatpush1.msra.mxu0 0.0
    %2271 = vmatprep.subr.mxu0 0.0
    %2272 = vmatpush1.msra.mxu0 0.0
    %2273 = vmatprep.subr.mxu0 0.0
    %2274 = vmatpush1.msra.mxu0 0.0
    %2275 = vmatprep.subr.mxu0 0.0
    %2276 = vmatpush1.msra.mxu0 0.0
    %2277 = vmatprep.subr.mxu0 0.0
    %2278 = vmatpush1.msra.mxu0 0.0
    %2279 = vmatprep.subr.mxu0 0.0
    %2280 = vmatpush1.msra.mxu0 0.0
    %2281 = vmatprep.subr.mxu0 0.0
    %2282 = vmatpush1.msra.mxu0 0.0
    %2283 = vmatprep.subr.mxu0 %v2212
    %2284 = vmatpush1.msra.mxu0 %v2211
    %2285 = vmatprep.subr.mxu0 %v2210
    %2286 = vmatpush1.msra.mxu0 %v2209
    %2287 = vmatprep.subr.mxu0 %v2208
    %2288 = vmatpush1.msra.mxu0 %v2207
    %2289 = vmatprep.subr.mxu0 %v2206
    %2290 = vmatpush1.msra.mxu0 %v2205
    %2291 = vmatprep.subr.mxu0 0.0
    %2292 = vmatpush2.msra.mxu0 0.0
    %2293 = vmatprep.subr.mxu0 0.0
    %2294 = vmatpush2.msra.mxu0 0.0
    %2295 = vmatprep.subr.mxu0 0.0
    %2296 = vmatpush2.msra.mxu0 0.0
    %2297 = vmatprep.subr.mxu0 0.0
    %2298 = vmatpush2.msra.mxu0 0.0
    %2299 = vmatprep.subr.mxu0 0.0
    %2300 = vmatpush2.msra.mxu0 0.0
    %2301 = vmatprep.subr.mxu0 0.0
    %2302 = vmatpush2.msra.mxu0 0.0
    %2303 = vmatprep.subr.mxu0 0.0
    %2304 = vmatpush2.msra.mxu0 0.0
    %2305 = vmatprep.subr.mxu0 0.0
    %2306 = vmatpush2.msra.mxu0 0.0
    %2307 = vmatprep.subr.mxu0 0.0
    %2308 = vmatpush2.msra.mxu0 0.0
    %2309 = vmatprep.subr.mxu0 0.0
    %2310 = vmatpush2.msra.mxu0 0.0
    %2311 = vmatprep.subr.mxu0 0.0
    %2312 = vmatpush2.msra.mxu0 0.0
    %2313 = vmatprep.subr.mxu0 0.0
    %2314 = vmatpush2.msra.mxu0 0.0
    %2315 = vmatprep.subr.mxu0 0.0
    %2316 = vmatpush2.msra.mxu0 0.0
    %2317 = vmatprep.subr.mxu0 0.0
    %2318 = vmatpush2.msra.mxu0 0.0
    %2319 = vmatprep.subr.mxu0 0.0
    %2320 = vmatpush2.msra.mxu0 0.0
    %2321 = vmatprep.subr.mxu0 0.0
    %2322 = vmatpush2.msra.mxu0 0.0
    %2323 = vmatprep.mubr.f32.mxu0 0.0
    %2324 = vmatmul.mubr.f32.gmra.mxu0 %v2254
    %v2325 = vpop.f32.mrf.mxu0
    %v2326 = vadd.f32 0.0, %v2325
    %v2327 = vpop.f32.mrf.mxu0
    %v2328 = vadd.f32 0.0, %v2327
    %2329 = vmatprep.mubr.f32.mxu0 0.0
    %2330 = vmatmul.mubr.f32.gmra.mxu0 %v2257
    %v2331 = vpop.f32.mrf.mxu0
    %v2332 = vadd.f32 0.0, %v2331
    %v2333 = vpop.f32.mrf.mxu0
    %v2334 = vadd.f32 0.0, %v2333
    %2335 = vdwg.mxu0
    %v2336 = vmul.f32 %v2326, %v177
    %v2337 = vmul.f32 %v2332, %v178
    %2340 = vrot.lane.b32.xlu0 %v179, 96
    %v2341 = vpop.permute.xlu0 %2340
    %2342 = vrot.lane.b32.xlu0 %v180, 96
    %v2343 = vpop.permute.xlu0 %2342
    %v2346 = vmul.f32 %v2326, %v2341
    %v2347 = vmul.f32 %v2332, %v2343
    %2350 = vrot.lane.b32.xlu0 %v2346, 32
    %v2351 = vpop.permute.xlu0 %2350
    %2352 = vrot.lane.b32.xlu0 %v2347, 32
    %v2353 = vpop.permute.xlu0 %2352
    %v2356 = vadd.f32 %v2336, %v2351
    %v2357 = vadd.f32 %v2337, %v2353
    %2360 = vrot.lane.b32.xlu0 %v177, 32
    %v2361 = vpop.permute.xlu0 %2360
    %2362 = vrot.lane.b32.xlu0 %v178, 32
    %v2363 = vpop.permute.xlu0 %2362
    %v2366 = vmul.f32 %v2326, %v2361
    %v2367 = vmul.f32 %v2332, %v2363
    %v2368 = vmul.f32 %v2328, %v179
    %v2369 = vmul.f32 %v2334, %v180
    %2372 = vrot.lane.b32.xlu0 %v2368, 32
    %v2373 = vpop.permute.xlu0 %2372
    %2374 = vrot.lane.b32.xlu0 %v2369, 32
    %v2375 = vpop.permute.xlu0 %2374
    %v2378 = vadd.f32 %v2366, %v2373
    %v2379 = vadd.f32 %v2367, %v2375
    %2382 = vrot.lane.b32.xlu0 %v2356, 120
    %v2383 = vpop.permute.xlu0 %2382
    %2384 = vrot.lane.b32.xlu0 %v2357, 120
    %v2385 = vpop.permute.xlu0 %2384
    %2386 = vrot.lane.b32.xlu0 %v2356, 112
    %v2387 = vpop.permute.xlu0 %2386
    %2388 = vrot.lane.b32.xlu0 %v2357, 112
    %v2389 = vpop.permute.xlu0 %2388
    %2390 = vrot.lane.b32.xlu0 %v2356, 104
    %v2391 = vpop.permute.xlu0 %2390
    %2392 = vrot.lane.b32.xlu0 %v2357, 104
    %v2393 = vpop.permute.xlu0 %2392
    %2396 = vrot.lane.b32.xlu0 %v2378, 120
    %v2397 = vpop.permute.xlu0 %2396
    %2398 = vrot.lane.b32.xlu0 %v2379, 120
    %v2399 = vpop.permute.xlu0 %2398
    %2400 = vrot.lane.b32.xlu0 %v2378, 112
    %v2401 = vpop.permute.xlu0 %2400
    %2402 = vrot.lane.b32.xlu0 %v2379, 112
    %v2403 = vpop.permute.xlu0 %2402
    %2404 = vrot.lane.b32.xlu0 %v2378, 104
    %v2405 = vpop.permute.xlu0 %2404
    %2406 = vrot.lane.b32.xlu0 %v2379, 104
    %v2407 = vpop.permute.xlu0 %2406
    %2410 = vrot.lane.b32.xlu0 %v2326, 120
    %v2411 = vpop.permute.xlu0 %2410
    %2412 = vrot.lane.b32.xlu0 %v2332, 120
    %v2413 = vpop.permute.xlu0 %2412
    %2414 = vrot.lane.b32.xlu0 %v2326, 112
    %v2415 = vpop.permute.xlu0 %2414
    %2416 = vrot.lane.b32.xlu0 %v2332, 112
    %v2417 = vpop.permute.xlu0 %2416
    %2418 = vrot.lane.b32.xlu0 %v2326, 104
    %v2419 = vpop.permute.xlu0 %2418
    %2420 = vrot.lane.b32.xlu0 %v2332, 104
    %v2421 = vpop.permute.xlu0 %2420
    %2422 = vrot.lane.b32.xlu0 %v2378, 96
    %v2423 = vpop.permute.xlu0 %2422
    %v2424 = vsel %vm404, %v2356, 0
    %v2426 = vsel %vm404, %v2423, 0
    %2428 = vmatprep.subr.mxu0 0.0
    %2429 = vmatpush1.xpose.msra.mxu0 0.0
    %2430 = vmatprep.subr.mxu0 0.0
    %2431 = vmatpush1.xpose.msra.mxu0 0.0
    %2432 = vmatprep.subr.mxu0 0.0
    %2433 = vmatpush1.xpose.msra.mxu0 0.0
    %2434 = vmatprep.subr.mxu0 0.0
    %2435 = vmatpush1.xpose.msra.mxu0 0.0
    %2436 = vmatprep.subr.mxu0 0.0
    %2437 = vmatpush1.xpose.msra.mxu0 0.0
    %2438 = vmatprep.subr.mxu0 0.0
    %2439 = vmatpush1.xpose.msra.mxu0 0.0
    %2440 = vmatprep.subr.mxu0 0.0
    %2441 = vmatpush1.xpose.msra.mxu0 0.0
    %2442 = vmatprep.subr.mxu0 0.0
    %2443 = vmatpush1.xpose.msra.mxu0 0.0
    %2444 = vmatprep.subr.mxu0 0.0
    %2445 = vmatpush1.xpose.msra.mxu0 0.0
    %2446 = vmatprep.subr.mxu0 0.0
    %2447 = vmatpush1.xpose.msra.mxu0 0.0
    %2448 = vmatprep.subr.mxu0 0.0
    %2449 = vmatpush1.xpose.msra.mxu0 0.0
    %2450 = vmatprep.subr.mxu0 0.0
    %2451 = vmatpush1.xpose.msra.mxu0 0.0
    %2452 = vmatprep.subr.mxu0 0.0
    %2453 = vmatpush1.xpose.msra.mxu0 0.0
    %2454 = vmatprep.subr.mxu0 0.0
    %2455 = vmatpush1.xpose.msra.mxu0 0.0
    %2456 = vmatprep.subr.mxu0 0.0
    %2457 = vmatpush1.xpose.msra.mxu0 %v2426
    %2458 = vmatprep.subr.mxu0 0.0
    %2459 = vmatpush1.xpose.msra.mxu0 %v407
    %2460 = vmatprep.subr.mxu0 0.0
    %2461 = vmatpush2.xpose.msra.mxu0 0.0
    %2462 = vmatprep.subr.mxu0 0.0
    %2463 = vmatpush2.xpose.msra.mxu0 0.0
    %2464 = vmatprep.subr.mxu0 0.0
    %2465 = vmatpush2.xpose.msra.mxu0 0.0
    %2466 = vmatprep.subr.mxu0 0.0
    %2467 = vmatpush2.xpose.msra.mxu0 0.0
    %2468 = vmatprep.subr.mxu0 0.0
    %2469 = vmatpush2.xpose.msra.mxu0 0.0
    %2470 = vmatprep.subr.mxu0 0.0
    %2471 = vmatpush2.xpose.msra.mxu0 0.0
    %2472 = vmatprep.subr.mxu0 0.0
    %2473 = vmatpush2.xpose.msra.mxu0 0.0
    %2474 = vmatprep.subr.mxu0 0.0
    %2475 = vmatpush2.xpose.msra.mxu0 0.0
    %2476 = vmatprep.subr.mxu0 0.0
    %2477 = vmatpush2.xpose.msra.mxu0 0.0
    %2478 = vmatprep.subr.mxu0 0.0
    %2479 = vmatpush2.xpose.msra.mxu0 0.0
    %2480 = vmatprep.subr.mxu0 0.0
    %2481 = vmatpush2.xpose.msra.mxu0 0.0
    %2482 = vmatprep.subr.mxu0 0.0
    %2483 = vmatpush2.xpose.msra.mxu0 0.0
    %2484 = vmatprep.subr.mxu0 0.0
    %2485 = vmatpush2.xpose.msra.mxu0 0.0
    %2486 = vmatprep.subr.mxu0 0.0
    %2487 = vmatpush2.xpose.msra.mxu0 0.0
    %2488 = vmatprep.subr.mxu0 0.0
    %2489 = vmatpush2.xpose.msra.mxu0 0.0
    %2490 = vmatprep.subr.mxu0 0.0
    %2491 = vmatpush2.xpose.msra.mxu0 0.0
    %2492 = vmatprep.mubr.f32.mxu0 0.0
    %2493 = vmatmul.mubr.f32.gmra.mxu0 %v2424
    %v2494 = vpop.f32.mrf.mxu0
    %v2495 = vadd.f32 0.0, %v2494
    %v2496 = vpop.f32.mrf.mxu0
    %2497 = vdwg.mxu0
    %2498 = vrot.lane.b32.xlu0 %v2379, 96
    %v2499 = vpop.permute.xlu0 %2498
    %v2500 = vsel %vm404, %v2357, 0
    %v2502 = vsel %vm404, %v2499, 0
    %2504 = vmatprep.subr.mxu0 0.0
    %2505 = vmatpush1.xpose.msra.mxu0 0.0
    %2506 = vmatprep.subr.mxu0 0.0
    %2507 = vmatpush1.xpose.msra.mxu0 0.0
    %2508 = vmatprep.subr.mxu0 0.0
    %2509 = vmatpush1.xpose.msra.mxu0 0.0
    %2510 = vmatprep.subr.mxu0 0.0
    %2511 = vmatpush1.xpose.msra.mxu0 0.0
    %2512 = vmatprep.subr.mxu0 0.0
    %2513 = vmatpush1.xpose.msra.mxu0 0.0
    %2514 = vmatprep.subr.mxu0 0.0
    %2515 = vmatpush1.xpose.msra.mxu0 0.0
    %2516 = vmatprep.subr.mxu0 0.0
    %2517 = vmatpush1.xpose.msra.mxu0 0.0
    %2518 = vmatprep.subr.mxu0 0.0
    %2519 = vmatpush1.xpose.msra.mxu0 0.0
    %2520 = vmatprep.subr.mxu0 0.0
    %2521 = vmatpush1.xpose.msra.mxu0 0.0
    %2522 = vmatprep.subr.mxu0 0.0
    %2523 = vmatpush1.xpose.msra.mxu0 0.0
    %2524 = vmatprep.subr.mxu0 0.0
    %2525 = vmatpush1.xpose.msra.mxu0 0.0
    %2526 = vmatprep.subr.mxu0 0.0
    %2527 = vmatpush1.xpose.msra.mxu0 0.0
    %2528 = vmatprep.subr.mxu0 0.0
    %2529 = vmatpush1.xpose.msra.mxu0 0.0
    %2530 = vmatprep.subr.mxu0 0.0
    %2531 = vmatpush1.xpose.msra.mxu0 0.0
    %2532 = vmatprep.subr.mxu0 0.0
    %2533 = vmatpush1.xpose.msra.mxu0 %v2502
    %2534 = vmatprep.subr.mxu0 0.0
    %2535 = vmatpush1.xpose.msra.mxu0 %v483
    %2536 = vmatprep.subr.mxu0 0.0
    %2537 = vmatpush2.xpose.msra.mxu0 0.0
    %2538 = vmatprep.subr.mxu0 0.0
    %2539 = vmatpush2.xpose.msra.mxu0 0.0
    %2540 = vmatprep.subr.mxu0 0.0
    %2541 = vmatpush2.xpose.msra.mxu0 0.0
    %2542 = vmatprep.subr.mxu0 0.0
    %2543 = vmatpush2.xpose.msra.mxu0 0.0
    %2544 = vmatprep.subr.mxu0 0.0
    %2545 = vmatpush2.xpose.msra.mxu0 0.0
    %2546 = vmatprep.subr.mxu0 0.0
    %2547 = vmatpush2.xpose.msra.mxu0 0.0
    %2548 = vmatprep.subr.mxu0 0.0
    %2549 = vmatpush2.xpose.msra.mxu0 0.0
    %2550 = vmatprep.subr.mxu0 0.0
    %2551 = vmatpush2.xpose.msra.mxu0 0.0
    %2552 = vmatprep.subr.mxu0 0.0
    %2553 = vmatpush2.xpose.msra.mxu0 0.0
    %2554 = vmatprep.subr.mxu0 0.0
    %2555 = vmatpush2.xpose.msra.mxu0 0.0
    %2556 = vmatprep.subr.mxu0 0.0
    %2557 = vmatpush2.xpose.msra.mxu0 0.0
    %2558 = vmatprep.subr.mxu0 0.0
    %2559 = vmatpush2.xpose.msra.mxu0 0.0
    %2560 = vmatprep.subr.mxu0 0.0
    %2561 = vmatpush2.xpose.msra.mxu0 0.0
    %2562 = vmatprep.subr.mxu0 0.0
    %2563 = vmatpush2.xpose.msra.mxu0 0.0
    %2564 = vmatprep.subr.mxu0 0.0
    %2565 = vmatpush2.xpose.msra.mxu0 0.0
    %2566 = vmatprep.subr.mxu0 0.0
    %2567 = vmatpush2.xpose.msra.mxu0 0.0
    %2568 = vmatprep.mubr.f32.mxu0 0.0
    %2569 = vmatmul.mubr.f32.gmra.mxu0 %v2500
    %v2570 = vpop.f32.mrf.mxu0
    %v2571 = vadd.f32 0.0, %v2570
    %v2572 = vpop.f32.mrf.mxu0
    %2573 = vdwg.mxu0
    %2574 = vrot.lane.b32.xlu0 %v2397, 96
    %v2575 = vpop.permute.xlu0 %2574
    %v2576 = vsel %vm404, %v2383, 0
    %v2578 = vsel %vm404, %v2575, 0
    %2580 = vmatprep.subr.mxu0 0.0
    %2581 = vmatpush1.xpose.msra.mxu0 0.0
    %2582 = vmatprep.subr.mxu0 0.0
    %2583 = vmatpush1.xpose.msra.mxu0 0.0
    %2584 = vmatprep.subr.mxu0 0.0
    %2585 = vmatpush1.xpose.msra.mxu0 0.0
    %2586 = vmatprep.subr.mxu0 0.0
    %2587 = vmatpush1.xpose.msra.mxu0 0.0
    %2588 = vmatprep.subr.mxu0 0.0
    %2589 = vmatpush1.xpose.msra.mxu0 0.0
    %2590 = vmatprep.subr.mxu0 0.0
    %2591 = vmatpush1.xpose.msra.mxu0 0.0
    %2592 = vmatprep.subr.mxu0 0.0
    %2593 = vmatpush1.xpose.msra.mxu0 0.0
    %2594 = vmatprep.subr.mxu0 0.0
    %2595 = vmatpush1.xpose.msra.mxu0 0.0
    %2596 = vmatprep.subr.mxu0 0.0
    %2597 = vmatpush1.xpose.msra.mxu0 0.0
    %2598 = vmatprep.subr.mxu0 0.0
    %2599 = vmatpush1.xpose.msra.mxu0 0.0
    %2600 = vmatprep.subr.mxu0 0.0
    %2601 = vmatpush1.xpose.msra.mxu0 0.0
    %2602 = vmatprep.subr.mxu0 0.0
    %2603 = vmatpush1.xpose.msra.mxu0 0.0
    %2604 = vmatprep.subr.mxu0 0.0
    %2605 = vmatpush1.xpose.msra.mxu0 0.0
    %2606 = vmatprep.subr.mxu0 0.0
    %2607 = vmatpush1.xpose.msra.mxu0 0.0
    %2608 = vmatprep.subr.mxu0 0.0
    %2609 = vmatpush1.xpose.msra.mxu0 %v2578
    %2610 = vmatprep.subr.mxu0 0.0
    %2611 = vmatpush1.xpose.msra.mxu0 %v559
    %2612 = vmatprep.subr.mxu0 0.0
    %2613 = vmatpush2.xpose.msra.mxu0 0.0
    %2614 = vmatprep.subr.mxu0 0.0
    %2615 = vmatpush2.xpose.msra.mxu0 0.0
    %2616 = vmatprep.subr.mxu0 0.0
    %2617 = vmatpush2.xpose.msra.mxu0 0.0
    %2618 = vmatprep.subr.mxu0 0.0
    %2619 = vmatpush2.xpose.msra.mxu0 0.0
    %2620 = vmatprep.subr.mxu0 0.0
    %2621 = vmatpush2.xpose.msra.mxu0 0.0
    %2622 = vmatprep.subr.mxu0 0.0
    %2623 = vmatpush2.xpose.msra.mxu0 0.0
    %2624 = vmatprep.subr.mxu0 0.0
    %2625 = vmatpush2.xpose.msra.mxu0 0.0
    %2626 = vmatprep.subr.mxu0 0.0
    %2627 = vmatpush2.xpose.msra.mxu0 0.0
    %2628 = vmatprep.subr.mxu0 0.0
    %2629 = vmatpush2.xpose.msra.mxu0 0.0
    %2630 = vmatprep.subr.mxu0 0.0
    %2631 = vmatpush2.xpose.msra.mxu0 0.0
    %2632 = vmatprep.subr.mxu0 0.0
    %2633 = vmatpush2.xpose.msra.mxu0 0.0
    %2634 = vmatprep.subr.mxu0 0.0
    %2635 = vmatpush2.xpose.msra.mxu0 0.0
    %2636 = vmatprep.subr.mxu0 0.0
    %2637 = vmatpush2.xpose.msra.mxu0 0.0
    %2638 = vmatprep.subr.mxu0 0.0
    %2639 = vmatpush2.xpose.msra.mxu0 0.0
    %2640 = vmatprep.subr.mxu0 0.0
    %2641 = vmatpush2.xpose.msra.mxu0 0.0
    %2642 = vmatprep.subr.mxu0 0.0
    %2643 = vmatpush2.xpose.msra.mxu0 0.0
    %2644 = vmatprep.mubr.f32.mxu0 0.0
    %2645 = vmatmul.mubr.f32.gmra.mxu0 %v2576
    %v2646 = vpop.f32.mrf.mxu0
    %v2647 = vadd.f32 0.0, %v2646
    %v2648 = vpop.f32.mrf.mxu0
    %2649 = vdwg.mxu0
    %2650 = vrot.lane.b32.xlu0 %v2399, 96
    %v2651 = vpop.permute.xlu0 %2650
    %v2652 = vsel %vm404, %v2385, 0
    %v2654 = vsel %vm404, %v2651, 0
    %2656 = vmatprep.subr.mxu0 0.0
    %2657 = vmatpush1.xpose.msra.mxu0 0.0
    %2658 = vmatprep.subr.mxu0 0.0
    %2659 = vmatpush1.xpose.msra.mxu0 0.0
    %2660 = vmatprep.subr.mxu0 0.0
    %2661 = vmatpush1.xpose.msra.mxu0 0.0
    %2662 = vmatprep.subr.mxu0 0.0
    %2663 = vmatpush1.xpose.msra.mxu0 0.0
    %2664 = vmatprep.subr.mxu0 0.0
    %2665 = vmatpush1.xpose.msra.mxu0 0.0
    %2666 = vmatprep.subr.mxu0 0.0
    %2667 = vmatpush1.xpose.msra.mxu0 0.0
    %2668 = vmatprep.subr.mxu0 0.0
    %2669 = vmatpush1.xpose.msra.mxu0 0.0
    %2670 = vmatprep.subr.mxu0 0.0
    %2671 = vmatpush1.xpose.msra.mxu0 0.0
    %2672 = vmatprep.subr.mxu0 0.0
    %2673 = vmatpush1.xpose.msra.mxu0 0.0
    %2674 = vmatprep.subr.mxu0 0.0
    %2675 = vmatpush1.xpose.msra.mxu0 0.0
    %2676 = vmatprep.subr.mxu0 0.0
    %2677 = vmatpush1.xpose.msra.mxu0 0.0
    %2678 = vmatprep.subr.mxu0 0.0
    %2679 = vmatpush1.xpose.msra.mxu0 0.0
    %2680 = vmatprep.subr.mxu0 0.0
    %2681 = vmatpush1.xpose.msra.mxu0 0.0
    %2682 = vmatprep.subr.mxu0 0.0
    %2683 = vmatpush1.xpose.msra.mxu0 0.0
    %2684 = vmatprep.subr.mxu0 0.0
    %2685 = vmatpush1.xpose.msra.mxu0 %v2654
    %2686 = vmatprep.subr.mxu0 0.0
    %2687 = vmatpush1.xpose.msra.mxu0 %v635
    %2688 = vmatprep.subr.mxu0 0.0
    %2689 = vmatpush2.xpose.msra.mxu0 0.0
    %2690 = vmatprep.subr.mxu0 0.0
    %2691 = vmatpush2.xpose.msra.mxu0 0.0
    %2692 = vmatprep.subr.mxu0 0.0
    %2693 = vmatpush2.xpose.msra.mxu0 0.0
    %2694 = vmatprep.subr.mxu0 0.0
    %2695 = vmatpush2.xpose.msra.mxu0 0.0
    %2696 = vmatprep.subr.mxu0 0.0
    %2697 = vmatpush2.xpose.msra.mxu0 0.0
    %2698 = vmatprep.subr.mxu0 0.0
    %2699 = vmatpush2.xpose.msra.mxu0 0.0
    %2700 = vmatprep.subr.mxu0 0.0
    %2701 = vmatpush2.xpose.msra.mxu0 0.0
    %2702 = vmatprep.subr.mxu0 0.0
    %2703 = vmatpush2.xpose.msra.mxu0 0.0
    %2704 = vmatprep.subr.mxu0 0.0
    %2705 = vmatpush2.xpose.msra.mxu0 0.0
    %2706 = vmatprep.subr.mxu0 0.0
    %2707 = vmatpush2.xpose.msra.mxu0 0.0
    %2708 = vmatprep.subr.mxu0 0.0
    %2709 = vmatpush2.xpose.msra.mxu0 0.0
    %2710 = vmatprep.subr.mxu0 0.0
    %2711 = vmatpush2.xpose.msra.mxu0 0.0
    %2712 = vmatprep.subr.mxu0 0.0
    %2713 = vmatpush2.xpose.msra.mxu0 0.0
    %2714 = vmatprep.subr.mxu0 0.0
    %2715 = vmatpush2.xpose.msra.mxu0 0.0
    %2716 = vmatprep.subr.mxu0 0.0
    %2717 = vmatpush2.xpose.msra.mxu0 0.0
    %2718 = vmatprep.subr.mxu0 0.0
    %2719 = vmatpush2.xpose.msra.mxu0 0.0
    %2720 = vmatprep.mubr.f32.mxu0 0.0
    %2721 = vmatmul.mubr.f32.gmra.mxu0 %v2652
    %v2722 = vpop.f32.mrf.mxu0
    %v2723 = vadd.f32 0.0, %v2722
    %v2724 = vpop.f32.mrf.mxu0
    %2725 = vdwg.mxu0
    %2726 = vrot.lane.b32.xlu0 %v2401, 96
    %v2727 = vpop.permute.xlu0 %2726
    %v2728 = vsel %vm404, %v2387, 0
    %v2730 = vsel %vm404, %v2727, 0
    %2732 = vmatprep.subr.mxu0 0.0
    %2733 = vmatpush1.xpose.msra.mxu0 0.0
    %2734 = vmatprep.subr.mxu0 0.0
    %2735 = vmatpush1.xpose.msra.mxu0 0.0
    %2736 = vmatprep.subr.mxu0 0.0
    %2737 = vmatpush1.xpose.msra.mxu0 0.0
    %2738 = vmatprep.subr.mxu0 0.0
    %2739 = vmatpush1.xpose.msra.mxu0 0.0
    %2740 = vmatprep.subr.mxu0 0.0
    %2741 = vmatpush1.xpose.msra.mxu0 0.0
    %2742 = vmatprep.subr.mxu0 0.0
    %2743 = vmatpush1.xpose.msra.mxu0 0.0
    %2744 = vmatprep.subr.mxu0 0.0
    %2745 = vmatpush1.xpose.msra.mxu0 0.0
    %2746 = vmatprep.subr.mxu0 0.0
    %2747 = vmatpush1.xpose.msra.mxu0 0.0
    %2748 = vmatprep.subr.mxu0 0.0
    %2749 = vmatpush1.xpose.msra.mxu0 0.0
    %2750 = vmatprep.subr.mxu0 0.0
    %2751 = vmatpush1.xpose.msra.mxu0 0.0
    %2752 = vmatprep.subr.mxu0 0.0
    %2753 = vmatpush1.xpose.msra.mxu0 0.0
    %2754 = vmatprep.subr.mxu0 0.0
    %2755 = vmatpush1.xpose.msra.mxu0 0.0
    %2756 = vmatprep.subr.mxu0 0.0
    %2757 = vmatpush1.xpose.msra.mxu0 0.0
    %2758 = vmatprep.subr.mxu0 0.0
    %2759 = vmatpush1.xpose.msra.mxu0 0.0
    %2760 = vmatprep.subr.mxu0 0.0
    %2761 = vmatpush1.xpose.msra.mxu0 %v2730
    %2762 = vmatprep.subr.mxu0 0.0
    %2763 = vmatpush1.xpose.msra.mxu0 %v711
    %2764 = vmatprep.subr.mxu0 0.0
    %2765 = vmatpush2.xpose.msra.mxu0 0.0
    %2766 = vmatprep.subr.mxu0 0.0
    %2767 = vmatpush2.xpose.msra.mxu0 0.0
    %2768 = vmatprep.subr.mxu0 0.0
    %2769 = vmatpush2.xpose.msra.mxu0 0.0
    %2770 = vmatprep.subr.mxu0 0.0
    %2771 = vmatpush2.xpose.msra.mxu0 0.0
    %2772 = vmatprep.subr.mxu0 0.0
    %2773 = vmatpush2.xpose.msra.mxu0 0.0
    %2774 = vmatprep.subr.mxu0 0.0
    %2775 = vmatpush2.xpose.msra.mxu0 0.0
    %2776 = vmatprep.subr.mxu0 0.0
    %2777 = vmatpush2.xpose.msra.mxu0 0.0
    %2778 = vmatprep.subr.mxu0 0.0
    %2779 = vmatpush2.xpose.msra.mxu0 0.0
    %2780 = vmatprep.subr.mxu0 0.0
    %2781 = vmatpush2.xpose.msra.mxu0 0.0
    %2782 = vmatprep.subr.mxu0 0.0
    %2783 = vmatpush2.xpose.msra.mxu0 0.0
    %2784 = vmatprep.subr.mxu0 0.0
    %2785 = vmatpush2.xpose.msra.mxu0 0.0
    %2786 = vmatprep.subr.mxu0 0.0
    %2787 = vmatpush2.xpose.msra.mxu0 0.0
    %2788 = vmatprep.subr.mxu0 0.0
    %2789 = vmatpush2.xpose.msra.mxu0 0.0
    %2790 = vmatprep.subr.mxu0 0.0
    %2791 = vmatpush2.xpose.msra.mxu0 0.0
    %2792 = vmatprep.subr.mxu0 0.0
    %2793 = vmatpush2.xpose.msra.mxu0 0.0
    %2794 = vmatprep.subr.mxu0 0.0
    %2795 = vmatpush2.xpose.msra.mxu0 0.0
    %2796 = vmatprep.mubr.f32.mxu0 0.0
    %2797 = vmatmul.mubr.f32.gmra.mxu0 %v2728
    %v2798 = vpop.f32.mrf.mxu0
    %v2799 = vadd.f32 0.0, %v2798
    %v2800 = vpop.f32.mrf.mxu0
    %2801 = vdwg.mxu0
    %2802 = vrot.lane.b32.xlu0 %v2403, 96
    %v2803 = vpop.permute.xlu0 %2802
    %v2804 = vsel %vm404, %v2389, 0
    %v2806 = vsel %vm404, %v2803, 0
    %2808 = vmatprep.subr.mxu0 0.0
    %2809 = vmatpush1.xpose.msra.mxu0 0.0
    %2810 = vmatprep.subr.mxu0 0.0
    %2811 = vmatpush1.xpose.msra.mxu0 0.0
    %2812 = vmatprep.subr.mxu0 0.0
    %2813 = vmatpush1.xpose.msra.mxu0 0.0
    %2814 = vmatprep.subr.mxu0 0.0
    %2815 = vmatpush1.xpose.msra.mxu0 0.0
    %2816 = vmatprep.subr.mxu0 0.0
    %2817 = vmatpush1.xpose.msra.mxu0 0.0
    %2818 = vmatprep.subr.mxu0 0.0
    %2819 = vmatpush1.xpose.msra.mxu0 0.0
    %2820 = vmatprep.subr.mxu0 0.0
    %2821 = vmatpush1.xpose.msra.mxu0 0.0
    %2822 = vmatprep.subr.mxu0 0.0
    %2823 = vmatpush1.xpose.msra.mxu0 0.0
    %2824 = vmatprep.subr.mxu0 0.0
    %2825 = vmatpush1.xpose.msra.mxu0 0.0
    %2826 = vmatprep.subr.mxu0 0.0
    %2827 = vmatpush1.xpose.msra.mxu0 0.0
    %2828 = vmatprep.subr.mxu0 0.0
    %2829 = vmatpush1.xpose.msra.mxu0 0.0
    %2830 = vmatprep.subr.mxu0 0.0
    %2831 = vmatpush1.xpose.msra.mxu0 0.0
    %2832 = vmatprep.subr.mxu0 0.0
    %2833 = vmatpush1.xpose.msra.mxu0 0.0
    %2834 = vmatprep.subr.mxu0 0.0
    %2835 = vmatpush1.xpose.msra.mxu0 0.0
    %2836 = vmatprep.subr.mxu0 0.0
    %2837 = vmatpush1.xpose.msra.mxu0 %v2806
    %2838 = vmatprep.subr.mxu0 0.0
    %2839 = vmatpush1.xpose.msra.mxu0 %v787
    %2840 = vmatprep.subr.mxu0 0.0
    %2841 = vmatpush2.xpose.msra.mxu0 0.0
    %2842 = vmatprep.subr.mxu0 0.0
    %2843 = vmatpush2.xpose.msra.mxu0 0.0
    %2844 = vmatprep.subr.mxu0 0.0
    %2845 = vmatpush2.xpose.msra.mxu0 0.0
    %2846 = vmatprep.subr.mxu0 0.0
    %2847 = vmatpush2.xpose.msra.mxu0 0.0
    %2848 = vmatprep.subr.mxu0 0.0
    %2849 = vmatpush2.xpose.msra.mxu0 0.0
    %2850 = vmatprep.subr.mxu0 0.0
    %2851 = vmatpush2.xpose.msra.mxu0 0.0
    %2852 = vmatprep.subr.mxu0 0.0
    %2853 = vmatpush2.xpose.msra.mxu0 0.0
    %2854 = vmatprep.subr.mxu0 0.0
    %2855 = vmatpush2.xpose.msra.mxu0 0.0
    %2856 = vmatprep.subr.mxu0 0.0
    %2857 = vmatpush2.xpose.msra.mxu0 0.0
    %2858 = vmatprep.subr.mxu0 0.0
    %2859 = vmatpush2.xpose.msra.mxu0 0.0
    %2860 = vmatprep.subr.mxu0 0.0
    %2861 = vmatpush2.xpose.msra.mxu0 0.0
    %2862 = vmatprep.subr.mxu0 0.0
    %2863 = vmatpush2.xpose.msra.mxu0 0.0
    %2864 = vmatprep.subr.mxu0 0.0
    %2865 = vmatpush2.xpose.msra.mxu0 0.0
    %2866 = vmatprep.subr.mxu0 0.0
    %2867 = vmatpush2.xpose.msra.mxu0 0.0
    %2868 = vmatprep.subr.mxu0 0.0
    %2869 = vmatpush2.xpose.msra.mxu0 0.0
    %2870 = vmatprep.subr.mxu0 0.0
    %2871 = vmatpush2.xpose.msra.mxu0 0.0
    %2872 = vmatprep.mubr.f32.mxu0 0.0
    %2873 = vmatmul.mubr.f32.gmra.mxu0 %v2804
    %v2874 = vpop.f32.mrf.mxu0
    %v2875 = vadd.f32 0.0, %v2874
    %v2876 = vpop.f32.mrf.mxu0
    %2877 = vdwg.mxu0
    %2878 = vrot.lane.b32.xlu0 %v2405, 96
    %v2879 = vpop.permute.xlu0 %2878
    %v2880 = vsel %vm404, %v2391, 0
    %v2882 = vsel %vm404, %v2879, 0
    %2884 = vmatprep.subr.mxu0 0.0
    %2885 = vmatpush1.xpose.msra.mxu0 0.0
    %2886 = vmatprep.subr.mxu0 0.0
    %2887 = vmatpush1.xpose.msra.mxu0 0.0
    %2888 = vmatprep.subr.mxu0 0.0
    %2889 = vmatpush1.xpose.msra.mxu0 0.0
    %2890 = vmatprep.subr.mxu0 0.0
    %2891 = vmatpush1.xpose.msra.mxu0 0.0
    %2892 = vmatprep.subr.mxu0 0.0
    %2893 = vmatpush1.xpose.msra.mxu0 0.0
    %2894 = vmatprep.subr.mxu0 0.0
    %2895 = vmatpush1.xpose.msra.mxu0 0.0
    %2896 = vmatprep.subr.mxu0 0.0
    %2897 = vmatpush1.xpose.msra.mxu0 0.0
    %2898 = vmatprep.subr.mxu0 0.0
    %2899 = vmatpush1.xpose.msra.mxu0 0.0
    %2900 = vmatprep.subr.mxu0 0.0
    %2901 = vmatpush1.xpose.msra.mxu0 0.0
    %2902 = vmatprep.subr.mxu0 0.0
    %2903 = vmatpush1.xpose.msra.mxu0 0.0
    %2904 = vmatprep.subr.mxu0 0.0
    %2905 = vmatpush1.xpose.msra.mxu0 0.0
    %2906 = vmatprep.subr.mxu0 0.0
    %2907 = vmatpush1.xpose.msra.mxu0 0.0
    %2908 = vmatprep.subr.mxu0 0.0
    %2909 = vmatpush1.xpose.msra.mxu0 0.0
    %2910 = vmatprep.subr.mxu0 0.0
    %2911 = vmatpush1.xpose.msra.mxu0 0.0
    %2912 = vmatprep.subr.mxu0 0.0
    %2913 = vmatpush1.xpose.msra.mxu0 %v2882
    %2914 = vmatprep.subr.mxu0 0.0
    %2915 = vmatpush1.xpose.msra.mxu0 %v863
    %2916 = vmatprep.subr.mxu0 0.0
    %2917 = vmatpush2.xpose.msra.mxu0 0.0
    %2918 = vmatprep.subr.mxu0 0.0
    %2919 = vmatpush2.xpose.msra.mxu0 0.0
    %2920 = vmatprep.subr.mxu0 0.0
    %2921 = vmatpush2.xpose.msra.mxu0 0.0
    %2922 = vmatprep.subr.mxu0 0.0
    %2923 = vmatpush2.xpose.msra.mxu0 0.0
    %2924 = vmatprep.subr.mxu0 0.0
    %2925 = vmatpush2.xpose.msra.mxu0 0.0
    %2926 = vmatprep.subr.mxu0 0.0
    %2927 = vmatpush2.xpose.msra.mxu0 0.0
    %2928 = vmatprep.subr.mxu0 0.0
    %2929 = vmatpush2.xpose.msra.mxu0 0.0
    %2930 = vmatprep.subr.mxu0 0.0
    %2931 = vmatpush2.xpose.msra.mxu0 0.0
    %2932 = vmatprep.subr.mxu0 0.0
    %2933 = vmatpush2.xpose.msra.mxu0 0.0
    %2934 = vmatprep.subr.mxu0 0.0
    %2935 = vmatpush2.xpose.msra.mxu0 0.0
    %2936 = vmatprep.subr.mxu0 0.0
    %2937 = vmatpush2.xpose.msra.mxu0 0.0
    %2938 = vmatprep.subr.mxu0 0.0
    %2939 = vmatpush2.xpose.msra.mxu0 0.0
    %2940 = vmatprep.subr.mxu0 0.0
    %2941 = vmatpush2.xpose.msra.mxu0 0.0
    %2942 = vmatprep.subr.mxu0 0.0
    %2943 = vmatpush2.xpose.msra.mxu0 0.0
    %2944 = vmatprep.subr.mxu0 0.0
    %2945 = vmatpush2.xpose.msra.mxu0 0.0
    %2946 = vmatprep.subr.mxu0 0.0
    %2947 = vmatpush2.xpose.msra.mxu0 0.0
    %2948 = vmatprep.mubr.f32.mxu0 0.0
    %2949 = vmatmul.mubr.f32.gmra.mxu0 %v2880
    %v2950 = vpop.f32.mrf.mxu0
    %v2951 = vadd.f32 0.0, %v2950
    %v2952 = vpop.f32.mrf.mxu0
    %2953 = vdwg.mxu0
    %2954 = vrot.lane.b32.xlu0 %v2407, 96
    %v2955 = vpop.permute.xlu0 %2954
    %v2956 = vsel %vm404, %v2393, 0
    %v2958 = vsel %vm404, %v2955, 0
    %2960 = vmatprep.subr.mxu0 0.0
    %2961 = vmatpush1.xpose.msra.mxu0 0.0
    %2962 = vmatprep.subr.mxu0 0.0
    %2963 = vmatpush1.xpose.msra.mxu0 0.0
    %2964 = vmatprep.subr.mxu0 0.0
    %2965 = vmatpush1.xpose.msra.mxu0 0.0
    %2966 = vmatprep.subr.mxu0 0.0
    %2967 = vmatpush1.xpose.msra.mxu0 0.0
    %2968 = vmatprep.subr.mxu0 0.0
    %2969 = vmatpush1.xpose.msra.mxu0 0.0
    %2970 = vmatprep.subr.mxu0 0.0
    %2971 = vmatpush1.xpose.msra.mxu0 0.0
    %2972 = vmatprep.subr.mxu0 0.0
    %2973 = vmatpush1.xpose.msra.mxu0 0.0
    %2974 = vmatprep.subr.mxu0 0.0
    %2975 = vmatpush1.xpose.msra.mxu0 0.0
    %2976 = vmatprep.subr.mxu0 0.0
    %2977 = vmatpush1.xpose.msra.mxu0 0.0
    %2978 = vmatprep.subr.mxu0 0.0
    %2979 = vmatpush1.xpose.msra.mxu0 0.0
    %2980 = vmatprep.subr.mxu0 0.0
    %2981 = vmatpush1.xpose.msra.mxu0 0.0
    %2982 = vmatprep.subr.mxu0 0.0
    %2983 = vmatpush1.xpose.msra.mxu0 0.0
    %2984 = vmatprep.subr.mxu0 0.0
    %2985 = vmatpush1.xpose.msra.mxu0 0.0
    %2986 = vmatprep.subr.mxu0 0.0
    %2987 = vmatpush1.xpose.msra.mxu0 0.0
    %2988 = vmatprep.subr.mxu0 0.0
    %2989 = vmatpush1.xpose.msra.mxu0 %v2958
    %2990 = vmatprep.subr.mxu0 0.0
    %2991 = vmatpush1.xpose.msra.mxu0 %v939
    %2992 = vmatprep.subr.mxu0 0.0
    %2993 = vmatpush2.xpose.msra.mxu0 0.0
    %2994 = vmatprep.subr.mxu0 0.0
    %2995 = vmatpush2.xpose.msra.mxu0 0.0
    %2996 = vmatprep.subr.mxu0 0.0
    %2997 = vmatpush2.xpose.msra.mxu0 0.0
    %2998 = vmatprep.subr.mxu0 0.0
    %2999 = vmatpush2.xpose.msra.mxu0 0.0
    %3000 = vmatprep.subr.mxu0 0.0
    %3001 = vmatpush2.xpose.msra.mxu0 0.0
    %3002 = vmatprep.subr.mxu0 0.0
    %3003 = vmatpush2.xpose.msra.mxu0 0.0
    %3004 = vmatprep.subr.mxu0 0.0
    %3005 = vmatpush2.xpose.msra.mxu0 0.0
    %3006 = vmatprep.subr.mxu0 0.0
    %3007 = vmatpush2.xpose.msra.mxu0 0.0
    %3008 = vmatprep.subr.mxu0 0.0
    %3009 = vmatpush2.xpose.msra.mxu0 0.0
    %3010 = vmatprep.subr.mxu0 0.0
    %3011 = vmatpush2.xpose.msra.mxu0 0.0
    %3012 = vmatprep.subr.mxu0 0.0
    %3013 = vmatpush2.xpose.msra.mxu0 0.0
    %3014 = vmatprep.subr.mxu0 0.0
    %3015 = vmatpush2.xpose.msra.mxu0 0.0
    %3016 = vmatprep.subr.mxu0 0.0
    %3017 = vmatpush2.xpose.msra.mxu0 0.0
    %3018 = vmatprep.subr.mxu0 0.0
    %3019 = vmatpush2.xpose.msra.mxu0 0.0
    %3020 = vmatprep.subr.mxu0 0.0
    %3021 = vmatpush2.xpose.msra.mxu0 0.0
    %3022 = vmatprep.subr.mxu0 0.0
    %3023 = vmatpush2.xpose.msra.mxu0 0.0
    %3024 = vmatprep.mubr.f32.mxu0 0.0
    %3025 = vmatmul.mubr.f32.gmra.mxu0 %v2956
    %v3026 = vpop.f32.mrf.mxu0
    %v3027 = vadd.f32 0.0, %v3026
    %v3028 = vpop.f32.mrf.mxu0
    %3029 = vdwg.mxu0
    %v3030 = vmul.f32 %v2495, 0.35355338
    %v3031 = vmul.f32 %v2571, 0.35355338
    %v3032 = vmul.f32 %v2647, 0.35355338
    %v3033 = vmul.f32 %v2723, 0.35355338
    %v3034 = vmul.f32 %v2799, 0.35355338
    %v3035 = vmul.f32 %v2875, 0.35355338
    %v3036 = vmul.f32 %v2951, 0.35355338
    %v3037 = vmul.f32 %v3027, 0.35355338
    %v3038 = vlaneseq
    %v3039 = vshrl.u32 %v3038, 7
    %v3040 = vlaneseq
    %v3041 = vand.u32 %v3040, 127
    %v3042 = vadd.s32 %v3039, 8
    %vm3043 = vcmp.le.s32.totalorder %v3041, %v3042
    %v3044 = vsel %vm3043, %v3030, -1e+30
    %v3045 = vsel %vm3043, %v3031, -1e+30
    %v3046 = vsel %vm3043, %v3032, -1e+30
    %v3047 = vsel %vm3043, %v3033, -1e+30
    %v3048 = vsel %vm3043, %v3034, -1e+30
    %v3049 = vsel %vm3043, %v3035, -1e+30
    %v3050 = vsel %vm3043, %v3036, -1e+30
    %v3051 = vsel %vm3043, %v3037, -1e+30
    %v3052 = vsel %vm1741, %v3044, -inf
    %3053 = vmax.xlane.f32.xlu0 %v3052
    %v3054 = vpop.xlane.xlu0 %3053
    %v3055 = vsel %vm1741, %v3045, -inf
    %3056 = vmax.xlane.f32.xlu0 %v3055
    %v3057 = vpop.xlane.xlu0 %3056
    %v3058 = vsel %vm1741, %v3046, -inf
    %3059 = vmax.xlane.f32.xlu0 %v3058
    %v3060 = vpop.xlane.xlu0 %3059
    %v3061 = vsel %vm1741, %v3047, -inf
    %3062 = vmax.xlane.f32.xlu0 %v3061
    %v3063 = vpop.xlane.xlu0 %3062
    %v3064 = vsel %vm1741, %v3048, -inf
    %3065 = vmax.xlane.f32.xlu0 %v3064
    %v3066 = vpop.xlane.xlu0 %3065
    %v3067 = vsel %vm1741, %v3049, -inf
    %3068 = vmax.xlane.f32.xlu0 %v3067
    %v3069 = vpop.xlane.xlu0 %3068
    %v3070 = vsel %vm1741, %v3050, -inf
    %3071 = vmax.xlane.f32.xlu0 %v3070
    %v3072 = vpop.xlane.xlu0 %3071
    %v3073 = vsel %vm1741, %v3051, -inf
    %3074 = vmax.xlane.f32.xlu0 %v3073
    %v3075 = vpop.xlane.xlu0 %3074
    %v3076 = vsub.f32 %v3044, %v3054
    %v3077 = vsub.f32 %v3045, %v3057
    %v3078 = vsub.f32 %v3046, %v3060
    %v3079 = vsub.f32 %v3047, %v3063
    %v3080 = vsub.f32 %v3048, %v3066
    %v3081 = vsub.f32 %v3049, %v3069
    %v3082 = vsub.f32 %v3050, %v3072
    %v3083 = vsub.f32 %v3051, %v3075
    %v3084 = vmul.f32 %v3076, 1.442695
    %v3085 = vpow.pop %v3084
    %v3086 = vmul.f32 %v3077, 1.442695
    %v3087 = vpow.pop %v3086
    %v3088 = vmul.f32 %v3078, 1.442695
    %v3089 = vpow.pop %v3088
    %v3090 = vmul.f32 %v3079, 1.442695
    %v3091 = vpow.pop %v3090
    %v3092 = vmul.f32 %v3080, 1.442695
    %v3093 = vpow.pop %v3092
    %v3094 = vmul.f32 %v3081, 1.442695
    %v3095 = vpow.pop %v3094
    %v3096 = vmul.f32 %v3082, 1.442695
    %v3097 = vpow.pop %v3096
    %v3098 = vmul.f32 %v3083, 1.442695
    %v3099 = vpow.pop %v3098
    %v3100 = vsel %vm1741, %v3085, 0.0
    %3101 = vadd.xlane.f32.xlu0 %v3100
    %v3102 = vpop.xlane.xlu0 %3101
    %v3103 = vsel %vm1741, %v3087, 0.0
    %3104 = vadd.xlane.f32.xlu0 %v3103
    %v3105 = vpop.xlane.xlu0 %3104
    %v3106 = vsel %vm1741, %v3089, 0.0
    %3107 = vadd.xlane.f32.xlu0 %v3106
    %v3108 = vpop.xlane.xlu0 %3107
    %v3109 = vsel %vm1741, %v3091, 0.0
    %3110 = vadd.xlane.f32.xlu0 %v3109
    %v3111 = vpop.xlane.xlu0 %3110
    %v3112 = vsel %vm1741, %v3093, 0.0
    %3113 = vadd.xlane.f32.xlu0 %v3112
    %v3114 = vpop.xlane.xlu0 %3113
    %v3115 = vsel %vm1741, %v3095, 0.0
    %3116 = vadd.xlane.f32.xlu0 %v3115
    %v3117 = vpop.xlane.xlu0 %3116
    %v3118 = vsel %vm1741, %v3097, 0.0
    %3119 = vadd.xlane.f32.xlu0 %v3118
    %v3120 = vpop.xlane.xlu0 %3119
    %v3121 = vsel %vm1741, %v3099, 0.0
    %3122 = vadd.xlane.f32.xlu0 %v3121
    %v3123 = vpop.xlane.xlu0 %3122
    %v3124 = vrcp.pop %v3102
    %v3125 = vrcp.pop %v3105
    %v3126 = vrcp.pop %v3108
    %v3127 = vrcp.pop %v3111
    %v3128 = vrcp.pop %v3114
    %v3129 = vrcp.pop %v3117
    %v3130 = vrcp.pop %v3120
    %v3131 = vrcp.pop %v3123
    %3132 = vrot.lane.b32.xlu0 %v2326, 64
    %v3133 = vpop.permute.xlu0 %3132
    %v3136 = vsel %vm1741, %v3085, 0
    %3138 = vmatprep.subr.mxu0 0.0
    %3139 = vmatpush1.msra.mxu0 0.0
    %3140 = vmatprep.subr.mxu0 0.0
    %3141 = vmatpush1.msra.mxu0 0.0
    %3142 = vmatprep.subr.mxu0 0.0
    %3143 = vmatpush1.msra.mxu0 0.0
    %3144 = vmatprep.subr.mxu0 0.0
    %3145 = vmatpush1.msra.mxu0 0.0
    %3146 = vmatprep.subr.mxu0 0.0
    %3147 = vmatpush1.msra.mxu0 0.0
    %3148 = vmatprep.subr.mxu0 0.0
    %3149 = vmatpush1.msra.mxu0 0.0
    %3150 = vmatprep.subr.mxu0 0.0
    %3151 = vmatpush1.msra.mxu0 0.0
    %3152 = vmatprep.subr.mxu0 0.0
    %3153 = vmatpush1.msra.mxu0 0.0
    %3154 = vmatprep.subr.mxu0 0.0
    %3155 = vmatpush1.msra.mxu0 0.0
    %3156 = vmatprep.subr.mxu0 0.0
    %3157 = vmatpush1.msra.mxu0 0.0
    %3158 = vmatprep.subr.mxu0 0.0
    %3159 = vmatpush1.msra.mxu0 0.0
    %3160 = vmatprep.subr.mxu0 0.0
    %3161 = vmatpush1.msra.mxu0 0.0
    %3162 = vmatprep.subr.mxu0 0.0
    %3163 = vmatpush1.msra.mxu0 0.0
    %3164 = vmatprep.subr.mxu0 0.0
    %3165 = vmatpush1.msra.mxu0 0.0
    %3166 = vmatprep.subr.mxu0 0.0
    %3167 = vmatpush1.msra.mxu0 %v3133
    %3168 = vmatprep.subr.mxu0 0.0
    %3169 = vmatpush1.msra.mxu0 %v1100
    %3170 = vmatprep.subr.mxu0 0.0
    %3171 = vmatpush2.msra.mxu0 0.0
    %3172 = vmatprep.subr.mxu0 0.0
    %3173 = vmatpush2.msra.mxu0 0.0
    %3174 = vmatprep.subr.mxu0 0.0
    %3175 = vmatpush2.msra.mxu0 0.0
    %3176 = vmatprep.subr.mxu0 0.0
    %3177 = vmatpush2.msra.mxu0 0.0
    %3178 = vmatprep.subr.mxu0 0.0
    %3179 = vmatpush2.msra.mxu0 0.0
    %3180 = vmatprep.subr.mxu0 0.0
    %3181 = vmatpush2.msra.mxu0 0.0
    %3182 = vmatprep.subr.mxu0 0.0
    %3183 = vmatpush2.msra.mxu0 0.0
    %3184 = vmatprep.subr.mxu0 0.0
    %3185 = vmatpush2.msra.mxu0 0.0
    %3186 = vmatprep.subr.mxu0 0.0
    %3187 = vmatpush2.msra.mxu0 0.0
    %3188 = vmatprep.subr.mxu0 0.0
    %3189 = vmatpush2.msra.mxu0 0.0
    %3190 = vmatprep.subr.mxu0 0.0
    %3191 = vmatpush2.msra.mxu0 0.0
    %3192 = vmatprep.subr.mxu0 0.0
    %3193 = vmatpush2.msra.mxu0 0.0
    %3194 = vmatprep.subr.mxu0 0.0
    %3195 = vmatpush2.msra.mxu0 0.0
    %3196 = vmatprep.subr.mxu0 0.0
    %3197 = vmatpush2.msra.mxu0 0.0
    %3198 = vmatprep.subr.mxu0 0.0
    %3199 = vmatpush2.msra.mxu0 0.0
    %3200 = vmatprep.subr.mxu0 0.0
    %3201 = vmatpush2.msra.mxu0 0.0
    %3202 = vmatprep.mubr.f32.mxu0 0.0
    %3203 = vmatmul.mubr.f32.gmra.mxu0 %v3136
    %v3204 = vpop.f32.mrf.mxu0
    %v3205 = vadd.f32 0.0, %v3204
    %v3206 = vpop.f32.mrf.mxu0
    %3207 = vdwg.mxu0
    %3208 = vrot.lane.b32.xlu0 %v2332, 64
    %v3209 = vpop.permute.xlu0 %3208
    %v3212 = vsel %vm1741, %v3087, 0
    %3214 = vmatprep.subr.mxu0 0.0
    %3215 = vmatpush1.msra.mxu0 0.0
    %3216 = vmatprep.subr.mxu0 0.0
    %3217 = vmatpush1.msra.mxu0 0.0
    %3218 = vmatprep.subr.mxu0 0.0
    %3219 = vmatpush1.msra.mxu0 0.0
    %3220 = vmatprep.subr.mxu0 0.0
    %3221 = vmatpush1.msra.mxu0 0.0
    %3222 = vmatprep.subr.mxu0 0.0
    %3223 = vmatpush1.msra.mxu0 0.0
    %3224 = vmatprep.subr.mxu0 0.0
    %3225 = vmatpush1.msra.mxu0 0.0
    %3226 = vmatprep.subr.mxu0 0.0
    %3227 = vmatpush1.msra.mxu0 0.0
    %3228 = vmatprep.subr.mxu0 0.0
    %3229 = vmatpush1.msra.mxu0 0.0
    %3230 = vmatprep.subr.mxu0 0.0
    %3231 = vmatpush1.msra.mxu0 0.0
    %3232 = vmatprep.subr.mxu0 0.0
    %3233 = vmatpush1.msra.mxu0 0.0
    %3234 = vmatprep.subr.mxu0 0.0
    %3235 = vmatpush1.msra.mxu0 0.0
    %3236 = vmatprep.subr.mxu0 0.0
    %3237 = vmatpush1.msra.mxu0 0.0
    %3238 = vmatprep.subr.mxu0 0.0
    %3239 = vmatpush1.msra.mxu0 0.0
    %3240 = vmatprep.subr.mxu0 0.0
    %3241 = vmatpush1.msra.mxu0 0.0
    %3242 = vmatprep.subr.mxu0 0.0
    %3243 = vmatpush1.msra.mxu0 %v3209
    %3244 = vmatprep.subr.mxu0 0.0
    %3245 = vmatpush1.msra.mxu0 %v1176
    %3246 = vmatprep.subr.mxu0 0.0
    %3247 = vmatpush2.msra.mxu0 0.0
    %3248 = vmatprep.subr.mxu0 0.0
    %3249 = vmatpush2.msra.mxu0 0.0
    %3250 = vmatprep.subr.mxu0 0.0
    %3251 = vmatpush2.msra.mxu0 0.0
    %3252 = vmatprep.subr.mxu0 0.0
    %3253 = vmatpush2.msra.mxu0 0.0
    %3254 = vmatprep.subr.mxu0 0.0
    %3255 = vmatpush2.msra.mxu0 0.0
    %3256 = vmatprep.subr.mxu0 0.0
    %3257 = vmatpush2.msra.mxu0 0.0
    %3258 = vmatprep.subr.mxu0 0.0
    %3259 = vmatpush2.msra.mxu0 0.0
    %3260 = vmatprep.subr.mxu0 0.0
    %3261 = vmatpush2.msra.mxu0 0.0
    %3262 = vmatprep.subr.mxu0 0.0
    %3263 = vmatpush2.msra.mxu0 0.0
    %3264 = vmatprep.subr.mxu0 0.0
    %3265 = vmatpush2.msra.mxu0 0.0
    %3266 = vmatprep.subr.mxu0 0.0
    %3267 = vmatpush2.msra.mxu0 0.0
    %3268 = vmatprep.subr.mxu0 0.0
    %3269 = vmatpush2.msra.mxu0 0.0
    %3270 = vmatprep.subr.mxu0 0.0
    %3271 = vmatpush2.msra.mxu0 0.0
    %3272 = vmatprep.subr.mxu0 0.0
    %3273 = vmatpush2.msra.mxu0 0.0
    %3274 = vmatprep.subr.mxu0 0.0
    %3275 = vmatpush2.msra.mxu0 0.0
    %3276 = vmatprep.subr.mxu0 0.0
    %3277 = vmatpush2.msra.mxu0 0.0
    %3278 = vmatprep.mubr.f32.mxu0 0.0
    %3279 = vmatmul.mubr.f32.gmra.mxu0 %v3212
    %v3280 = vpop.f32.mrf.mxu0
    %v3281 = vadd.f32 0.0, %v3280
    %v3282 = vpop.f32.mrf.mxu0
    %3283 = vdwg.mxu0
    %3284 = vrot.lane.b32.xlu0 %v2411, 64
    %v3285 = vpop.permute.xlu0 %3284
    %v3288 = vsel %vm1741, %v3089, 0
    %3290 = vmatprep.subr.mxu0 0.0
    %3291 = vmatpush1.msra.mxu0 0.0
    %3292 = vmatprep.subr.mxu0 0.0
    %3293 = vmatpush1.msra.mxu0 0.0
    %3294 = vmatprep.subr.mxu0 0.0
    %3295 = vmatpush1.msra.mxu0 0.0
    %3296 = vmatprep.subr.mxu0 0.0
    %3297 = vmatpush1.msra.mxu0 0.0
    %3298 = vmatprep.subr.mxu0 0.0
    %3299 = vmatpush1.msra.mxu0 0.0
    %3300 = vmatprep.subr.mxu0 0.0
    %3301 = vmatpush1.msra.mxu0 0.0
    %3302 = vmatprep.subr.mxu0 0.0
    %3303 = vmatpush1.msra.mxu0 0.0
    %3304 = vmatprep.subr.mxu0 0.0
    %3305 = vmatpush1.msra.mxu0 0.0
    %3306 = vmatprep.subr.mxu0 0.0
    %3307 = vmatpush1.msra.mxu0 0.0
    %3308 = vmatprep.subr.mxu0 0.0
    %3309 = vmatpush1.msra.mxu0 0.0
    %3310 = vmatprep.subr.mxu0 0.0
    %3311 = vmatpush1.msra.mxu0 0.0
    %3312 = vmatprep.subr.mxu0 0.0
    %3313 = vmatpush1.msra.mxu0 0.0
    %3314 = vmatprep.subr.mxu0 0.0
    %3315 = vmatpush1.msra.mxu0 0.0
    %3316 = vmatprep.subr.mxu0 0.0
    %3317 = vmatpush1.msra.mxu0 0.0
    %3318 = vmatprep.subr.mxu0 0.0
    %3319 = vmatpush1.msra.mxu0 %v3285
    %3320 = vmatprep.subr.mxu0 0.0
    %3321 = vmatpush1.msra.mxu0 %v1252
    %3322 = vmatprep.subr.mxu0 0.0
    %3323 = vmatpush2.msra.mxu0 0.0
    %3324 = vmatprep.subr.mxu0 0.0
    %3325 = vmatpush2.msra.mxu0 0.0
    %3326 = vmatprep.subr.mxu0 0.0
    %3327 = vmatpush2.msra.mxu0 0.0
    %3328 = vmatprep.subr.mxu0 0.0
    %3329 = vmatpush2.msra.mxu0 0.0
    %3330 = vmatprep.subr.mxu0 0.0
    %3331 = vmatpush2.msra.mxu0 0.0
    %3332 = vmatprep.subr.mxu0 0.0
    %3333 = vmatpush2.msra.mxu0 0.0
    %3334 = vmatprep.subr.mxu0 0.0
    %3335 = vmatpush2.msra.mxu0 0.0
    %3336 = vmatprep.subr.mxu0 0.0
    %3337 = vmatpush2.msra.mxu0 0.0
    %3338 = vmatprep.subr.mxu0 0.0
    %3339 = vmatpush2.msra.mxu0 0.0
    %3340 = vmatprep.subr.mxu0 0.0
    %3341 = vmatpush2.msra.mxu0 0.0
    %3342 = vmatprep.subr.mxu0 0.0
    %3343 = vmatpush2.msra.mxu0 0.0
    %3344 = vmatprep.subr.mxu0 0.0
    %3345 = vmatpush2.msra.mxu0 0.0
    %3346 = vmatprep.subr.mxu0 0.0
    %3347 = vmatpush2.msra.mxu0 0.0
    %3348 = vmatprep.subr.mxu0 0.0
    %3349 = vmatpush2.msra.mxu0 0.0
    %3350 = vmatprep.subr.mxu0 0.0
    %3351 = vmatpush2.msra.mxu0 0.0
    %3352 = vmatprep.subr.mxu0 0.0
    %3353 = vmatpush2.msra.mxu0 0.0
    %3354 = vmatprep.mubr.f32.mxu0 0.0
    %3355 = vmatmul.mubr.f32.gmra.mxu0 %v3288
    %v3356 = vpop.f32.mrf.mxu0
    %v3357 = vadd.f32 0.0, %v3356
    %v3358 = vpop.f32.mrf.mxu0
    %3359 = vdwg.mxu0
    %3360 = vrot.lane.b32.xlu0 %v2413, 64
    %v3361 = vpop.permute.xlu0 %3360
    %v3364 = vsel %vm1741, %v3091, 0
    %3366 = vmatprep.subr.mxu0 0.0
    %3367 = vmatpush1.msra.mxu0 0.0
    %3368 = vmatprep.subr.mxu0 0.0
    %3369 = vmatpush1.msra.mxu0 0.0
    %3370 = vmatprep.subr.mxu0 0.0
    %3371 = vmatpush1.msra.mxu0 0.0
    %3372 = vmatprep.subr.mxu0 0.0
    %3373 = vmatpush1.msra.mxu0 0.0
    %3374 = vmatprep.subr.mxu0 0.0
    %3375 = vmatpush1.msra.mxu0 0.0
    %3376 = vmatprep.subr.mxu0 0.0
    %3377 = vmatpush1.msra.mxu0 0.0
    %3378 = vmatprep.subr.mxu0 0.0
    %3379 = vmatpush1.msra.mxu0 0.0
    %3380 = vmatprep.subr.mxu0 0.0
    %3381 = vmatpush1.msra.mxu0 0.0
    %3382 = vmatprep.subr.mxu0 0.0
    %3383 = vmatpush1.msra.mxu0 0.0
    %3384 = vmatprep.subr.mxu0 0.0
    %3385 = vmatpush1.msra.mxu0 0.0
    %3386 = vmatprep.subr.mxu0 0.0
    %3387 = vmatpush1.msra.mxu0 0.0
    %3388 = vmatprep.subr.mxu0 0.0
    %3389 = vmatpush1.msra.mxu0 0.0
    %3390 = vmatprep.subr.mxu0 0.0
    %3391 = vmatpush1.msra.mxu0 0.0
    %3392 = vmatprep.subr.mxu0 0.0
    %3393 = vmatpush1.msra.mxu0 0.0
    %3394 = vmatprep.subr.mxu0 0.0
    %3395 = vmatpush1.msra.mxu0 %v3361
    %3396 = vmatprep.subr.mxu0 0.0
    %3397 = vmatpush1.msra.mxu0 %v1328
    %3398 = vmatprep.subr.mxu0 0.0
    %3399 = vmatpush2.msra.mxu0 0.0
    %3400 = vmatprep.subr.mxu0 0.0
    %3401 = vmatpush2.msra.mxu0 0.0
    %3402 = vmatprep.subr.mxu0 0.0
    %3403 = vmatpush2.msra.mxu0 0.0
    %3404 = vmatprep.subr.mxu0 0.0
    %3405 = vmatpush2.msra.mxu0 0.0
    %3406 = vmatprep.subr.mxu0 0.0
    %3407 = vmatpush2.msra.mxu0 0.0
    %3408 = vmatprep.subr.mxu0 0.0
    %3409 = vmatpush2.msra.mxu0 0.0
    %3410 = vmatprep.subr.mxu0 0.0
    %3411 = vmatpush2.msra.mxu0 0.0
    %3412 = vmatprep.subr.mxu0 0.0
    %3413 = vmatpush2.msra.mxu0 0.0
    %3414 = vmatprep.subr.mxu0 0.0
    %3415 = vmatpush2.msra.mxu0 0.0
    %3416 = vmatprep.subr.mxu0 0.0
    %3417 = vmatpush2.msra.mxu0 0.0
    %3418 = vmatprep.subr.mxu0 0.0
    %3419 = vmatpush2.msra.mxu0 0.0
    %3420 = vmatprep.subr.mxu0 0.0
    %3421 = vmatpush2.msra.mxu0 0.0
    %3422 = vmatprep.subr.mxu0 0.0
    %3423 = vmatpush2.msra.mxu0 0.0
    %3424 = vmatprep.subr.mxu0 0.0
    %3425 = vmatpush2.msra.mxu0 0.0
    %3426 = vmatprep.subr.mxu0 0.0
    %3427 = vmatpush2.msra.mxu0 0.0
    %3428 = vmatprep.subr.mxu0 0.0
    %3429 = vmatpush2.msra.mxu0 0.0
    %3430 = vmatprep.mubr.f32.mxu0 0.0
    %3431 = vmatmul.mubr.f32.gmra.mxu0 %v3364
    %v3432 = vpop.f32.mrf.mxu0
    %v3433 = vadd.f32 0.0, %v3432
    %v3434 = vpop.f32.mrf.mxu0
    %3435 = vdwg.mxu0
    %3436 = vrot.lane.b32.xlu0 %v2415, 64
    %v3437 = vpop.permute.xlu0 %3436
    %v3440 = vsel %vm1741, %v3093, 0
    %3442 = vmatprep.subr.mxu0 0.0
    %3443 = vmatpush1.msra.mxu0 0.0
    %3444 = vmatprep.subr.mxu0 0.0
    %3445 = vmatpush1.msra.mxu0 0.0
    %3446 = vmatprep.subr.mxu0 0.0
    %3447 = vmatpush1.msra.mxu0 0.0
    %3448 = vmatprep.subr.mxu0 0.0
    %3449 = vmatpush1.msra.mxu0 0.0
    %3450 = vmatprep.subr.mxu0 0.0
    %3451 = vmatpush1.msra.mxu0 0.0
    %3452 = vmatprep.subr.mxu0 0.0
    %3453 = vmatpush1.msra.mxu0 0.0
    %3454 = vmatprep.subr.mxu0 0.0
    %3455 = vmatpush1.msra.mxu0 0.0
    %3456 = vmatprep.subr.mxu0 0.0
    %3457 = vmatpush1.msra.mxu0 0.0
    %3458 = vmatprep.subr.mxu0 0.0
    %3459 = vmatpush1.msra.mxu0 0.0
    %3460 = vmatprep.subr.mxu0 0.0
    %3461 = vmatpush1.msra.mxu0 0.0
    %3462 = vmatprep.subr.mxu0 0.0
    %3463 = vmatpush1.msra.mxu0 0.0
    %3464 = vmatprep.subr.mxu0 0.0
    %3465 = vmatpush1.msra.mxu0 0.0
    %3466 = vmatprep.subr.mxu0 0.0
    %3467 = vmatpush1.msra.mxu0 0.0
    %3468 = vmatprep.subr.mxu0 0.0
    %3469 = vmatpush1.msra.mxu0 0.0
    %3470 = vmatprep.subr.mxu0 0.0
    %3471 = vmatpush1.msra.mxu0 %v3437
    %3472 = vmatprep.subr.mxu0 0.0
    %3473 = vmatpush1.msra.mxu0 %v1404
    %3474 = vmatprep.subr.mxu0 0.0
    %3475 = vmatpush2.msra.mxu0 0.0
    %3476 = vmatprep.subr.mxu0 0.0
    %3477 = vmatpush2.msra.mxu0 0.0
    %3478 = vmatprep.subr.mxu0 0.0
    %3479 = vmatpush2.msra.mxu0 0.0
    %3480 = vmatprep.subr.mxu0 0.0
    %3481 = vmatpush2.msra.mxu0 0.0
    %3482 = vmatprep.subr.mxu0 0.0
    %3483 = vmatpush2.msra.mxu0 0.0
    %3484 = vmatprep.subr.mxu0 0.0
    %3485 = vmatpush2.msra.mxu0 0.0
    %3486 = vmatprep.subr.mxu0 0.0
    %3487 = vmatpush2.msra.mxu0 0.0
    %3488 = vmatprep.subr.mxu0 0.0
    %3489 = vmatpush2.msra.mxu0 0.0
    %3490 = vmatprep.subr.mxu0 0.0
    %3491 = vmatpush2.msra.mxu0 0.0
    %3492 = vmatprep.subr.mxu0 0.0
    %3493 = vmatpush2.msra.mxu0 0.0
    %3494 = vmatprep.subr.mxu0 0.0
    %3495 = vmatpush2.msra.mxu0 0.0
    %3496 = vmatprep.subr.mxu0 0.0
    %3497 = vmatpush2.msra.mxu0 0.0
    %3498 = vmatprep.subr.mxu0 0.0
    %3499 = vmatpush2.msra.mxu0 0.0
    %3500 = vmatprep.subr.mxu0 0.0
    %3501 = vmatpush2.msra.mxu0 0.0
    %3502 = vmatprep.subr.mxu0 0.0
    %3503 = vmatpush2.msra.mxu0 0.0
    %3504 = vmatprep.subr.mxu0 0.0
    %3505 = vmatpush2.msra.mxu0 0.0
    %3506 = vmatprep.mubr.f32.mxu0 0.0
    %3507 = vmatmul.mubr.f32.gmra.mxu0 %v3440
    %v3508 = vpop.f32.mrf.mxu0
    %v3509 = vadd.f32 0.0, %v3508
    %v3510 = vpop.f32.mrf.mxu0
    %3511 = vdwg.mxu0
    %3512 = vrot.lane.b32.xlu0 %v2417, 64
    %v3513 = vpop.permute.xlu0 %3512
    %v3516 = vsel %vm1741, %v3095, 0
    %3518 = vmatprep.subr.mxu0 0.0
    %3519 = vmatpush1.msra.mxu0 0.0
    %3520 = vmatprep.subr.mxu0 0.0
    %3521 = vmatpush1.msra.mxu0 0.0
    %3522 = vmatprep.subr.mxu0 0.0
    %3523 = vmatpush1.msra.mxu0 0.0
    %3524 = vmatprep.subr.mxu0 0.0
    %3525 = vmatpush1.msra.mxu0 0.0
    %3526 = vmatprep.subr.mxu0 0.0
    %3527 = vmatpush1.msra.mxu0 0.0
    %3528 = vmatprep.subr.mxu0 0.0
    %3529 = vmatpush1.msra.mxu0 0.0
    %3530 = vmatprep.subr.mxu0 0.0
    %3531 = vmatpush1.msra.mxu0 0.0
    %3532 = vmatprep.subr.mxu0 0.0
    %3533 = vmatpush1.msra.mxu0 0.0
    %3534 = vmatprep.subr.mxu0 0.0
    %3535 = vmatpush1.msra.mxu0 0.0
    %3536 = vmatprep.subr.mxu0 0.0
    %3537 = vmatpush1.msra.mxu0 0.0
    %3538 = vmatprep.subr.mxu0 0.0
    %3539 = vmatpush1.msra.mxu0 0.0
    %3540 = vmatprep.subr.mxu0 0.0
    %3541 = vmatpush1.msra.mxu0 0.0
    %3542 = vmatprep.subr.mxu0 0.0
    %3543 = vmatpush1.msra.mxu0 0.0
    %3544 = vmatprep.subr.mxu0 0.0
    %3545 = vmatpush1.msra.mxu0 0.0
    %3546 = vmatprep.subr.mxu0 0.0
    %3547 = vmatpush1.msra.mxu0 %v3513
    %3548 = vmatprep.subr.mxu0 0.0
    %3549 = vmatpush1.msra.mxu0 %v1480
    %3550 = vmatprep.subr.mxu0 0.0
    %3551 = vmatpush2.msra.mxu0 0.0
    %3552 = vmatprep.subr.mxu0 0.0
    %3553 = vmatpush2.msra.mxu0 0.0
    %3554 = vmatprep.subr.mxu0 0.0
    %3555 = vmatpush2.msra.mxu0 0.0
    %3556 = vmatprep.subr.mxu0 0.0
    %3557 = vmatpush2.msra.mxu0 0.0
    %3558 = vmatprep.subr.mxu0 0.0
    %3559 = vmatpush2.msra.mxu0 0.0
    %3560 = vmatprep.subr.mxu0 0.0
    %3561 = vmatpush2.msra.mxu0 0.0
    %3562 = vmatprep.subr.mxu0 0.0
    %3563 = vmatpush2.msra.mxu0 0.0
    %3564 = vmatprep.subr.mxu0 0.0
    %3565 = vmatpush2.msra.mxu0 0.0
    %3566 = vmatprep.subr.mxu0 0.0
    %3567 = vmatpush2.msra.mxu0 0.0
    %3568 = vmatprep.subr.mxu0 0.0
    %3569 = vmatpush2.msra.mxu0 0.0
    %3570 = vmatprep.subr.mxu0 0.0
    %3571 = vmatpush2.msra.mxu0 0.0
    %3572 = vmatprep.subr.mxu0 0.0
    %3573 = vmatpush2.msra.mxu0 0.0
    %3574 = vmatprep.subr.mxu0 0.0
    %3575 = vmatpush2.msra.mxu0 0.0
    %3576 = vmatprep.subr.mxu0 0.0
    %3577 = vmatpush2.msra.mxu0 0.0
    %3578 = vmatprep.subr.mxu0 0.0
    %3579 = vmatpush2.msra.mxu0 0.0
    %3580 = vmatprep.subr.mxu0 0.0
    %3581 = vmatpush2.msra.mxu0 0.0
    %3582 = vmatprep.mubr.f32.mxu0 0.0
    %3583 = vmatmul.mubr.f32.gmra.mxu0 %v3516
    %v3584 = vpop.f32.mrf.mxu0
    %v3585 = vadd.f32 0.0, %v3584
    %v3586 = vpop.f32.mrf.mxu0
    %3587 = vdwg.mxu0
    %3588 = vrot.lane.b32.xlu0 %v2419, 64
    %v3589 = vpop.permute.xlu0 %3588
    %v3592 = vsel %vm1741, %v3097, 0
    %3594 = vmatprep.subr.mxu0 0.0
    %3595 = vmatpush1.msra.mxu0 0.0
    %3596 = vmatprep.subr.mxu0 0.0
    %3597 = vmatpush1.msra.mxu0 0.0
    %3598 = vmatprep.subr.mxu0 0.0
    %3599 = vmatpush1.msra.mxu0 0.0
    %3600 = vmatprep.subr.mxu0 0.0
    %3601 = vmatpush1.msra.mxu0 0.0
    %3602 = vmatprep.subr.mxu0 0.0
    %3603 = vmatpush1.msra.mxu0 0.0
    %3604 = vmatprep.subr.mxu0 0.0
    %3605 = vmatpush1.msra.mxu0 0.0
    %3606 = vmatprep.subr.mxu0 0.0
    %3607 = vmatpush1.msra.mxu0 0.0
    %3608 = vmatprep.subr.mxu0 0.0
    %3609 = vmatpush1.msra.mxu0 0.0
    %3610 = vmatprep.subr.mxu0 0.0
    %3611 = vmatpush1.msra.mxu0 0.0
    %3612 = vmatprep.subr.mxu0 0.0
    %3613 = vmatpush1.msra.mxu0 0.0
    %3614 = vmatprep.subr.mxu0 0.0
    %3615 = vmatpush1.msra.mxu0 0.0
    %3616 = vmatprep.subr.mxu0 0.0
    %3617 = vmatpush1.msra.mxu0 0.0
    %3618 = vmatprep.subr.mxu0 0.0
    %3619 = vmatpush1.msra.mxu0 0.0
    %3620 = vmatprep.subr.mxu0 0.0
    %3621 = vmatpush1.msra.mxu0 0.0
    %3622 = vmatprep.subr.mxu0 0.0
    %3623 = vmatpush1.msra.mxu0 %v3589
    %3624 = vmatprep.subr.mxu0 0.0
    %3625 = vmatpush1.msra.mxu0 %v1556
    %3626 = vmatprep.subr.mxu0 0.0
    %3627 = vmatpush2.msra.mxu0 0.0
    %3628 = vmatprep.subr.mxu0 0.0
    %3629 = vmatpush2.msra.mxu0 0.0
    %3630 = vmatprep.subr.mxu0 0.0
    %3631 = vmatpush2.msra.mxu0 0.0
    %3632 = vmatprep.subr.mxu0 0.0
    %3633 = vmatpush2.msra.mxu0 0.0
    %3634 = vmatprep.subr.mxu0 0.0
    %3635 = vmatpush2.msra.mxu0 0.0
    %3636 = vmatprep.subr.mxu0 0.0
    %3637 = vmatpush2.msra.mxu0 0.0
    %3638 = vmatprep.subr.mxu0 0.0
    %3639 = vmatpush2.msra.mxu0 0.0
    %3640 = vmatprep.subr.mxu0 0.0
    %3641 = vmatpush2.msra.mxu0 0.0
    %3642 = vmatprep.subr.mxu0 0.0
    %3643 = vmatpush2.msra.mxu0 0.0
    %3644 = vmatprep.subr.mxu0 0.0
    %3645 = vmatpush2.msra.mxu0 0.0
    %3646 = vmatprep.subr.mxu0 0.0
    %3647 = vmatpush2.msra.mxu0 0.0
    %3648 = vmatprep.subr.mxu0 0.0
    %3649 = vmatpush2.msra.mxu0 0.0
    %3650 = vmatprep.subr.mxu0 0.0
    %3651 = vmatpush2.msra.mxu0 0.0
    %3652 = vmatprep.subr.mxu0 0.0
    %3653 = vmatpush2.msra.mxu0 0.0
    %3654 = vmatprep.subr.mxu0 0.0
    %3655 = vmatpush2.msra.mxu0 0.0
    %3656 = vmatprep.subr.mxu0 0.0
    %3657 = vmatpush2.msra.mxu0 0.0
    %3658 = vmatprep.mubr.f32.mxu0 0.0
    %3659 = vmatmul.mubr.f32.gmra.mxu0 %v3592
    %v3660 = vpop.f32.mrf.mxu0
    %v3661 = vadd.f32 0.0, %v3660
    %v3662 = vpop.f32.mrf.mxu0
    %3663 = vdwg.mxu0
    %3664 = vrot.lane.b32.xlu0 %v2421, 64
    %v3665 = vpop.permute.xlu0 %3664
    %v3668 = vsel %vm1741, %v3099, 0
    %3670 = vmatprep.subr.mxu0 0.0
    %3671 = vmatpush1.msra.mxu0 0.0
    %3672 = vmatprep.subr.mxu0 0.0
    %3673 = vmatpush1.msra.mxu0 0.0
    %3674 = vmatprep.subr.mxu0 0.0
    %3675 = vmatpush1.msra.mxu0 0.0
    %3676 = vmatprep.subr.mxu0 0.0
    %3677 = vmatpush1.msra.mxu0 0.0
    %3678 = vmatprep.subr.mxu0 0.0
    %3679 = vmatpush1.msra.mxu0 0.0
    %3680 = vmatprep.subr.mxu0 0.0
    %3681 = vmatpush1.msra.mxu0 0.0
    %3682 = vmatprep.subr.mxu0 0.0
    %3683 = vmatpush1.msra.mxu0 0.0
    %3684 = vmatprep.subr.mxu0 0.0
    %3685 = vmatpush1.msra.mxu0 0.0
    %3686 = vmatprep.subr.mxu0 0.0
    %3687 = vmatpush1.msra.mxu0 0.0
    %3688 = vmatprep.subr.mxu0 0.0
    %3689 = vmatpush1.msra.mxu0 0.0
    %3690 = vmatprep.subr.mxu0 0.0
    %3691 = vmatpush1.msra.mxu0 0.0
    %3692 = vmatprep.subr.mxu0 0.0
    %3693 = vmatpush1.msra.mxu0 0.0
    %3694 = vmatprep.subr.mxu0 0.0
    %3695 = vmatpush1.msra.mxu0 0.0
    %3696 = vmatprep.subr.mxu0 0.0
    %3697 = vmatpush1.msra.mxu0 0.0
    %3698 = vmatprep.subr.mxu0 0.0
    %3699 = vmatpush1.msra.mxu0 %v3665
    %3700 = vmatprep.subr.mxu0 0.0
    %3701 = vmatpush1.msra.mxu0 %v1632
    %3702 = vmatprep.subr.mxu0 0.0
    %3703 = vmatpush2.msra.mxu0 0.0
    %3704 = vmatprep.subr.mxu0 0.0
    %3705 = vmatpush2.msra.mxu0 0.0
    %3706 = vmatprep.subr.mxu0 0.0
    %3707 = vmatpush2.msra.mxu0 0.0
    %3708 = vmatprep.subr.mxu0 0.0
    %3709 = vmatpush2.msra.mxu0 0.0
    %3710 = vmatprep.subr.mxu0 0.0
    %3711 = vmatpush2.msra.mxu0 0.0
    %3712 = vmatprep.subr.mxu0 0.0
    %3713 = vmatpush2.msra.mxu0 0.0
    %3714 = vmatprep.subr.mxu0 0.0
    %3715 = vmatpush2.msra.mxu0 0.0
    %3716 = vmatprep.subr.mxu0 0.0
    %3717 = vmatpush2.msra.mxu0 0.0
    %3718 = vmatprep.subr.mxu0 0.0
    %3719 = vmatpush2.msra.mxu0 0.0
    %3720 = vmatprep.subr.mxu0 0.0
    %3721 = vmatpush2.msra.mxu0 0.0
    %3722 = vmatprep.subr.mxu0 0.0
    %3723 = vmatpush2.msra.mxu0 0.0
    %3724 = vmatprep.subr.mxu0 0.0
    %3725 = vmatpush2.msra.mxu0 0.0
    %3726 = vmatprep.subr.mxu0 0.0
    %3727 = vmatpush2.msra.mxu0 0.0
    %3728 = vmatprep.subr.mxu0 0.0
    %3729 = vmatpush2.msra.mxu0 0.0
    %3730 = vmatprep.subr.mxu0 0.0
    %3731 = vmatpush2.msra.mxu0 0.0
    %3732 = vmatprep.subr.mxu0 0.0
    %3733 = vmatpush2.msra.mxu0 0.0
    %3734 = vmatprep.mubr.f32.mxu0 0.0
    %3735 = vmatmul.mubr.f32.gmra.mxu0 %v3668
    %v3736 = vpop.f32.mrf.mxu0
    %v3737 = vadd.f32 0.0, %v3736
    %v3738 = vpop.f32.mrf.mxu0
    %3739 = vdwg.mxu0
    %v3740 = vmul.f32 %v3205, %v3124
    %v3741 = vmul.f32 %v3281, %v3125
    %v3742 = vmul.f32 %v3357, %v3126
    %v3743 = vmul.f32 %v3433, %v3127
    %v3744 = vmul.f32 %v3509, %v3128
    %v3745 = vmul.f32 %v3585, %v3129
    %v3746 = vmul.f32 %v3661, %v3130
    %v3747 = vmul.f32 %v3737, %v3131
    %3750 = vrot.lane.b32.xlu0 %v3742, 8
    %v3751 = vpop.permute.xlu0 %3750
    %3752 = vrot.lane.b32.xlu0 %v3743, 8
    %v3753 = vpop.permute.xlu0 %3752
    %3758 = vrot.lane.b32.xlu0 %v3744, 16
    %v3759 = vpop.permute.xlu0 %3758
    %3760 = vrot.lane.b32.xlu0 %v3745, 16
    %v3761 = vpop.permute.xlu0 %3760
    %3766 = vrot.lane.b32.xlu0 %v3746, 24
    %v3767 = vpop.permute.xlu0 %3766
    %3768 = vrot.lane.b32.xlu0 %v3747, 24
    %v3769 = vpop.permute.xlu0 %3768
    %v3772 = vsel %vm404, %v3740, %v3751
    %v3773 = vsel %vm404, %v3741, %v3753
    %v3774 = vsel %vm1741, %v3772, %v3759
    %v3775 = vsel %vm1741, %v3773, %v3761
    %v3776 = vsel %vm1744, %v3774, %v3767
    %v3777 = vsel %vm1744, %v3775, %v3769
    %v3779 = vsel %vm209, %v3776, 0
    %v3782 = vsel %vm209, %v3777, 0
    %3784 = vmatprep.subr.mxu0 0.0
    %3785 = vmatpush1.msra.mxu0 0.0
    %3786 = vmatprep.subr.mxu0 0.0
    %3787 = vmatpush1.msra.mxu0 0.0
    %3788 = vmatprep.subr.mxu0 0.0
    %3789 = vmatpush1.msra.mxu0 0.0
    %3790 = vmatprep.subr.mxu0 0.0
    %3791 = vmatpush1.msra.mxu0 0.0
    %3792 = vmatprep.subr.mxu0 0.0
    %3793 = vmatpush1.msra.mxu0 0.0
    %3794 = vmatprep.subr.mxu0 0.0
    %3795 = vmatpush1.msra.mxu0 0.0
    %3796 = vmatprep.subr.mxu0 0.0
    %3797 = vmatpush1.msra.mxu0 0.0
    %3798 = vmatprep.subr.mxu0 0.0
    %3799 = vmatpush1.msra.mxu0 0.0
    %3800 = vmatprep.subr.mxu0 0.0
    %3801 = vmatpush1.msra.mxu0 0.0
    %3802 = vmatprep.subr.mxu0 0.0
    %3803 = vmatpush1.msra.mxu0 0.0
    %3804 = vmatprep.subr.mxu0 0.0
    %3805 = vmatpush1.msra.mxu0 0.0
    %3806 = vmatprep.subr.mxu0 0.0
    %3807 = vmatpush1.msra.mxu0 0.0
    %3808 = vmatprep.subr.mxu0 0.0
    %3809 = vmatpush1.msra.mxu0 %v2216
    %3810 = vmatprep.subr.mxu0 0.0
    %3811 = vmatpush1.msra.mxu0 %v2215
    %3812 = vmatprep.subr.mxu0 0.0
    %3813 = vmatpush1.msra.mxu0 %v2214
    %3814 = vmatprep.subr.mxu0 0.0
    %3815 = vmatpush1.msra.mxu0 %v2213
    %3816 = vmatprep.subr.mxu0 0.0
    %3817 = vmatpush2.msra.mxu0 0.0
    %3818 = vmatprep.subr.mxu0 0.0
    %3819 = vmatpush2.msra.mxu0 0.0
    %3820 = vmatprep.subr.mxu0 0.0
    %3821 = vmatpush2.msra.mxu0 0.0
    %3822 = vmatprep.subr.mxu0 0.0
    %3823 = vmatpush2.msra.mxu0 0.0
    %3824 = vmatprep.subr.mxu0 0.0
    %3825 = vmatpush2.msra.mxu0 0.0
    %3826 = vmatprep.subr.mxu0 0.0
    %3827 = vmatpush2.msra.mxu0 0.0
    %3828 = vmatprep.subr.mxu0 0.0
    %3829 = vmatpush2.msra.mxu0 0.0
    %3830 = vmatprep.subr.mxu0 0.0
    %3831 = vmatpush2.msra.mxu0 0.0
    %3832 = vmatprep.subr.mxu0 0.0
    %3833 = vmatpush2.msra.mxu0 0.0
    %3834 = vmatprep.subr.mxu0 0.0
    %3835 = vmatpush2.msra.mxu0 0.0
    %3836 = vmatprep.subr.mxu0 0.0
    %3837 = vmatpush2.msra.mxu0 0.0
    %3838 = vmatprep.subr.mxu0 0.0
    %3839 = vmatpush2.msra.mxu0 0.0
    %3840 = vmatprep.subr.mxu0 0.0
    %3841 = vmatpush2.msra.mxu0 0.0
    %3842 = vmatprep.subr.mxu0 0.0
    %3843 = vmatpush2.msra.mxu0 0.0
    %3844 = vmatprep.subr.mxu0 0.0
    %3845 = vmatpush2.msra.mxu0 0.0
    %3846 = vmatprep.subr.mxu0 0.0
    %3847 = vmatpush2.msra.mxu0 0.0
    %3848 = vmatprep.mubr.f32.mxu0 0.0
    %3849 = vmatmul.mubr.f32.gmra.mxu0 %v3779
    %v3850 = vpop.f32.mrf.mxu0
    %v3851 = vadd.f32 0.0, %v3850
    %v3852 = vpop.f32.mrf.mxu0
    %3853 = vmatprep.mubr.f32.mxu0 0.0
    %3854 = vmatmul.mubr.f32.gmra.mxu0 %v3782
    %v3855 = vpop.f32.mrf.mxu0
    %v3856 = vadd.f32 0.0, %v3855
    %v3857 = vpop.f32.mrf.mxu0
    %3858 = vdwg.mxu0
    %v3859 = vadd.f32 %v171, %v3851
    %v3860 = vadd.f32 %v172, %v3856
    %v3861 = vmul.f32 %v3859, %v3859
    %v3862 = vmul.f32 %v3860, %v3860
    %v3863 = vsel %vm209, %v3861, 0.0
    %3864 = vadd.xlane.f32.xlu0 %v3863
    %v3865 = vpop.xlane.xlu0 %3864
    %v3866 = vsel %vm209, %v3862, 0.0
    %3867 = vadd.xlane.f32.xlu0 %v3866
    %v3868 = vpop.xlane.xlu0 %3867
    %v3869 = vmul.f32 %v3865, %v216
    %v3870 = vmul.f32 %v3868, %v216
    %v3871 = vadd.f32 %v3869, 1e-05
    %v3872 = vadd.f32 %v3870, 1e-05
    %v3873 = vrsqrt.pop %v3871
    %v3874 = vrsqrt.pop %v3872
    %v3875 = vmul.f32 %v3859, %v3873
    %v3876 = vmul.f32 %v3860, %v3874
    %v3878 = vlaneseq
    %v3879 = vshrl.u32 %v3878, 7
    %v3880 = vsub.s32 0, %v3879
    %v3881 = vrot.slane %v2204, %v3880
    %v3883 = vmul.f32 %v3875, %v3881
    %v3884 = vmul.f32 %v3876, %v3881
    %v3886 = vsel %vm209, %v3883, 0
    %v3889 = vsel %vm209, %v3884, 0
    %3891 = vmatprep.subr.mxu0 0.0
    %3892 = vmatpush1.msra.mxu0 0.0
    %3893 = vmatprep.subr.mxu0 0.0
    %3894 = vmatpush1.msra.mxu0 0.0
    %3895 = vmatprep.subr.mxu0 0.0
    %3896 = vmatpush1.msra.mxu0 0.0
    %3897 = vmatprep.subr.mxu0 0.0
    %3898 = vmatpush1.msra.mxu0 0.0
    %3899 = vmatprep.subr.mxu0 0.0
    %3900 = vmatpush1.msra.mxu0 0.0
    %3901 = vmatprep.subr.mxu0 0.0
    %3902 = vmatpush1.msra.mxu0 0.0
    %3903 = vmatprep.subr.mxu0 0.0
    %3904 = vmatpush1.msra.mxu0 0.0
    %3905 = vmatprep.subr.mxu0 0.0
    %3906 = vmatpush1.msra.mxu0 0.0
    %3907 = vmatprep.subr.mxu0 0.0
    %3908 = vmatpush1.msra.mxu0 0.0
    %3909 = vmatprep.subr.mxu0 0.0
    %3910 = vmatpush1.msra.mxu0 0.0
    %3911 = vmatprep.subr.mxu0 0.0
    %3912 = vmatpush1.msra.mxu0 0.0
    %3913 = vmatprep.subr.mxu0 0.0
    %3914 = vmatpush1.msra.mxu0 0.0
    %3915 = vmatprep.subr.mxu0 0.0
    %3916 = vmatpush1.msra.mxu0 %v2220
    %3917 = vmatprep.subr.mxu0 0.0
    %3918 = vmatpush1.msra.mxu0 %v2219
    %3919 = vmatprep.subr.mxu0 0.0
    %3920 = vmatpush1.msra.mxu0 %v2218
    %3921 = vmatprep.subr.mxu0 0.0
    %3922 = vmatpush1.msra.mxu0 %v2217
    %3923 = vmatprep.subr.mxu0 0.0
    %3924 = vmatpush2.msra.mxu0 0.0
    %3925 = vmatprep.subr.mxu0 0.0
    %3926 = vmatpush2.msra.mxu0 0.0
    %3927 = vmatprep.subr.mxu0 0.0
    %3928 = vmatpush2.msra.mxu0 0.0
    %3929 = vmatprep.subr.mxu0 0.0
    %3930 = vmatpush2.msra.mxu0 0.0
    %3931 = vmatprep.subr.mxu0 0.0
    %3932 = vmatpush2.msra.mxu0 0.0
    %3933 = vmatprep.subr.mxu0 0.0
    %3934 = vmatpush2.msra.mxu0 0.0
    %3935 = vmatprep.subr.mxu0 0.0
    %3936 = vmatpush2.msra.mxu0 0.0
    %3937 = vmatprep.subr.mxu0 0.0
    %3938 = vmatpush2.msra.mxu0 0.0
    %3939 = vmatprep.subr.mxu0 0.0
    %3940 = vmatpush2.msra.mxu0 0.0
    %3941 = vmatprep.subr.mxu0 0.0
    %3942 = vmatpush2.msra.mxu0 0.0
    %3943 = vmatprep.subr.mxu0 0.0
    %3944 = vmatpush2.msra.mxu0 0.0
    %3945 = vmatprep.subr.mxu0 0.0
    %3946 = vmatpush2.msra.mxu0 0.0
    %3947 = vmatprep.subr.mxu0 0.0
    %3948 = vmatpush2.msra.mxu0 0.0
    %3949 = vmatprep.subr.mxu0 0.0
    %3950 = vmatpush2.msra.mxu0 0.0
    %3951 = vmatprep.subr.mxu0 0.0
    %3952 = vmatpush2.msra.mxu0 0.0
    %3953 = vmatprep.subr.mxu0 0.0
    %3954 = vmatpush2.msra.mxu0 0.0
    %3955 = vmatprep.mubr.f32.mxu0 0.0
    %3956 = vmatmul.mubr.f32.gmra.mxu0 %v3886
    %v3957 = vpop.f32.mrf.mxu0
    %v3958 = vadd.f32 0.0, %v3957
    %v3959 = vpop.f32.mrf.mxu0
    %3960 = vmatprep.mubr.f32.mxu0 0.0
    %3961 = vmatmul.mubr.f32.gmra.mxu0 %v3889
    %v3962 = vpop.f32.mrf.mxu0
    %v3963 = vadd.f32 0.0, %v3962
    %v3964 = vpop.f32.mrf.mxu0
    %3965 = vdwg.mxu0
    %v3966 = vxor.u32 %v3958, 2147483648
    %v3967 = vxor.u32 %v3963, 2147483648
    %v3968 = vmul.f32 %v3966, 1.442695
    %v3969 = vpow.pop %v3968
    %v3970 = vmul.f32 %v3967, 1.442695
    %v3971 = vpow.pop %v3970
    %v3972 = vadd.f32 %v3969, 1.0
    %v3973 = vadd.f32 %v3971, 1.0
    %v3974 = vrcp.pop %v3972
    %v3975 = vmul.f32 1.0, %v3974
    %v3976 = vrcp.pop %v3973
    %v3977 = vmul.f32 1.0, %v3976
    %v3978 = vmul.f32 %v3958, %v3975
    %v3979 = vmul.f32 %v3963, %v3977
    %3982 = vrot.lane.b32.xlu0 %v3958, 64
    %v3983 = vpop.permute.xlu0 %3982
    %3984 = vrot.lane.b32.xlu0 %v3963, 64
    %v3985 = vpop.permute.xlu0 %3984
    %v3988 = vmul.f32 %v3978, %v3983
    %v3989 = vmul.f32 %v3979, %v3985
    %v3991 = vsel %vm1959, %v3988, 0
    %v3994 = vsel %vm1959, %v3989, 0
    %3996 = vmatprep.subr.mxu0 0.0
    %3997 = vmatpush1.msra.mxu0 0.0
    %3998 = vmatprep.subr.mxu0 0.0
    %3999 = vmatpush1.msra.mxu0 0.0
    %4000 = vmatprep.subr.mxu0 0.0
    %4001 = vmatpush1.msra.mxu0 0.0
    %4002 = vmatprep.subr.mxu0 0.0
    %4003 = vmatpush1.msra.mxu0 0.0
    %4004 = vmatprep.subr.mxu0 0.0
    %4005 = vmatpush1.msra.mxu0 0.0
    %4006 = vmatprep.subr.mxu0 0.0
    %4007 = vmatpush1.msra.mxu0 0.0
    %4008 = vmatprep.subr.mxu0 0.0
    %4009 = vmatpush1.msra.mxu0 0.0
    %4010 = vmatprep.subr.mxu0 0.0
    %4011 = vmatpush1.msra.mxu0 0.0
    %4012 = vmatprep.subr.mxu0 0.0
    %4013 = vmatpush1.msra.mxu0 %v2228
    %4014 = vmatprep.subr.mxu0 0.0
    %4015 = vmatpush1.msra.mxu0 %v2227
    %4016 = vmatprep.subr.mxu0 0.0
    %4017 = vmatpush1.msra.mxu0 %v2226
    %4018 = vmatprep.subr.mxu0 0.0
    %4019 = vmatpush1.msra.mxu0 %v2225
    %4020 = vmatprep.subr.mxu0 0.0
    %4021 = vmatpush1.msra.mxu0 %v2224
    %4022 = vmatprep.subr.mxu0 0.0
    %4023 = vmatpush1.msra.mxu0 %v2223
    %4024 = vmatprep.subr.mxu0 0.0
    %4025 = vmatpush1.msra.mxu0 %v2222
    %4026 = vmatprep.subr.mxu0 0.0
    %4027 = vmatpush1.msra.mxu0 %v2221
    %4028 = vmatprep.subr.mxu0 0.0
    %4029 = vmatpush2.msra.mxu0 0.0
    %4030 = vmatprep.subr.mxu0 0.0
    %4031 = vmatpush2.msra.mxu0 0.0
    %4032 = vmatprep.subr.mxu0 0.0
    %4033 = vmatpush2.msra.mxu0 0.0
    %4034 = vmatprep.subr.mxu0 0.0
    %4035 = vmatpush2.msra.mxu0 0.0
    %4036 = vmatprep.subr.mxu0 0.0
    %4037 = vmatpush2.msra.mxu0 0.0
    %4038 = vmatprep.subr.mxu0 0.0
    %4039 = vmatpush2.msra.mxu0 0.0
    %4040 = vmatprep.subr.mxu0 0.0
    %4041 = vmatpush2.msra.mxu0 0.0
    %4042 = vmatprep.subr.mxu0 0.0
    %4043 = vmatpush2.msra.mxu0 0.0
    %4044 = vmatprep.subr.mxu0 0.0
    %4045 = vmatpush2.msra.mxu0 0.0
    %4046 = vmatprep.subr.mxu0 0.0
    %4047 = vmatpush2.msra.mxu0 0.0
    %4048 = vmatprep.subr.mxu0 0.0
    %4049 = vmatpush2.msra.mxu0 0.0
    %4050 = vmatprep.subr.mxu0 0.0
    %4051 = vmatpush2.msra.mxu0 0.0
    %4052 = vmatprep.subr.mxu0 0.0
    %4053 = vmatpush2.msra.mxu0 0.0
    %4054 = vmatprep.subr.mxu0 0.0
    %4055 = vmatpush2.msra.mxu0 0.0
    %4056 = vmatprep.subr.mxu0 0.0
    %4057 = vmatpush2.msra.mxu0 0.0
    %4058 = vmatprep.subr.mxu0 0.0
    %4059 = vmatpush2.msra.mxu0 0.0
    %4060 = vmatprep.mubr.f32.mxu0 0.0
    %4061 = vmatmul.mubr.f32.gmra.mxu0 %v3991
    %v4062 = vpop.f32.mrf.mxu0
    %v4063 = vadd.f32 0.0, %v4062
    %v4064 = vpop.f32.mrf.mxu0
    %4065 = vmatprep.mubr.f32.mxu0 0.0
    %4066 = vmatmul.mubr.f32.gmra.mxu0 %v3994
    %v4067 = vpop.f32.mrf.mxu0
    %v4068 = vadd.f32 0.0, %v4067
    %v4069 = vpop.f32.mrf.mxu0
    %4070 = vdwg.mxu0
    %v4071 = vadd.f32 %v3859, %v4063
    %v4072 = vadd.f32 %v3860, %v4068
    %s4073 = scalar_lea.vmem %s12, 1
    %v4074 = vld [vmem:[%s4073] sm:$0x1]
    %s4075 = scalar_lea.vmem %s13, 1
    %v4076 = vld [vmem:[%s4075] sm:$0x1]
    %s4077 = scalar_lea.vmem %s14, 64
    %v4078 = vld [vmem:[%s4077] sm:$0xff]
    %v4079 = vld [vmem:[%s4077 + $0x8] sm:$0xff]
    %v4080 = vld [vmem:[%s4077 + $0x10] sm:$0xff]
    %v4081 = vld [vmem:[%s4077 + $0x18] sm:$0xff]
    %v4082 = vld [vmem:[%s4077 + $0x20] sm:$0xff]
    %v4083 = vld [vmem:[%s4077 + $0x28] sm:$0xff]
    %v4084 = vld [vmem:[%s4077 + $0x30] sm:$0xff]
    %v4085 = vld [vmem:[%s4077 + $0x38] sm:$0xff]
    %s4086 = scalar_lea.vmem [#allocation13], 32
    %v4087 = vld [vmem:[%s4086] sm:$0xff]
    %v4088 = vld [vmem:[%s4086 + $0x8] sm:$0xff]
    %v4089 = vld [vmem:[%s4086 + $0x10] sm:$0xff]
    %v4090 = vld [vmem:[%s4086 + $0x18] sm:$0xff]
    %s4091 = scalar_lea.vmem [#allocation14], 32
    %v4092 = vld [vmem:[%s4091] sm:$0xff]
    %v4093 = vld [vmem:[%s4091 + $0x8] sm:$0xff]
    %v4094 = vld [vmem:[%s4091 + $0x10] sm:$0xff]
    %v4095 = vld [vmem:[%s4091 + $0x18] sm:$0xff]
    %s4096 = scalar_lea.vmem %s17, 64
    %v4097 = vld [vmem:[%s4096] sm:$0xff]
    %v4098 = vld [vmem:[%s4096 + $0x8] sm:$0xff]
    %v4099 = vld [vmem:[%s4096 + $0x10] sm:$0xff]
    %v4100 = vld [vmem:[%s4096 + $0x18] sm:$0xff]
    %v4101 = vld [vmem:[%s4096 + $0x20] sm:$0xff]
    %v4102 = vld [vmem:[%s4096 + $0x28] sm:$0xff]
    %v4103 = vld [vmem:[%s4096 + $0x30] sm:$0xff]
    %v4104 = vld [vmem:[%s4096 + $0x38] sm:$0xff]
    %v4105 = vmul.f32 %v4071, %v4071
    %v4106 = vmul.f32 %v4072, %v4072
    %v4107 = vsel %vm209, %v4105, 0.0
    %4108 = vadd.xlane.f32.xlu0 %v4107
    %v4109 = vpop.xlane.xlu0 %4108
    %v4110 = vsel %vm209, %v4106, 0.0
    %4111 = vadd.xlane.f32.xlu0 %v4110
    %v4112 = vpop.xlane.xlu0 %4111
    %v4113 = vmul.f32 %v4109, %v216
    %v4114 = vmul.f32 %v4112, %v216
    %v4115 = vadd.f32 %v4113, 1e-05
    %v4116 = vadd.f32 %v4114, 1e-05
    %v4117 = vrsqrt.pop %v4115
    %v4118 = vrsqrt.pop %v4116
    %v4119 = vmul.f32 %v4071, %v4117
    %v4120 = vmul.f32 %v4072, %v4118
    %v4122 = vlaneseq
    %v4123 = vshrl.u32 %v4122, 7
    %v4124 = vsub.s32 0, %v4123
    %v4125 = vrot.slane %v4074, %v4124
    %v4127 = vmul.f32 %v4119, %v4125
    %v4128 = vmul.f32 %v4120, %v4125
    %v4130 = vsel %vm209, %v4127, 0
    %v4133 = vsel %vm209, %v4128, 0
    %4135 = vmatprep.subr.mxu0 0.0
    %4136 = vmatpush1.msra.mxu0 0.0
    %4137 = vmatprep.subr.mxu0 0.0
    %4138 = vmatpush1.msra.mxu0 0.0
    %4139 = vmatprep.subr.mxu0 0.0
    %4140 = vmatpush1.msra.mxu0 0.0
    %4141 = vmatprep.subr.mxu0 0.0
    %4142 = vmatpush1.msra.mxu0 0.0
    %4143 = vmatprep.subr.mxu0 0.0
    %4144 = vmatpush1.msra.mxu0 0.0
    %4145 = vmatprep.subr.mxu0 0.0
    %4146 = vmatpush1.msra.mxu0 0.0
    %4147 = vmatprep.subr.mxu0 0.0
    %4148 = vmatpush1.msra.mxu0 0.0
    %4149 = vmatprep.subr.mxu0 0.0
    %4150 = vmatpush1.msra.mxu0 0.0
    %4151 = vmatprep.subr.mxu0 0.0
    %4152 = vmatpush1.msra.mxu0 0.0
    %4153 = vmatprep.subr.mxu0 0.0
    %4154 = vmatpush1.msra.mxu0 0.0
    %4155 = vmatprep.subr.mxu0 0.0
    %4156 = vmatpush1.msra.mxu0 0.0
    %4157 = vmatprep.subr.mxu0 0.0
    %4158 = vmatpush1.msra.mxu0 0.0
    %4159 = vmatprep.subr.mxu0 %v4085
    %4160 = vmatpush1.msra.mxu0 %v4084
    %4161 = vmatprep.subr.mxu0 %v4083
    %4162 = vmatpush1.msra.mxu0 %v4082
    %4163 = vmatprep.subr.mxu0 %v4081
    %4164 = vmatpush1.msra.mxu0 %v4080
    %4165 = vmatprep.subr.mxu0 %v4079
    %4166 = vmatpush1.msra.mxu0 %v4078
    %4167 = vmatprep.subr.mxu0 0.0
    %4168 = vmatpush2.msra.mxu0 0.0
    %4169 = vmatprep.subr.mxu0 0.0
    %4170 = vmatpush2.msra.mxu0 0.0
    %4171 = vmatprep.subr.mxu0 0.0
    %4172 = vmatpush2.msra.mxu0 0.0
    %4173 = vmatprep.subr.mxu0 0.0
    %4174 = vmatpush2.msra.mxu0 0.0
    %4175 = vmatprep.subr.mxu0 0.0
    %4176 = vmatpush2.msra.mxu0 0.0
    %4177 = vmatprep.subr.mxu0 0.0
    %4178 = vmatpush2.msra.mxu0 0.0
    %4179 = vmatprep.subr.mxu0 0.0
    %4180 = vmatpush2.msra.mxu0 0.0
    %4181 = vmatprep.subr.mxu0 0.0
    %4182 = vmatpush2.msra.mxu0 0.0
    %4183 = vmatprep.subr.mxu0 0.0
    %4184 = vmatpush2.msra.mxu0 0.0
    %4185 = vmatprep.subr.mxu0 0.0
    %4186 = vmatpush2.msra.mxu0 0.0
    %4187 = vmatprep.subr.mxu0 0.0
    %4188 = vmatpush2.msra.mxu0 0.0
    %4189 = vmatprep.subr.mxu0 0.0
    %4190 = vmatpush2.msra.mxu0 0.0
    %4191 = vmatprep.subr.mxu0 0.0
    %4192 = vmatpush2.msra.mxu0 0.0
    %4193 = vmatprep.subr.mxu0 0.0
    %4194 = vmatpush2.msra.mxu0 0.0
    %4195 = vmatprep.subr.mxu0 0.0
    %4196 = vmatpush2.msra.mxu0 0.0
    %4197 = vmatprep.subr.mxu0 0.0
    %4198 = vmatpush2.msra.mxu0 0.0
    %4199 = vmatprep.mubr.f32.mxu0 0.0
    %4200 = vmatmul.mubr.f32.gmra.mxu0 %v4130
    %v4201 = vpop.f32.mrf.mxu0
    %v4202 = vadd.f32 0.0, %v4201
    %v4203 = vpop.f32.mrf.mxu0
    %v4204 = vadd.f32 0.0, %v4203
    %4205 = vmatprep.mubr.f32.mxu0 0.0
    %4206 = vmatmul.mubr.f32.gmra.mxu0 %v4133
    %v4207 = vpop.f32.mrf.mxu0
    %v4208 = vadd.f32 0.0, %v4207
    %v4209 = vpop.f32.mrf.mxu0
    %v4210 = vadd.f32 0.0, %v4209
    %4211 = vdwg.mxu0
    %v4212 = vmul.f32 %v4202, %v177
    %v4213 = vmul.f32 %v4208, %v178
    %v4214 = vmul.f32 %v4202, %v2341
    %v4215 = vmul.f32 %v4208, %v2343
    %4218 = vrot.lane.b32.xlu0 %v4214, 32
    %v4219 = vpop.permute.xlu0 %4218
    %4220 = vrot.lane.b32.xlu0 %v4215, 32
    %v4221 = vpop.permute.xlu0 %4220
    %v4224 = vadd.f32 %v4212, %v4219
    %v4225 = vadd.f32 %v4213, %v4221
    %v4226 = vmul.f32 %v4202, %v2361
    %v4227 = vmul.f32 %v4208, %v2363
    %v4228 = vmul.f32 %v4204, %v179
    %v4229 = vmul.f32 %v4210, %v180
    %4232 = vrot.lane.b32.xlu0 %v4228, 32
    %v4233 = vpop.permute.xlu0 %4232
    %4234 = vrot.lane.b32.xlu0 %v4229, 32
    %v4235 = vpop.permute.xlu0 %4234
    %v4238 = vadd.f32 %v4226, %v4233
    %v4239 = vadd.f32 %v4227, %v4235
    %4242 = vrot.lane.b32.xlu0 %v4224, 120
    %v4243 = vpop.permute.xlu0 %4242
    %4244 = vrot.lane.b32.xlu0 %v4225, 120
    %v4245 = vpop.permute.xlu0 %4244
    %4246 = vrot.lane.b32.xlu0 %v4224, 112
    %v4247 = vpop.permute.xlu0 %4246
    %4248 = vrot.lane.b32.xlu0 %v4225, 112
    %v4249 = vpop.permute.xlu0 %4248
    %4250 = vrot.lane.b32.xlu0 %v4224, 104
    %v4251 = vpop.permute.xlu0 %4250
    %4252 = vrot.lane.b32.xlu0 %v4225, 104
    %v4253 = vpop.permute.xlu0 %4252
    %4256 = vrot.lane.b32.xlu0 %v4238, 120
    %v4257 = vpop.permute.xlu0 %4256
    %4258 = vrot.lane.b32.xlu0 %v4239, 120
    %v4259 = vpop.permute.xlu0 %4258
    %4260 = vrot.lane.b32.xlu0 %v4238, 112
    %v4261 = vpop.permute.xlu0 %4260
    %4262 = vrot.lane.b32.xlu0 %v4239, 112
    %v4263 = vpop.permute.xlu0 %4262
    %4264 = vrot.lane.b32.xlu0 %v4238, 104
    %v4265 = vpop.permute.xlu0 %4264
    %4266 = vrot.lane.b32.xlu0 %v4239, 104
    %v4267 = vpop.permute.xlu0 %4266
    %4270 = vrot.lane.b32.xlu0 %v4202, 120
    %v4271 = vpop.permute.xlu0 %4270
    %4272 = vrot.lane.b32.xlu0 %v4208, 120
    %v4273 = vpop.permute.xlu0 %4272
    %4274 = vrot.lane.b32.xlu0 %v4202, 112
    %v4275 = vpop.permute.xlu0 %4274
    %4276 = vrot.lane.b32.xlu0 %v4208, 112
    %v4277 = vpop.permute.xlu0 %4276
    %4278 = vrot.lane.b32.xlu0 %v4202, 104
    %v4279 = vpop.permute.xlu0 %4278
    %4280 = vrot.lane.b32.xlu0 %v4208, 104
    %v4281 = vpop.permute.xlu0 %4280
    %4282 = vrot.lane.b32.xlu0 %v2173, 96
    %v4283 = vpop.permute.xlu0 %4282
    %4284 = vrot.lane.b32.xlu0 %v4238, 96
    %v4285 = vpop.permute.xlu0 %4284
    %v4286 = vsel %vm404, %v4224, 0
    %v4288 = vsel %vm404, %v4283, 0
    %v4290 = vsel %vm404, %v4285, 0
    %4292 = vmatprep.subr.mxu0 0.0
    %4293 = vmatpush1.xpose.msra.mxu0 0.0
    %4294 = vmatprep.subr.mxu0 0.0
    %4295 = vmatpush1.xpose.msra.mxu0 0.0
    %4296 = vmatprep.subr.mxu0 0.0
    %4297 = vmatpush1.xpose.msra.mxu0 0.0
    %4298 = vmatprep.subr.mxu0 0.0
    %4299 = vmatpush1.xpose.msra.mxu0 0.0
    %4300 = vmatprep.subr.mxu0 0.0
    %4301 = vmatpush1.xpose.msra.mxu0 0.0
    %4302 = vmatprep.subr.mxu0 0.0
    %4303 = vmatpush1.xpose.msra.mxu0 0.0
    %4304 = vmatprep.subr.mxu0 0.0
    %4305 = vmatpush1.xpose.msra.mxu0 0.0
    %4306 = vmatprep.subr.mxu0 0.0
    %4307 = vmatpush1.xpose.msra.mxu0 0.0
    %4308 = vmatprep.subr.mxu0 0.0
    %4309 = vmatpush1.xpose.msra.mxu0 0.0
    %4310 = vmatprep.subr.mxu0 0.0
    %4311 = vmatpush1.xpose.msra.mxu0 0.0
    %4312 = vmatprep.subr.mxu0 0.0
    %4313 = vmatpush1.xpose.msra.mxu0 0.0
    %4314 = vmatprep.subr.mxu0 0.0
    %4315 = vmatpush1.xpose.msra.mxu0 0.0
    %4316 = vmatprep.subr.mxu0 0.0
    %4317 = vmatpush1.xpose.msra.mxu0 0.0
    %4318 = vmatprep.subr.mxu0 0.0
    %4319 = vmatpush1.xpose.msra.mxu0 0.0
    %4320 = vmatprep.subr.mxu0 0.0
    %4321 = vmatpush1.xpose.msra.mxu0 %v4290
    %4322 = vmatprep.subr.mxu0 0.0
    %4323 = vmatpush1.xpose.msra.mxu0 %v4288
    %4324 = vmatprep.subr.mxu0 0.0
    %4325 = vmatpush2.xpose.msra.mxu0 0.0
    %4326 = vmatprep.subr.mxu0 0.0
    %4327 = vmatpush2.xpose.msra.mxu0 0.0
    %4328 = vmatprep.subr.mxu0 0.0
    %4329 = vmatpush2.xpose.msra.mxu0 0.0
    %4330 = vmatprep.subr.mxu0 0.0
    %4331 = vmatpush2.xpose.msra.mxu0 0.0
    %4332 = vmatprep.subr.mxu0 0.0
    %4333 = vmatpush2.xpose.msra.mxu0 0.0
    %4334 = vmatprep.subr.mxu0 0.0
    %4335 = vmatpush2.xpose.msra.mxu0 0.0
    %4336 = vmatprep.subr.mxu0 0.0
    %4337 = vmatpush2.xpose.msra.mxu0 0.0
    %4338 = vmatprep.subr.mxu0 0.0
    %4339 = vmatpush2.xpose.msra.mxu0 0.0
    %4340 = vmatprep.subr.mxu0 0.0
    %4341 = vmatpush2.xpose.msra.mxu0 0.0
    %4342 = vmatprep.subr.mxu0 0.0
    %4343 = vmatpush2.xpose.msra.mxu0 0.0
    %4344 = vmatprep.subr.mxu0 0.0
    %4345 = vmatpush2.xpose.msra.mxu0 0.0
    %4346 = vmatprep.subr.mxu0 0.0
    %4347 = vmatpush2.xpose.msra.mxu0 0.0
    %4348 = vmatprep.subr.mxu0 0.0
    %4349 = vmatpush2.xpose.msra.mxu0 0.0
    %4350 = vmatprep.subr.mxu0 0.0
    %4351 = vmatpush2.xpose.msra.mxu0 0.0
    %4352 = vmatprep.subr.mxu0 0.0
    %4353 = vmatpush2.xpose.msra.mxu0 0.0
    %4354 = vmatprep.subr.mxu0 0.0
    %4355 = vmatpush2.xpose.msra.mxu0 0.0
    %4356 = vmatprep.mubr.f32.mxu0 0.0
    %4357 = vmatmul.mubr.f32.gmra.mxu0 %v4286
    %v4358 = vpop.f32.mrf.mxu0
    %v4359 = vadd.f32 0.0, %v4358
    %v4360 = vpop.f32.mrf.mxu0
    %4361 = vdwg.mxu0
    %4362 = vrot.lane.b32.xlu0 %v2174, 96
    %v4363 = vpop.permute.xlu0 %4362
    %4364 = vrot.lane.b32.xlu0 %v4239, 96
    %v4365 = vpop.permute.xlu0 %4364
    %v4366 = vsel %vm404, %v4225, 0
    %v4368 = vsel %vm404, %v4363, 0
    %v4370 = vsel %vm404, %v4365, 0
    %4372 = vmatprep.subr.mxu0 0.0
    %4373 = vmatpush1.xpose.msra.mxu0 0.0
    %4374 = vmatprep.subr.mxu0 0.0
    %4375 = vmatpush1.xpose.msra.mxu0 0.0
    %4376 = vmatprep.subr.mxu0 0.0
    %4377 = vmatpush1.xpose.msra.mxu0 0.0
    %4378 = vmatprep.subr.mxu0 0.0
    %4379 = vmatpush1.xpose.msra.mxu0 0.0
    %4380 = vmatprep.subr.mxu0 0.0
    %4381 = vmatpush1.xpose.msra.mxu0 0.0
    %4382 = vmatprep.subr.mxu0 0.0
    %4383 = vmatpush1.xpose.msra.mxu0 0.0
    %4384 = vmatprep.subr.mxu0 0.0
    %4385 = vmatpush1.xpose.msra.mxu0 0.0
    %4386 = vmatprep.subr.mxu0 0.0
    %4387 = vmatpush1.xpose.msra.mxu0 0.0
    %4388 = vmatprep.subr.mxu0 0.0
    %4389 = vmatpush1.xpose.msra.mxu0 0.0
    %4390 = vmatprep.subr.mxu0 0.0
    %4391 = vmatpush1.xpose.msra.mxu0 0.0
    %4392 = vmatprep.subr.mxu0 0.0
    %4393 = vmatpush1.xpose.msra.mxu0 0.0
    %4394 = vmatprep.subr.mxu0 0.0
    %4395 = vmatpush1.xpose.msra.mxu0 0.0
    %4396 = vmatprep.subr.mxu0 0.0
    %4397 = vmatpush1.xpose.msra.mxu0 0.0
    %4398 = vmatprep.subr.mxu0 0.0
    %4399 = vmatpush1.xpose.msra.mxu0 0.0
    %4400 = vmatprep.subr.mxu0 0.0
    %4401 = vmatpush1.xpose.msra.mxu0 %v4370
    %4402 = vmatprep.subr.mxu0 0.0
    %4403 = vmatpush1.xpose.msra.mxu0 %v4368
    %4404 = vmatprep.subr.mxu0 0.0
    %4405 = vmatpush2.xpose.msra.mxu0 0.0
    %4406 = vmatprep.subr.mxu0 0.0
    %4407 = vmatpush2.xpose.msra.mxu0 0.0
    %4408 = vmatprep.subr.mxu0 0.0
    %4409 = vmatpush2.xpose.msra.mxu0 0.0
    %4410 = vmatprep.subr.mxu0 0.0
    %4411 = vmatpush2.xpose.msra.mxu0 0.0
    %4412 = vmatprep.subr.mxu0 0.0
    %4413 = vmatpush2.xpose.msra.mxu0 0.0
    %4414 = vmatprep.subr.mxu0 0.0
    %4415 = vmatpush2.xpose.msra.mxu0 0.0
    %4416 = vmatprep.subr.mxu0 0.0
    %4417 = vmatpush2.xpose.msra.mxu0 0.0
    %4418 = vmatprep.subr.mxu0 0.0
    %4419 = vmatpush2.xpose.msra.mxu0 0.0
    %4420 = vmatprep.subr.mxu0 0.0
    %4421 = vmatpush2.xpose.msra.mxu0 0.0
    %4422 = vmatprep.subr.mxu0 0.0
    %4423 = vmatpush2.xpose.msra.mxu0 0.0
    %4424 = vmatprep.subr.mxu0 0.0
    %4425 = vmatpush2.xpose.msra.mxu0 0.0
    %4426 = vmatprep.subr.mxu0 0.0
    %4427 = vmatpush2.xpose.msra.mxu0 0.0
    %4428 = vmatprep.subr.mxu0 0.0
    %4429 = vmatpush2.xpose.msra.mxu0 0.0
    %4430 = vmatprep.subr.mxu0 0.0
    %4431 = vmatpush2.xpose.msra.mxu0 0.0
    %4432 = vmatprep.subr.mxu0 0.0
    %4433 = vmatpush2.xpose.msra.mxu0 0.0
    %4434 = vmatprep.subr.mxu0 0.0
    %4435 = vmatpush2.xpose.msra.mxu0 0.0
    %4436 = vmatprep.mubr.f32.mxu0 0.0
    %4437 = vmatmul.mubr.f32.gmra.mxu0 %v4366
    %v4438 = vpop.f32.mrf.mxu0
    %v4439 = vadd.f32 0.0, %v4438
    %v4440 = vpop.f32.mrf.mxu0
    %4441 = vdwg.mxu0
    %4442 = vrot.lane.b32.xlu0 %v2178, 96
    %v4443 = vpop.permute.xlu0 %4442
    %4444 = vrot.lane.b32.xlu0 %v4257, 96
    %v4445 = vpop.permute.xlu0 %4444
    %v4446 = vsel %vm404, %v4243, 0
    %v4448 = vsel %vm404, %v4443, 0
    %v4450 = vsel %vm404, %v4445, 0
    %4452 = vmatprep.subr.mxu0 0.0
    %4453 = vmatpush1.xpose.msra.mxu0 0.0
    %4454 = vmatprep.subr.mxu0 0.0
    %4455 = vmatpush1.xpose.msra.mxu0 0.0
    %4456 = vmatprep.subr.mxu0 0.0
    %4457 = vmatpush1.xpose.msra.mxu0 0.0
    %4458 = vmatprep.subr.mxu0 0.0
    %4459 = vmatpush1.xpose.msra.mxu0 0.0
    %4460 = vmatprep.subr.mxu0 0.0
    %4461 = vmatpush1.xpose.msra.mxu0 0.0
    %4462 = vmatprep.subr.mxu0 0.0
    %4463 = vmatpush1.xpose.msra.mxu0 0.0
    %4464 = vmatprep.subr.mxu0 0.0
    %4465 = vmatpush1.xpose.msra.mxu0 0.0
    %4466 = vmatprep.subr.mxu0 0.0
    %4467 = vmatpush1.xpose.msra.mxu0 0.0
    %4468 = vmatprep.subr.mxu0 0.0
    %4469 = vmatpush1.xpose.msra.mxu0 0.0
    %4470 = vmatprep.subr.mxu0 0.0
    %4471 = vmatpush1.xpose.msra.mxu0 0.0
    %4472 = vmatprep.subr.mxu0 0.0
    %4473 = vmatpush1.xpose.msra.mxu0 0.0
    %4474 = vmatprep.subr.mxu0 0.0
    %4475 = vmatpush1.xpose.msra.mxu0 0.0
    %4476 = vmatprep.subr.mxu0 0.0
    %4477 = vmatpush1.xpose.msra.mxu0 0.0
    %4478 = vmatprep.subr.mxu0 0.0
    %4479 = vmatpush1.xpose.msra.mxu0 0.0
    %4480 = vmatprep.subr.mxu0 0.0
    %4481 = vmatpush1.xpose.msra.mxu0 %v4450
    %4482 = vmatprep.subr.mxu0 0.0
    %4483 = vmatpush1.xpose.msra.mxu0 %v4448
    %4484 = vmatprep.subr.mxu0 0.0
    %4485 = vmatpush2.xpose.msra.mxu0 0.0
    %4486 = vmatprep.subr.mxu0 0.0
    %4487 = vmatpush2.xpose.msra.mxu0 0.0
    %4488 = vmatprep.subr.mxu0 0.0
    %4489 = vmatpush2.xpose.msra.mxu0 0.0
    %4490 = vmatprep.subr.mxu0 0.0
    %4491 = vmatpush2.xpose.msra.mxu0 0.0
    %4492 = vmatprep.subr.mxu0 0.0
    %4493 = vmatpush2.xpose.msra.mxu0 0.0
    %4494 = vmatprep.subr.mxu0 0.0
    %4495 = vmatpush2.xpose.msra.mxu0 0.0
    %4496 = vmatprep.subr.mxu0 0.0
    %4497 = vmatpush2.xpose.msra.mxu0 0.0
    %4498 = vmatprep.subr.mxu0 0.0
    %4499 = vmatpush2.xpose.msra.mxu0 0.0
    %4500 = vmatprep.subr.mxu0 0.0
    %4501 = vmatpush2.xpose.msra.mxu0 0.0
    %4502 = vmatprep.subr.mxu0 0.0
    %4503 = vmatpush2.xpose.msra.mxu0 0.0
    %4504 = vmatprep.subr.mxu0 0.0
    %4505 = vmatpush2.xpose.msra.mxu0 0.0
    %4506 = vmatprep.subr.mxu0 0.0
    %4507 = vmatpush2.xpose.msra.mxu0 0.0
    %4508 = vmatprep.subr.mxu0 0.0
    %4509 = vmatpush2.xpose.msra.mxu0 0.0
    %4510 = vmatprep.subr.mxu0 0.0
    %4511 = vmatpush2.xpose.msra.mxu0 0.0
    %4512 = vmatprep.subr.mxu0 0.0
    %4513 = vmatpush2.xpose.msra.mxu0 0.0
    %4514 = vmatprep.subr.mxu0 0.0
    %4515 = vmatpush2.xpose.msra.mxu0 0.0
    %4516 = vmatprep.mubr.f32.mxu0 0.0
    %4517 = vmatmul.mubr.f32.gmra.mxu0 %v4446
    %v4518 = vpop.f32.mrf.mxu0
    %v4519 = vadd.f32 0.0, %v4518
    %v4520 = vpop.f32.mrf.mxu0
    %4521 = vdwg.mxu0
    %4522 = vrot.lane.b32.xlu0 %v2180, 96
    %v4523 = vpop.permute.xlu0 %4522
    %4524 = vrot.lane.b32.xlu0 %v4259, 96
    %v4525 = vpop.permute.xlu0 %4524
    %v4526 = vsel %vm404, %v4245, 0
    %v4528 = vsel %vm404, %v4523, 0
    %v4530 = vsel %vm404, %v4525, 0
    %4532 = vmatprep.subr.mxu0 0.0
    %4533 = vmatpush1.xpose.msra.mxu0 0.0
    %4534 = vmatprep.subr.mxu0 0.0
    %4535 = vmatpush1.xpose.msra.mxu0 0.0
    %4536 = vmatprep.subr.mxu0 0.0
    %4537 = vmatpush1.xpose.msra.mxu0 0.0
    %4538 = vmatprep.subr.mxu0 0.0
    %4539 = vmatpush1.xpose.msra.mxu0 0.0
    %4540 = vmatprep.subr.mxu0 0.0
    %4541 = vmatpush1.xpose.msra.mxu0 0.0
    %4542 = vmatprep.subr.mxu0 0.0
    %4543 = vmatpush1.xpose.msra.mxu0 0.0
    %4544 = vmatprep.subr.mxu0 0.0
    %4545 = vmatpush1.xpose.msra.mxu0 0.0
    %4546 = vmatprep.subr.mxu0 0.0
    %4547 = vmatpush1.xpose.msra.mxu0 0.0
    %4548 = vmatprep.subr.mxu0 0.0
    %4549 = vmatpush1.xpose.msra.mxu0 0.0
    %4550 = vmatprep.subr.mxu0 0.0
    %4551 = vmatpush1.xpose.msra.mxu0 0.0
    %4552 = vmatprep.subr.mxu0 0.0
    %4553 = vmatpush1.xpose.msra.mxu0 0.0
    %4554 = vmatprep.subr.mxu0 0.0
    %4555 = vmatpush1.xpose.msra.mxu0 0.0
    %4556 = vmatprep.subr.mxu0 0.0
    %4557 = vmatpush1.xpose.msra.mxu0 0.0
    %4558 = vmatprep.subr.mxu0 0.0
    %4559 = vmatpush1.xpose.msra.mxu0 0.0
    %4560 = vmatprep.subr.mxu0 0.0
    %4561 = vmatpush1.xpose.msra.mxu0 %v4530
    %4562 = vmatprep.subr.mxu0 0.0
    %4563 = vmatpush1.xpose.msra.mxu0 %v4528
    %4564 = vmatprep.subr.mxu0 0.0
    %4565 = vmatpush2.xpose.msra.mxu0 0.0
    %4566 = vmatprep.subr.mxu0 0.0
    %4567 = vmatpush2.xpose.msra.mxu0 0.0
    %4568 = vmatprep.subr.mxu0 0.0
    %4569 = vmatpush2.xpose.msra.mxu0 0.0
    %4570 = vmatprep.subr.mxu0 0.0
    %4571 = vmatpush2.xpose.msra.mxu0 0.0
    %4572 = vmatprep.subr.mxu0 0.0
    %4573 = vmatpush2.xpose.msra.mxu0 0.0
    %4574 = vmatprep.subr.mxu0 0.0
    %4575 = vmatpush2.xpose.msra.mxu0 0.0
    %4576 = vmatprep.subr.mxu0 0.0
    %4577 = vmatpush2.xpose.msra.mxu0 0.0
    %4578 = vmatprep.subr.mxu0 0.0
    %4579 = vmatpush2.xpose.msra.mxu0 0.0
    %4580 = vmatprep.subr.mxu0 0.0
    %4581 = vmatpush2.xpose.msra.mxu0 0.0
    %4582 = vmatprep.subr.mxu0 0.0
    %4583 = vmatpush2.xpose.msra.mxu0 0.0
    %4584 = vmatprep.subr.mxu0 0.0
    %4585 = vmatpush2.xpose.msra.mxu0 0.0
    %4586 = vmatprep.subr.mxu0 0.0
    %4587 = vmatpush2.xpose.msra.mxu0 0.0
    %4588 = vmatprep.subr.mxu0 0.0
    %4589 = vmatpush2.xpose.msra.mxu0 0.0
    %4590 = vmatprep.subr.mxu0 0.0
    %4591 = vmatpush2.xpose.msra.mxu0 0.0
    %4592 = vmatprep.subr.mxu0 0.0
    %4593 = vmatpush2.xpose.msra.mxu0 0.0
    %4594 = vmatprep.subr.mxu0 0.0
    %4595 = vmatpush2.xpose.msra.mxu0 0.0
    %4596 = vmatprep.mubr.f32.mxu0 0.0
    %4597 = vmatmul.mubr.f32.gmra.mxu0 %v4526
    %v4598 = vpop.f32.mrf.mxu0
    %v4599 = vadd.f32 0.0, %v4598
    %v4600 = vpop.f32.mrf.mxu0
    %4601 = vdwg.mxu0
    %4602 = vrot.lane.b32.xlu0 %v2182, 96
    %v4603 = vpop.permute.xlu0 %4602
    %4604 = vrot.lane.b32.xlu0 %v4261, 96
    %v4605 = vpop.permute.xlu0 %4604
    %v4606 = vsel %vm404, %v4247, 0
    %v4608 = vsel %vm404, %v4603, 0
    %v4610 = vsel %vm404, %v4605, 0
    %4612 = vmatprep.subr.mxu0 0.0
    %4613 = vmatpush1.xpose.msra.mxu0 0.0
    %4614 = vmatprep.subr.mxu0 0.0
    %4615 = vmatpush1.xpose.msra.mxu0 0.0
    %4616 = vmatprep.subr.mxu0 0.0
    %4617 = vmatpush1.xpose.msra.mxu0 0.0
    %4618 = vmatprep.subr.mxu0 0.0
    %4619 = vmatpush1.xpose.msra.mxu0 0.0
    %4620 = vmatprep.subr.mxu0 0.0
    %4621 = vmatpush1.xpose.msra.mxu0 0.0
    %4622 = vmatprep.subr.mxu0 0.0
    %4623 = vmatpush1.xpose.msra.mxu0 0.0
    %4624 = vmatprep.subr.mxu0 0.0
    %4625 = vmatpush1.xpose.msra.mxu0 0.0
    %4626 = vmatprep.subr.mxu0 0.0
    %4627 = vmatpush1.xpose.msra.mxu0 0.0
    %4628 = vmatprep.subr.mxu0 0.0
    %4629 = vmatpush1.xpose.msra.mxu0 0.0
    %4630 = vmatprep.subr.mxu0 0.0
    %4631 = vmatpush1.xpose.msra.mxu0 0.0
    %4632 = vmatprep.subr.mxu0 0.0
    %4633 = vmatpush1.xpose.msra.mxu0 0.0
    %4634 = vmatprep.subr.mxu0 0.0
    %4635 = vmatpush1.xpose.msra.mxu0 0.0
    %4636 = vmatprep.subr.mxu0 0.0
    %4637 = vmatpush1.xpose.msra.mxu0 0.0
    %4638 = vmatprep.subr.mxu0 0.0
    %4639 = vmatpush1.xpose.msra.mxu0 0.0
    %4640 = vmatprep.subr.mxu0 0.0
    %4641 = vmatpush1.xpose.msra.mxu0 %v4610
    %4642 = vmatprep.subr.mxu0 0.0
    %4643 = vmatpush1.xpose.msra.mxu0 %v4608
    %4644 = vmatprep.subr.mxu0 0.0
    %4645 = vmatpush2.xpose.msra.mxu0 0.0
    %4646 = vmatprep.subr.mxu0 0.0
    %4647 = vmatpush2.xpose.msra.mxu0 0.0
    %4648 = vmatprep.subr.mxu0 0.0
    %4649 = vmatpush2.xpose.msra.mxu0 0.0
    %4650 = vmatprep.subr.mxu0 0.0
    %4651 = vmatpush2.xpose.msra.mxu0 0.0
    %4652 = vmatprep.subr.mxu0 0.0
    %4653 = vmatpush2.xpose.msra.mxu0 0.0
    %4654 = vmatprep.subr.mxu0 0.0
    %4655 = vmatpush2.xpose.msra.mxu0 0.0
    %4656 = vmatprep.subr.mxu0 0.0
    %4657 = vmatpush2.xpose.msra.mxu0 0.0
    %4658 = vmatprep.subr.mxu0 0.0
    %4659 = vmatpush2.xpose.msra.mxu0 0.0
    %4660 = vmatprep.subr.mxu0 0.0
    %4661 = vmatpush2.xpose.msra.mxu0 0.0
    %4662 = vmatprep.subr.mxu0 0.0
    %4663 = vmatpush2.xpose.msra.mxu0 0.0
    %4664 = vmatprep.subr.mxu0 0.0
    %4665 = vmatpush2.xpose.msra.mxu0 0.0
    %4666 = vmatprep.subr.mxu0 0.0
    %4667 = vmatpush2.xpose.msra.mxu0 0.0
    %4668 = vmatprep.subr.mxu0 0.0
    %4669 = vmatpush2.xpose.msra.mxu0 0.0
    %4670 = vmatprep.subr.mxu0 0.0
    %4671 = vmatpush2.xpose.msra.mxu0 0.0
    %4672 = vmatprep.subr.mxu0 0.0
    %4673 = vmatpush2.xpose.msra.mxu0 0.0
    %4674 = vmatprep.subr.mxu0 0.0
    %4675 = vmatpush2.xpose.msra.mxu0 0.0
    %4676 = vmatprep.mubr.f32.mxu0 0.0
    %4677 = vmatmul.mubr.f32.gmra.mxu0 %v4606
    %v4678 = vpop.f32.mrf.mxu0
    %v4679 = vadd.f32 0.0, %v4678
    %v4680 = vpop.f32.mrf.mxu0
    %4681 = vdwg.mxu0
    %4682 = vrot.lane.b32.xlu0 %v2184, 96
    %v4683 = vpop.permute.xlu0 %4682
    %4684 = vrot.lane.b32.xlu0 %v4263, 96
    %v4685 = vpop.permute.xlu0 %4684
    %v4686 = vsel %vm404, %v4249, 0
    %v4688 = vsel %vm404, %v4683, 0
    %v4690 = vsel %vm404, %v4685, 0
    %4692 = vmatprep.subr.mxu0 0.0
    %4693 = vmatpush1.xpose.msra.mxu0 0.0
    %4694 = vmatprep.subr.mxu0 0.0
    %4695 = vmatpush1.xpose.msra.mxu0 0.0
    %4696 = vmatprep.subr.mxu0 0.0
    %4697 = vmatpush1.xpose.msra.mxu0 0.0
    %4698 = vmatprep.subr.mxu0 0.0
    %4699 = vmatpush1.xpose.msra.mxu0 0.0
    %4700 = vmatprep.subr.mxu0 0.0
    %4701 = vmatpush1.xpose.msra.mxu0 0.0
    %4702 = vmatprep.subr.mxu0 0.0
    %4703 = vmatpush1.xpose.msra.mxu0 0.0
    %4704 = vmatprep.subr.mxu0 0.0
    %4705 = vmatpush1.xpose.msra.mxu0 0.0
    %4706 = vmatprep.subr.mxu0 0.0
    %4707 = vmatpush1.xpose.msra.mxu0 0.0
    %4708 = vmatprep.subr.mxu0 0.0
    %4709 = vmatpush1.xpose.msra.mxu0 0.0
    %4710 = vmatprep.subr.mxu0 0.0
    %4711 = vmatpush1.xpose.msra.mxu0 0.0
    %4712 = vmatprep.subr.mxu0 0.0
    %4713 = vmatpush1.xpose.msra.mxu0 0.0
    %4714 = vmatprep.subr.mxu0 0.0
    %4715 = vmatpush1.xpose.msra.mxu0 0.0
    %4716 = vmatprep.subr.mxu0 0.0
    %4717 = vmatpush1.xpose.msra.mxu0 0.0
    %4718 = vmatprep.subr.mxu0 0.0
    %4719 = vmatpush1.xpose.msra.mxu0 0.0
    %4720 = vmatprep.subr.mxu0 0.0
    %4721 = vmatpush1.xpose.msra.mxu0 %v4690
    %4722 = vmatprep.subr.mxu0 0.0
    %4723 = vmatpush1.xpose.msra.mxu0 %v4688
    %4724 = vmatprep.subr.mxu0 0.0
    %4725 = vmatpush2.xpose.msra.mxu0 0.0
    %4726 = vmatprep.subr.mxu0 0.0
    %4727 = vmatpush2.xpose.msra.mxu0 0.0
    %4728 = vmatprep.subr.mxu0 0.0
    %4729 = vmatpush2.xpose.msra.mxu0 0.0
    %4730 = vmatprep.subr.mxu0 0.0
    %4731 = vmatpush2.xpose.msra.mxu0 0.0
    %4732 = vmatprep.subr.mxu0 0.0
    %4733 = vmatpush2.xpose.msra.mxu0 0.0
    %4734 = vmatprep.subr.mxu0 0.0
    %4735 = vmatpush2.xpose.msra.mxu0 0.0
    %4736 = vmatprep.subr.mxu0 0.0
    %4737 = vmatpush2.xpose.msra.mxu0 0.0
    %4738 = vmatprep.subr.mxu0 0.0
    %4739 = vmatpush2.xpose.msra.mxu0 0.0
    %4740 = vmatprep.subr.mxu0 0.0
    %4741 = vmatpush2.xpose.msra.mxu0 0.0
    %4742 = vmatprep.subr.mxu0 0.0
    %4743 = vmatpush2.xpose.msra.mxu0 0.0
    %4744 = vmatprep.subr.mxu0 0.0
    %4745 = vmatpush2.xpose.msra.mxu0 0.0
    %4746 = vmatprep.subr.mxu0 0.0
    %4747 = vmatpush2.xpose.msra.mxu0 0.0
    %4748 = vmatprep.subr.mxu0 0.0
    %4749 = vmatpush2.xpose.msra.mxu0 0.0
    %4750 = vmatprep.subr.mxu0 0.0
    %4751 = vmatpush2.xpose.msra.mxu0 0.0
    %4752 = vmatprep.subr.mxu0 0.0
    %4753 = vmatpush2.xpose.msra.mxu0 0.0
    %4754 = vmatprep.subr.mxu0 0.0
    %4755 = vmatpush2.xpose.msra.mxu0 0.0
    %4756 = vmatprep.mubr.f32.mxu0 0.0
    %4757 = vmatmul.mubr.f32.gmra.mxu0 %v4686
    %v4758 = vpop.f32.mrf.mxu0
    %v4759 = vadd.f32 0.0, %v4758
    %v4760 = vpop.f32.mrf.mxu0
    %4761 = vdwg.mxu0
    %4762 = vrot.lane.b32.xlu0 %v2186, 96
    %v4763 = vpop.permute.xlu0 %4762
    %4764 = vrot.lane.b32.xlu0 %v4265, 96
    %v4765 = vpop.permute.xlu0 %4764
    %v4766 = vsel %vm404, %v4251, 0
    %v4768 = vsel %vm404, %v4763, 0
    %v4770 = vsel %vm404, %v4765, 0
    %4772 = vmatprep.subr.mxu0 0.0
    %4773 = vmatpush1.xpose.msra.mxu0 0.0
    %4774 = vmatprep.subr.mxu0 0.0
    %4775 = vmatpush1.xpose.msra.mxu0 0.0
    %4776 = vmatprep.subr.mxu0 0.0
    %4777 = vmatpush1.xpose.msra.mxu0 0.0
    %4778 = vmatprep.subr.mxu0 0.0
    %4779 = vmatpush1.xpose.msra.mxu0 0.0
    %4780 = vmatprep.subr.mxu0 0.0
    %4781 = vmatpush1.xpose.msra.mxu0 0.0
    %4782 = vmatprep.subr.mxu0 0.0
    %4783 = vmatpush1.xpose.msra.mxu0 0.0
    %4784 = vmatprep.subr.mxu0 0.0
    %4785 = vmatpush1.xpose.msra.mxu0 0.0
    %4786 = vmatprep.subr.mxu0 0.0
    %4787 = vmatpush1.xpose.msra.mxu0 0.0
    %4788 = vmatprep.subr.mxu0 0.0
    %4789 = vmatpush1.xpose.msra.mxu0 0.0
    %4790 = vmatprep.subr.mxu0 0.0
    %4791 = vmatpush1.xpose.msra.mxu0 0.0
    %4792 = vmatprep.subr.mxu0 0.0
    %4793 = vmatpush1.xpose.msra.mxu0 0.0
    %4794 = vmatprep.subr.mxu0 0.0
    %4795 = vmatpush1.xpose.msra.mxu0 0.0
    %4796 = vmatprep.subr.mxu0 0.0
    %4797 = vmatpush1.xpose.msra.mxu0 0.0
    %4798 = vmatprep.subr.mxu0 0.0
    %4799 = vmatpush1.xpose.msra.mxu0 0.0
    %4800 = vmatprep.subr.mxu0 0.0
    %4801 = vmatpush1.xpose.msra.mxu0 %v4770
    %4802 = vmatprep.subr.mxu0 0.0
    %4803 = vmatpush1.xpose.msra.mxu0 %v4768
    %4804 = vmatprep.subr.mxu0 0.0
    %4805 = vmatpush2.xpose.msra.mxu0 0.0
    %4806 = vmatprep.subr.mxu0 0.0
    %4807 = vmatpush2.xpose.msra.mxu0 0.0
    %4808 = vmatprep.subr.mxu0 0.0
    %4809 = vmatpush2.xpose.msra.mxu0 0.0
    %4810 = vmatprep.subr.mxu0 0.0
    %4811 = vmatpush2.xpose.msra.mxu0 0.0
    %4812 = vmatprep.subr.mxu0 0.0
    %4813 = vmatpush2.xpose.msra.mxu0 0.0
    %4814 = vmatprep.subr.mxu0 0.0
    %4815 = vmatpush2.xpose.msra.mxu0 0.0
    %4816 = vmatprep.subr.mxu0 0.0
    %4817 = vmatpush2.xpose.msra.mxu0 0.0
    %4818 = vmatprep.subr.mxu0 0.0
    %4819 = vmatpush2.xpose.msra.mxu0 0.0
    %4820 = vmatprep.subr.mxu0 0.0
    %4821 = vmatpush2.xpose.msra.mxu0 0.0
    %4822 = vmatprep.subr.mxu0 0.0
    %4823 = vmatpush2.xpose.msra.mxu0 0.0
    %4824 = vmatprep.subr.mxu0 0.0
    %4825 = vmatpush2.xpose.msra.mxu0 0.0
    %4826 = vmatprep.subr.mxu0 0.0
    %4827 = vmatpush2.xpose.msra.mxu0 0.0
    %4828 = vmatprep.subr.mxu0 0.0
    %4829 = vmatpush2.xpose.msra.mxu0 0.0
    %4830 = vmatprep.subr.mxu0 0.0
    %4831 = vmatpush2.xpose.msra.mxu0 0.0
    %4832 = vmatprep.subr.mxu0 0.0
    %4833 = vmatpush2.xpose.msra.mxu0 0.0
    %4834 = vmatprep.subr.mxu0 0.0
    %4835 = vmatpush2.xpose.msra.mxu0 0.0
    %4836 = vmatprep.mubr.f32.mxu0 0.0
    %4837 = vmatmul.mubr.f32.gmra.mxu0 %v4766
    %v4838 = vpop.f32.mrf.mxu0
    %v4839 = vadd.f32 0.0, %v4838
    %v4840 = vpop.f32.mrf.mxu0
    %4841 = vdwg.mxu0
    %4842 = vrot.lane.b32.xlu0 %v2188, 96
    %v4843 = vpop.permute.xlu0 %4842
    %4844 = vrot.lane.b32.xlu0 %v4267, 96
    %v4845 = vpop.permute.xlu0 %4844
    %v4846 = vsel %vm404, %v4253, 0
    %v4848 = vsel %vm404, %v4843, 0
    %v4850 = vsel %vm404, %v4845, 0
    %4852 = vmatprep.subr.mxu0 0.0
    %4853 = vmatpush1.xpose.msra.mxu0 0.0
    %4854 = vmatprep.subr.mxu0 0.0
    %4855 = vmatpush1.xpose.msra.mxu0 0.0
    %4856 = vmatprep.subr.mxu0 0.0
    %4857 = vmatpush1.xpose.msra.mxu0 0.0
    %4858 = vmatprep.subr.mxu0 0.0
    %4859 = vmatpush1.xpose.msra.mxu0 0.0
    %4860 = vmatprep.subr.mxu0 0.0
    %4861 = vmatpush1.xpose.msra.mxu0 0.0
    %4862 = vmatprep.subr.mxu0 0.0
    %4863 = vmatpush1.xpose.msra.mxu0 0.0
    %4864 = vmatprep.subr.mxu0 0.0
    %4865 = vmatpush1.xpose.msra.mxu0 0.0
    %4866 = vmatprep.subr.mxu0 0.0
    %4867 = vmatpush1.xpose.msra.mxu0 0.0
    %4868 = vmatprep.subr.mxu0 0.0
    %4869 = vmatpush1.xpose.msra.mxu0 0.0
    %4870 = vmatprep.subr.mxu0 0.0
    %4871 = vmatpush1.xpose.msra.mxu0 0.0
    %4872 = vmatprep.subr.mxu0 0.0
    %4873 = vmatpush1.xpose.msra.mxu0 0.0
    %4874 = vmatprep.subr.mxu0 0.0
    %4875 = vmatpush1.xpose.msra.mxu0 0.0
    %4876 = vmatprep.subr.mxu0 0.0
    %4877 = vmatpush1.xpose.msra.mxu0 0.0
    %4878 = vmatprep.subr.mxu0 0.0
    %4879 = vmatpush1.xpose.msra.mxu0 0.0
    %4880 = vmatprep.subr.mxu0 0.0
    %4881 = vmatpush1.xpose.msra.mxu0 %v4850
    %4882 = vmatprep.subr.mxu0 0.0
    %4883 = vmatpush1.xpose.msra.mxu0 %v4848
    %4884 = vmatprep.subr.mxu0 0.0
    %4885 = vmatpush2.xpose.msra.mxu0 0.0
    %4886 = vmatprep.subr.mxu0 0.0
    %4887 = vmatpush2.xpose.msra.mxu0 0.0
    %4888 = vmatprep.subr.mxu0 0.0
    %4889 = vmatpush2.xpose.msra.mxu0 0.0
    %4890 = vmatprep.subr.mxu0 0.0
    %4891 = vmatpush2.xpose.msra.mxu0 0.0
    %4892 = vmatprep.subr.mxu0 0.0
    %4893 = vmatpush2.xpose.msra.mxu0 0.0
    %4894 = vmatprep.subr.mxu0 0.0
    %4895 = vmatpush2.xpose.msra.mxu0 0.0
    %4896 = vmatprep.subr.mxu0 0.0
    %4897 = vmatpush2.xpose.msra.mxu0 0.0
    %4898 = vmatprep.subr.mxu0 0.0
    %4899 = vmatpush2.xpose.msra.mxu0 0.0
    %4900 = vmatprep.subr.mxu0 0.0
    %4901 = vmatpush2.xpose.msra.mxu0 0.0
    %4902 = vmatprep.subr.mxu0 0.0
    %4903 = vmatpush2.xpose.msra.mxu0 0.0
    %4904 = vmatprep.subr.mxu0 0.0
    %4905 = vmatpush2.xpose.msra.mxu0 0.0
    %4906 = vmatprep.subr.mxu0 0.0
    %4907 = vmatpush2.xpose.msra.mxu0 0.0
    %4908 = vmatprep.subr.mxu0 0.0
    %4909 = vmatpush2.xpose.msra.mxu0 0.0
    %4910 = vmatprep.subr.mxu0 0.0
    %4911 = vmatpush2.xpose.msra.mxu0 0.0
    %4912 = vmatprep.subr.mxu0 0.0
    %4913 = vmatpush2.xpose.msra.mxu0 0.0
    %4914 = vmatprep.subr.mxu0 0.0
    %4915 = vmatpush2.xpose.msra.mxu0 0.0
    %4916 = vmatprep.mubr.f32.mxu0 0.0
    %4917 = vmatmul.mubr.f32.gmra.mxu0 %v4846
    %v4918 = vpop.f32.mrf.mxu0
    %v4919 = vadd.f32 0.0, %v4918
    %v4920 = vpop.f32.mrf.mxu0
    %4921 = vdwg.mxu0
    %v4922 = vmul.f32 %v4359, 0.35355338
    %v4923 = vmul.f32 %v4439, 0.35355338
    %v4924 = vmul.f32 %v4519, 0.35355338
    %v4925 = vmul.f32 %v4599, 0.35355338
    %v4926 = vmul.f32 %v4679, 0.35355338
    %v4927 = vmul.f32 %v4759, 0.35355338
    %v4928 = vmul.f32 %v4839, 0.35355338
    %v4929 = vmul.f32 %v4919, 0.35355338
    %v4930 = vsel %vm3043, %v4922, -1e+30
    %v4931 = vsel %vm3043, %v4923, -1e+30
    %v4932 = vsel %vm3043, %v4924, -1e+30
    %v4933 = vsel %vm3043, %v4925, -1e+30
    %v4934 = vsel %vm3043, %v4926, -1e+30
    %v4935 = vsel %vm3043, %v4927, -1e+30
    %v4936 = vsel %vm3043, %v4928, -1e+30
    %v4937 = vsel %vm3043, %v4929, -1e+30
    %v4938 = vsel %vm1741, %v4930, -inf
    %4939 = vmax.xlane.f32.xlu0 %v4938
    %v4940 = vpop.xlane.xlu0 %4939
    %v4941 = vsel %vm1741, %v4931, -inf
    %4942 = vmax.xlane.f32.xlu0 %v4941
    %v4943 = vpop.xlane.xlu0 %4942
    %v4944 = vsel %vm1741, %v4932, -inf
    %4945 = vmax.xlane.f32.xlu0 %v4944
    %v4946 = vpop.xlane.xlu0 %4945
    %v4947 = vsel %vm1741, %v4933, -inf
    %4948 = vmax.xlane.f32.xlu0 %v4947
    %v4949 = vpop.xlane.xlu0 %4948
    %v4950 = vsel %vm1741, %v4934, -inf
    %4951 = vmax.xlane.f32.xlu0 %v4950
    %v4952 = vpop.xlane.xlu0 %4951
    %v4953 = vsel %vm1741, %v4935, -inf
    %4954 = vmax.xlane.f32.xlu0 %v4953
    %v4955 = vpop.xlane.xlu0 %4954
    %v4956 = vsel %vm1741, %v4936, -inf
    %4957 = vmax.xlane.f32.xlu0 %v4956
    %v4958 = vpop.xlane.xlu0 %4957
    %v4959 = vsel %vm1741, %v4937, -inf
    %4960 = vmax.xlane.f32.xlu0 %v4959
    %v4961 = vpop.xlane.xlu0 %4960
    %v4962 = vsub.f32 %v4930, %v4940
    %v4963 = vsub.f32 %v4931, %v4943
    %v4964 = vsub.f32 %v4932, %v4946
    %v4965 = vsub.f32 %v4933, %v4949
    %v4966 = vsub.f32 %v4934, %v4952
    %v4967 = vsub.f32 %v4935, %v4955
    %v4968 = vsub.f32 %v4936, %v4958
    %v4969 = vsub.f32 %v4937, %v4961
    %v4970 = vmul.f32 %v4962, 1.442695
    %v4971 = vpow.pop %v4970
    %v4972 = vmul.f32 %v4963, 1.442695
    %v4973 = vpow.pop %v4972
    %v4974 = vmul.f32 %v4964, 1.442695
    %v4975 = vpow.pop %v4974
    %v4976 = vmul.f32 %v4965, 1.442695
    %v4977 = vpow.pop %v4976
    %v4978 = vmul.f32 %v4966, 1.442695
    %v4979 = vpow.pop %v4978
    %v4980 = vmul.f32 %v4967, 1.442695
    %v4981 = vpow.pop %v4980
    %v4982 = vmul.f32 %v4968, 1.442695
    %v4983 = vpow.pop %v4982
    %v4984 = vmul.f32 %v4969, 1.442695
    %v4985 = vpow.pop %v4984
    %v4986 = vsel %vm1741, %v4971, 0.0
    %4987 = vadd.xlane.f32.xlu0 %v4986
    %v4988 = vpop.xlane.xlu0 %4987
    %v4989 = vsel %vm1741, %v4973, 0.0
    %4990 = vadd.xlane.f32.xlu0 %v4989
    %v4991 = vpop.xlane.xlu0 %4990
    %v4992 = vsel %vm1741, %v4975, 0.0
    %4993 = vadd.xlane.f32.xlu0 %v4992
    %v4994 = vpop.xlane.xlu0 %4993
    %v4995 = vsel %vm1741, %v4977, 0.0
    %4996 = vadd.xlane.f32.xlu0 %v4995
    %v4997 = vpop.xlane.xlu0 %4996
    %v4998 = vsel %vm1741, %v4979, 0.0
    %4999 = vadd.xlane.f32.xlu0 %v4998
    %v5000 = vpop.xlane.xlu0 %4999
    %v5001 = vsel %vm1741, %v4981, 0.0
    %5002 = vadd.xlane.f32.xlu0 %v5001
    %v5003 = vpop.xlane.xlu0 %5002
    %v5004 = vsel %vm1741, %v4983, 0.0
    %5005 = vadd.xlane.f32.xlu0 %v5004
    %v5006 = vpop.xlane.xlu0 %5005
    %v5007 = vsel %vm1741, %v4985, 0.0
    %5008 = vadd.xlane.f32.xlu0 %v5007
    %v5009 = vpop.xlane.xlu0 %5008
    %v5010 = vrcp.pop %v4988
    %v5011 = vrcp.pop %v4991
    %v5012 = vrcp.pop %v4994
    %v5013 = vrcp.pop %v4997
    %v5014 = vrcp.pop %v5000
    %v5015 = vrcp.pop %v5003
    %v5016 = vrcp.pop %v5006
    %v5017 = vrcp.pop %v5009
    %5018 = vrot.lane.b32.xlu0 %v2151, 64
    %v5019 = vpop.permute.xlu0 %5018
    %5020 = vrot.lane.b32.xlu0 %v4202, 64
    %v5021 = vpop.permute.xlu0 %5020
    %v5025 = vsel %vm1741, %v4971, 0
    %5027 = vmatprep.subr.mxu0 0.0
    %5028 = vmatpush1.msra.mxu0 0.0
    %5029 = vmatprep.subr.mxu0 0.0
    %5030 = vmatpush1.msra.mxu0 0.0
    %5031 = vmatprep.subr.mxu0 0.0
    %5032 = vmatpush1.msra.mxu0 0.0
    %5033 = vmatprep.subr.mxu0 0.0
    %5034 = vmatpush1.msra.mxu0 0.0
    %5035 = vmatprep.subr.mxu0 0.0
    %5036 = vmatpush1.msra.mxu0 0.0
    %5037 = vmatprep.subr.mxu0 0.0
    %5038 = vmatpush1.msra.mxu0 0.0
    %5039 = vmatprep.subr.mxu0 0.0
    %5040 = vmatpush1.msra.mxu0 0.0
    %5041 = vmatprep.subr.mxu0 0.0
    %5042 = vmatpush1.msra.mxu0 0.0
    %5043 = vmatprep.subr.mxu0 0.0
    %5044 = vmatpush1.msra.mxu0 0.0
    %5045 = vmatprep.subr.mxu0 0.0
    %5046 = vmatpush1.msra.mxu0 0.0
    %5047 = vmatprep.subr.mxu0 0.0
    %5048 = vmatpush1.msra.mxu0 0.0
    %5049 = vmatprep.subr.mxu0 0.0
    %5050 = vmatpush1.msra.mxu0 0.0
    %5051 = vmatprep.subr.mxu0 0.0
    %5052 = vmatpush1.msra.mxu0 0.0
    %5053 = vmatprep.subr.mxu0 0.0
    %5054 = vmatpush1.msra.mxu0 0.0
    %5055 = vmatprep.subr.mxu0 0.0
    %5056 = vmatpush1.msra.mxu0 %v5021
    %5057 = vmatprep.subr.mxu0 0.0
    %5058 = vmatpush1.msra.mxu0 %v5019
    %5059 = vmatprep.subr.mxu0 0.0
    %5060 = vmatpush2.msra.mxu0 0.0
    %5061 = vmatprep.subr.mxu0 0.0
    %5062 = vmatpush2.msra.mxu0 0.0
    %5063 = vmatprep.subr.mxu0 0.0
    %5064 = vmatpush2.msra.mxu0 0.0
    %5065 = vmatprep.subr.mxu0 0.0
    %5066 = vmatpush2.msra.mxu0 0.0
    %5067 = vmatprep.subr.mxu0 0.0
    %5068 = vmatpush2.msra.mxu0 0.0
    %5069 = vmatprep.subr.mxu0 0.0
    %5070 = vmatpush2.msra.mxu0 0.0
    %5071 = vmatprep.subr.mxu0 0.0
    %5072 = vmatpush2.msra.mxu0 0.0
    %5073 = vmatprep.subr.mxu0 0.0
    %5074 = vmatpush2.msra.mxu0 0.0
    %5075 = vmatprep.subr.mxu0 0.0
    %5076 = vmatpush2.msra.mxu0 0.0
    %5077 = vmatprep.subr.mxu0 0.0
    %5078 = vmatpush2.msra.mxu0 0.0
    %5079 = vmatprep.subr.mxu0 0.0
    %5080 = vmatpush2.msra.mxu0 0.0
    %5081 = vmatprep.subr.mxu0 0.0
    %5082 = vmatpush2.msra.mxu0 0.0
    %5083 = vmatprep.subr.mxu0 0.0
    %5084 = vmatpush2.msra.mxu0 0.0
    %5085 = vmatprep.subr.mxu0 0.0
    %5086 = vmatpush2.msra.mxu0 0.0
    %5087 = vmatprep.subr.mxu0 0.0
    %5088 = vmatpush2.msra.mxu0 0.0
    %5089 = vmatprep.subr.mxu0 0.0
    %5090 = vmatpush2.msra.mxu0 0.0
    %5091 = vmatprep.mubr.f32.mxu0 0.0
    %5092 = vmatmul.mubr.f32.gmra.mxu0 %v5025
    %v5093 = vpop.f32.mrf.mxu0
    %v5094 = vadd.f32 0.0, %v5093
    %v5095 = vpop.f32.mrf.mxu0
    %5096 = vdwg.mxu0
    %5097 = vrot.lane.b32.xlu0 %v2157, 64
    %v5098 = vpop.permute.xlu0 %5097
    %5099 = vrot.lane.b32.xlu0 %v4208, 64
    %v5100 = vpop.permute.xlu0 %5099
    %v5104 = vsel %vm1741, %v4973, 0
    %5106 = vmatprep.subr.mxu0 0.0
    %5107 = vmatpush1.msra.mxu0 0.0
    %5108 = vmatprep.subr.mxu0 0.0
    %5109 = vmatpush1.msra.mxu0 0.0
    %5110 = vmatprep.subr.mxu0 0.0
    %5111 = vmatpush1.msra.mxu0 0.0
    %5112 = vmatprep.subr.mxu0 0.0
    %5113 = vmatpush1.msra.mxu0 0.0
    %5114 = vmatprep.subr.mxu0 0.0
    %5115 = vmatpush1.msra.mxu0 0.0
    %5116 = vmatprep.subr.mxu0 0.0
    %5117 = vmatpush1.msra.mxu0 0.0
    %5118 = vmatprep.subr.mxu0 0.0
    %5119 = vmatpush1.msra.mxu0 0.0
    %5120 = vmatprep.subr.mxu0 0.0
    %5121 = vmatpush1.msra.mxu0 0.0
    %5122 = vmatprep.subr.mxu0 0.0
    %5123 = vmatpush1.msra.mxu0 0.0
    %5124 = vmatprep.subr.mxu0 0.0
    %5125 = vmatpush1.msra.mxu0 0.0
    %5126 = vmatprep.subr.mxu0 0.0
    %5127 = vmatpush1.msra.mxu0 0.0
    %5128 = vmatprep.subr.mxu0 0.0
    %5129 = vmatpush1.msra.mxu0 0.0
    %5130 = vmatprep.subr.mxu0 0.0
    %5131 = vmatpush1.msra.mxu0 0.0
    %5132 = vmatprep.subr.mxu0 0.0
    %5133 = vmatpush1.msra.mxu0 0.0
    %5134 = vmatprep.subr.mxu0 0.0
    %5135 = vmatpush1.msra.mxu0 %v5100
    %5136 = vmatprep.subr.mxu0 0.0
    %5137 = vmatpush1.msra.mxu0 %v5098
    %5138 = vmatprep.subr.mxu0 0.0
    %5139 = vmatpush2.msra.mxu0 0.0
    %5140 = vmatprep.subr.mxu0 0.0
    %5141 = vmatpush2.msra.mxu0 0.0
    %5142 = vmatprep.subr.mxu0 0.0
    %5143 = vmatpush2.msra.mxu0 0.0
    %5144 = vmatprep.subr.mxu0 0.0
    %5145 = vmatpush2.msra.mxu0 0.0
    %5146 = vmatprep.subr.mxu0 0.0
    %5147 = vmatpush2.msra.mxu0 0.0
    %5148 = vmatprep.subr.mxu0 0.0
    %5149 = vmatpush2.msra.mxu0 0.0
    %5150 = vmatprep.subr.mxu0 0.0
    %5151 = vmatpush2.msra.mxu0 0.0
    %5152 = vmatprep.subr.mxu0 0.0
    %5153 = vmatpush2.msra.mxu0 0.0
    %5154 = vmatprep.subr.mxu0 0.0
    %5155 = vmatpush2.msra.mxu0 0.0
    %5156 = vmatprep.subr.mxu0 0.0
    %5157 = vmatpush2.msra.mxu0 0.0
    %5158 = vmatprep.subr.mxu0 0.0
    %5159 = vmatpush2.msra.mxu0 0.0
    %5160 = vmatprep.subr.mxu0 0.0
    %5161 = vmatpush2.msra.mxu0 0.0
    %5162 = vmatprep.subr.mxu0 0.0
    %5163 = vmatpush2.msra.mxu0 0.0
    %5164 = vmatprep.subr.mxu0 0.0
    %5165 = vmatpush2.msra.mxu0 0.0
    %5166 = vmatprep.subr.mxu0 0.0
    %5167 = vmatpush2.msra.mxu0 0.0
    %5168 = vmatprep.subr.mxu0 0.0
    %5169 = vmatpush2.msra.mxu0 0.0
    %5170 = vmatprep.mubr.f32.mxu0 0.0
    %5171 = vmatmul.mubr.f32.gmra.mxu0 %v5104
    %v5172 = vpop.f32.mrf.mxu0
    %v5173 = vadd.f32 0.0, %v5172
    %v5174 = vpop.f32.mrf.mxu0
    %5175 = vdwg.mxu0
    %5176 = vrot.lane.b32.xlu0 %v2192, 64
    %v5177 = vpop.permute.xlu0 %5176
    %5178 = vrot.lane.b32.xlu0 %v4271, 64
    %v5179 = vpop.permute.xlu0 %5178
    %v5183 = vsel %vm1741, %v4975, 0
    %5185 = vmatprep.subr.mxu0 0.0
    %5186 = vmatpush1.msra.mxu0 0.0
    %5187 = vmatprep.subr.mxu0 0.0
    %5188 = vmatpush1.msra.mxu0 0.0
    %5189 = vmatprep.subr.mxu0 0.0
    %5190 = vmatpush1.msra.mxu0 0.0
    %5191 = vmatprep.subr.mxu0 0.0
    %5192 = vmatpush1.msra.mxu0 0.0
    %5193 = vmatprep.subr.mxu0 0.0
    %5194 = vmatpush1.msra.mxu0 0.0
    %5195 = vmatprep.subr.mxu0 0.0
    %5196 = vmatpush1.msra.mxu0 0.0
    %5197 = vmatprep.subr.mxu0 0.0
    %5198 = vmatpush1.msra.mxu0 0.0
    %5199 = vmatprep.subr.mxu0 0.0
    %5200 = vmatpush1.msra.mxu0 0.0
    %5201 = vmatprep.subr.mxu0 0.0
    %5202 = vmatpush1.msra.mxu0 0.0
    %5203 = vmatprep.subr.mxu0 0.0
    %5204 = vmatpush1.msra.mxu0 0.0
    %5205 = vmatprep.subr.mxu0 0.0
    %5206 = vmatpush1.msra.mxu0 0.0
    %5207 = vmatprep.subr.mxu0 0.0
    %5208 = vmatpush1.msra.mxu0 0.0
    %5209 = vmatprep.subr.mxu0 0.0
    %5210 = vmatpush1.msra.mxu0 0.0
    %5211 = vmatprep.subr.mxu0 0.0
    %5212 = vmatpush1.msra.mxu0 0.0
    %5213 = vmatprep.subr.mxu0 0.0
    %5214 = vmatpush1.msra.mxu0 %v5179
    %5215 = vmatprep.subr.mxu0 0.0
    %5216 = vmatpush1.msra.mxu0 %v5177
    %5217 = vmatprep.subr.mxu0 0.0
    %5218 = vmatpush2.msra.mxu0 0.0
    %5219 = vmatprep.subr.mxu0 0.0
    %5220 = vmatpush2.msra.mxu0 0.0
    %5221 = vmatprep.subr.mxu0 0.0
    %5222 = vmatpush2.msra.mxu0 0.0
    %5223 = vmatprep.subr.mxu0 0.0
    %5224 = vmatpush2.msra.mxu0 0.0
    %5225 = vmatprep.subr.mxu0 0.0
    %5226 = vmatpush2.msra.mxu0 0.0
    %5227 = vmatprep.subr.mxu0 0.0
    %5228 = vmatpush2.msra.mxu0 0.0
    %5229 = vmatprep.subr.mxu0 0.0
    %5230 = vmatpush2.msra.mxu0 0.0
    %5231 = vmatprep.subr.mxu0 0.0
    %5232 = vmatpush2.msra.mxu0 0.0
    %5233 = vmatprep.subr.mxu0 0.0
    %5234 = vmatpush2.msra.mxu0 0.0
    %5235 = vmatprep.subr.mxu0 0.0
    %5236 = vmatpush2.msra.mxu0 0.0
    %5237 = vmatprep.subr.mxu0 0.0
    %5238 = vmatpush2.msra.mxu0 0.0
    %5239 = vmatprep.subr.mxu0 0.0
    %5240 = vmatpush2.msra.mxu0 0.0
    %5241 = vmatprep.subr.mxu0 0.0
    %5242 = vmatpush2.msra.mxu0 0.0
    %5243 = vmatprep.subr.mxu0 0.0
    %5244 = vmatpush2.msra.mxu0 0.0
    %5245 = vmatprep.subr.mxu0 0.0
    %5246 = vmatpush2.msra.mxu0 0.0
    %5247 = vmatprep.subr.mxu0 0.0
    %5248 = vmatpush2.msra.mxu0 0.0
    %5249 = vmatprep.mubr.f32.mxu0 0.0
    %5250 = vmatmul.mubr.f32.gmra.mxu0 %v5183
    %v5251 = vpop.f32.mrf.mxu0
    %v5252 = vadd.f32 0.0, %v5251
    %v5253 = vpop.f32.mrf.mxu0
    %5254 = vdwg.mxu0
    %5255 = vrot.lane.b32.xlu0 %v2194, 64
    %v5256 = vpop.permute.xlu0 %5255
    %5257 = vrot.lane.b32.xlu0 %v4273, 64
    %v5258 = vpop.permute.xlu0 %5257
    %v5262 = vsel %vm1741, %v4977, 0
    %5264 = vmatprep.subr.mxu0 0.0
    %5265 = vmatpush1.msra.mxu0 0.0
    %5266 = vmatprep.subr.mxu0 0.0
    %5267 = vmatpush1.msra.mxu0 0.0
    %5268 = vmatprep.subr.mxu0 0.0
    %5269 = vmatpush1.msra.mxu0 0.0
    %5270 = vmatprep.subr.mxu0 0.0
    %5271 = vmatpush1.msra.mxu0 0.0
    %5272 = vmatprep.subr.mxu0 0.0
    %5273 = vmatpush1.msra.mxu0 0.0
    %5274 = vmatprep.subr.mxu0 0.0
    %5275 = vmatpush1.msra.mxu0 0.0
    %5276 = vmatprep.subr.mxu0 0.0
    %5277 = vmatpush1.msra.mxu0 0.0
    %5278 = vmatprep.subr.mxu0 0.0
    %5279 = vmatpush1.msra.mxu0 0.0
    %5280 = vmatprep.subr.mxu0 0.0
    %5281 = vmatpush1.msra.mxu0 0.0
    %5282 = vmatprep.subr.mxu0 0.0
    %5283 = vmatpush1.msra.mxu0 0.0
    %5284 = vmatprep.subr.mxu0 0.0
    %5285 = vmatpush1.msra.mxu0 0.0
    %5286 = vmatprep.subr.mxu0 0.0
    %5287 = vmatpush1.msra.mxu0 0.0
    %5288 = vmatprep.subr.mxu0 0.0
    %5289 = vmatpush1.msra.mxu0 0.0
    %5290 = vmatprep.subr.mxu0 0.0
    %5291 = vmatpush1.msra.mxu0 0.0
    %5292 = vmatprep.subr.mxu0 0.0
    %5293 = vmatpush1.msra.mxu0 %v5258
    %5294 = vmatprep.subr.mxu0 0.0
    %5295 = vmatpush1.msra.mxu0 %v5256
    %5296 = vmatprep.subr.mxu0 0.0
    %5297 = vmatpush2.msra.mxu0 0.0
    %5298 = vmatprep.subr.mxu0 0.0
    %5299 = vmatpush2.msra.mxu0 0.0
    %5300 = vmatprep.subr.mxu0 0.0
    %5301 = vmatpush2.msra.mxu0 0.0
    %5302 = vmatprep.subr.mxu0 0.0
    %5303 = vmatpush2.msra.mxu0 0.0
    %5304 = vmatprep.subr.mxu0 0.0
    %5305 = vmatpush2.msra.mxu0 0.0
    %5306 = vmatprep.subr.mxu0 0.0
    %5307 = vmatpush2.msra.mxu0 0.0
    %5308 = vmatprep.subr.mxu0 0.0
    %5309 = vmatpush2.msra.mxu0 0.0
    %5310 = vmatprep.subr.mxu0 0.0
    %5311 = vmatpush2.msra.mxu0 0.0
    %5312 = vmatprep.subr.mxu0 0.0
    %5313 = vmatpush2.msra.mxu0 0.0
    %5314 = vmatprep.subr.mxu0 0.0
    %5315 = vmatpush2.msra.mxu0 0.0
    %5316 = vmatprep.subr.mxu0 0.0
    %5317 = vmatpush2.msra.mxu0 0.0
    %5318 = vmatprep.subr.mxu0 0.0
    %5319 = vmatpush2.msra.mxu0 0.0
    %5320 = vmatprep.subr.mxu0 0.0
    %5321 = vmatpush2.msra.mxu0 0.0
    %5322 = vmatprep.subr.mxu0 0.0
    %5323 = vmatpush2.msra.mxu0 0.0
    %5324 = vmatprep.subr.mxu0 0.0
    %5325 = vmatpush2.msra.mxu0 0.0
    %5326 = vmatprep.subr.mxu0 0.0
    %5327 = vmatpush2.msra.mxu0 0.0
    %5328 = vmatprep.mubr.f32.mxu0 0.0
    %5329 = vmatmul.mubr.f32.gmra.mxu0 %v5262
    %v5330 = vpop.f32.mrf.mxu0
    %v5331 = vadd.f32 0.0, %v5330
    %v5332 = vpop.f32.mrf.mxu0
    %5333 = vdwg.mxu0
    %5334 = vrot.lane.b32.xlu0 %v2196, 64
    %v5335 = vpop.permute.xlu0 %5334
    %5336 = vrot.lane.b32.xlu0 %v4275, 64
    %v5337 = vpop.permute.xlu0 %5336
    %v5341 = vsel %vm1741, %v4979, 0
    %5343 = vmatprep.subr.mxu0 0.0
    %5344 = vmatpush1.msra.mxu0 0.0
    %5345 = vmatprep.subr.mxu0 0.0
    %5346 = vmatpush1.msra.mxu0 0.0
    %5347 = vmatprep.subr.mxu0 0.0
    %5348 = vmatpush1.msra.mxu0 0.0
    %5349 = vmatprep.subr.mxu0 0.0
    %5350 = vmatpush1.msra.mxu0 0.0
    %5351 = vmatprep.subr.mxu0 0.0
    %5352 = vmatpush1.msra.mxu0 0.0
    %5353 = vmatprep.subr.mxu0 0.0
    %5354 = vmatpush1.msra.mxu0 0.0
    %5355 = vmatprep.subr.mxu0 0.0
    %5356 = vmatpush1.msra.mxu0 0.0
    %5357 = vmatprep.subr.mxu0 0.0
    %5358 = vmatpush1.msra.mxu0 0.0
    %5359 = vmatprep.subr.mxu0 0.0
    %5360 = vmatpush1.msra.mxu0 0.0
    %5361 = vmatprep.subr.mxu0 0.0
    %5362 = vmatpush1.msra.mxu0 0.0
    %5363 = vmatprep.subr.mxu0 0.0
    %5364 = vmatpush1.msra.mxu0 0.0
    %5365 = vmatprep.subr.mxu0 0.0
    %5366 = vmatpush1.msra.mxu0 0.0
    %5367 = vmatprep.subr.mxu0 0.0
    %5368 = vmatpush1.msra.mxu0 0.0
    %5369 = vmatprep.subr.mxu0 0.0
    %5370 = vmatpush1.msra.mxu0 0.0
    %5371 = vmatprep.subr.mxu0 0.0
    %5372 = vmatpush1.msra.mxu0 %v5337
    %5373 = vmatprep.subr.mxu0 0.0
    %5374 = vmatpush1.msra.mxu0 %v5335
    %5375 = vmatprep.subr.mxu0 0.0
    %5376 = vmatpush2.msra.mxu0 0.0
    %5377 = vmatprep.subr.mxu0 0.0
    %5378 = vmatpush2.msra.mxu0 0.0
    %5379 = vmatprep.subr.mxu0 0.0
    %5380 = vmatpush2.msra.mxu0 0.0
    %5381 = vmatprep.subr.mxu0 0.0
    %5382 = vmatpush2.msra.mxu0 0.0
    %5383 = vmatprep.subr.mxu0 0.0
    %5384 = vmatpush2.msra.mxu0 0.0
    %5385 = vmatprep.subr.mxu0 0.0
    %5386 = vmatpush2.msra.mxu0 0.0
    %5387 = vmatprep.subr.mxu0 0.0
    %5388 = vmatpush2.msra.mxu0 0.0
    %5389 = vmatprep.subr.mxu0 0.0
    %5390 = vmatpush2.msra.mxu0 0.0
    %5391 = vmatprep.subr.mxu0 0.0
    %5392 = vmatpush2.msra.mxu0 0.0
    %5393 = vmatprep.subr.mxu0 0.0
    %5394 = vmatpush2.msra.mxu0 0.0
    %5395 = vmatprep.subr.mxu0 0.0
    %5396 = vmatpush2.msra.mxu0 0.0
    %5397 = vmatprep.subr.mxu0 0.0
    %5398 = vmatpush2.msra.mxu0 0.0
    %5399 = vmatprep.subr.mxu0 0.0
    %5400 = vmatpush2.msra.mxu0 0.0
    %5401 = vmatprep.subr.mxu0 0.0
    %5402 = vmatpush2.msra.mxu0 0.0
    %5403 = vmatprep.subr.mxu0 0.0
    %5404 = vmatpush2.msra.mxu0 0.0
    %5405 = vmatprep.subr.mxu0 0.0
    %5406 = vmatpush2.msra.mxu0 0.0
    %5407 = vmatprep.mubr.f32.mxu0 0.0
    %5408 = vmatmul.mubr.f32.gmra.mxu0 %v5341
    %v5409 = vpop.f32.mrf.mxu0
    %v5410 = vadd.f32 0.0, %v5409
    %v5411 = vpop.f32.mrf.mxu0
    %5412 = vdwg.mxu0
    %5413 = vrot.lane.b32.xlu0 %v2198, 64
    %v5414 = vpop.permute.xlu0 %5413
    %5415 = vrot.lane.b32.xlu0 %v4277, 64
    %v5416 = vpop.permute.xlu0 %5415
    %v5420 = vsel %vm1741, %v4981, 0
    %5422 = vmatprep.subr.mxu0 0.0
    %5423 = vmatpush1.msra.mxu0 0.0
    %5424 = vmatprep.subr.mxu0 0.0
    %5425 = vmatpush1.msra.mxu0 0.0
    %5426 = vmatprep.subr.mxu0 0.0
    %5427 = vmatpush1.msra.mxu0 0.0
    %5428 = vmatprep.subr.mxu0 0.0
    %5429 = vmatpush1.msra.mxu0 0.0
    %5430 = vmatprep.subr.mxu0 0.0
    %5431 = vmatpush1.msra.mxu0 0.0
    %5432 = vmatprep.subr.mxu0 0.0
    %5433 = vmatpush1.msra.mxu0 0.0
    %5434 = vmatprep.subr.mxu0 0.0
    %5435 = vmatpush1.msra.mxu0 0.0
    %5436 = vmatprep.subr.mxu0 0.0
    %5437 = vmatpush1.msra.mxu0 0.0
    %5438 = vmatprep.subr.mxu0 0.0
    %5439 = vmatpush1.msra.mxu0 0.0
    %5440 = vmatprep.subr.mxu0 0.0
    %5441 = vmatpush1.msra.mxu0 0.0
    %5442 = vmatprep.subr.mxu0 0.0
    %5443 = vmatpush1.msra.mxu0 0.0
    %5444 = vmatprep.subr.mxu0 0.0
    %5445 = vmatpush1.msra.mxu0 0.0
    %5446 = vmatprep.subr.mxu0 0.0
    %5447 = vmatpush1.msra.mxu0 0.0
    %5448 = vmatprep.subr.mxu0 0.0
    %5449 = vmatpush1.msra.mxu0 0.0
    %5450 = vmatprep.subr.mxu0 0.0
    %5451 = vmatpush1.msra.mxu0 %v5416
    %5452 = vmatprep.subr.mxu0 0.0
    %5453 = vmatpush1.msra.mxu0 %v5414
    %5454 = vmatprep.subr.mxu0 0.0
    %5455 = vmatpush2.msra.mxu0 0.0
    %5456 = vmatprep.subr.mxu0 0.0
    %5457 = vmatpush2.msra.mxu0 0.0
    %5458 = vmatprep.subr.mxu0 0.0
    %5459 = vmatpush2.msra.mxu0 0.0
    %5460 = vmatprep.subr.mxu0 0.0
    %5461 = vmatpush2.msra.mxu0 0.0
    %5462 = vmatprep.subr.mxu0 0.0
    %5463 = vmatpush2.msra.mxu0 0.0
    %5464 = vmatprep.subr.mxu0 0.0
    %5465 = vmatpush2.msra.mxu0 0.0
    %5466 = vmatprep.subr.mxu0 0.0
    %5467 = vmatpush2.msra.mxu0 0.0
    %5468 = vmatprep.subr.mxu0 0.0
    %5469 = vmatpush2.msra.mxu0 0.0
    %5470 = vmatprep.subr.mxu0 0.0
    %5471 = vmatpush2.msra.mxu0 0.0
    %5472 = vmatprep.subr.mxu0 0.0
    %5473 = vmatpush2.msra.mxu0 0.0
    %5474 = vmatprep.subr.mxu0 0.0
    %5475 = vmatpush2.msra.mxu0 0.0
    %5476 = vmatprep.subr.mxu0 0.0
    %5477 = vmatpush2.msra.mxu0 0.0
    %5478 = vmatprep.subr.mxu0 0.0
    %5479 = vmatpush2.msra.mxu0 0.0
    %5480 = vmatprep.subr.mxu0 0.0
    %5481 = vmatpush2.msra.mxu0 0.0
    %5482 = vmatprep.subr.mxu0 0.0
    %5483 = vmatpush2.msra.mxu0 0.0
    %5484 = vmatprep.subr.mxu0 0.0
    %5485 = vmatpush2.msra.mxu0 0.0
    %5486 = vmatprep.mubr.f32.mxu0 0.0
    %5487 = vmatmul.mubr.f32.gmra.mxu0 %v5420
    %v5488 = vpop.f32.mrf.mxu0
    %v5489 = vadd.f32 0.0, %v5488
    %v5490 = vpop.f32.mrf.mxu0
    %5491 = vdwg.mxu0
    %5492 = vrot.lane.b32.xlu0 %v2200, 64
    %v5493 = vpop.permute.xlu0 %5492
    %5494 = vrot.lane.b32.xlu0 %v4279, 64
    %v5495 = vpop.permute.xlu0 %5494
    %v5499 = vsel %vm1741, %v4983, 0
    %5501 = vmatprep.subr.mxu0 0.0
    %5502 = vmatpush1.msra.mxu0 0.0
    %5503 = vmatprep.subr.mxu0 0.0
    %5504 = vmatpush1.msra.mxu0 0.0
    %5505 = vmatprep.subr.mxu0 0.0
    %5506 = vmatpush1.msra.mxu0 0.0
    %5507 = vmatprep.subr.mxu0 0.0
    %5508 = vmatpush1.msra.mxu0 0.0
    %5509 = vmatprep.subr.mxu0 0.0
    %5510 = vmatpush1.msra.mxu0 0.0
    %5511 = vmatprep.subr.mxu0 0.0
    %5512 = vmatpush1.msra.mxu0 0.0
    %5513 = vmatprep.subr.mxu0 0.0
    %5514 = vmatpush1.msra.mxu0 0.0
    %5515 = vmatprep.subr.mxu0 0.0
    %5516 = vmatpush1.msra.mxu0 0.0
    %5517 = vmatprep.subr.mxu0 0.0
    %5518 = vmatpush1.msra.mxu0 0.0
    %5519 = vmatprep.subr.mxu0 0.0
    %5520 = vmatpush1.msra.mxu0 0.0
    %5521 = vmatprep.subr.mxu0 0.0
    %5522 = vmatpush1.msra.mxu0 0.0
    %5523 = vmatprep.subr.mxu0 0.0
    %5524 = vmatpush1.msra.mxu0 0.0
    %5525 = vmatprep.subr.mxu0 0.0
    %5526 = vmatpush1.msra.mxu0 0.0
    %5527 = vmatprep.subr.mxu0 0.0
    %5528 = vmatpush1.msra.mxu0 0.0
    %5529 = vmatprep.subr.mxu0 0.0
    %5530 = vmatpush1.msra.mxu0 %v5495
    %5531 = vmatprep.subr.mxu0 0.0
    %5532 = vmatpush1.msra.mxu0 %v5493
    %5533 = vmatprep.subr.mxu0 0.0
    %5534 = vmatpush2.msra.mxu0 0.0
    %5535 = vmatprep.subr.mxu0 0.0
    %5536 = vmatpush2.msra.mxu0 0.0
    %5537 = vmatprep.subr.mxu0 0.0
    %5538 = vmatpush2.msra.mxu0 0.0
    %5539 = vmatprep.subr.mxu0 0.0
    %5540 = vmatpush2.msra.mxu0 0.0
    %5541 = vmatprep.subr.mxu0 0.0
    %5542 = vmatpush2.msra.mxu0 0.0
    %5543 = vmatprep.subr.mxu0 0.0
    %5544 = vmatpush2.msra.mxu0 0.0
    %5545 = vmatprep.subr.mxu0 0.0
    %5546 = vmatpush2.msra.mxu0 0.0
    %5547 = vmatprep.subr.mxu0 0.0
    %5548 = vmatpush2.msra.mxu0 0.0
    %5549 = vmatprep.subr.mxu0 0.0
    %5550 = vmatpush2.msra.mxu0 0.0
    %5551 = vmatprep.subr.mxu0 0.0
    %5552 = vmatpush2.msra.mxu0 0.0
    %5553 = vmatprep.subr.mxu0 0.0
    %5554 = vmatpush2.msra.mxu0 0.0
    %5555 = vmatprep.subr.mxu0 0.0
    %5556 = vmatpush2.msra.mxu0 0.0
    %5557 = vmatprep.subr.mxu0 0.0
    %5558 = vmatpush2.msra.mxu0 0.0
    %5559 = vmatprep.subr.mxu0 0.0
    %5560 = vmatpush2.msra.mxu0 0.0
    %5561 = vmatprep.subr.mxu0 0.0
    %5562 = vmatpush2.msra.mxu0 0.0
    %5563 = vmatprep.subr.mxu0 0.0
    %5564 = vmatpush2.msra.mxu0 0.0
    %5565 = vmatprep.mubr.f32.mxu0 0.0
    %5566 = vmatmul.mubr.f32.gmra.mxu0 %v5499
    %v5567 = vpop.f32.mrf.mxu0
    %v5568 = vadd.f32 0.0, %v5567
    %v5569 = vpop.f32.mrf.mxu0
    %5570 = vdwg.mxu0
    %5571 = vrot.lane.b32.xlu0 %v2202, 64
    %v5572 = vpop.permute.xlu0 %5571
    %5573 = vrot.lane.b32.xlu0 %v4281, 64
    %v5574 = vpop.permute.xlu0 %5573
    %v5578 = vsel %vm1741, %v4985, 0
    %5580 = vmatprep.subr.mxu0 0.0
    %5581 = vmatpush1.msra.mxu0 0.0
    %5582 = vmatprep.subr.mxu0 0.0
    %5583 = vmatpush1.msra.mxu0 0.0
    %5584 = vmatprep.subr.mxu0 0.0
    %5585 = vmatpush1.msra.mxu0 0.0
    %5586 = vmatprep.subr.mxu0 0.0
    %5587 = vmatpush1.msra.mxu0 0.0
    %5588 = vmatprep.subr.mxu0 0.0
    %5589 = vmatpush1.msra.mxu0 0.0
    %5590 = vmatprep.subr.mxu0 0.0
    %5591 = vmatpush1.msra.mxu0 0.0
    %5592 = vmatprep.subr.mxu0 0.0
    %5593 = vmatpush1.msra.mxu0 0.0
    %5594 = vmatprep.subr.mxu0 0.0
    %5595 = vmatpush1.msra.mxu0 0.0
    %5596 = vmatprep.subr.mxu0 0.0
    %5597 = vmatpush1.msra.mxu0 0.0
    %5598 = vmatprep.subr.mxu0 0.0
    %5599 = vmatpush1.msra.mxu0 0.0
    %5600 = vmatprep.subr.mxu0 0.0
    %5601 = vmatpush1.msra.mxu0 0.0
    %5602 = vmatprep.subr.mxu0 0.0
    %5603 = vmatpush1.msra.mxu0 0.0
    %5604 = vmatprep.subr.mxu0 0.0
    %5605 = vmatpush1.msra.mxu0 0.0
    %5606 = vmatprep.subr.mxu0 0.0
    %5607 = vmatpush1.msra.mxu0 0.0
    %5608 = vmatprep.subr.mxu0 0.0
    %5609 = vmatpush1.msra.mxu0 %v5574
    %5610 = vmatprep.subr.mxu0 0.0
    %5611 = vmatpush1.msra.mxu0 %v5572
    %5612 = vmatprep.subr.mxu0 0.0
    %5613 = vmatpush2.msra.mxu0 0.0
    %5614 = vmatprep.subr.mxu0 0.0
    %5615 = vmatpush2.msra.mxu0 0.0
    %5616 = vmatprep.subr.mxu0 0.0
    %5617 = vmatpush2.msra.mxu0 0.0
    %5618 = vmatprep.subr.mxu0 0.0
    %5619 = vmatpush2.msra.mxu0 0.0
    %5620 = vmatprep.subr.mxu0 0.0
    %5621 = vmatpush2.msra.mxu0 0.0
    %5622 = vmatprep.subr.mxu0 0.0
    %5623 = vmatpush2.msra.mxu0 0.0
    %5624 = vmatprep.subr.mxu0 0.0
    %5625 = vmatpush2.msra.mxu0 0.0
    %5626 = vmatprep.subr.mxu0 0.0
    %5627 = vmatpush2.msra.mxu0 0.0
    %5628 = vmatprep.subr.mxu0 0.0
    %5629 = vmatpush2.msra.mxu0 0.0
    %5630 = vmatprep.subr.mxu0 0.0
    %5631 = vmatpush2.msra.mxu0 0.0
    %5632 = vmatprep.subr.mxu0 0.0
    %5633 = vmatpush2.msra.mxu0 0.0
    %5634 = vmatprep.subr.mxu0 0.0
    %5635 = vmatpush2.msra.mxu0 0.0
    %5636 = vmatprep.subr.mxu0 0.0
    %5637 = vmatpush2.msra.mxu0 0.0
    %5638 = vmatprep.subr.mxu0 0.0
    %5639 = vmatpush2.msra.mxu0 0.0
    %5640 = vmatprep.subr.mxu0 0.0
    %5641 = vmatpush2.msra.mxu0 0.0
    %5642 = vmatprep.subr.mxu0 0.0
    %5643 = vmatpush2.msra.mxu0 0.0
    %5644 = vmatprep.mubr.f32.mxu0 0.0
    %5645 = vmatmul.mubr.f32.gmra.mxu0 %v5578
    %v5646 = vpop.f32.mrf.mxu0
    %v5647 = vadd.f32 0.0, %v5646
    %v5648 = vpop.f32.mrf.mxu0
    %5649 = vdwg.mxu0
    %v5650 = vmul.f32 %v5094, %v5010
    %v5651 = vmul.f32 %v5173, %v5011
    %v5652 = vmul.f32 %v5252, %v5012
    %v5653 = vmul.f32 %v5331, %v5013
    %v5654 = vmul.f32 %v5410, %v5014
    %v5655 = vmul.f32 %v5489, %v5015
    %v5656 = vmul.f32 %v5568, %v5016
    %v5657 = vmul.f32 %v5647, %v5017
    %5660 = vrot.lane.b32.xlu0 %v5652, 8
    %v5661 = vpop.permute.xlu0 %5660
    %5662 = vrot.lane.b32.xlu0 %v5653, 8
    %v5663 = vpop.permute.xlu0 %5662
    %5668 = vrot.lane.b32.xlu0 %v5654, 16
    %v5669 = vpop.permute.xlu0 %5668
    %5670 = vrot.lane.b32.xlu0 %v5655, 16
    %v5671 = vpop.permute.xlu0 %5670
    %5676 = vrot.lane.b32.xlu0 %v5656, 24
    %v5677 = vpop.permute.xlu0 %5676
    %5678 = vrot.lane.b32.xlu0 %v5657, 24
    %v5679 = vpop.permute.xlu0 %5678
    %v5682 = vsel %vm404, %v5650, %v5661
    %v5683 = vsel %vm404, %v5651, %v5663
    %v5684 = vsel %vm1741, %v5682, %v5669
    %v5685 = vsel %vm1741, %v5683, %v5671
    %v5686 = vsel %vm1744, %v5684, %v5677
    %v5687 = vsel %vm1744, %v5685, %v5679
    %v5689 = vsel %vm209, %v5686, 0
    %v5692 = vsel %vm209, %v5687, 0
    %5694 = vmatprep.subr.mxu0 0.0
    %5695 = vmatpush1.msra.mxu0 0.0
    %5696 = vmatprep.subr.mxu0 0.0
    %5697 = vmatpush1.msra.mxu0 0.0
    %5698 = vmatprep.subr.mxu0 0.0
    %5699 = vmatpush1.msra.mxu0 0.0
    %5700 = vmatprep.subr.mxu0 0.0
    %5701 = vmatpush1.msra.mxu0 0.0
    %5702 = vmatprep.subr.mxu0 0.0
    %5703 = vmatpush1.msra.mxu0 0.0
    %5704 = vmatprep.subr.mxu0 0.0
    %5705 = vmatpush1.msra.mxu0 0.0
    %5706 = vmatprep.subr.mxu0 0.0
    %5707 = vmatpush1.msra.mxu0 0.0
    %5708 = vmatprep.subr.mxu0 0.0
    %5709 = vmatpush1.msra.mxu0 0.0
    %5710 = vmatprep.subr.mxu0 0.0
    %5711 = vmatpush1.msra.mxu0 0.0
    %5712 = vmatprep.subr.mxu0 0.0
    %5713 = vmatpush1.msra.mxu0 0.0
    %5714 = vmatprep.subr.mxu0 0.0
    %5715 = vmatpush1.msra.mxu0 0.0
    %5716 = vmatprep.subr.mxu0 0.0
    %5717 = vmatpush1.msra.mxu0 0.0
    %5718 = vmatprep.subr.mxu0 0.0
    %5719 = vmatpush1.msra.mxu0 %v4090
    %5720 = vmatprep.subr.mxu0 0.0
    %5721 = vmatpush1.msra.mxu0 %v4089
    %5722 = vmatprep.subr.mxu0 0.0
    %5723 = vmatpush1.msra.mxu0 %v4088
    %5724 = vmatprep.subr.mxu0 0.0
    %5725 = vmatpush1.msra.mxu0 %v4087
    %5726 = vmatprep.subr.mxu0 0.0
    %5727 = vmatpush2.msra.mxu0 0.0
    %5728 = vmatprep.subr.mxu0 0.0
    %5729 = vmatpush2.msra.mxu0 0.0
    %5730 = vmatprep.subr.mxu0 0.0
    %5731 = vmatpush2.msra.mxu0 0.0
    %5732 = vmatprep.subr.mxu0 0.0
    %5733 = vmatpush2.msra.mxu0 0.0
    %5734 = vmatprep.subr.mxu0 0.0
    %5735 = vmatpush2.msra.mxu0 0.0
    %5736 = vmatprep.subr.mxu0 0.0
    %5737 = vmatpush2.msra.mxu0 0.0
    %5738 = vmatprep.subr.mxu0 0.0
    %5739 = vmatpush2.msra.mxu0 0.0
    %5740 = vmatprep.subr.mxu0 0.0
    %5741 = vmatpush2.msra.mxu0 0.0
    %5742 = vmatprep.subr.mxu0 0.0
    %5743 = vmatpush2.msra.mxu0 0.0
    %5744 = vmatprep.subr.mxu0 0.0
    %5745 = vmatpush2.msra.mxu0 0.0
    %5746 = vmatprep.subr.mxu0 0.0
    %5747 = vmatpush2.msra.mxu0 0.0
    %5748 = vmatprep.subr.mxu0 0.0
    %5749 = vmatpush2.msra.mxu0 0.0
    %5750 = vmatprep.subr.mxu0 0.0
    %5751 = vmatpush2.msra.mxu0 0.0
    %5752 = vmatprep.subr.mxu0 0.0
    %5753 = vmatpush2.msra.mxu0 0.0
    %5754 = vmatprep.subr.mxu0 0.0
    %5755 = vmatpush2.msra.mxu0 0.0
    %5756 = vmatprep.subr.mxu0 0.0
    %5757 = vmatpush2.msra.mxu0 0.0
    %5758 = vmatprep.mubr.f32.mxu0 0.0
    %5759 = vmatmul.mubr.f32.gmra.mxu0 %v5689
    %v5760 = vpop.f32.mrf.mxu0
    %v5761 = vadd.f32 0.0, %v5760
    %v5762 = vpop.f32.mrf.mxu0
    %5763 = vmatprep.mubr.f32.mxu0 0.0
    %5764 = vmatmul.mubr.f32.gmra.mxu0 %v5692
    %v5765 = vpop.f32.mrf.mxu0
    %v5766 = vadd.f32 0.0, %v5765
    %v5767 = vpop.f32.mrf.mxu0
    %5768 = vdwg.mxu0
    %v5769 = vadd.f32 %v4071, %v5761
    %v5770 = vadd.f32 %v4072, %v5766
    %v5771 = vmul.f32 %v5769, %v5769
    %v5772 = vmul.f32 %v5770, %v5770
    %v5773 = vsel %vm209, %v5771, 0.0
    %5774 = vadd.xlane.f32.xlu0 %v5773
    %v5775 = vpop.xlane.xlu0 %5774
    %v5776 = vsel %vm209, %v5772, 0.0
    %5777 = vadd.xlane.f32.xlu0 %v5776
    %v5778 = vpop.xlane.xlu0 %5777
    %v5779 = vmul.f32 %v5775, %v216
    %v5780 = vmul.f32 %v5778, %v216
    %v5781 = vadd.f32 %v5779, 1e-05
    %v5782 = vadd.f32 %v5780, 1e-05
    %v5783 = vrsqrt.pop %v5781
    %v5784 = vrsqrt.pop %v5782
    %v5785 = vmul.f32 %v5769, %v5783
    %v5786 = vmul.f32 %v5770, %v5784
    %v5788 = vlaneseq
    %v5789 = vshrl.u32 %v5788, 7
    %v5790 = vsub.s32 0, %v5789
    %v5791 = vrot.slane %v4076, %v5790
    %v5793 = vmul.f32 %v5785, %v5791
    %v5794 = vmul.f32 %v5786, %v5791
    %v5796 = vsel %vm209, %v5793, 0
    %v5799 = vsel %vm209, %v5794, 0
    %5801 = vmatprep.subr.mxu0 0.0
    %5802 = vmatpush1.msra.mxu0 0.0
    %5803 = vmatprep.subr.mxu0 0.0
    %5804 = vmatpush1.msra.mxu0 0.0
    %5805 = vmatprep.subr.mxu0 0.0
    %5806 = vmatpush1.msra.mxu0 0.0
    %5807 = vmatprep.subr.mxu0 0.0
    %5808 = vmatpush1.msra.mxu0 0.0
    %5809 = vmatprep.subr.mxu0 0.0
    %5810 = vmatpush1.msra.mxu0 0.0
    %5811 = vmatprep.subr.mxu0 0.0
    %5812 = vmatpush1.msra.mxu0 0.0
    %5813 = vmatprep.subr.mxu0 0.0
    %5814 = vmatpush1.msra.mxu0 0.0
    %5815 = vmatprep.subr.mxu0 0.0
    %5816 = vmatpush1.msra.mxu0 0.0
    %5817 = vmatprep.subr.mxu0 0.0
    %5818 = vmatpush1.msra.mxu0 0.0
    %5819 = vmatprep.subr.mxu0 0.0
    %5820 = vmatpush1.msra.mxu0 0.0
    %5821 = vmatprep.subr.mxu0 0.0
    %5822 = vmatpush1.msra.mxu0 0.0
    %5823 = vmatprep.subr.mxu0 0.0
    %5824 = vmatpush1.msra.mxu0 0.0
    %5825 = vmatprep.subr.mxu0 0.0
    %5826 = vmatpush1.msra.mxu0 %v4095
    %5827 = vmatprep.subr.mxu0 0.0
    %5828 = vmatpush1.msra.mxu0 %v4094
    %5829 = vmatprep.subr.mxu0 0.0
    %5830 = vmatpush1.msra.mxu0 %v4093
    %5831 = vmatprep.subr.mxu0 0.0
    %5832 = vmatpush1.msra.mxu0 %v4092
    %5833 = vmatprep.subr.mxu0 0.0
    %5834 = vmatpush2.msra.mxu0 0.0
    %5835 = vmatprep.subr.mxu0 0.0
    %5836 = vmatpush2.msra.mxu0 0.0
    %5837 = vmatprep.subr.mxu0 0.0
    %5838 = vmatpush2.msra.mxu0 0.0
    %5839 = vmatprep.subr.mxu0 0.0
    %5840 = vmatpush2.msra.mxu0 0.0
    %5841 = vmatprep.subr.mxu0 0.0
    %5842 = vmatpush2.msra.mxu0 0.0
    %5843 = vmatprep.subr.mxu0 0.0
    %5844 = vmatpush2.msra.mxu0 0.0
    %5845 = vmatprep.subr.mxu0 0.0
    %5846 = vmatpush2.msra.mxu0 0.0
    %5847 = vmatprep.subr.mxu0 0.0
    %5848 = vmatpush2.msra.mxu0 0.0
    %5849 = vmatprep.subr.mxu0 0.0
    %5850 = vmatpush2.msra.mxu0 0.0
    %5851 = vmatprep.subr.mxu0 0.0
    %5852 = vmatpush2.msra.mxu0 0.0
    %5853 = vmatprep.subr.mxu0 0.0
    %5854 = vmatpush2.msra.mxu0 0.0
    %5855 = vmatprep.subr.mxu0 0.0
    %5856 = vmatpush2.msra.mxu0 0.0
    %5857 = vmatprep.subr.mxu0 0.0
    %5858 = vmatpush2.msra.mxu0 0.0
    %5859 = vmatprep.subr.mxu0 0.0
    %5860 = vmatpush2.msra.mxu0 0.0
    %5861 = vmatprep.subr.mxu0 0.0
    %5862 = vmatpush2.msra.mxu0 0.0
    %5863 = vmatprep.subr.mxu0 0.0
    %5864 = vmatpush2.msra.mxu0 0.0
    %5865 = vmatprep.mubr.f32.mxu0 0.0
    %5866 = vmatmul.mubr.f32.gmra.mxu0 %v5796
    %v5867 = vpop.f32.mrf.mxu0
    %v5868 = vadd.f32 0.0, %v5867
    %v5869 = vpop.f32.mrf.mxu0
    %5870 = vmatprep.mubr.f32.mxu0 0.0
    %5871 = vmatmul.mubr.f32.gmra.mxu0 %v5799
    %v5872 = vpop.f32.mrf.mxu0
    %v5873 = vadd.f32 0.0, %v5872
    %v5874 = vpop.f32.mrf.mxu0
    %5875 = vdwg.mxu0
    %v5876 = vxor.u32 %v5868, 2147483648
    %v5877 = vxor.u32 %v5873, 2147483648
    %v5878 = vmul.f32 %v5876, 1.442695
    %v5879 = vpow.pop %v5878
    %v5880 = vmul.f32 %v5877, 1.442695
    %v5881 = vpow.pop %v5880
    %v5882 = vadd.f32 %v5879, 1.0
    %v5883 = vadd.f32 %v5881, 1.0
    %v5884 = vrcp.pop %v5882
    %v5885 = vmul.f32 1.0, %v5884
    %v5886 = vrcp.pop %v5883
    %v5887 = vmul.f32 1.0, %v5886
    %v5888 = vmul.f32 %v5868, %v5885
    %v5889 = vmul.f32 %v5873, %v5887
    %5892 = vrot.lane.b32.xlu0 %v5868, 64
    %v5893 = vpop.permute.xlu0 %5892
    %5894 = vrot.lane.b32.xlu0 %v5873, 64
    %v5895 = vpop.permute.xlu0 %5894
    %v5898 = vmul.f32 %v5888, %v5893
    %v5899 = vmul.f32 %v5889, %v5895
    %v5901 = vsel %vm1959, %v5898, 0
    %v5904 = vsel %vm1959, %v5899, 0
    %5906 = vmatprep.subr.mxu0 0.0
    %5907 = vmatpush1.msra.mxu0 0.0
    %5908 = vmatprep.subr.mxu0 0.0
    %5909 = vmatpush1.msra.mxu0 0.0
    %5910 = vmatprep.subr.mxu0 0.0
    %5911 = vmatpush1.msra.mxu0 0.0
    %5912 = vmatprep.subr.mxu0 0.0
    %5913 = vmatpush1.msra.mxu0 0.0
    %5914 = vmatprep.subr.mxu0 0.0
    %5915 = vmatpush1.msra.mxu0 0.0
    %5916 = vmatprep.subr.mxu0 0.0
    %5917 = vmatpush1.msra.mxu0 0.0
    %5918 = vmatprep.subr.mxu0 0.0
    %5919 = vmatpush1.msra.mxu0 0.0
    %5920 = vmatprep.subr.mxu0 0.0
    %5921 = vmatpush1.msra.mxu0 0.0
    %5922 = vmatprep.subr.mxu0 0.0
    %5923 = vmatpush1.msra.mxu0 %v4104
    %5924 = vmatprep.subr.mxu0 0.0
    %5925 = vmatpush1.msra.mxu0 %v4103
    %5926 = vmatprep.subr.mxu0 0.0
    %5927 = vmatpush1.msra.mxu0 %v4102
    %5928 = vmatprep.subr.mxu0 0.0
    %5929 = vmatpush1.msra.mxu0 %v4101
    %5930 = vmatprep.subr.mxu0 0.0
    %5931 = vmatpush1.msra.mxu0 %v4100
    %5932 = vmatprep.subr.mxu0 0.0
    %5933 = vmatpush1.msra.mxu0 %v4099
    %5934 = vmatprep.subr.mxu0 0.0
    %5935 = vmatpush1.msra.mxu0 %v4098
    %5936 = vmatprep.subr.mxu0 0.0
    %5937 = vmatpush1.msra.mxu0 %v4097
    %5938 = vmatprep.subr.mxu0 0.0
    %5939 = vmatpush2.msra.mxu0 0.0
    %5940 = vmatprep.subr.mxu0 0.0
    %5941 = vmatpush2.msra.mxu0 0.0
    %5942 = vmatprep.subr.mxu0 0.0
    %5943 = vmatpush2.msra.mxu0 0.0
    %5944 = vmatprep.subr.mxu0 0.0
    %5945 = vmatpush2.msra.mxu0 0.0
    %5946 = vmatprep.subr.mxu0 0.0
    %5947 = vmatpush2.msra.mxu0 0.0
    %5948 = vmatprep.subr.mxu0 0.0
    %5949 = vmatpush2.msra.mxu0 0.0
    %5950 = vmatprep.subr.mxu0 0.0
    %5951 = vmatpush2.msra.mxu0 0.0
    %5952 = vmatprep.subr.mxu0 0.0
    %5953 = vmatpush2.msra.mxu0 0.0
    %5954 = vmatprep.subr.mxu0 0.0
    %5955 = vmatpush2.msra.mxu0 0.0
    %5956 = vmatprep.subr.mxu0 0.0
    %5957 = vmatpush2.msra.mxu0 0.0
    %5958 = vmatprep.subr.mxu0 0.0
    %5959 = vmatpush2.msra.mxu0 0.0
    %5960 = vmatprep.subr.mxu0 0.0
    %5961 = vmatpush2.msra.mxu0 0.0
    %5962 = vmatprep.subr.mxu0 0.0
    %5963 = vmatpush2.msra.mxu0 0.0
    %5964 = vmatprep.subr.mxu0 0.0
    %5965 = vmatpush2.msra.mxu0 0.0
    %5966 = vmatprep.subr.mxu0 0.0
    %5967 = vmatpush2.msra.mxu0 0.0
    %5968 = vmatprep.subr.mxu0 0.0
    %5969 = vmatpush2.msra.mxu0 0.0
    %5970 = vmatprep.mubr.f32.mxu0 0.0
    %5971 = vmatmul.mubr.f32.gmra.mxu0 %v5901
    %v5972 = vpop.f32.mrf.mxu0
    %v5973 = vadd.f32 0.0, %v5972
    %v5974 = vpop.f32.mrf.mxu0
    %5975 = vmatprep.mubr.f32.mxu0 0.0
    %5976 = vmatmul.mubr.f32.gmra.mxu0 %v5904
    %v5977 = vpop.f32.mrf.mxu0
    %v5978 = vadd.f32 0.0, %v5977
    %v5979 = vpop.f32.mrf.mxu0
    %5980 = vdwg.mxu0
    %v5981 = vadd.f32 %v5769, %v5973
    %v5982 = vadd.f32 %v5770, %v5978
    %5983 = vst.msk [vmem:[#allocation16] sm:$0xff] %vm209, %v5981
    %5984 = vst.msk [vmem:[#allocation16 + $0x8] sm:$0xff] %vm209, %v5982
    // Predicated region
    $region106: #{tpu_custom_call.1} parent=1 // pred_check
      _
    $region107: #{tpu_custom_call.1} parent=1 // pred_check_branch
      %5986 = sbr.rel (0) target = $region109
    $region108: #{tpu_custom_call.1} parent=1 // pred_region
      %s5988 = ssub.s32 256, 256
      %5989 = vsyncadd [#allocation4], %s5988
      %s5990 = sshll.u32 [#allocation16], 4
      %s5991 = int_to_ptr.vmem [resolvable:$true] %s5990
      %5996 = dma.vmem_to_hbm [thread:$0]  %s5991, 256, %s18, [#allocation4], 128, 128, 8
    $region109: #{tpu_custom_call.1} parent=1 // pred_fallthru
      _
    // Predicated region
    $region110: #{tpu_custom_call.1} parent=1 // pred_check
      _
    $region111: #{tpu_custom_call.1} parent=1 // pred_check_branch
      %5998 = sbr.rel (0) target = $region113
    $region112: #{tpu_custom_call.1} parent=1 // pred_region
      %5999 = dma.done [#allocation4], 256
    $region113: #{tpu_custom_call.1} parent=1 // pred_fallthru
      _
    %6000 = vsyncpa [#allocation3], 1
    %6001 = vsyncpa [#allocation6], 1
    %6002 = vsyncpa [#allocation9], 1
    %6003 = vsyncpa [#allocation12], 1
    %6004 = vsyncpa [#allocation15], 1
    %6005 = vsyncpa [#allocation4], 1

</llo_original>
